<compile_context>
chip_gen: v7x
topology: tpu7x:2x2x1
jax: 0.10.0
libtpu: 0.0.40
codegen_flags: <defaults>
</compile_context>

<pallas_src>
import functools

import jax
import jax.numpy as jnp
from jax import lax
from jax.experimental import pallas as pl
from jax.experimental.pallas import tpu as pltpu


# -----------------------------------------------------------------------------
# helpers
# -----------------------------------------------------------------------------
def _round_up(x, m):
    return ((x + m - 1) // m) * m


def _pad1(v, n):
    return jnp.pad(v, (0, n - v.shape[0]))


def _pack_gate_matrix(w, d_pad, h, h_pad, dtype):
    """w: (3h, d) PyTorch gate layout -> (d_pad, 3*h_pad), transposed,
    each gate block (r, z, n) lane-padded from h to h_pad, cast to MXU dtype."""
    wt = w.T                                    # (d, 3h)
    d = wt.shape[0]
    gates = []
    for g in range(3):
        blk = wt[:, g * h:(g + 1) * h]          # (d, h)
        blk = jnp.pad(blk, ((0, d_pad - d), (0, h_pad - h)))
        gates.append(blk)
    return jnp.concatenate(gates, axis=1).astype(dtype)   # (d_pad, 3*h_pad)


def _pick_chunk(t_steps, bs, d_pad, h_pad, max_chunk=64, budget_bytes=6 << 20):
    """Timesteps per grid step, sized from a VMEM budget; padding waste < n_chunks."""
    per_t = bs * (2 * d_pad + 2 * h_pad + 2 * 3 * h_pad) * 4   # x/out blocks + gi pingpong
    cap = max(1, min(max_chunk, budget_bytes // per_t, t_steps))
    n_chunks = -(-t_steps // cap)
    return int(-(-t_steps // n_chunks))


def _vmem_limit_bytes(chunk, bs, d_pad, h_pad, mxu_bytes):
    weights = (d_pad * 3 * h_pad + h_pad * 3 * h_pad) * mxu_bytes * 2  # dbl-buffered
    biases = 4 * h_pad * 4 * 2
    xblk = chunk * bs * d_pad * 4 * 2
    oblk = chunk * bs * h_pad * 4 * 2
    gi = 2 * chunk * bs * 3 * h_pad * 4
    hs = bs * h_pad * 4
    est = weights + biases + xblk + oblk + gi + hs
    # Keep <= 64 MiB so the request is valid on v7x (64 MiB physical / TC).
    return int(min(max(int(est * 1.3) + (2 << 20), 32 << 20), 64 << 20))


# -----------------------------------------------------------------------------
# Parameter packing (done ONCE per model, outside the per-call forward).
# Gate order matches PyTorch nn.GRU: (r, z, n).
# -----------------------------------------------------------------------------
def pack_gru_params(gru_params, w_fc, b_fc, mxu_dtype=jnp.bfloat16):
    layers = []
    for (w_ih, w_hh, b_ih, b_hh) in gru_params:
        h = w_hh.shape[1]
        d = w_ih.shape[1]
        d_pad = _round_up(d, 128)
        h_pad = _round_up(h, 128)
        wih_p = _pack_gate_matrix(w_ih, d_pad, h, h_pad, mxu_dtype)   # (Dp, 3Hp)
        whh_p = _pack_gate_matrix(w_hh, h_pad, h, h_pad, mxu_dtype)   # (Hp, 3Hp)
        # Fused biases: r/z gate biases folded into the hoisted projection.
        b_r = b_ih[0:h] + b_hh[0:h]
        b_z = b_ih[h:2 * h] + b_hh[h:2 * h]
        b_n_in = b_ih[2 * h:3 * h]
        bgi = jnp.concatenate(
            [_pad1(b_r, h_pad), _pad1(b_z, h_pad), _pad1(b_n_in, h_pad)]
        ).reshape(1, 3 * h_pad).astype(jnp.float32)
        bhn = _pad1(b_hh[2 * h:3 * h], h_pad).reshape(1, h_pad).astype(jnp.float32)
        layers.append((wih_p, whh_p, bgi, bhn))

    o_dim, h_dim = w_fc.shape
    h_pad = _round_up(h_dim, 128)
    o_pad = _round_up(o_dim, 128)
    fc_w = jnp.pad(w_fc.T, ((0, h_pad - h_dim), (0, o_pad - o_dim))).astype(mxu_dtype)
    fc_b = jnp.pad(b_fc, (0, o_pad - o_dim)).reshape(1, o_pad).astype(jnp.float32)
    return {"layers": tuple(layers), "fc_w": fc_w, "fc_b": fc_b}


# -----------------------------------------------------------------------------
# GRU layer kernel.
# Grid: (batch_shards [parallel], time_chunks + 1 [arbitrary]).
# Step c: project chunk c into ping-pong slot c%2, run recurrence of chunk c-1
# from slot (c-1)%2.  Hidden state carried in VMEM scratch across chunks.
# -----------------------------------------------------------------------------
def _gru_layer_kernel(x_ref, wih_ref, whh_ref, bgi_ref, bhn_ref, out_ref,
                      h_scr, gi_scr, *, chunk, n_chunks):
    c = pl.program_id(1)
    bs, hp = h_scr.shape
    dp = x_ref.shape[-1]

    def project():
        # Input projection for time-chunk c (one big MXU matmul, bias folded).
        slot = c % 2
        x2 = x_ref[...].reshape(chunk * bs, dp).astype(wih_ref.dtype)
        gi = (jnp.dot(x2, wih_ref[...], preferred_element_type=jnp.float32)
              + bgi_ref[...])
        base = pl.multiple_of(slot * chunk, chunk)
        gi_scr[pl.ds(base, chunk)] = gi.reshape(chunk, bs, 3 * hp)

    def recur():
        # Serial recurrence for time-chunk c-1 (reads the other slot).
        slot = (c - 1) % 2
        base = pl.multiple_of(slot * chunk, chunk)
        whh = whh_ref[...]                                   # (Hp, 3Hp) resident
        bhn = jnp.broadcast_to(bhn_ref[...], (bs, hp))       # hoisted broadcast

        def step(t, h):
            gi = gi_scr[base + t]                            # (bs, 3Hp) from VMEM
            gh = jnp.dot(h.astype(whh.dtype), whh,
                         preferred_element_type=jnp.float32)
            r = jax.nn.sigmoid(gi[:, :hp] + gh[:, :hp])
            z = jax.nn.sigmoid(gi[:, hp:2 * hp] + gh[:, hp:2 * hp])
            n = jnp.tanh(gi[:, 2 * hp:] + r * (gh[:, 2 * hp:] + bhn))
            h_new = n + z * (h - n)                          # == (1-z)*n + z*h
            out_ref[t] = h_new.astype(out_ref.dtype)
            return h_new

        h_scr[...] = lax.fori_loop(0, chunk, step, h_scr[...],
                                   unroll=min(chunk, 8))

    last = n_chunks   # grid extent along axis 1 is n_chunks + 1

    @pl.when(c == 0)                       # prologue: init h, project chunk 0
    def _():
        h_scr[...] = jnp.zeros_like(h_scr)
        project()

    @pl.when(jnp.logical_and(c > 0, c < last))   # interior: overlap proj + recur
    def _():
        project()
        recur()

    @pl.when(c == last)                    # drain: recurrence of the last chunk
    def _():
        recur()


def gru_layer_pallas(x3d, wih_p, whh_p, bgi, bhn, *, chunk, n_bshards, vmem_limit):
    """x3d: (T_pad, B_pad, D_pad) time-major padded f32 -> (T_pad, B_pad, H_pad) f32."""
    t_pad, b_pad, d_pad = x3d.shape
    h_pad = whh_p.shape[0]
    bs = b_pad // n_bshards
    n_chunks = t_pad // chunk

    kernel = functools.partial(_gru_layer_kernel, chunk=chunk, n_chunks=n_chunks)

    return pl.pallas_call(
        kernel,
        out_shape=jax.ShapeDtypeStruct((t_pad, b_pad, h_pad), jnp.float32),
        grid=(n_bshards, n_chunks + 1),
        in_specs=[
            pl.BlockSpec((chunk, bs, d_pad),
                         lambda b, c: (jnp.minimum(c, n_chunks - 1), b, 0)),
            pl.BlockSpec((d_pad, 3 * h_pad), lambda b, c: (0, 0)),
            pl.BlockSpec((h_pad, 3 * h_pad), lambda b, c: (0, 0)),
            pl.BlockSpec((1, 3 * h_pad), lambda b, c: (0, 0)),
            pl.BlockSpec((1, h_pad), lambda b, c: (0, 0)),
        ],
        out_specs=pl.BlockSpec((chunk, bs, h_pad),
                               lambda b, c: (jnp.maximum(c - 1, 0), b, 0)),
        scratch_shapes=[
            pltpu.VMEM((bs, h_pad), jnp.float32),                 # carried h
            pltpu.VMEM((2 * chunk, bs, 3 * h_pad), jnp.float32),  # gi ping-pong
        ],
        compiler_params=pltpu.CompilerParams(
            dimension_semantics=("parallel", "arbitrary"),
            vmem_limit_bytes=vmem_limit),
    )(x3d, wih_p, whh_p, bgi, bhn)


# -----------------------------------------------------------------------------
# Linear head kernel: tiled (N, Hp) @ (Hp, Op) + b, lane-padded output.
# -----------------------------------------------------------------------------
def _fc_kernel(x_ref, w_ref, b_ref, o_ref):
    o_ref[...] = (jnp.dot(x_ref[...].astype(w_ref.dtype), w_ref[...],
                          preferred_element_type=jnp.float32)
                  + b_ref[...]).astype(o_ref.dtype)


def fc_pallas(x2d, w_t, b):
    n_rows, h_pad = x2d.shape
    o_pad = w_t.shape[1]
    tile_n = n_rows
    for cand in (512, 256, 128, 64, 32, 16, 8):
        if n_rows % cand == 0:
            tile_n = cand
            break
    return pl.pallas_call(
        _fc_kernel,
        out_shape=jax.ShapeDtypeStruct((n_rows, o_pad), jnp.float32),
        grid=(n_rows // tile_n,),
        in_specs=[
            pl.BlockSpec((tile_n, h_pad), lambda i: (i, 0)),
            pl.BlockSpec((h_pad, o_pad), lambda i: (0, 0)),
            pl.BlockSpec((1, o_pad), lambda i: (0, 0)),
        ],
        out_specs=pl.BlockSpec((tile_n, o_pad), lambda i: (i, 0)),
        compiler_params=pltpu.CompilerParams(
            dimension_semantics=("parallel",)),
    )(x2d, w_t, b)


# -----------------------------------------------------------------------------
# Full GRUModel forward (takes pre-packed params).
# -----------------------------------------------------------------------------
def gru_model_forward(x_btd, packed, *, output_window, output_dim):
    """x_btd: (B, T, input_dim). Returns (B, min(output_window, T), output_dim)."""
    batch, t_steps, d_in = x_btd.shape
    layers = packed["layers"]
    h_pad = layers[0][1].shape[0]
    d_pad0 = layers[0][0].shape[0]

    b_pad = _round_up(batch, 8)
    n_bshards = 2 if (b_pad % 16 == 0) else 1       # use v7x's 2nd TC when possible
    bs = b_pad // n_bshards
    ow = min(output_window, t_steps)

    d_pad_max = max(layer[0].shape[0] for layer in layers)
    chunk = _pick_chunk(t_steps, bs, d_pad_max, h_pad)
    t_pad = _round_up(t_steps, chunk)
    mxu_bytes = jnp.dtype(layers[0][0].dtype).itemsize

    # One small transpose + zero-pad of the raw input; inter-layer activations
    # stay time-major, padded, 3-D -> no HBM transposes at layer boundaries.
    x = jnp.transpose(x_btd, (1, 0, 2)).astype(jnp.float32)          # (T, B, D)
    x = jnp.pad(x, ((0, t_pad - t_steps), (0, b_pad - batch), (0, d_pad0 - d_in)))

    h = x
    for (wih_p, whh_p, bgi, bhn) in layers:
        vmem_limit = _vmem_limit_bytes(chunk, bs, wih_p.shape[0], h_pad, mxu_bytes)
        h = gru_layer_pallas(h, wih_p, whh_p, bgi, bhn,
                             chunk=chunk, n_bshards=n_bshards,
                             vmem_limit=vmem_limit)

    # Head consumes the FIRST ow timesteps (matches out[:, :output_window, :]).
    out2d = h[:ow].reshape(ow * b_pad, h_pad)
    y = fc_pallas(out2d, packed["fc_w"], packed["fc_b"])             # (ow*Bp, Op)
    o_pad = packed["fc_w"].shape[1]
    y = y.reshape(ow, b_pad, o_pad)[:, :batch, :output_dim]          # (ow, B, O)
    return jnp.transpose(y, (1, 0, 2))                               # (B, ow, O)


# -----------------------------------------------------------------------------
# Pure-JAX reference (lax.scan) for sanity checking
# -----------------------------------------------------------------------------
def _gru_layer_ref(x_tbd, w_ih, w_hh, b_ih, b_hh):
    _, batch, _ = x_tbd.shape
    h_dim = w_hh.shape[1]
    wih_t, whh_t = w_ih.T, w_hh.T

    def step(h, x_t):
        gi = x_t @ wih_t + b_ih
        gh = h @ whh_t + b_hh
        r = jax.nn.sigmoid(gi[:, :h_dim] + gh[:, :h_dim])
        z = jax.nn.sigmoid(gi[:, h_dim:2 * h_dim] + gh[:, h_dim:2 * h_dim])
        n = jnp.tanh(gi[:, 2 * h_dim:] + r * gh[:, 2 * h_dim:])
        h_new = (1.0 - z) * n + z * h
        return h_new, h_new

    h0 = jnp.zeros((batch, h_dim), jnp.float32)
    _, out = jax.lax.scan(step, h0, x_tbd)
    return out


def gru_model_ref(x_btd, gru_params, w_fc, b_fc, output_window):
    _, t_steps, _ = x_btd.shape
    h = jnp.transpose(x_btd, (1, 0, 2)).astype(jnp.float32)
    for p in gru_params:
        h = _gru_layer_ref(h, *p)
    out = jnp.transpose(h, (1, 0, 2))[:, :min(output_window, t_steps), :]
    return out @ w_fc.T + b_fc


# -----------------------------------------------------------------------------
# Deterministic parameter init (PyTorch-style uniform(-1/sqrt(H), 1/sqrt(H)))
# -----------------------------------------------------------------------------
def init_params(key, input_dim, hidden_dim, layer_dim, output_dim):
    k = 1.0 / jnp.sqrt(jnp.float32(hidden_dim))
    gru_params = []
    for layer in range(layer_dim):
        d_in = input_dim if layer == 0 else hidden_dim
        key, k1, k2, k3, k4 = jax.random.split(key, 5)
        w_ih = jax.random.uniform(k1, (3 * hidden_dim, d_in), jnp.float32, -k, k)
        w_hh = jax.random.uniform(k2, (3 * hidden_dim, hidden_dim), jnp.float32, -k, k)
        b_ih = jax.random.uniform(k3, (3 * hidden_dim,), jnp.float32, -k, k)
        b_hh = jax.random.uniform(k4, (3 * hidden_dim,), jnp.float32, -k, k)
        gru_params.append((w_ih, w_hh, b_ih, b_hh))
    key, k5, k6 = jax.random.split(key, 3)
    w_fc = jax.random.uniform(k5, (output_dim, hidden_dim), jnp.float32, -k, k)
    b_fc = jax.random.uniform(k6, (output_dim,), jnp.float32, -k, k)
    return gru_params, w_fc, b_fc


if __name__ == "__main__":
    # Small shapes consistent with the module's forward.
    B, T = 2, 8
    input_dim, hidden_dim, layer_dim, output_dim = 8, 32, 2, 4
    output_window = 4

    key = jax.random.PRNGKey(0)
    key, kx = jax.random.split(key)
    x = jax.random.normal(kx, (B, T, input_dim), jnp.float32)
    gru_params, w_fc, b_fc = init_params(key, input_dim, hidden_dim,
                                         layer_dim, output_dim)

    y_ref = gru_model_ref(x, gru_params, w_fc, b_fc, output_window)

    fwd = jax.jit(functools.partial(gru_model_forward,
                                    output_window=output_window,
                                    output_dim=output_dim))

    # 1) f32 MXU operands: strict correctness check vs. the f32 lax.scan reference.
    packed_f32 = pack_gru_params(gru_params, w_fc, b_fc, mxu_dtype=jnp.float32)
    y32 = jax.block_until_ready(fwd(x, packed_f32))
    assert y32.shape == (B, output_window, output_dim), y32.shape
    assert jnp.allclose(y32, y_ref, atol=1e-5, rtol=1e-5), \
        float(jnp.max(jnp.abs(y32 - y_ref)))

    # 2) bf16 MXU operands (f32 accumulation, f32 carried h): fast path.
    packed_bf16 = pack_gru_params(gru_params, w_fc, b_fc, mxu_dtype=jnp.bfloat16)
    y16 = jax.block_until_ready(fwd(x, packed_bf16))
    assert y16.shape == (B, output_window, output_dim), y16.shape
    assert jnp.allclose(y16, y_ref, atol=6e-2, rtol=6e-2), \
        float(jnp.max(jnp.abs(y16 - y_ref)))

    print("KERNEL_OK")
</pallas_src>

<mosaic_0001>
module attributes {stable_mosaic.version = 11 : i64} {
  func.func @_gru_layer_kernel(%arg0: i32, %arg1: i32, %arg2: memref<8x8x128xf32, #tpu.memory_space<vmem>>, %arg3: memref<128x384xf32, #tpu.memory_space<vmem>>, %arg4: memref<128x384xf32, #tpu.memory_space<vmem>>, %arg5: memref<1x384xf32, #tpu.memory_space<vmem>>, %arg6: memref<1x128xf32, #tpu.memory_space<vmem>>, %arg7: memref<8x8x128xf32, #tpu.memory_space<vmem>>, %arg8: memref<8x128xf32, #tpu.memory_space<vmem>>, %arg9: memref<16x8x384xf32, #tpu.memory_space<vmem>>) attributes {dimension_semantics = [#tpu.dimension_semantics<parallel>, #tpu.dimension_semantics<arbitrary>], iteration_bounds = array<i64: 1, 2>, scalar_prefetch = 0 : i64, scratch_operands = 2 : i64, tpu.core_type = #tpu.core_type<tc>, window_params = [{transform_indices = @transform_0, window_bounds = array<i64: 8, 8, 128>}, {pipeline_mode = #tpu.pipeline_mode<synchronous>, transform_indices = @transform_1, window_bounds = array<i64: 128, 384>}, {pipeline_mode = #tpu.pipeline_mode<synchronous>, transform_indices = @transform_2, window_bounds = array<i64: 128, 384>}, {pipeline_mode = #tpu.pipeline_mode<synchronous>, transform_indices = @transform_3, window_bounds = array<i64: 1, 384>}, {pipeline_mode = #tpu.pipeline_mode<synchronous>, transform_indices = @transform_4, window_bounds = array<i64: 1, 128>}, {transform_indices = @transform_5, window_bounds = array<i64: 8, 8, 128>}]} {
    %c0_i32 = arith.constant 0 : i32
    %0 = arith.cmpi eq, %arg1, %c0_i32 : i32
    %1 = arith.extui %0 : i1 to i32
    %c0_i32_0 = arith.constant 0 : i32
    %2 = arith.cmpi ne, %1, %c0_i32_0 : i32
    scf.if %2 {
      %cst = arith.constant 0.000000e+00 : f32
      %11 = vector.broadcast %cst : f32 to vector<8x128xf32>
      %c0 = arith.constant 0 : index
      %c0_5 = arith.constant 0 : index
      %12 = vector.load %arg8[%c0, %c0_5] : memref<8x128xf32, #tpu.memory_space<vmem>>, vector<8x128xf32>
      tpu.vector_store %arg8[%c0, %c0_5], %11 {strides = array<i32>} : memref<8x128xf32, #tpu.memory_space<vmem>>, vector<8x128xf32>,
      %c2_i32 = arith.constant 2 : i32
      %c0_i32_6 = arith.constant 0 : i32
      %13 = arith.cmpi eq, %c2_i32, %c0_i32_6 : i32
      %c1_i32_7 = arith.constant 1 : i32
      %14 = arith.select %13, %c1_i32_7, %c2_i32 : i32
      %15 = arith.remsi %arg1, %14 : i32
      %c0_i32_8 = arith.constant 0 : i32
      %16 = arith.cmpi ne, %15, %c0_i32_8 : i32
      %c0_i32_9 = arith.constant 0 : i32
      %17 = arith.cmpi slt, %15, %c0_i32_9 : i32
      %c0_i32_10 = arith.constant 0 : i32
      %18 = arith.cmpi slt, %14, %c0_i32_10 : i32
      %19 = arith.xori %17, %18 : i1
      %20 = arith.andi %19, %16 : i1
      %21 = arith.addi %15, %14 : i32
      %22 = arith.select %20, %21, %15 : i32
      %c0_11 = arith.constant 0 : index
      %c0_12 = arith.constant 0 : index
      %c0_13 = arith.constant 0 : index
      %23 = vector.load %arg2[%c0_11, %c0_12, %c0_13] : memref<8x8x128xf32, #tpu.memory_space<vmem>>, vector<8x8x128xf32>
      %24 = vector.shape_cast %23 : vector<8x8x128xf32> to vector<64x128xf32>
      %c0_14 = arith.constant 0 : index
      %c0_15 = arith.constant 0 : index
      %25 = vector.load %arg3[%c0_14, %c0_15] : memref<128x384xf32, #tpu.memory_space<vmem>>, vector<128x384xf32>
      %cst_16 = arith.constant dense<0.000000e+00> : vector<64x384xf32>
      %26 = tpu.matmul %24, %25, %cst_16 {dimension_numbers = #tpu.dot_dimension_numbers<[1], [0], [0], [1], [0, 0, 1, 1], [], []>} : vector<64x128xf32>, vector<128x384xf32>, vector<64x384xf32> -> vector<64x384xf32>
      %c0_17 = arith.constant 0 : index
      %c0_18 = arith.constant 0 : index
      %27 = vector.load %arg5[%c0_17, %c0_18] : memref<1x384xf32, #tpu.memory_space<vmem>>, vector<1x384xf32>
      %28 = vector.broadcast %27 : vector<1x384xf32> to vector<64x384xf32>
      %29 = arith.addf %26, %28 : vector<64x384xf32>
      %c8_i32 = arith.constant 8 : i32
      %30 = arith.muli %22, %c8_i32 : i32
      %31 = tpu.assume_multiple %30, 8 : i32
      %32 = vector.shape_cast %29 : vector<64x384xf32> to vector<8x8x384xf32>
      %33 = arith.index_cast %31 : i32 to index
      %c0_19 = arith.constant 0 : index
      %c0_20 = arith.constant 0 : index
      %34 = vector.load %arg9[%33, %c0_19, %c0_20] : memref<16x8x384xf32, #tpu.memory_space<vmem>>, vector<8x8x384xf32>
      tpu.vector_store %arg9[%33, %c0_19, %c0_20], %32 {strides = array<i32>} : memref<16x8x384xf32, #tpu.memory_space<vmem>>, vector<8x8x384xf32>,
    } else {
    }
    %c0_i32_1 = arith.constant 0 : i32
    %3 = arith.cmpi sgt, %arg1, %c0_i32_1 : i32
    %c1_i32 = arith.constant 1 : i32
    %4 = arith.cmpi slt, %arg1, %c1_i32 : i32
    %5 = arith.andi %3, %4 : i1
    %6 = arith.extui %5 : i1 to i32
    %c0_i32_2 = arith.constant 0 : i32
    %7 = arith.cmpi ne, %6, %c0_i32_2 : i32
    scf.if %7 {
      %c2_i32 = arith.constant 2 : i32
      %c0_i32_5 = arith.constant 0 : i32
      %11 = arith.cmpi eq, %c2_i32, %c0_i32_5 : i32
      %c1_i32_6 = arith.constant 1 : i32
      %12 = arith.select %11, %c1_i32_6, %c2_i32 : i32
      %13 = arith.remsi %arg1, %12 : i32
      %c0_i32_7 = arith.constant 0 : i32
      %14 = arith.cmpi ne, %13, %c0_i32_7 : i32
      %c0_i32_8 = arith.constant 0 : i32
      %15 = arith.cmpi slt, %13, %c0_i32_8 : i32
      %c0_i32_9 = arith.constant 0 : i32
      %16 = arith.cmpi slt, %12, %c0_i32_9 : i32
      %17 = arith.xori %15, %16 : i1
      %18 = arith.andi %17, %14 : i1
      %19 = arith.addi %13, %12 : i32
      %20 = arith.select %18, %19, %13 : i32
      %c0 = arith.constant 0 : index
      %c0_10 = arith.constant 0 : index
      %c0_11 = arith.constant 0 : index
      %21 = vector.load %arg2[%c0, %c0_10, %c0_11] : memref<8x8x128xf32, #tpu.memory_space<vmem>>, vector<8x8x128xf32>
      %22 = vector.shape_cast %21 : vector<8x8x128xf32> to vector<64x128xf32>
      %c0_12 = arith.constant 0 : index
      %c0_13 = arith.constant 0 : index
      %23 = vector.load %arg3[%c0_12, %c0_13] : memref<128x384xf32, #tpu.memory_space<vmem>>, vector<128x384xf32>
      %cst = arith.constant dense<0.000000e+00> : vector<64x384xf32>
      %24 = tpu.matmul %22, %23, %cst {dimension_numbers = #tpu.dot_dimension_numbers<[1], [0], [0], [1], [0, 0, 1, 1], [], []>} : vector<64x128xf32>, vector<128x384xf32>, vector<64x384xf32> -> vector<64x384xf32>
      %c0_14 = arith.constant 0 : index
      %c0_15 = arith.constant 0 : index
      %25 = vector.load %arg5[%c0_14, %c0_15] : memref<1x384xf32, #tpu.memory_space<vmem>>, vector<1x384xf32>
      %26 = vector.broadcast %25 : vector<1x384xf32> to vector<64x384xf32>
      %27 = arith.addf %24, %26 : vector<64x384xf32>
      %c8_i32 = arith.constant 8 : i32
      %28 = arith.muli %20, %c8_i32 : i32
      %29 = tpu.assume_multiple %28, 8 : i32
      %30 = vector.shape_cast %27 : vector<64x384xf32> to vector<8x8x384xf32>
      %31 = arith.index_cast %29 : i32 to index
      %c0_16 = arith.constant 0 : index
      %c0_17 = arith.constant 0 : index
      %32 = vector.load %arg9[%31, %c0_16, %c0_17] : memref<16x8x384xf32, #tpu.memory_space<vmem>>, vector<8x8x384xf32>
      tpu.vector_store %arg9[%31, %c0_16, %c0_17], %30 {strides = array<i32>} : memref<16x8x384xf32, #tpu.memory_space<vmem>>, vector<8x8x384xf32>,
      %c1_i32_18 = arith.constant 1 : i32
      %33 = arith.subi %arg1, %c1_i32_18 : i32
      %c2_i32_19 = arith.constant 2 : i32
      %c0_i32_20 = arith.constant 0 : i32
      %34 = arith.cmpi eq, %c2_i32_19, %c0_i32_20 : i32
      %c1_i32_21 = arith.constant 1 : i32
      %35 = arith.select %34, %c1_i32_21, %c2_i32_19 : i32
      %36 = arith.remsi %33, %35 : i32
      %c0_i32_22 = arith.constant 0 : i32
      %37 = arith.cmpi ne, %36, %c0_i32_22 : i32
      %c0_i32_23 = arith.constant 0 : i32
      %38 = arith.cmpi slt, %36, %c0_i32_23 : i32
      %c0_i32_24 = arith.constant 0 : i32
      %39 = arith.cmpi slt, %35, %c0_i32_24 : i32
      %40 = arith.xori %38, %39 : i1
      %41 = arith.andi %40, %37 : i1
      %42 = arith.addi %36, %35 : i32
      %43 = arith.select %41, %42, %36 : i32
      %c8_i32_25 = arith.constant 8 : i32
      %44 = arith.muli %43, %c8_i32_25 : i32
      %45 = tpu.assume_multiple %44, 8 : i32
      %c0_26 = arith.constant 0 : index
      %c0_27 = arith.constant 0 : index
      %46 = vector.load %arg4[%c0_26, %c0_27] : memref<128x384xf32, #tpu.memory_space<vmem>>, vector<128x384xf32>
      %c0_28 = arith.constant 0 : index
      %c0_29 = arith.constant 0 : index
      %47 = vector.load %arg6[%c0_28, %c0_29] : memref<1x128xf32, #tpu.memory_space<vmem>>, vector<1x128xf32>
      %48 = vector.shape_cast %47 : vector<1x128xf32> to vector<1x128xf32>
      %49 = vector.broadcast %48 : vector<1x128xf32> to vector<8x128xf32>
      %c0_30 = arith.constant 0 : index
      %c0_31 = arith.constant 0 : index
      %50 = vector.load %arg8[%c0_30, %c0_31] : memref<8x128xf32, #tpu.memory_space<vmem>>, vector<8x128xf32>
      %c0_i32_32 = arith.constant 0 : i32
      %51 = arith.addi %45, %c0_i32_32 : i32
      %52 = arith.index_cast %51 : i32 to index
      %c0_33 = arith.constant 0 : index
      %c0_34 = arith.constant 0 : index
      %53 = vector.load %arg9[%52, %c0_33, %c0_34] : memref<16x8x384xf32, #tpu.memory_space<vmem>>, vector<1x8x384xf32>
      %54 = vector.shape_cast %53 : vector<1x8x384xf32> to vector<8x384xf32>
      %cst_35 = arith.constant dense<0.000000e+00> : vector<8x384xf32>
      %55 = tpu.matmul %50, %46, %cst_35 {dimension_numbers = #tpu.dot_dimension_numbers<[1], [0], [0], [1], [0, 0, 1, 1], [], []>} : vector<8x128xf32>, vector<128x384xf32>, vector<8x384xf32> -> vector<8x384xf32>
      %56 = vector.extract_strided_slice %54 {offsets = [0, 0], sizes = [8, 128], strides = [1, 1]} : vector<8x384xf32> to vector<8x128xf32>
      %57 = vector.extract_strided_slice %55 {offsets = [0, 0], sizes = [8, 128], strides = [1, 1]} : vector<8x384xf32> to vector<8x128xf32>
      %58 = arith.addf %56, %57 : vector<8x128xf32>
      %59 = arith.negf %58 : vector<8x128xf32>
      %60 = math.exp %59 : vector<8x128xf32>
      %cst_36 = arith.constant 1.000000e+00 : f32
      %61 = vector.broadcast %cst_36 : f32 to vector<8x128xf32>
      %62 = arith.addf %61, %60 : vector<8x128xf32>
      %63 = arith.divf %61, %62 : vector<8x128xf32>
      %64 = vector.extract_strided_slice %54 {offsets = [0, 128], sizes = [8, 128], strides = [1, 1]} : vector<8x384xf32> to vector<8x128xf32>
      %65 = vector.extract_strided_slice %55 {offsets = [0, 128], sizes = [8, 128], strides = [1, 1]} : vector<8x384xf32> to vector<8x128xf32>
      %66 = arith.addf %64, %65 : vector<8x128xf32>
      %67 = arith.negf %66 : vector<8x128xf32>
      %68 = math.exp %67 : vector<8x128xf32>
      %cst_37 = arith.constant 1.000000e+00 : f32
      %69 = vector.broadcast %cst_37 : f32 to vector<8x128xf32>
      %70 = arith.addf %69, %68 : vector<8x128xf32>
      %71 = arith.divf %69, %70 : vector<8x128xf32>
      %72 = vector.extract_strided_slice %54 {offsets = [0, 256], sizes = [8, 128], strides = [1, 1]} : vector<8x384xf32> to vector<8x128xf32>
      %73 = vector.extract_strided_slice %55 {offsets = [0, 256], sizes = [8, 128], strides = [1, 1]} : vector<8x384xf32> to vector<8x128xf32>
      %74 = arith.addf %73, %49 : vector<8x128xf32>
      %75 = arith.mulf %63, %74 : vector<8x128xf32>
      %76 = arith.addf %72, %75 : vector<8x128xf32>
      %77 = math.tanh %76 : vector<8x128xf32>
      %78 = arith.subf %50, %77 : vector<8x128xf32>
      %79 = arith.mulf %71, %78 : vector<8x128xf32>
      %80 = arith.addf %77, %79 : vector<8x128xf32>
      %81 = arith.index_cast %c0_i32_32 : i32 to index
      %c0_38 = arith.constant 0 : index
      %c0_39 = arith.constant 0 : index
      %82 = vector.load %arg7[%81, %c0_38, %c0_39] : memref<8x8x128xf32, #tpu.memory_space<vmem>>, vector<1x8x128xf32>
      %83 = vector.shape_cast %82 : vector<1x8x128xf32> to vector<8x128xf32>
      %84 = vector.shape_cast %80 : vector<8x128xf32> to vector<1x8x128xf32>
      tpu.vector_store %arg7[%81, %c0_38, %c0_39], %84 {strides = array<i32>} : memref<8x8x128xf32, #tpu.memory_space<vmem>>, vector<1x8x128xf32>,
      %c1_i32_40 = arith.constant 1 : i32
      %85 = arith.addi %45, %c1_i32_40 : i32
      %86 = arith.index_cast %85 : i32 to index
      %c0_41 = arith.constant 0 : index
      %c0_42 = arith.constant 0 : index
      %87 = vector.load %arg9[%86, %c0_41, %c0_42] : memref<16x8x384xf32, #tpu.memory_space<vmem>>, vector<1x8x384xf32>
      %88 = vector.shape_cast %87 : vector<1x8x384xf32> to vector<8x384xf32>
      %cst_43 = arith.constant dense<0.000000e+00> : vector<8x384xf32>
      %89 = tpu.matmul %80, %46, %cst_43 {dimension_numbers = #tpu.dot_dimension_numbers<[1], [0], [0], [1], [0, 0, 1, 1], [], []>} : vector<8x128xf32>, vector<128x384xf32>, vector<8x384xf32> -> vector<8x384xf32>
      %90 = vector.extract_strided_slice %88 {offsets = [0, 0], sizes = [8, 128], strides = [1, 1]} : vector<8x384xf32> to vector<8x128xf32>
      %91 = vector.extract_strided_slice %89 {offsets = [0, 0], sizes = [8, 128], strides = [1, 1]} : vector<8x384xf32> to vector<8x128xf32>
      %92 = arith.addf %90, %91 : vector<8x128xf32>
      %93 = arith.negf %92 : vector<8x128xf32>
      %94 = math.exp %93 : vector<8x128xf32>
      %cst_44 = arith.constant 1.000000e+00 : f32
      %95 = vector.broadcast %cst_44 : f32 to vector<8x128xf32>
      %96 = arith.addf %95, %94 : vector<8x128xf32>
      %97 = arith.divf %95, %96 : vector<8x128xf32>
      %98 = vector.extract_strided_slice %88 {offsets = [0, 128], sizes = [8, 128], strides = [1, 1]} : vector<8x384xf32> to vector<8x128xf32>
      %99 = vector.extract_strided_slice %89 {offsets = [0, 128], sizes = [8, 128], strides = [1, 1]} : vector<8x384xf32> to vector<8x128xf32>
      %100 = arith.addf %98, %99 : vector<8x128xf32>
      %101 = arith.negf %100 : vector<8x128xf32>
      %102 = math.exp %101 : vector<8x128xf32>
      %cst_45 = arith.constant 1.000000e+00 : f32
      %103 = vector.broadcast %cst_45 : f32 to vector<8x128xf32>
      %104 = arith.addf %103, %102 : vector<8x128xf32>
      %105 = arith.divf %103, %104 : vector<8x128xf32>
      %106 = vector.extract_strided_slice %88 {offsets = [0, 256], sizes = [8, 128], strides = [1, 1]} : vector<8x384xf32> to vector<8x128xf32>
      %107 = vector.extract_strided_slice %89 {offsets = [0, 256], sizes = [8, 128], strides = [1, 1]} : vector<8x384xf32> to vector<8x128xf32>
      %108 = arith.addf %107, %49 : vector<8x128xf32>
      %109 = arith.mulf %97, %108 : vector<8x128xf32>
      %110 = arith.addf %106, %109 : vector<8x128xf32>
      %111 = math.tanh %110 : vector<8x128xf32>
      %112 = arith.subf %80, %111 : vector<8x128xf32>
      %113 = arith.mulf %105, %112 : vector<8x128xf32>
      %114 = arith.addf %111, %113 : vector<8x128xf32>
      %115 = arith.index_cast %c1_i32_40 : i32 to index
      %c0_46 = arith.constant 0 : index
      %c0_47 = arith.constant 0 : index
      %116 = vector.load %arg7[%115, %c0_46, %c0_47] : memref<8x8x128xf32, #tpu.memory_space<vmem>>, vector<1x8x128xf32>
      %117 = vector.shape_cast %116 : vector<1x8x128xf32> to vector<8x128xf32>
      %118 = vector.shape_cast %114 : vector<8x128xf32> to vector<1x8x128xf32>
      tpu.vector_store %arg7[%115, %c0_46, %c0_47], %118 {strides = array<i32>} : memref<8x8x128xf32, #tpu.memory_space<vmem>>, vector<1x8x128xf32>,
      %c2_i32_48 = arith.constant 2 : i32
      %119 = arith.addi %45, %c2_i32_48 : i32
      %120 = arith.index_cast %119 : i32 to index
      %c0_49 = arith.constant 0 : index
      %c0_50 = arith.constant 0 : index
      %121 = vector.load %arg9[%120, %c0_49, %c0_50] : memref<16x8x384xf32, #tpu.memory_space<vmem>>, vector<1x8x384xf32>
      %122 = vector.shape_cast %121 : vector<1x8x384xf32> to vector<8x384xf32>
      %cst_51 = arith.constant dense<0.000000e+00> : vector<8x384xf32>
      %123 = tpu.matmul %114, %46, %cst_51 {dimension_numbers = #tpu.dot_dimension_numbers<[1], [0], [0], [1], [0, 0, 1, 1], [], []>} : vector<8x128xf32>, vector<128x384xf32>, vector<8x384xf32> -> vector<8x384xf32>
      %124 = vector.extract_strided_slice %122 {offsets = [0, 0], sizes = [8, 128], strides = [1, 1]} : vector<8x384xf32> to vector<8x128xf32>
      %125 = vector.extract_strided_slice %123 {offsets = [0, 0], sizes = [8, 128], strides = [1, 1]} : vector<8x384xf32> to vector<8x128xf32>
      %126 = arith.addf %124, %125 : vector<8x128xf32>
      %127 = arith.negf %126 : vector<8x128xf32>
      %128 = math.exp %127 : vector<8x128xf32>
      %cst_52 = arith.constant 1.000000e+00 : f32
      %129 = vector.broadcast %cst_52 : f32 to vector<8x128xf32>
      %130 = arith.addf %129, %128 : vector<8x128xf32>
      %131 = arith.divf %129, %130 : vector<8x128xf32>
      %132 = vector.extract_strided_slice %122 {offsets = [0, 128], sizes = [8, 128], strides = [1, 1]} : vector<8x384xf32> to vector<8x128xf32>
      %133 = vector.extract_strided_slice %123 {offsets = [0, 128], sizes = [8, 128], strides = [1, 1]} : vector<8x384xf32> to vector<8x128xf32>
      %134 = arith.addf %132, %133 : vector<8x128xf32>
      %135 = arith.negf %134 : vector<8x128xf32>
      %136 = math.exp %135 : vector<8x128xf32>
      %cst_53 = arith.constant 1.000000e+00 : f32
      %137 = vector.broadcast %cst_53 : f32 to vector<8x128xf32>
      %138 = arith.addf %137, %136 : vector<8x128xf32>
      %139 = arith.divf %137, %138 : vector<8x128xf32>
      %140 = vector.extract_strided_slice %122 {offsets = [0, 256], sizes = [8, 128], strides = [1, 1]} : vector<8x384xf32> to vector<8x128xf32>
      %141 = vector.extract_strided_slice %123 {offsets = [0, 256], sizes = [8, 128], strides = [1, 1]} : vector<8x384xf32> to vector<8x128xf32>
      %142 = arith.addf %141, %49 : vector<8x128xf32>
      %143 = arith.mulf %131, %142 : vector<8x128xf32>
      %144 = arith.addf %140, %143 : vector<8x128xf32>
      %145 = math.tanh %144 : vector<8x128xf32>
      %146 = arith.subf %114, %145 : vector<8x128xf32>
      %147 = arith.mulf %139, %146 : vector<8x128xf32>
      %148 = arith.addf %145, %147 : vector<8x128xf32>
      %149 = arith.index_cast %c2_i32_48 : i32 to index
      %c0_54 = arith.constant 0 : index
      %c0_55 = arith.constant 0 : index
      %150 = vector.load %arg7[%149, %c0_54, %c0_55] : memref<8x8x128xf32, #tpu.memory_space<vmem>>, vector<1x8x128xf32>
      %151 = vector.shape_cast %150 : vector<1x8x128xf32> to vector<8x128xf32>
      %152 = vector.shape_cast %148 : vector<8x128xf32> to vector<1x8x128xf32>
      tpu.vector_store %arg7[%149, %c0_54, %c0_55], %152 {strides = array<i32>} : memref<8x8x128xf32, #tpu.memory_space<vmem>>, vector<1x8x128xf32>,
      %c3_i32 = arith.constant 3 : i32
      %153 = arith.addi %45, %c3_i32 : i32
      %154 = arith.index_cast %153 : i32 to index
      %c0_56 = arith.constant 0 : index
      %c0_57 = arith.constant 0 : index
      %155 = vector.load %arg9[%154, %c0_56, %c0_57] : memref<16x8x384xf32, #tpu.memory_space<vmem>>, vector<1x8x384xf32>
      %156 = vector.shape_cast %155 : vector<1x8x384xf32> to vector<8x384xf32>
      %cst_58 = arith.constant dense<0.000000e+00> : vector<8x384xf32>
      %157 = tpu.matmul %148, %46, %cst_58 {dimension_numbers = #tpu.dot_dimension_numbers<[1], [0], [0], [1], [0, 0, 1, 1], [], []>} : vector<8x128xf32>, vector<128x384xf32>, vector<8x384xf32> -> vector<8x384xf32>
      %158 = vector.extract_strided_slice %156 {offsets = [0, 0], sizes = [8, 128], strides = [1, 1]} : vector<8x384xf32> to vector<8x128xf32>
      %159 = vector.extract_strided_slice %157 {offsets = [0, 0], sizes = [8, 128], strides = [1, 1]} : vector<8x384xf32> to vector<8x128xf32>
      %160 = arith.addf %158, %159 : vector<8x128xf32>
      %161 = arith.negf %160 : vector<8x128xf32>
      %162 = math.exp %161 : vector<8x128xf32>
      %cst_59 = arith.constant 1.000000e+00 : f32
      %163 = vector.broadcast %cst_59 : f32 to vector<8x128xf32>
      %164 = arith.addf %163, %162 : vector<8x128xf32>
      %165 = arith.divf %163, %164 : vector<8x128xf32>
      %166 = vector.extract_strided_slice %156 {offsets = [0, 128], sizes = [8, 128], strides = [1, 1]} : vector<8x384xf32> to vector<8x128xf32>
      %167 = vector.extract_strided_slice %157 {offsets = [0, 128], sizes = [8, 128], strides = [1, 1]} : vector<8x384xf32> to vector<8x128xf32>
      %168 = arith.addf %166, %167 : vector<8x128xf32>
      %169 = arith.negf %168 : vector<8x128xf32>
      %170 = math.exp %169 : vector<8x128xf32>
      %cst_60 = arith.constant 1.000000e+00 : f32
      %171 = vector.broadcast %cst_60 : f32 to vector<8x128xf32>
      %172 = arith.addf %171, %170 : vector<8x128xf32>
      %173 = arith.divf %171, %172 : vector<8x128xf32>
      %174 = vector.extract_strided_slice %156 {offsets = [0, 256], sizes = [8, 128], strides = [1, 1]} : vector<8x384xf32> to vector<8x128xf32>
      %175 = vector.extract_strided_slice %157 {offsets = [0, 256], sizes = [8, 128], strides = [1, 1]} : vector<8x384xf32> to vector<8x128xf32>
      %176 = arith.addf %175, %49 : vector<8x128xf32>
      %177 = arith.mulf %165, %176 : vector<8x128xf32>
      %178 = arith.addf %174, %177 : vector<8x128xf32>
      %179 = math.tanh %178 : vector<8x128xf32>
      %180 = arith.subf %148, %179 : vector<8x128xf32>
      %181 = arith.mulf %173, %180 : vector<8x128xf32>
      %182 = arith.addf %179, %181 : vector<8x128xf32>
      %183 = arith.index_cast %c3_i32 : i32 to index
      %c0_61 = arith.constant 0 : index
      %c0_62 = arith.constant 0 : index
      %184 = vector.load %arg7[%183, %c0_61, %c0_62] : memref<8x8x128xf32, #tpu.memory_space<vmem>>, vector<1x8x128xf32>
      %185 = vector.shape_cast %184 : vector<1x8x128xf32> to vector<8x128xf32>
      %186 = vector.shape_cast %182 : vector<8x128xf32> to vector<1x8x128xf32>
      tpu.vector_store %arg7[%183, %c0_61, %c0_62], %186 {strides = array<i32>} : memref<8x8x128xf32, #tpu.memory_space<vmem>>, vector<1x8x128xf32>,
      %c4_i32 = arith.constant 4 : i32
      %187 = arith.addi %45, %c4_i32 : i32
      %188 = arith.index_cast %187 : i32 to index
      %c0_63 = arith.constant 0 : index
      %c0_64 = arith.constant 0 : index
      %189 = vector.load %arg9[%188, %c0_63, %c0_64] : memref<16x8x384xf32, #tpu.memory_space<vmem>>, vector<1x8x384xf32>
      %190 = vector.shape_cast %189 : vector<1x8x384xf32> to vector<8x384xf32>
      %cst_65 = arith.constant dense<0.000000e+00> : vector<8x384xf32>
      %191 = tpu.matmul %182, %46, %cst_65 {dimension_numbers = #tpu.dot_dimension_numbers<[1], [0], [0], [1], [0, 0, 1, 1], [], []>} : vector<8x128xf32>, vector<128x384xf32>, vector<8x384xf32> -> vector<8x384xf32>
      %192 = vector.extract_strided_slice %190 {offsets = [0, 0], sizes = [8, 128], strides = [1, 1]} : vector<8x384xf32> to vector<8x128xf32>
      %193 = vector.extract_strided_slice %191 {offsets = [0, 0], sizes = [8, 128], strides = [1, 1]} : vector<8x384xf32> to vector<8x128xf32>
      %194 = arith.addf %192, %193 : vector<8x128xf32>
      %195 = arith.negf %194 : vector<8x128xf32>
      %196 = math.exp %195 : vector<8x128xf32>
      %cst_66 = arith.constant 1.000000e+00 : f32
      %197 = vector.broadcast %cst_66 : f32 to vector<8x128xf32>
      %198 = arith.addf %197, %196 : vector<8x128xf32>
      %199 = arith.divf %197, %198 : vector<8x128xf32>
      %200 = vector.extract_strided_slice %190 {offsets = [0, 128], sizes = [8, 128], strides = [1, 1]} : vector<8x384xf32> to vector<8x128xf32>
      %201 = vector.extract_strided_slice %191 {offsets = [0, 128], sizes = [8, 128], strides = [1, 1]} : vector<8x384xf32> to vector<8x128xf32>
      %202 = arith.addf %200, %201 : vector<8x128xf32>
      %203 = arith.negf %202 : vector<8x128xf32>
      %204 = math.exp %203 : vector<8x128xf32>
      %cst_67 = arith.constant 1.000000e+00 : f32
      %205 = vector.broadcast %cst_67 : f32 to vector<8x128xf32>
      %206 = arith.addf %205, %204 : vector<8x128xf32>
      %207 = arith.divf %205, %206 : vector<8x128xf32>
      %208 = vector.extract_strided_slice %190 {offsets = [0, 256], sizes = [8, 128], strides = [1, 1]} : vector<8x384xf32> to vector<8x128xf32>
      %209 = vector.extract_strided_slice %191 {offsets = [0, 256], sizes = [8, 128], strides = [1, 1]} : vector<8x384xf32> to vector<8x128xf32>
      %210 = arith.addf %209, %49 : vector<8x128xf32>
      %211 = arith.mulf %199, %210 : vector<8x128xf32>
      %212 = arith.addf %208, %211 : vector<8x128xf32>
      %213 = math.tanh %212 : vector<8x128xf32>
      %214 = arith.subf %182, %213 : vector<8x128xf32>
      %215 = arith.mulf %207, %214 : vector<8x128xf32>
      %216 = arith.addf %213, %215 : vector<8x128xf32>
      %217 = arith.index_cast %c4_i32 : i32 to index
      %c0_68 = arith.constant 0 : index
      %c0_69 = arith.constant 0 : index
      %218 = vector.load %arg7[%217, %c0_68, %c0_69] : memref<8x8x128xf32, #tpu.memory_space<vmem>>, vector<1x8x128xf32>
      %219 = vector.shape_cast %218 : vector<1x8x128xf32> to vector<8x128xf32>
      %220 = vector.shape_cast %216 : vector<8x128xf32> to vector<1x8x128xf32>
      tpu.vector_store %arg7[%217, %c0_68, %c0_69], %220 {strides = array<i32>} : memref<8x8x128xf32, #tpu.memory_space<vmem>>, vector<1x8x128xf32>,
      %c5_i32 = arith.constant 5 : i32
      %221 = arith.addi %45, %c5_i32 : i32
      %222 = arith.index_cast %221 : i32 to index
      %c0_70 = arith.constant 0 : index
      %c0_71 = arith.constant 0 : index
      %223 = vector.load %arg9[%222, %c0_70, %c0_71] : memref<16x8x384xf32, #tpu.memory_space<vmem>>, vector<1x8x384xf32>
      %224 = vector.shape_cast %223 : vector<1x8x384xf32> to vector<8x384xf32>
      %cst_72 = arith.constant dense<0.000000e+00> : vector<8x384xf32>
      %225 = tpu.matmul %216, %46, %cst_72 {dimension_numbers = #tpu.dot_dimension_numbers<[1], [0], [0], [1], [0, 0, 1, 1], [], []>} : vector<8x128xf32>, vector<128x384xf32>, vector<8x384xf32> -> vector<8x384xf32>
      %226 = vector.extract_strided_slice %224 {offsets = [0, 0], sizes = [8, 128], strides = [1, 1]} : vector<8x384xf32> to vector<8x128xf32>
      %227 = vector.extract_strided_slice %225 {offsets = [0, 0], sizes = [8, 128], strides = [1, 1]} : vector<8x384xf32> to vector<8x128xf32>
      %228 = arith.addf %226, %227 : vector<8x128xf32>
      %229 = arith.negf %228 : vector<8x128xf32>
      %230 = math.exp %229 : vector<8x128xf32>
      %cst_73 = arith.constant 1.000000e+00 : f32
      %231 = vector.broadcast %cst_73 : f32 to vector<8x128xf32>
      %232 = arith.addf %231, %230 : vector<8x128xf32>
      %233 = arith.divf %231, %232 : vector<8x128xf32>
      %234 = vector.extract_strided_slice %224 {offsets = [0, 128], sizes = [8, 128], strides = [1, 1]} : vector<8x384xf32> to vector<8x128xf32>
      %235 = vector.extract_strided_slice %225 {offsets = [0, 128], sizes = [8, 128], strides = [1, 1]} : vector<8x384xf32> to vector<8x128xf32>
      %236 = arith.addf %234, %235 : vector<8x128xf32>
      %237 = arith.negf %236 : vector<8x128xf32>
      %238 = math.exp %237 : vector<8x128xf32>
      %cst_74 = arith.constant 1.000000e+00 : f32
      %239 = vector.broadcast %cst_74 : f32 to vector<8x128xf32>
      %240 = arith.addf %239, %238 : vector<8x128xf32>
      %241 = arith.divf %239, %240 : vector<8x128xf32>
      %242 = vector.extract_strided_slice %224 {offsets = [0, 256], sizes = [8, 128], strides = [1, 1]} : vector<8x384xf32> to vector<8x128xf32>
      %243 = vector.extract_strided_slice %225 {offsets = [0, 256], sizes = [8, 128], strides = [1, 1]} : vector<8x384xf32> to vector<8x128xf32>
      %244 = arith.addf %243, %49 : vector<8x128xf32>
      %245 = arith.mulf %233, %244 : vector<8x128xf32>
      %246 = arith.addf %242, %245 : vector<8x128xf32>
      %247 = math.tanh %246 : vector<8x128xf32>
      %248 = arith.subf %216, %247 : vector<8x128xf32>
      %249 = arith.mulf %241, %248 : vector<8x128xf32>
      %250 = arith.addf %247, %249 : vector<8x128xf32>
      %251 = arith.index_cast %c5_i32 : i32 to index
      %c0_75 = arith.constant 0 : index
      %c0_76 = arith.constant 0 : index
      %252 = vector.load %arg7[%251, %c0_75, %c0_76] : memref<8x8x128xf32, #tpu.memory_space<vmem>>, vector<1x8x128xf32>
      %253 = vector.shape_cast %252 : vector<1x8x128xf32> to vector<8x128xf32>
      %254 = vector.shape_cast %250 : vector<8x128xf32> to vector<1x8x128xf32>
      tpu.vector_store %arg7[%251, %c0_75, %c0_76], %254 {strides = array<i32>} : memref<8x8x128xf32, #tpu.memory_space<vmem>>, vector<1x8x128xf32>,
      %c6_i32 = arith.constant 6 : i32
      %255 = arith.addi %45, %c6_i32 : i32
      %256 = arith.index_cast %255 : i32 to index
      %c0_77 = arith.constant 0 : index
      %c0_78 = arith.constant 0 : index
      %257 = vector.load %arg9[%256, %c0_77, %c0_78] : memref<16x8x384xf32, #tpu.memory_space<vmem>>, vector<1x8x384xf32>
      %258 = vector.shape_cast %257 : vector<1x8x384xf32> to vector<8x384xf32>
      %cst_79 = arith.constant dense<0.000000e+00> : vector<8x384xf32>
      %259 = tpu.matmul %250, %46, %cst_79 {dimension_numbers = #tpu.dot_dimension_numbers<[1], [0], [0], [1], [0, 0, 1, 1], [], []>} : vector<8x128xf32>, vector<128x384xf32>, vector<8x384xf32> -> vector<8x384xf32>
      %260 = vector.extract_strided_slice %258 {offsets = [0, 0], sizes = [8, 128], strides = [1, 1]} : vector<8x384xf32> to vector<8x128xf32>
      %261 = vector.extract_strided_slice %259 {offsets = [0, 0], sizes = [8, 128], strides = [1, 1]} : vector<8x384xf32> to vector<8x128xf32>
      %262 = arith.addf %260, %261 : vector<8x128xf32>
      %263 = arith.negf %262 : vector<8x128xf32>
      %264 = math.exp %263 : vector<8x128xf32>
      %cst_80 = arith.constant 1.000000e+00 : f32
      %265 = vector.broadcast %cst_80 : f32 to vector<8x128xf32>
      %266 = arith.addf %265, %264 : vector<8x128xf32>
      %267 = arith.divf %265, %266 : vector<8x128xf32>
      %268 = vector.extract_strided_slice %258 {offsets = [0, 128], sizes = [8, 128], strides = [1, 1]} : vector<8x384xf32> to vector<8x128xf32>
      %269 = vector.extract_strided_slice %259 {offsets = [0, 128], sizes = [8, 128], strides = [1, 1]} : vector<8x384xf32> to vector<8x128xf32>
      %270 = arith.addf %268, %269 : vector<8x128xf32>
      %271 = arith.negf %270 : vector<8x128xf32>
      %272 = math.exp %271 : vector<8x128xf32>
      %cst_81 = arith.constant 1.000000e+00 : f32
      %273 = vector.broadcast %cst_81 : f32 to vector<8x128xf32>
      %274 = arith.addf %273, %272 : vector<8x128xf32>
      %275 = arith.divf %273, %274 : vector<8x128xf32>
      %276 = vector.extract_strided_slice %258 {offsets = [0, 256], sizes = [8, 128], strides = [1, 1]} : vector<8x384xf32> to vector<8x128xf32>
      %277 = vector.extract_strided_slice %259 {offsets = [0, 256], sizes = [8, 128], strides = [1, 1]} : vector<8x384xf32> to vector<8x128xf32>
      %278 = arith.addf %277, %49 : vector<8x128xf32>
      %279 = arith.mulf %267, %278 : vector<8x128xf32>
      %280 = arith.addf %276, %279 : vector<8x128xf32>
      %281 = math.tanh %280 : vector<8x128xf32>
      %282 = arith.subf %250, %281 : vector<8x128xf32>
      %283 = arith.mulf %275, %282 : vector<8x128xf32>
      %284 = arith.addf %281, %283 : vector<8x128xf32>
      %285 = arith.index_cast %c6_i32 : i32 to index
      %c0_82 = arith.constant 0 : index
      %c0_83 = arith.constant 0 : index
      %286 = vector.load %arg7[%285, %c0_82, %c0_83] : memref<8x8x128xf32, #tpu.memory_space<vmem>>, vector<1x8x128xf32>
      %287 = vector.shape_cast %286 : vector<1x8x128xf32> to vector<8x128xf32>
      %288 = vector.shape_cast %284 : vector<8x128xf32> to vector<1x8x128xf32>
      tpu.vector_store %arg7[%285, %c0_82, %c0_83], %288 {strides = array<i32>} : memref<8x8x128xf32, #tpu.memory_space<vmem>>, vector<1x8x128xf32>,
      %c7_i32 = arith.constant 7 : i32
      %289 = arith.addi %45, %c7_i32 : i32
      %290 = arith.index_cast %289 : i32 to index
      %c0_84 = arith.constant 0 : index
      %c0_85 = arith.constant 0 : index
      %291 = vector.load %arg9[%290, %c0_84, %c0_85] : memref<16x8x384xf32, #tpu.memory_space<vmem>>, vector<1x8x384xf32>
      %292 = vector.shape_cast %291 : vector<1x8x384xf32> to vector<8x384xf32>
      %cst_86 = arith.constant dense<0.000000e+00> : vector<8x384xf32>
      %293 = tpu.matmul %284, %46, %cst_86 {dimension_numbers = #tpu.dot_dimension_numbers<[1], [0], [0], [1], [0, 0, 1, 1], [], []>} : vector<8x128xf32>, vector<128x384xf32>, vector<8x384xf32> -> vector<8x384xf32>
      %294 = vector.extract_strided_slice %292 {offsets = [0, 0], sizes = [8, 128], strides = [1, 1]} : vector<8x384xf32> to vector<8x128xf32>
      %295 = vector.extract_strided_slice %293 {offsets = [0, 0], sizes = [8, 128], strides = [1, 1]} : vector<8x384xf32> to vector<8x128xf32>
      %296 = arith.addf %294, %295 : vector<8x128xf32>
      %297 = arith.negf %296 : vector<8x128xf32>
      %298 = math.exp %297 : vector<8x128xf32>
      %cst_87 = arith.constant 1.000000e+00 : f32
      %299 = vector.broadcast %cst_87 : f32 to vector<8x128xf32>
      %300 = arith.addf %299, %298 : vector<8x128xf32>
      %301 = arith.divf %299, %300 : vector<8x128xf32>
      %302 = vector.extract_strided_slice %292 {offsets = [0, 128], sizes = [8, 128], strides = [1, 1]} : vector<8x384xf32> to vector<8x128xf32>
      %303 = vector.extract_strided_slice %293 {offsets = [0, 128], sizes = [8, 128], strides = [1, 1]} : vector<8x384xf32> to vector<8x128xf32>
      %304 = arith.addf %302, %303 : vector<8x128xf32>
      %305 = arith.negf %304 : vector<8x128xf32>
      %306 = math.exp %305 : vector<8x128xf32>
      %cst_88 = arith.constant 1.000000e+00 : f32
      %307 = vector.broadcast %cst_88 : f32 to vector<8x128xf32>
      %308 = arith.addf %307, %306 : vector<8x128xf32>
      %309 = arith.divf %307, %308 : vector<8x128xf32>
      %310 = vector.extract_strided_slice %292 {offsets = [0, 256], sizes = [8, 128], strides = [1, 1]} : vector<8x384xf32> to vector<8x128xf32>
      %311 = vector.extract_strided_slice %293 {offsets = [0, 256], sizes = [8, 128], strides = [1, 1]} : vector<8x384xf32> to vector<8x128xf32>
      %312 = arith.addf %311, %49 : vector<8x128xf32>
      %313 = arith.mulf %301, %312 : vector<8x128xf32>
      %314 = arith.addf %310, %313 : vector<8x128xf32>
      %315 = math.tanh %314 : vector<8x128xf32>
      %316 = arith.subf %284, %315 : vector<8x128xf32>
      %317 = arith.mulf %309, %316 : vector<8x128xf32>
      %318 = arith.addf %315, %317 : vector<8x128xf32>
      %319 = arith.index_cast %c7_i32 : i32 to index
      %c0_89 = arith.constant 0 : index
      %c0_90 = arith.constant 0 : index
      %320 = vector.load %arg7[%319, %c0_89, %c0_90] : memref<8x8x128xf32, #tpu.memory_space<vmem>>, vector<1x8x128xf32>
      %321 = vector.shape_cast %320 : vector<1x8x128xf32> to vector<8x128xf32>
      %322 = vector.shape_cast %318 : vector<8x128xf32> to vector<1x8x128xf32>
      tpu.vector_store %arg7[%319, %c0_89, %c0_90], %322 {strides = array<i32>} : memref<8x8x128xf32, #tpu.memory_space<vmem>>, vector<1x8x128xf32>,
      %c8_i32_91 = arith.constant 8 : i32
      %c0_92 = arith.constant 0 : index
      %c0_93 = arith.constant 0 : index
      %323 = vector.load %arg8[%c0_92, %c0_93] : memref<8x128xf32, #tpu.memory_space<vmem>>, vector<8x128xf32>
      tpu.vector_store %arg8[%c0_92, %c0_93], %318 {strides = array<i32>} : memref<8x128xf32, #tpu.memory_space<vmem>>, vector<8x128xf32>,
    } else {
    }
    %c1_i32_3 = arith.constant 1 : i32
    %8 = arith.cmpi eq, %arg1, %c1_i32_3 : i32
    %9 = arith.extui %8 : i1 to i32
    %c0_i32_4 = arith.constant 0 : i32
    %10 = arith.cmpi ne, %9, %c0_i32_4 : i32
    scf.if %10 {
      %c1_i32_5 = arith.constant 1 : i32
      %11 = arith.subi %arg1, %c1_i32_5 : i32
      %c2_i32 = arith.constant 2 : i32
      %c0_i32_6 = arith.constant 0 : i32
      %12 = arith.cmpi eq, %c2_i32, %c0_i32_6 : i32
      %c1_i32_7 = arith.constant 1 : i32
      %13 = arith.select %12, %c1_i32_7, %c2_i32 : i32
      %14 = arith.remsi %11, %13 : i32
      %c0_i32_8 = arith.constant 0 : i32
      %15 = arith.cmpi ne, %14, %c0_i32_8 : i32
      %c0_i32_9 = arith.constant 0 : i32
      %16 = arith.cmpi slt, %14, %c0_i32_9 : i32
      %c0_i32_10 = arith.constant 0 : i32
      %17 = arith.cmpi slt, %13, %c0_i32_10 : i32
      %18 = arith.xori %16, %17 : i1
      %19 = arith.andi %18, %15 : i1
      %20 = arith.addi %14, %13 : i32
      %21 = arith.select %19, %20, %14 : i32
      %c8_i32 = arith.constant 8 : i32
      %22 = arith.muli %21, %c8_i32 : i32
      %23 = tpu.assume_multiple %22, 8 : i32
      %c0 = arith.constant 0 : index
      %c0_11 = arith.constant 0 : index
      %24 = vector.load %arg4[%c0, %c0_11] : memref<128x384xf32, #tpu.memory_space<vmem>>, vector<128x384xf32>
      %c0_12 = arith.constant 0 : index
      %c0_13 = arith.constant 0 : index
      %25 = vector.load %arg6[%c0_12, %c0_13] : memref<1x128xf32, #tpu.memory_space<vmem>>, vector<1x128xf32>
      %26 = vector.shape_cast %25 : vector<1x128xf32> to vector<1x128xf32>
      %27 = vector.broadcast %26 : vector<1x128xf32> to vector<8x128xf32>
      %c0_14 = arith.constant 0 : index
      %c0_15 = arith.constant 0 : index
      %28 = vector.load %arg8[%c0_14, %c0_15] : memref<8x128xf32, #tpu.memory_space<vmem>>, vector<8x128xf32>
      %c0_i32_16 = arith.constant 0 : i32
      %29 = arith.addi %23, %c0_i32_16 : i32
      %30 = arith.index_cast %29 : i32 to index
      %c0_17 = arith.constant 0 : index
      %c0_18 = arith.constant 0 : index
      %31 = vector.load %arg9[%30, %c0_17, %c0_18] : memref<16x8x384xf32, #tpu.memory_space<vmem>>, vector<1x8x384xf32>
      %32 = vector.shape_cast %31 : vector<1x8x384xf32> to vector<8x384xf32>
      %cst = arith.constant dense<0.000000e+00> : vector<8x384xf32>
      %33 = tpu.matmul %28, %24, %cst {dimension_numbers = #tpu.dot_dimension_numbers<[1], [0], [0], [1], [0, 0, 1, 1], [], []>} : vector<8x128xf32>, vector<128x384xf32>, vector<8x384xf32> -> vector<8x384xf32>
      %34 = vector.extract_strided_slice %32 {offsets = [0, 0], sizes = [8, 128], strides = [1, 1]} : vector<8x384xf32> to vector<8x128xf32>
      %35 = vector.extract_strided_slice %33 {offsets = [0, 0], sizes = [8, 128], strides = [1, 1]} : vector<8x384xf32> to vector<8x128xf32>
      %36 = arith.addf %34, %35 : vector<8x128xf32>
      %37 = arith.negf %36 : vector<8x128xf32>
      %38 = math.exp %37 : vector<8x128xf32>
      %cst_19 = arith.constant 1.000000e+00 : f32
      %39 = vector.broadcast %cst_19 : f32 to vector<8x128xf32>
      %40 = arith.addf %39, %38 : vector<8x128xf32>
      %41 = arith.divf %39, %40 : vector<8x128xf32>
      %42 = vector.extract_strided_slice %32 {offsets = [0, 128], sizes = [8, 128], strides = [1, 1]} : vector<8x384xf32> to vector<8x128xf32>
      %43 = vector.extract_strided_slice %33 {offsets = [0, 128], sizes = [8, 128], strides = [1, 1]} : vector<8x384xf32> to vector<8x128xf32>
      %44 = arith.addf %42, %43 : vector<8x128xf32>
      %45 = arith.negf %44 : vector<8x128xf32>
      %46 = math.exp %45 : vector<8x128xf32>
      %cst_20 = arith.constant 1.000000e+00 : f32
      %47 = vector.broadcast %cst_20 : f32 to vector<8x128xf32>
      %48 = arith.addf %47, %46 : vector<8x128xf32>
      %49 = arith.divf %47, %48 : vector<8x128xf32>
      %50 = vector.extract_strided_slice %32 {offsets = [0, 256], sizes = [8, 128], strides = [1, 1]} : vector<8x384xf32> to vector<8x128xf32>
      %51 = vector.extract_strided_slice %33 {offsets = [0, 256], sizes = [8, 128], strides = [1, 1]} : vector<8x384xf32> to vector<8x128xf32>
      %52 = arith.addf %51, %27 : vector<8x128xf32>
      %53 = arith.mulf %41, %52 : vector<8x128xf32>
      %54 = arith.addf %50, %53 : vector<8x128xf32>
      %55 = math.tanh %54 : vector<8x128xf32>
      %56 = arith.subf %28, %55 : vector<8x128xf32>
      %57 = arith.mulf %49, %56 : vector<8x128xf32>
      %58 = arith.addf %55, %57 : vector<8x128xf32>
      %59 = arith.index_cast %c0_i32_16 : i32 to index
      %c0_21 = arith.constant 0 : index
      %c0_22 = arith.constant 0 : index
      %60 = vector.load %arg7[%59, %c0_21, %c0_22] : memref<8x8x128xf32, #tpu.memory_space<vmem>>, vector<1x8x128xf32>
      %61 = vector.shape_cast %60 : vector<1x8x128xf32> to vector<8x128xf32>
      %62 = vector.shape_cast %58 : vector<8x128xf32> to vector<1x8x128xf32>
      tpu.vector_store %arg7[%59, %c0_21, %c0_22], %62 {strides = array<i32>} : memref<8x8x128xf32, #tpu.memory_space<vmem>>, vector<1x8x128xf32>,
      %c1_i32_23 = arith.constant 1 : i32
      %63 = arith.addi %23, %c1_i32_23 : i32
      %64 = arith.index_cast %63 : i32 to index
      %c0_24 = arith.constant 0 : index
      %c0_25 = arith.constant 0 : index
      %65 = vector.load %arg9[%64, %c0_24, %c0_25] : memref<16x8x384xf32, #tpu.memory_space<vmem>>, vector<1x8x384xf32>
      %66 = vector.shape_cast %65 : vector<1x8x384xf32> to vector<8x384xf32>
      %cst_26 = arith.constant dense<0.000000e+00> : vector<8x384xf32>
      %67 = tpu.matmul %58, %24, %cst_26 {dimension_numbers = #tpu.dot_dimension_numbers<[1], [0], [0], [1], [0, 0, 1, 1], [], []>} : vector<8x128xf32>, vector<128x384xf32>, vector<8x384xf32> -> vector<8x384xf32>
      %68 = vector.extract_strided_slice %66 {offsets = [0, 0], sizes = [8, 128], strides = [1, 1]} : vector<8x384xf32> to vector<8x128xf32>
      %69 = vector.extract_strided_slice %67 {offsets = [0, 0], sizes = [8, 128], strides = [1, 1]} : vector<8x384xf32> to vector<8x128xf32>
      %70 = arith.addf %68, %69 : vector<8x128xf32>
      %71 = arith.negf %70 : vector<8x128xf32>
      %72 = math.exp %71 : vector<8x128xf32>
      %cst_27 = arith.constant 1.000000e+00 : f32
      %73 = vector.broadcast %cst_27 : f32 to vector<8x128xf32>
      %74 = arith.addf %73, %72 : vector<8x128xf32>
      %75 = arith.divf %73, %74 : vector<8x128xf32>
      %76 = vector.extract_strided_slice %66 {offsets = [0, 128], sizes = [8, 128], strides = [1, 1]} : vector<8x384xf32> to vector<8x128xf32>
      %77 = vector.extract_strided_slice %67 {offsets = [0, 128], sizes = [8, 128], strides = [1, 1]} : vector<8x384xf32> to vector<8x128xf32>
      %78 = arith.addf %76, %77 : vector<8x128xf32>
      %79 = arith.negf %78 : vector<8x128xf32>
      %80 = math.exp %79 : vector<8x128xf32>
      %cst_28 = arith.constant 1.000000e+00 : f32
      %81 = vector.broadcast %cst_28 : f32 to vector<8x128xf32>
      %82 = arith.addf %81, %80 : vector<8x128xf32>
      %83 = arith.divf %81, %82 : vector<8x128xf32>
      %84 = vector.extract_strided_slice %66 {offsets = [0, 256], sizes = [8, 128], strides = [1, 1]} : vector<8x384xf32> to vector<8x128xf32>
      %85 = vector.extract_strided_slice %67 {offsets = [0, 256], sizes = [8, 128], strides = [1, 1]} : vector<8x384xf32> to vector<8x128xf32>
      %86 = arith.addf %85, %27 : vector<8x128xf32>
      %87 = arith.mulf %75, %86 : vector<8x128xf32>
      %88 = arith.addf %84, %87 : vector<8x128xf32>
      %89 = math.tanh %88 : vector<8x128xf32>
      %90 = arith.subf %58, %89 : vector<8x128xf32>
      %91 = arith.mulf %83, %90 : vector<8x128xf32>
      %92 = arith.addf %89, %91 : vector<8x128xf32>
      %93 = arith.index_cast %c1_i32_23 : i32 to index
      %c0_29 = arith.constant 0 : index
      %c0_30 = arith.constant 0 : index
      %94 = vector.load %arg7[%93, %c0_29, %c0_30] : memref<8x8x128xf32, #tpu.memory_space<vmem>>, vector<1x8x128xf32>
      %95 = vector.shape_cast %94 : vector<1x8x128xf32> to vector<8x128xf32>
      %96 = vector.shape_cast %92 : vector<8x128xf32> to vector<1x8x128xf32>
      tpu.vector_store %arg7[%93, %c0_29, %c0_30], %96 {strides = array<i32>} : memref<8x8x128xf32, #tpu.memory_space<vmem>>, vector<1x8x128xf32>,
      %c2_i32_31 = arith.constant 2 : i32
      %97 = arith.addi %23, %c2_i32_31 : i32
      %98 = arith.index_cast %97 : i32 to index
      %c0_32 = arith.constant 0 : index
      %c0_33 = arith.constant 0 : index
      %99 = vector.load %arg9[%98, %c0_32, %c0_33] : memref<16x8x384xf32, #tpu.memory_space<vmem>>, vector<1x8x384xf32>
      %100 = vector.shape_cast %99 : vector<1x8x384xf32> to vector<8x384xf32>
      %cst_34 = arith.constant dense<0.000000e+00> : vector<8x384xf32>
      %101 = tpu.matmul %92, %24, %cst_34 {dimension_numbers = #tpu.dot_dimension_numbers<[1], [0], [0], [1], [0, 0, 1, 1], [], []>} : vector<8x128xf32>, vector<128x384xf32>, vector<8x384xf32> -> vector<8x384xf32>
      %102 = vector.extract_strided_slice %100 {offsets = [0, 0], sizes = [8, 128], strides = [1, 1]} : vector<8x384xf32> to vector<8x128xf32>
      %103 = vector.extract_strided_slice %101 {offsets = [0, 0], sizes = [8, 128], strides = [1, 1]} : vector<8x384xf32> to vector<8x128xf32>
      %104 = arith.addf %102, %103 : vector<8x128xf32>
      %105 = arith.negf %104 : vector<8x128xf32>
      %106 = math.exp %105 : vector<8x128xf32>
      %cst_35 = arith.constant 1.000000e+00 : f32
      %107 = vector.broadcast %cst_35 : f32 to vector<8x128xf32>
      %108 = arith.addf %107, %106 : vector<8x128xf32>
      %109 = arith.divf %107, %108 : vector<8x128xf32>
      %110 = vector.extract_strided_slice %100 {offsets = [0, 128], sizes = [8, 128], strides = [1, 1]} : vector<8x384xf32> to vector<8x128xf32>
      %111 = vector.extract_strided_slice %101 {offsets = [0, 128], sizes = [8, 128], strides = [1, 1]} : vector<8x384xf32> to vector<8x128xf32>
      %112 = arith.addf %110, %111 : vector<8x128xf32>
      %113 = arith.negf %112 : vector<8x128xf32>
      %114 = math.exp %113 : vector<8x128xf32>
      %cst_36 = arith.constant 1.000000e+00 : f32
      %115 = vector.broadcast %cst_36 : f32 to vector<8x128xf32>
      %116 = arith.addf %115, %114 : vector<8x128xf32>
      %117 = arith.divf %115, %116 : vector<8x128xf32>
      %118 = vector.extract_strided_slice %100 {offsets = [0, 256], sizes = [8, 128], strides = [1, 1]} : vector<8x384xf32> to vector<8x128xf32>
      %119 = vector.extract_strided_slice %101 {offsets = [0, 256], sizes = [8, 128], strides = [1, 1]} : vector<8x384xf32> to vector<8x128xf32>
      %120 = arith.addf %119, %27 : vector<8x128xf32>
      %121 = arith.mulf %109, %120 : vector<8x128xf32>
      %122 = arith.addf %118, %121 : vector<8x128xf32>
      %123 = math.tanh %122 : vector<8x128xf32>
      %124 = arith.subf %92, %123 : vector<8x128xf32>
      %125 = arith.mulf %117, %124 : vector<8x128xf32>
      %126 = arith.addf %123, %125 : vector<8x128xf32>
      %127 = arith.index_cast %c2_i32_31 : i32 to index
      %c0_37 = arith.constant 0 : index
      %c0_38 = arith.constant 0 : index
      %128 = vector.load %arg7[%127, %c0_37, %c0_38] : memref<8x8x128xf32, #tpu.memory_space<vmem>>, vector<1x8x128xf32>
      %129 = vector.shape_cast %128 : vector<1x8x128xf32> to vector<8x128xf32>
      %130 = vector.shape_cast %126 : vector<8x128xf32> to vector<1x8x128xf32>
      tpu.vector_store %arg7[%127, %c0_37, %c0_38], %130 {strides = array<i32>} : memref<8x8x128xf32, #tpu.memory_space<vmem>>, vector<1x8x128xf32>,
      %c3_i32 = arith.constant 3 : i32
      %131 = arith.addi %23, %c3_i32 : i32
      %132 = arith.index_cast %131 : i32 to index
      %c0_39 = arith.constant 0 : index
      %c0_40 = arith.constant 0 : index
      %133 = vector.load %arg9[%132, %c0_39, %c0_40] : memref<16x8x384xf32, #tpu.memory_space<vmem>>, vector<1x8x384xf32>
      %134 = vector.shape_cast %133 : vector<1x8x384xf32> to vector<8x384xf32>
      %cst_41 = arith.constant dense<0.000000e+00> : vector<8x384xf32>
      %135 = tpu.matmul %126, %24, %cst_41 {dimension_numbers = #tpu.dot_dimension_numbers<[1], [0], [0], [1], [0, 0, 1, 1], [], []>} : vector<8x128xf32>, vector<128x384xf32>, vector<8x384xf32> -> vector<8x384xf32>
      %136 = vector.extract_strided_slice %134 {offsets = [0, 0], sizes = [8, 128], strides = [1, 1]} : vector<8x384xf32> to vector<8x128xf32>
      %137 = vector.extract_strided_slice %135 {offsets = [0, 0], sizes = [8, 128], strides = [1, 1]} : vector<8x384xf32> to vector<8x128xf32>
      %138 = arith.addf %136, %137 : vector<8x128xf32>
      %139 = arith.negf %138 : vector<8x128xf32>
      %140 = math.exp %139 : vector<8x128xf32>
      %cst_42 = arith.constant 1.000000e+00 : f32
      %141 = vector.broadcast %cst_42 : f32 to vector<8x128xf32>
      %142 = arith.addf %141, %140 : vector<8x128xf32>
      %143 = arith.divf %141, %142 : vector<8x128xf32>
      %144 = vector.extract_strided_slice %134 {offsets = [0, 128], sizes = [8, 128], strides = [1, 1]} : vector<8x384xf32> to vector<8x128xf32>
      %145 = vector.extract_strided_slice %135 {offsets = [0, 128], sizes = [8, 128], strides = [1, 1]} : vector<8x384xf32> to vector<8x128xf32>
      %146 = arith.addf %144, %145 : vector<8x128xf32>
      %147 = arith.negf %146 : vector<8x128xf32>
      %148 = math.exp %147 : vector<8x128xf32>
      %cst_43 = arith.constant 1.000000e+00 : f32
      %149 = vector.broadcast %cst_43 : f32 to vector<8x128xf32>
      %150 = arith.addf %149, %148 : vector<8x128xf32>
      %151 = arith.divf %149, %150 : vector<8x128xf32>
      %152 = vector.extract_strided_slice %134 {offsets = [0, 256], sizes = [8, 128], strides = [1, 1]} : vector<8x384xf32> to vector<8x128xf32>
      %153 = vector.extract_strided_slice %135 {offsets = [0, 256], sizes = [8, 128], strides = [1, 1]} : vector<8x384xf32> to vector<8x128xf32>
      %154 = arith.addf %153, %27 : vector<8x128xf32>
      %155 = arith.mulf %143, %154 : vector<8x128xf32>
      %156 = arith.addf %152, %155 : vector<8x128xf32>
      %157 = math.tanh %156 : vector<8x128xf32>
      %158 = arith.subf %126, %157 : vector<8x128xf32>
      %159 = arith.mulf %151, %158 : vector<8x128xf32>
      %160 = arith.addf %157, %159 : vector<8x128xf32>
      %161 = arith.index_cast %c3_i32 : i32 to index
      %c0_44 = arith.constant 0 : index
      %c0_45 = arith.constant 0 : index
      %162 = vector.load %arg7[%161, %c0_44, %c0_45] : memref<8x8x128xf32, #tpu.memory_space<vmem>>, vector<1x8x128xf32>
      %163 = vector.shape_cast %162 : vector<1x8x128xf32> to vector<8x128xf32>
      %164 = vector.shape_cast %160 : vector<8x128xf32> to vector<1x8x128xf32>
      tpu.vector_store %arg7[%161, %c0_44, %c0_45], %164 {strides = array<i32>} : memref<8x8x128xf32, #tpu.memory_space<vmem>>, vector<1x8x128xf32>,
      %c4_i32 = arith.constant 4 : i32
      %165 = arith.addi %23, %c4_i32 : i32
      %166 = arith.index_cast %165 : i32 to index
      %c0_46 = arith.constant 0 : index
      %c0_47 = arith.constant 0 : index
      %167 = vector.load %arg9[%166, %c0_46, %c0_47] : memref<16x8x384xf32, #tpu.memory_space<vmem>>, vector<1x8x384xf32>
      %168 = vector.shape_cast %167 : vector<1x8x384xf32> to vector<8x384xf32>
      %cst_48 = arith.constant dense<0.000000e+00> : vector<8x384xf32>
      %169 = tpu.matmul %160, %24, %cst_48 {dimension_numbers = #tpu.dot_dimension_numbers<[1], [0], [0], [1], [0, 0, 1, 1], [], []>} : vector<8x128xf32>, vector<128x384xf32>, vector<8x384xf32> -> vector<8x384xf32>
      %170 = vector.extract_strided_slice %168 {offsets = [0, 0], sizes = [8, 128], strides = [1, 1]} : vector<8x384xf32> to vector<8x128xf32>
      %171 = vector.extract_strided_slice %169 {offsets = [0, 0], sizes = [8, 128], strides = [1, 1]} : vector<8x384xf32> to vector<8x128xf32>
      %172 = arith.addf %170, %171 : vector<8x128xf32>
      %173 = arith.negf %172 : vector<8x128xf32>
      %174 = math.exp %173 : vector<8x128xf32>
      %cst_49 = arith.constant 1.000000e+00 : f32
      %175 = vector.broadcast %cst_49 : f32 to vector<8x128xf32>
      %176 = arith.addf %175, %174 : vector<8x128xf32>
      %177 = arith.divf %175, %176 : vector<8x128xf32>
      %178 = vector.extract_strided_slice %168 {offsets = [0, 128], sizes = [8, 128], strides = [1, 1]} : vector<8x384xf32> to vector<8x128xf32>
      %179 = vector.extract_strided_slice %169 {offsets = [0, 128], sizes = [8, 128], strides = [1, 1]} : vector<8x384xf32> to vector<8x128xf32>
      %180 = arith.addf %178, %179 : vector<8x128xf32>
      %181 = arith.negf %180 : vector<8x128xf32>
      %182 = math.exp %181 : vector<8x128xf32>
      %cst_50 = arith.constant 1.000000e+00 : f32
      %183 = vector.broadcast %cst_50 : f32 to vector<8x128xf32>
      %184 = arith.addf %183, %182 : vector<8x128xf32>
      %185 = arith.divf %183, %184 : vector<8x128xf32>
      %186 = vector.extract_strided_slice %168 {offsets = [0, 256], sizes = [8, 128], strides = [1, 1]} : vector<8x384xf32> to vector<8x128xf32>
      %187 = vector.extract_strided_slice %169 {offsets = [0, 256], sizes = [8, 128], strides = [1, 1]} : vector<8x384xf32> to vector<8x128xf32>
      %188 = arith.addf %187, %27 : vector<8x128xf32>
      %189 = arith.mulf %177, %188 : vector<8x128xf32>
      %190 = arith.addf %186, %189 : vector<8x128xf32>
      %191 = math.tanh %190 : vector<8x128xf32>
      %192 = arith.subf %160, %191 : vector<8x128xf32>
      %193 = arith.mulf %185, %192 : vector<8x128xf32>
      %194 = arith.addf %191, %193 : vector<8x128xf32>
      %195 = arith.index_cast %c4_i32 : i32 to index
      %c0_51 = arith.constant 0 : index
      %c0_52 = arith.constant 0 : index
      %196 = vector.load %arg7[%195, %c0_51, %c0_52] : memref<8x8x128xf32, #tpu.memory_space<vmem>>, vector<1x8x128xf32>
      %197 = vector.shape_cast %196 : vector<1x8x128xf32> to vector<8x128xf32>
      %198 = vector.shape_cast %194 : vector<8x128xf32> to vector<1x8x128xf32>
      tpu.vector_store %arg7[%195, %c0_51, %c0_52], %198 {strides = array<i32>} : memref<8x8x128xf32, #tpu.memory_space<vmem>>, vector<1x8x128xf32>,
      %c5_i32 = arith.constant 5 : i32
      %199 = arith.addi %23, %c5_i32 : i32
      %200 = arith.index_cast %199 : i32 to index
      %c0_53 = arith.constant 0 : index
      %c0_54 = arith.constant 0 : index
      %201 = vector.load %arg9[%200, %c0_53, %c0_54] : memref<16x8x384xf32, #tpu.memory_space<vmem>>, vector<1x8x384xf32>
      %202 = vector.shape_cast %201 : vector<1x8x384xf32> to vector<8x384xf32>
      %cst_55 = arith.constant dense<0.000000e+00> : vector<8x384xf32>
      %203 = tpu.matmul %194, %24, %cst_55 {dimension_numbers = #tpu.dot_dimension_numbers<[1], [0], [0], [1], [0, 0, 1, 1], [], []>} : vector<8x128xf32>, vector<128x384xf32>, vector<8x384xf32> -> vector<8x384xf32>
      %204 = vector.extract_strided_slice %202 {offsets = [0, 0], sizes = [8, 128], strides = [1, 1]} : vector<8x384xf32> to vector<8x128xf32>
      %205 = vector.extract_strided_slice %203 {offsets = [0, 0], sizes = [8, 128], strides = [1, 1]} : vector<8x384xf32> to vector<8x128xf32>
      %206 = arith.addf %204, %205 : vector<8x128xf32>
      %207 = arith.negf %206 : vector<8x128xf32>
      %208 = math.exp %207 : vector<8x128xf32>
      %cst_56 = arith.constant 1.000000e+00 : f32
      %209 = vector.broadcast %cst_56 : f32 to vector<8x128xf32>
      %210 = arith.addf %209, %208 : vector<8x128xf32>
      %211 = arith.divf %209, %210 : vector<8x128xf32>
      %212 = vector.extract_strided_slice %202 {offsets = [0, 128], sizes = [8, 128], strides = [1, 1]} : vector<8x384xf32> to vector<8x128xf32>
      %213 = vector.extract_strided_slice %203 {offsets = [0, 128], sizes = [8, 128], strides = [1, 1]} : vector<8x384xf32> to vector<8x128xf32>
      %214 = arith.addf %212, %213 : vector<8x128xf32>
      %215 = arith.negf %214 : vector<8x128xf32>
      %216 = math.exp %215 : vector<8x128xf32>
      %cst_57 = arith.constant 1.000000e+00 : f32
      %217 = vector.broadcast %cst_57 : f32 to vector<8x128xf32>
      %218 = arith.addf %217, %216 : vector<8x128xf32>
      %219 = arith.divf %217, %218 : vector<8x128xf32>
      %220 = vector.extract_strided_slice %202 {offsets = [0, 256], sizes = [8, 128], strides = [1, 1]} : vector<8x384xf32> to vector<8x128xf32>
      %221 = vector.extract_strided_slice %203 {offsets = [0, 256], sizes = [8, 128], strides = [1, 1]} : vector<8x384xf32> to vector<8x128xf32>
      %222 = arith.addf %221, %27 : vector<8x128xf32>
      %223 = arith.mulf %211, %222 : vector<8x128xf32>
      %224 = arith.addf %220, %223 : vector<8x128xf32>
      %225 = math.tanh %224 : vector<8x128xf32>
      %226 = arith.subf %194, %225 : vector<8x128xf32>
      %227 = arith.mulf %219, %226 : vector<8x128xf32>
      %228 = arith.addf %225, %227 : vector<8x128xf32>
      %229 = arith.index_cast %c5_i32 : i32 to index
      %c0_58 = arith.constant 0 : index
      %c0_59 = arith.constant 0 : index
      %230 = vector.load %arg7[%229, %c0_58, %c0_59] : memref<8x8x128xf32, #tpu.memory_space<vmem>>, vector<1x8x128xf32>
      %231 = vector.shape_cast %230 : vector<1x8x128xf32> to vector<8x128xf32>
      %232 = vector.shape_cast %228 : vector<8x128xf32> to vector<1x8x128xf32>
      tpu.vector_store %arg7[%229, %c0_58, %c0_59], %232 {strides = array<i32>} : memref<8x8x128xf32, #tpu.memory_space<vmem>>, vector<1x8x128xf32>,
      %c6_i32 = arith.constant 6 : i32
      %233 = arith.addi %23, %c6_i32 : i32
      %234 = arith.index_cast %233 : i32 to index
      %c0_60 = arith.constant 0 : index
      %c0_61 = arith.constant 0 : index
      %235 = vector.load %arg9[%234, %c0_60, %c0_61] : memref<16x8x384xf32, #tpu.memory_space<vmem>>, vector<1x8x384xf32>
      %236 = vector.shape_cast %235 : vector<1x8x384xf32> to vector<8x384xf32>
      %cst_62 = arith.constant dense<0.000000e+00> : vector<8x384xf32>
      %237 = tpu.matmul %228, %24, %cst_62 {dimension_numbers = #tpu.dot_dimension_numbers<[1], [0], [0], [1], [0, 0, 1, 1], [], []>} : vector<8x128xf32>, vector<128x384xf32>, vector<8x384xf32> -> vector<8x384xf32>
      %238 = vector.extract_strided_slice %236 {offsets = [0, 0], sizes = [8, 128], strides = [1, 1]} : vector<8x384xf32> to vector<8x128xf32>
      %239 = vector.extract_strided_slice %237 {offsets = [0, 0], sizes = [8, 128], strides = [1, 1]} : vector<8x384xf32> to vector<8x128xf32>
      %240 = arith.addf %238, %239 : vector<8x128xf32>
      %241 = arith.negf %240 : vector<8x128xf32>
      %242 = math.exp %241 : vector<8x128xf32>
      %cst_63 = arith.constant 1.000000e+00 : f32
      %243 = vector.broadcast %cst_63 : f32 to vector<8x128xf32>
      %244 = arith.addf %243, %242 : vector<8x128xf32>
      %245 = arith.divf %243, %244 : vector<8x128xf32>
      %246 = vector.extract_strided_slice %236 {offsets = [0, 128], sizes = [8, 128], strides = [1, 1]} : vector<8x384xf32> to vector<8x128xf32>
      %247 = vector.extract_strided_slice %237 {offsets = [0, 128], sizes = [8, 128], strides = [1, 1]} : vector<8x384xf32> to vector<8x128xf32>
      %248 = arith.addf %246, %247 : vector<8x128xf32>
      %249 = arith.negf %248 : vector<8x128xf32>
      %250 = math.exp %249 : vector<8x128xf32>
      %cst_64 = arith.constant 1.000000e+00 : f32
      %251 = vector.broadcast %cst_64 : f32 to vector<8x128xf32>
      %252 = arith.addf %251, %250 : vector<8x128xf32>
      %253 = arith.divf %251, %252 : vector<8x128xf32>
      %254 = vector.extract_strided_slice %236 {offsets = [0, 256], sizes = [8, 128], strides = [1, 1]} : vector<8x384xf32> to vector<8x128xf32>
      %255 = vector.extract_strided_slice %237 {offsets = [0, 256], sizes = [8, 128], strides = [1, 1]} : vector<8x384xf32> to vector<8x128xf32>
      %256 = arith.addf %255, %27 : vector<8x128xf32>
      %257 = arith.mulf %245, %256 : vector<8x128xf32>
      %258 = arith.addf %254, %257 : vector<8x128xf32>
      %259 = math.tanh %258 : vector<8x128xf32>
      %260 = arith.subf %228, %259 : vector<8x128xf32>
      %261 = arith.mulf %253, %260 : vector<8x128xf32>
      %262 = arith.addf %259, %261 : vector<8x128xf32>
      %263 = arith.index_cast %c6_i32 : i32 to index
      %c0_65 = arith.constant 0 : index
      %c0_66 = arith.constant 0 : index
      %264 = vector.load %arg7[%263, %c0_65, %c0_66] : memref<8x8x128xf32, #tpu.memory_space<vmem>>, vector<1x8x128xf32>
      %265 = vector.shape_cast %264 : vector<1x8x128xf32> to vector<8x128xf32>
      %266 = vector.shape_cast %262 : vector<8x128xf32> to vector<1x8x128xf32>
      tpu.vector_store %arg7[%263, %c0_65, %c0_66], %266 {strides = array<i32>} : memref<8x8x128xf32, #tpu.memory_space<vmem>>, vector<1x8x128xf32>,
      %c7_i32 = arith.constant 7 : i32
      %267 = arith.addi %23, %c7_i32 : i32
      %268 = arith.index_cast %267 : i32 to index
      %c0_67 = arith.constant 0 : index
      %c0_68 = arith.constant 0 : index
      %269 = vector.load %arg9[%268, %c0_67, %c0_68] : memref<16x8x384xf32, #tpu.memory_space<vmem>>, vector<1x8x384xf32>
      %270 = vector.shape_cast %269 : vector<1x8x384xf32> to vector<8x384xf32>
      %cst_69 = arith.constant dense<0.000000e+00> : vector<8x384xf32>
      %271 = tpu.matmul %262, %24, %cst_69 {dimension_numbers = #tpu.dot_dimension_numbers<[1], [0], [0], [1], [0, 0, 1, 1], [], []>} : vector<8x128xf32>, vector<128x384xf32>, vector<8x384xf32> -> vector<8x384xf32>
      %272 = vector.extract_strided_slice %270 {offsets = [0, 0], sizes = [8, 128], strides = [1, 1]} : vector<8x384xf32> to vector<8x128xf32>
      %273 = vector.extract_strided_slice %271 {offsets = [0, 0], sizes = [8, 128], strides = [1, 1]} : vector<8x384xf32> to vector<8x128xf32>
      %274 = arith.addf %272, %273 : vector<8x128xf32>
      %275 = arith.negf %274 : vector<8x128xf32>
      %276 = math.exp %275 : vector<8x128xf32>
      %cst_70 = arith.constant 1.000000e+00 : f32
      %277 = vector.broadcast %cst_70 : f32 to vector<8x128xf32>
      %278 = arith.addf %277, %276 : vector<8x128xf32>
      %279 = arith.divf %277, %278 : vector<8x128xf32>
      %280 = vector.extract_strided_slice %270 {offsets = [0, 128], sizes = [8, 128], strides = [1, 1]} : vector<8x384xf32> to vector<8x128xf32>
      %281 = vector.extract_strided_slice %271 {offsets = [0, 128], sizes = [8, 128], strides = [1, 1]} : vector<8x384xf32> to vector<8x128xf32>
      %282 = arith.addf %280, %281 : vector<8x128xf32>
      %283 = arith.negf %282 : vector<8x128xf32>
      %284 = math.exp %283 : vector<8x128xf32>
      %cst_71 = arith.constant 1.000000e+00 : f32
      %285 = vector.broadcast %cst_71 : f32 to vector<8x128xf32>
      %286 = arith.addf %285, %284 : vector<8x128xf32>
      %287 = arith.divf %285, %286 : vector<8x128xf32>
      %288 = vector.extract_strided_slice %270 {offsets = [0, 256], sizes = [8, 128], strides = [1, 1]} : vector<8x384xf32> to vector<8x128xf32>
      %289 = vector.extract_strided_slice %271 {offsets = [0, 256], sizes = [8, 128], strides = [1, 1]} : vector<8x384xf32> to vector<8x128xf32>
      %290 = arith.addf %289, %27 : vector<8x128xf32>
      %291 = arith.mulf %279, %290 : vector<8x128xf32>
      %292 = arith.addf %288, %291 : vector<8x128xf32>
      %293 = math.tanh %292 : vector<8x128xf32>
      %294 = arith.subf %262, %293 : vector<8x128xf32>
      %295 = arith.mulf %287, %294 : vector<8x128xf32>
      %296 = arith.addf %293, %295 : vector<8x128xf32>
      %297 = arith.index_cast %c7_i32 : i32 to index
      %c0_72 = arith.constant 0 : index
      %c0_73 = arith.constant 0 : index
      %298 = vector.load %arg7[%297, %c0_72, %c0_73] : memref<8x8x128xf32, #tpu.memory_space<vmem>>, vector<1x8x128xf32>
      %299 = vector.shape_cast %298 : vector<1x8x128xf32> to vector<8x128xf32>
      %300 = vector.shape_cast %296 : vector<8x128xf32> to vector<1x8x128xf32>
      tpu.vector_store %arg7[%297, %c0_72, %c0_73], %300 {strides = array<i32>} : memref<8x8x128xf32, #tpu.memory_space<vmem>>, vector<1x8x128xf32>,
      %c8_i32_74 = arith.constant 8 : i32
      %c0_75 = arith.constant 0 : index
      %c0_76 = arith.constant 0 : index
      %301 = vector.load %arg8[%c0_75, %c0_76] : memref<8x128xf32, #tpu.memory_space<vmem>>, vector<8x128xf32>
      tpu.vector_store %arg8[%c0_75, %c0_76], %296 {strides = array<i32>} : memref<8x128xf32, #tpu.memory_space<vmem>>, vector<8x128xf32>,
    } else {
    }
    return
  }
  func.func @transform_0(%arg0: i32, %arg1: i32) -> (i32, i32, i32) {
    %c0_i32 = arith.constant 0 : i32
    %0 = arith.minsi %arg1, %c0_i32 : i32
    %c0_i32_0 = arith.constant 0 : i32
    %c0_i32_1 = arith.constant 0 : i32
    return %0, %arg0, %c0_i32_0 : i32, i32, i32
  }
  func.func @transform_1(%arg0: i32, %arg1: i32) -> (i32, i32) {
    %c0_i32 = arith.constant 0 : i32
    %c0_i32_0 = arith.constant 0 : i32
    %c0_i32_1 = arith.constant 0 : i32
    return %c0_i32, %c0_i32_0 : i32, i32
  }
  func.func @transform_2(%arg0: i32, %arg1: i32) -> (i32, i32) {
    %c0_i32 = arith.constant 0 : i32
    %c0_i32_0 = arith.constant 0 : i32
    %c0_i32_1 = arith.constant 0 : i32
    return %c0_i32, %c0_i32_0 : i32, i32
  }
  func.func @transform_3(%arg0: i32, %arg1: i32) -> (i32, i32) {
    %c0_i32 = arith.constant 0 : i32
    %c0_i32_0 = arith.constant 0 : i32
    %c0_i32_1 = arith.constant 0 : i32
    return %c0_i32, %c0_i32_0 : i32, i32
  }
  func.func @transform_4(%arg0: i32, %arg1: i32) -> (i32, i32) {
    %c0_i32 = arith.constant 0 : i32
    %c0_i32_0 = arith.constant 0 : i32
    %c0_i32_1 = arith.constant 0 : i32
    return %c0_i32, %c0_i32_0 : i32, i32
  }
  func.func @transform_5(%arg0: i32, %arg1: i32) -> (i32, i32, i32) {
    %c1_i32 = arith.constant 1 : i32
    %0 = arith.subi %arg1, %c1_i32 : i32
    %c0_i32 = arith.constant 0 : i32
    %1 = arith.maxsi %0, %c0_i32 : i32
    %c0_i32_0 = arith.constant 0 : i32
    %c0_i32_1 = arith.constant 0 : i32
    return %1, %arg0, %c0_i32_0 : i32, i32, i32
  }
}

module attributes {stable_mosaic.version = 11 : i64} {
  func.func @_gru_layer_kernel(%arg0: i32, %arg1: i32, %arg2: memref<8x8x128xf32, #tpu.memory_space<vmem>>, %arg3: memref<128x384xf32, #tpu.memory_space<vmem>>, %arg4: memref<128x384xf32, #tpu.memory_space<vmem>>, %arg5: memref<1x384xf32, #tpu.memory_space<vmem>>, %arg6: memref<1x128xf32, #tpu.memory_space<vmem>>, %arg7: memref<8x8x128xf32, #tpu.memory_space<vmem>>, %arg8: memref<8x128xf32, #tpu.memory_space<vmem>>, %arg9: memref<16x8x384xf32, #tpu.memory_space<vmem>>) attributes {dimension_semantics = [#tpu.dimension_semantics<parallel>, #tpu.dimension_semantics<arbitrary>], iteration_bounds = array<i64: 1, 2>, scalar_prefetch = 0 : i64, scratch_operands = 2 : i64, tpu.core_type = #tpu.core_type<tc>, window_params = [{transform_indices = @transform_0, window_bounds = array<i64: 8, 8, 128>}, {pipeline_mode = #tpu.pipeline_mode<synchronous>, transform_indices = @transform_1, window_bounds = array<i64: 128, 384>}, {pipeline_mode = #tpu.pipeline_mode<synchronous>, transform_indices = @transform_2, window_bounds = array<i64: 128, 384>}, {pipeline_mode = #tpu.pipeline_mode<synchronous>, transform_indices = @transform_3, window_bounds = array<i64: 1, 384>}, {pipeline_mode = #tpu.pipeline_mode<synchronous>, transform_indices = @transform_4, window_bounds = array<i64: 1, 128>}, {transform_indices = @transform_5, window_bounds = array<i64: 8, 8, 128>}]} {
    %c0_i32 = arith.constant 0 : i32
    %0 = arith.cmpi eq, %arg1, %c0_i32 : i32
    %1 = arith.extui %0 : i1 to i32
    %c0_i32_0 = arith.constant 0 : i32
    %2 = arith.cmpi ne, %1, %c0_i32_0 : i32
    scf.if %2 {
      %cst = arith.constant 0.000000e+00 : f32
      %11 = vector.broadcast %cst : f32 to vector<8x128xf32>
      %c0 = arith.constant 0 : index
      %c0_5 = arith.constant 0 : index
      %12 = vector.load %arg8[%c0, %c0_5] : memref<8x128xf32, #tpu.memory_space<vmem>>, vector<8x128xf32>
      tpu.vector_store %arg8[%c0, %c0_5], %11 {strides = array<i32>} : memref<8x128xf32, #tpu.memory_space<vmem>>, vector<8x128xf32>,
      %c2_i32 = arith.constant 2 : i32
      %c0_i32_6 = arith.constant 0 : i32
      %13 = arith.cmpi eq, %c2_i32, %c0_i32_6 : i32
      %c1_i32_7 = arith.constant 1 : i32
      %14 = arith.select %13, %c1_i32_7, %c2_i32 : i32
      %15 = arith.remsi %arg1, %14 : i32
      %c0_i32_8 = arith.constant 0 : i32
      %16 = arith.cmpi ne, %15, %c0_i32_8 : i32
      %c0_i32_9 = arith.constant 0 : i32
      %17 = arith.cmpi slt, %15, %c0_i32_9 : i32
      %c0_i32_10 = arith.constant 0 : i32
      %18 = arith.cmpi slt, %14, %c0_i32_10 : i32
      %19 = arith.xori %17, %18 : i1
      %20 = arith.andi %19, %16 : i1
      %21 = arith.addi %15, %14 : i32
      %22 = arith.select %20, %21, %15 : i32
      %c0_11 = arith.constant 0 : index
      %c0_12 = arith.constant 0 : index
      %c0_13 = arith.constant 0 : index
      %23 = vector.load %arg2[%c0_11, %c0_12, %c0_13] : memref<8x8x128xf32, #tpu.memory_space<vmem>>, vector<8x8x128xf32>
      %24 = vector.shape_cast %23 : vector<8x8x128xf32> to vector<64x128xf32>
      %c0_14 = arith.constant 0 : index
      %c0_15 = arith.constant 0 : index
      %25 = vector.load %arg3[%c0_14, %c0_15] : memref<128x384xf32, #tpu.memory_space<vmem>>, vector<128x384xf32>
      %cst_16 = arith.constant dense<0.000000e+00> : vector<64x384xf32>
      %26 = tpu.matmul %24, %25, %cst_16 {dimension_numbers = #tpu.dot_dimension_numbers<[1], [0], [0], [1], [0, 0, 1, 1], [], []>} : vector<64x128xf32>, vector<128x384xf32>, vector<64x384xf32> -> vector<64x384xf32>
      %c0_17 = arith.constant 0 : index
      %c0_18 = arith.constant 0 : index
      %27 = vector.load %arg5[%c0_17, %c0_18] : memref<1x384xf32, #tpu.memory_space<vmem>>, vector<1x384xf32>
      %28 = vector.broadcast %27 : vector<1x384xf32> to vector<64x384xf32>
      %29 = arith.addf %26, %28 : vector<64x384xf32>
      %c8_i32 = arith.constant 8 : i32
      %30 = arith.muli %22, %c8_i32 : i32
      %31 = tpu.assume_multiple %30, 8 : i32
      %32 = vector.shape_cast %29 : vector<64x384xf32> to vector<8x8x384xf32>
      %33 = arith.index_cast %31 : i32 to index
      %c0_19 = arith.constant 0 : index
      %c0_20 = arith.constant 0 : index
      %34 = vector.load %arg9[%33, %c0_19, %c0_20] : memref<16x8x384xf32, #tpu.memory_space<vmem>>, vector<8x8x384xf32>
      tpu.vector_store %arg9[%33, %c0_19, %c0_20], %32 {strides = array<i32>} : memref<16x8x384xf32, #tpu.memory_space<vmem>>, vector<8x8x384xf32>,
    } else {
    }
    %c0_i32_1 = arith.constant 0 : i32
    %3 = arith.cmpi sgt, %arg1, %c0_i32_1 : i32
    %c1_i32 = arith.constant 1 : i32
    %4 = arith.cmpi slt, %arg1, %c1_i32 : i32
    %5 = arith.andi %3, %4 : i1
    %6 = arith.extui %5 : i1 to i32
    %c0_i32_2 = arith.constant 0 : i32
    %7 = arith.cmpi ne, %6, %c0_i32_2 : i32
    scf.if %7 {
      %c2_i32 = arith.constant 2 : i32
      %c0_i32_5 = arith.constant 0 : i32
      %11 = arith.cmpi eq, %c2_i32, %c0_i32_5 : i32
      %c1_i32_6 = arith.constant 1 : i32
      %12 = arith.select %11, %c1_i32_6, %c2_i32 : i32
      %13 = arith.remsi %arg1, %12 : i32
      %c0_i32_7 = arith.constant 0 : i32
      %14 = arith.cmpi ne, %13, %c0_i32_7 : i32
      %c0_i32_8 = arith.constant 0 : i32
      %15 = arith.cmpi slt, %13, %c0_i32_8 : i32
      %c0_i32_9 = arith.constant 0 : i32
      %16 = arith.cmpi slt, %12, %c0_i32_9 : i32
      %17 = arith.xori %15, %16 : i1
      %18 = arith.andi %17, %14 : i1
      %19 = arith.addi %13, %12 : i32
      %20 = arith.select %18, %19, %13 : i32
      %c0 = arith.constant 0 : index
      %c0_10 = arith.constant 0 : index
      %c0_11 = arith.constant 0 : index
      %21 = vector.load %arg2[%c0, %c0_10, %c0_11] : memref<8x8x128xf32, #tpu.memory_space<vmem>>, vector<8x8x128xf32>
      %22 = vector.shape_cast %21 : vector<8x8x128xf32> to vector<64x128xf32>
      %c0_12 = arith.constant 0 : index
      %c0_13 = arith.constant 0 : index
      %23 = vector.load %arg3[%c0_12, %c0_13] : memref<128x384xf32, #tpu.memory_space<vmem>>, vector<128x384xf32>
      %cst = arith.constant dense<0.000000e+00> : vector<64x384xf32>
      %24 = tpu.matmul %22, %23, %cst {dimension_numbers = #tpu.dot_dimension_numbers<[1], [0], [0], [1], [0, 0, 1, 1], [], []>} : vector<64x128xf32>, vector<128x384xf32>, vector<64x384xf32> -> vector<64x384xf32>
      %c0_14 = arith.constant 0 : index
      %c0_15 = arith.constant 0 : index
      %25 = vector.load %arg5[%c0_14, %c0_15] : memref<1x384xf32, #tpu.memory_space<vmem>>, vector<1x384xf32>
      %26 = vector.broadcast %25 : vector<1x384xf32> to vector<64x384xf32>
      %27 = arith.addf %24, %26 : vector<64x384xf32>
      %c8_i32 = arith.constant 8 : i32
      %28 = arith.muli %20, %c8_i32 : i32
      %29 = tpu.assume_multiple %28, 8 : i32
      %30 = vector.shape_cast %27 : vector<64x384xf32> to vector<8x8x384xf32>
      %31 = arith.index_cast %29 : i32 to index
      %c0_16 = arith.constant 0 : index
      %c0_17 = arith.constant 0 : index
      %32 = vector.load %arg9[%31, %c0_16, %c0_17] : memref<16x8x384xf32, #tpu.memory_space<vmem>>, vector<8x8x384xf32>
      tpu.vector_store %arg9[%31, %c0_16, %c0_17], %30 {strides = array<i32>} : memref<16x8x384xf32, #tpu.memory_space<vmem>>, vector<8x8x384xf32>,
      %c1_i32_18 = arith.constant 1 : i32
      %33 = arith.subi %arg1, %c1_i32_18 : i32
      %c2_i32_19 = arith.constant 2 : i32
      %c0_i32_20 = arith.constant 0 : i32
      %34 = arith.cmpi eq, %c2_i32_19, %c0_i32_20 : i32
      %c1_i32_21 = arith.constant 1 : i32
      %35 = arith.select %34, %c1_i32_21, %c2_i32_19 : i32
      %36 = arith.remsi %33, %35 : i32
      %c0_i32_22 = arith.constant 0 : i32
      %37 = arith.cmpi ne, %36, %c0_i32_22 : i32
      %c0_i32_23 = arith.constant 0 : i32
      %38 = arith.cmpi slt, %36, %c0_i32_23 : i32
      %c0_i32_24 = arith.constant 0 : i32
      %39 = arith.cmpi slt, %35, %c0_i32_24 : i32
      %40 = arith.xori %38, %39 : i1
      %41 = arith.andi %40, %37 : i1
      %42 = arith.addi %36, %35 : i32
      %43 = arith.select %41, %42, %36 : i32
      %c8_i32_25 = arith.constant 8 : i32
      %44 = arith.muli %43, %c8_i32_25 : i32
      %45 = tpu.assume_multiple %44, 8 : i32
      %c0_26 = arith.constant 0 : index
      %c0_27 = arith.constant 0 : index
      %46 = vector.load %arg4[%c0_26, %c0_27] : memref<128x384xf32, #tpu.memory_space<vmem>>, vector<128x384xf32>
      %c0_28 = arith.constant 0 : index
      %c0_29 = arith.constant 0 : index
      %47 = vector.load %arg6[%c0_28, %c0_29] : memref<1x128xf32, #tpu.memory_space<vmem>>, vector<1x128xf32>
      %48 = vector.shape_cast %47 : vector<1x128xf32> to vector<1x128xf32>
      %49 = vector.broadcast %48 : vector<1x128xf32> to vector<8x128xf32>
      %c0_30 = arith.constant 0 : index
      %c0_31 = arith.constant 0 : index
      %50 = vector.load %arg8[%c0_30, %c0_31] : memref<8x128xf32, #tpu.memory_space<vmem>>, vector<8x128xf32>
      %c0_i32_32 = arith.constant 0 : i32
      %51 = arith.addi %45, %c0_i32_32 : i32
      %52 = arith.index_cast %51 : i32 to index
      %c0_33 = arith.constant 0 : index
      %c0_34 = arith.constant 0 : index
      %53 = vector.load %arg9[%52, %c0_33, %c0_34] : memref<16x8x384xf32, #tpu.memory_space<vmem>>, vector<1x8x384xf32>
      %54 = vector.shape_cast %53 : vector<1x8x384xf32> to vector<8x384xf32>
      %cst_35 = arith.constant dense<0.000000e+00> : vector<8x384xf32>
      %55 = tpu.matmul %50, %46, %cst_35 {dimension_numbers = #tpu.dot_dimension_numbers<[1], [0], [0], [1], [0, 0, 1, 1], [], []>} : vector<8x128xf32>, vector<128x384xf32>, vector<8x384xf32> -> vector<8x384xf32>
      %56 = vector.extract_strided_slice %54 {offsets = [0, 0], sizes = [8, 128], strides = [1, 1]} : vector<8x384xf32> to vector<8x128xf32>
      %57 = vector.extract_strided_slice %55 {offsets = [0, 0], sizes = [8, 128], strides = [1, 1]} : vector<8x384xf32> to vector<8x128xf32>
      %58 = arith.addf %56, %57 : vector<8x128xf32>
      %59 = arith.negf %58 : vector<8x128xf32>
      %60 = math.exp %59 : vector<8x128xf32>
      %cst_36 = arith.constant 1.000000e+00 : f32
      %61 = vector.broadcast %cst_36 : f32 to vector<8x128xf32>
      %62 = arith.addf %61, %60 : vector<8x128xf32>
      %63 = arith.divf %61, %62 : vector<8x128xf32>
      %64 = vector.extract_strided_slice %54 {offsets = [0, 128], sizes = [8, 128], strides = [1, 1]} : vector<8x384xf32> to vector<8x128xf32>
      %65 = vector.extract_strided_slice %55 {offsets = [0, 128], sizes = [8, 128], strides = [1, 1]} : vector<8x384xf32> to vector<8x128xf32>
      %66 = arith.addf %64, %65 : vector<8x128xf32>
      %67 = arith.negf %66 : vector<8x128xf32>
      %68 = math.exp %67 : vector<8x128xf32>
      %cst_37 = arith.constant 1.000000e+00 : f32
      %69 = vector.broadcast %cst_37 : f32 to vector<8x128xf32>
      %70 = arith.addf %69, %68 : vector<8x128xf32>
      %71 = arith.divf %69, %70 : vector<8x128xf32>
      %72 = vector.extract_strided_slice %54 {offsets = [0, 256], sizes = [8, 128], strides = [1, 1]} : vector<8x384xf32> to vector<8x128xf32>
      %73 = vector.extract_strided_slice %55 {offsets = [0, 256], sizes = [8, 128], strides = [1, 1]} : vector<8x384xf32> to vector<8x128xf32>
      %74 = arith.addf %73, %49 : vector<8x128xf32>
      %75 = arith.mulf %63, %74 : vector<8x128xf32>
      %76 = arith.addf %72, %75 : vector<8x128xf32>
      %77 = math.tanh %76 : vector<8x128xf32>
      %78 = arith.subf %50, %77 : vector<8x128xf32>
      %79 = arith.mulf %71, %78 : vector<8x128xf32>
      %80 = arith.addf %77, %79 : vector<8x128xf32>
      %81 = arith.index_cast %c0_i32_32 : i32 to index
      %c0_38 = arith.constant 0 : index
      %c0_39 = arith.constant 0 : index
      %82 = vector.load %arg7[%81, %c0_38, %c0_39] : memref<8x8x128xf32, #tpu.memory_space<vmem>>, vector<1x8x128xf32>
      %83 = vector.shape_cast %82 : vector<1x8x128xf32> to vector<8x128xf32>
      %84 = vector.shape_cast %80 : vector<8x128xf32> to vector<1x8x128xf32>
      tpu.vector_store %arg7[%81, %c0_38, %c0_39], %84 {strides = array<i32>} : memref<8x8x128xf32, #tpu.memory_space<vmem>>, vector<1x8x128xf32>,
      %c1_i32_40 = arith.constant 1 : i32
      %85 = arith.addi %45, %c1_i32_40 : i32
      %86 = arith.index_cast %85 : i32 to index
      %c0_41 = arith.constant 0 : index
      %c0_42 = arith.constant 0 : index
      %87 = vector.load %arg9[%86, %c0_41, %c0_42] : memref<16x8x384xf32, #tpu.memory_space<vmem>>, vector<1x8x384xf32>
      %88 = vector.shape_cast %87 : vector<1x8x384xf32> to vector<8x384xf32>
      %cst_43 = arith.constant dense<0.000000e+00> : vector<8x384xf32>
      %89 = tpu.matmul %80, %46, %cst_43 {dimension_numbers = #tpu.dot_dimension_numbers<[1], [0], [0], [1], [0, 0, 1, 1], [], []>} : vector<8x128xf32>, vector<128x384xf32>, vector<8x384xf32> -> vector<8x384xf32>
      %90 = vector.extract_strided_slice %88 {offsets = [0, 0], sizes = [8, 128], strides = [1, 1]} : vector<8x384xf32> to vector<8x128xf32>
      %91 = vector.extract_strided_slice %89 {offsets = [0, 0], sizes = [8, 128], strides = [1, 1]} : vector<8x384xf32> to vector<8x128xf32>
      %92 = arith.addf %90, %91 : vector<8x128xf32>
      %93 = arith.negf %92 : vector<8x128xf32>
      %94 = math.exp %93 : vector<8x128xf32>
      %cst_44 = arith.constant 1.000000e+00 : f32
      %95 = vector.broadcast %cst_44 : f32 to vector<8x128xf32>
      %96 = arith.addf %95, %94 : vector<8x128xf32>
      %97 = arith.divf %95, %96 : vector<8x128xf32>
      %98 = vector.extract_strided_slice %88 {offsets = [0, 128], sizes = [8, 128], strides = [1, 1]} : vector<8x384xf32> to vector<8x128xf32>
      %99 = vector.extract_strided_slice %89 {offsets = [0, 128], sizes = [8, 128], strides = [1, 1]} : vector<8x384xf32> to vector<8x128xf32>
      %100 = arith.addf %98, %99 : vector<8x128xf32>
      %101 = arith.negf %100 : vector<8x128xf32>
      %102 = math.exp %101 : vector<8x128xf32>
      %cst_45 = arith.constant 1.000000e+00 : f32
      %103 = vector.broadcast %cst_45 : f32 to vector<8x128xf32>
      %104 = arith.addf %103, %102 : vector<8x128xf32>
      %105 = arith.divf %103, %104 : vector<8x128xf32>
      %106 = vector.extract_strided_slice %88 {offsets = [0, 256], sizes = [8, 128], strides = [1, 1]} : vector<8x384xf32> to vector<8x128xf32>
      %107 = vector.extract_strided_slice %89 {offsets = [0, 256], sizes = [8, 128], strides = [1, 1]} : vector<8x384xf32> to vector<8x128xf32>
      %108 = arith.addf %107, %49 : vector<8x128xf32>
      %109 = arith.mulf %97, %108 : vector<8x128xf32>
      %110 = arith.addf %106, %109 : vector<8x128xf32>
      %111 = math.tanh %110 : vector<8x128xf32>
      %112 = arith.subf %80, %111 : vector<8x128xf32>
      %113 = arith.mulf %105, %112 : vector<8x128xf32>
      %114 = arith.addf %111, %113 : vector<8x128xf32>
      %115 = arith.index_cast %c1_i32_40 : i32 to index
      %c0_46 = arith.constant 0 : index
      %c0_47 = arith.constant 0 : index
      %116 = vector.load %arg7[%115, %c0_46, %c0_47] : memref<8x8x128xf32, #tpu.memory_space<vmem>>, vector<1x8x128xf32>
      %117 = vector.shape_cast %116 : vector<1x8x128xf32> to vector<8x128xf32>
      %118 = vector.shape_cast %114 : vector<8x128xf32> to vector<1x8x128xf32>
      tpu.vector_store %arg7[%115, %c0_46, %c0_47], %118 {strides = array<i32>} : memref<8x8x128xf32, #tpu.memory_space<vmem>>, vector<1x8x128xf32>,
      %c2_i32_48 = arith.constant 2 : i32
      %119 = arith.addi %45, %c2_i32_48 : i32
      %120 = arith.index_cast %119 : i32 to index
      %c0_49 = arith.constant 0 : index
      %c0_50 = arith.constant 0 : index
      %121 = vector.load %arg9[%120, %c0_49, %c0_50] : memref<16x8x384xf32, #tpu.memory_space<vmem>>, vector<1x8x384xf32>
      %122 = vector.shape_cast %121 : vector<1x8x384xf32> to vector<8x384xf32>
      %cst_51 = arith.constant dense<0.000000e+00> : vector<8x384xf32>
      %123 = tpu.matmul %114, %46, %cst_51 {dimension_numbers = #tpu.dot_dimension_numbers<[1], [0], [0], [1], [0, 0, 1, 1], [], []>} : vector<8x128xf32>, vector<128x384xf32>, vector<8x384xf32> -> vector<8x384xf32>
      %124 = vector.extract_strided_slice %122 {offsets = [0, 0], sizes = [8, 128], strides = [1, 1]} : vector<8x384xf32> to vector<8x128xf32>
      %125 = vector.extract_strided_slice %123 {offsets = [0, 0], sizes = [8, 128], strides = [1, 1]} : vector<8x384xf32> to vector<8x128xf32>
      %126 = arith.addf %124, %125 : vector<8x128xf32>
      %127 = arith.negf %126 : vector<8x128xf32>
      %128 = math.exp %127 : vector<8x128xf32>
      %cst_52 = arith.constant 1.000000e+00 : f32
      %129 = vector.broadcast %cst_52 : f32 to vector<8x128xf32>
      %130 = arith.addf %129, %128 : vector<8x128xf32>
      %131 = arith.divf %129, %130 : vector<8x128xf32>
      %132 = vector.extract_strided_slice %122 {offsets = [0, 128], sizes = [8, 128], strides = [1, 1]} : vector<8x384xf32> to vector<8x128xf32>
      %133 = vector.extract_strided_slice %123 {offsets = [0, 128], sizes = [8, 128], strides = [1, 1]} : vector<8x384xf32> to vector<8x128xf32>
      %134 = arith.addf %132, %133 : vector<8x128xf32>
      %135 = arith.negf %134 : vector<8x128xf32>
      %136 = math.exp %135 : vector<8x128xf32>
      %cst_53 = arith.constant 1.000000e+00 : f32
      %137 = vector.broadcast %cst_53 : f32 to vector<8x128xf32>
      %138 = arith.addf %137, %136 : vector<8x128xf32>
      %139 = arith.divf %137, %138 : vector<8x128xf32>
      %140 = vector.extract_strided_slice %122 {offsets = [0, 256], sizes = [8, 128], strides = [1, 1]} : vector<8x384xf32> to vector<8x128xf32>
      %141 = vector.extract_strided_slice %123 {offsets = [0, 256], sizes = [8, 128], strides = [1, 1]} : vector<8x384xf32> to vector<8x128xf32>
      %142 = arith.addf %141, %49 : vector<8x128xf32>
      %143 = arith.mulf %131, %142 : vector<8x128xf32>
      %144 = arith.addf %140, %143 : vector<8x128xf32>
      %145 = math.tanh %144 : vector<8x128xf32>
      %146 = arith.subf %114, %145 : vector<8x128xf32>
      %147 = arith.mulf %139, %146 : vector<8x128xf32>
      %148 = arith.addf %145, %147 : vector<8x128xf32>
      %149 = arith.index_cast %c2_i32_48 : i32 to index
      %c0_54 = arith.constant 0 : index
      %c0_55 = arith.constant 0 : index
      %150 = vector.load %arg7[%149, %c0_54, %c0_55] : memref<8x8x128xf32, #tpu.memory_space<vmem>>, vector<1x8x128xf32>
      %151 = vector.shape_cast %150 : vector<1x8x128xf32> to vector<8x128xf32>
      %152 = vector.shape_cast %148 : vector<8x128xf32> to vector<1x8x128xf32>
      tpu.vector_store %arg7[%149, %c0_54, %c0_55], %152 {strides = array<i32>} : memref<8x8x128xf32, #tpu.memory_space<vmem>>, vector<1x8x128xf32>,
      %c3_i32 = arith.constant 3 : i32
      %153 = arith.addi %45, %c3_i32 : i32
      %154 = arith.index_cast %153 : i32 to index
      %c0_56 = arith.constant 0 : index
      %c0_57 = arith.constant 0 : index
      %155 = vector.load %arg9[%154, %c0_56, %c0_57] : memref<16x8x384xf32, #tpu.memory_space<vmem>>, vector<1x8x384xf32>
      %156 = vector.shape_cast %155 : vector<1x8x384xf32> to vector<8x384xf32>
      %cst_58 = arith.constant dense<0.000000e+00> : vector<8x384xf32>
      %157 = tpu.matmul %148, %46, %cst_58 {dimension_numbers = #tpu.dot_dimension_numbers<[1], [0], [0], [1], [0, 0, 1, 1], [], []>} : vector<8x128xf32>, vector<128x384xf32>, vector<8x384xf32> -> vector<8x384xf32>
      %158 = vector.extract_strided_slice %156 {offsets = [0, 0], sizes = [8, 128], strides = [1, 1]} : vector<8x384xf32> to vector<8x128xf32>
      %159 = vector.extract_strided_slice %157 {offsets = [0, 0], sizes = [8, 128], strides = [1, 1]} : vector<8x384xf32> to vector<8x128xf32>
      %160 = arith.addf %158, %159 : vector<8x128xf32>
      %161 = arith.negf %160 : vector<8x128xf32>
      %162 = math.exp %161 : vector<8x128xf32>
      %cst_59 = arith.constant 1.000000e+00 : f32
      %163 = vector.broadcast %cst_59 : f32 to vector<8x128xf32>
      %164 = arith.addf %163, %162 : vector<8x128xf32>
      %165 = arith.divf %163, %164 : vector<8x128xf32>
      %166 = vector.extract_strided_slice %156 {offsets = [0, 128], sizes = [8, 128], strides = [1, 1]} : vector<8x384xf32> to vector<8x128xf32>
      %167 = vector.extract_strided_slice %157 {offsets = [0, 128], sizes = [8, 128], strides = [1, 1]} : vector<8x384xf32> to vector<8x128xf32>
      %168 = arith.addf %166, %167 : vector<8x128xf32>
      %169 = arith.negf %168 : vector<8x128xf32>
      %170 = math.exp %169 : vector<8x128xf32>
      %cst_60 = arith.constant 1.000000e+00 : f32
      %171 = vector.broadcast %cst_60 : f32 to vector<8x128xf32>
      %172 = arith.addf %171, %170 : vector<8x128xf32>
      %173 = arith.divf %171, %172 : vector<8x128xf32>
      %174 = vector.extract_strided_slice %156 {offsets = [0, 256], sizes = [8, 128], strides = [1, 1]} : vector<8x384xf32> to vector<8x128xf32>
      %175 = vector.extract_strided_slice %157 {offsets = [0, 256], sizes = [8, 128], strides = [1, 1]} : vector<8x384xf32> to vector<8x128xf32>
      %176 = arith.addf %175, %49 : vector<8x128xf32>
      %177 = arith.mulf %165, %176 : vector<8x128xf32>
      %178 = arith.addf %174, %177 : vector<8x128xf32>
      %179 = math.tanh %178 : vector<8x128xf32>
      %180 = arith.subf %148, %179 : vector<8x128xf32>
      %181 = arith.mulf %173, %180 : vector<8x128xf32>
      %182 = arith.addf %179, %181 : vector<8x128xf32>
      %183 = arith.index_cast %c3_i32 : i32 to index
      %c0_61 = arith.constant 0 : index
      %c0_62 = arith.constant 0 : index
      %184 = vector.load %arg7[%183, %c0_61, %c0_62] : memref<8x8x128xf32, #tpu.memory_space<vmem>>, vector<1x8x128xf32>
      %185 = vector.shape_cast %184 : vector<1x8x128xf32> to vector<8x128xf32>
      %186 = vector.shape_cast %182 : vector<8x128xf32> to vector<1x8x128xf32>
      tpu.vector_store %arg7[%183, %c0_61, %c0_62], %186 {strides = array<i32>} : memref<8x8x128xf32, #tpu.memory_space<vmem>>, vector<1x8x128xf32>,
      %c4_i32 = arith.constant 4 : i32
      %187 = arith.addi %45, %c4_i32 : i32
      %188 = arith.index_cast %187 : i32 to index
      %c0_63 = arith.constant 0 : index
      %c0_64 = arith.constant 0 : index
      %189 = vector.load %arg9[%188, %c0_63, %c0_64] : memref<16x8x384xf32, #tpu.memory_space<vmem>>, vector<1x8x384xf32>
      %190 = vector.shape_cast %189 : vector<1x8x384xf32> to vector<8x384xf32>
      %cst_65 = arith.constant dense<0.000000e+00> : vector<8x384xf32>
      %191 = tpu.matmul %182, %46, %cst_65 {dimension_numbers = #tpu.dot_dimension_numbers<[1], [0], [0], [1], [0, 0, 1, 1], [], []>} : vector<8x128xf32>, vector<128x384xf32>, vector<8x384xf32> -> vector<8x384xf32>
      %192 = vector.extract_strided_slice %190 {offsets = [0, 0], sizes = [8, 128], strides = [1, 1]} : vector<8x384xf32> to vector<8x128xf32>
      %193 = vector.extract_strided_slice %191 {offsets = [0, 0], sizes = [8, 128], strides = [1, 1]} : vector<8x384xf32> to vector<8x128xf32>
      %194 = arith.addf %192, %193 : vector<8x128xf32>
      %195 = arith.negf %194 : vector<8x128xf32>
      %196 = math.exp %195 : vector<8x128xf32>
      %cst_66 = arith.constant 1.000000e+00 : f32
      %197 = vector.broadcast %cst_66 : f32 to vector<8x128xf32>
      %198 = arith.addf %197, %196 : vector<8x128xf32>
      %199 = arith.divf %197, %198 : vector<8x128xf32>
      %200 = vector.extract_strided_slice %190 {offsets = [0, 128], sizes = [8, 128], strides = [1, 1]} : vector<8x384xf32> to vector<8x128xf32>
      %201 = vector.extract_strided_slice %191 {offsets = [0, 128], sizes = [8, 128], strides = [1, 1]} : vector<8x384xf32> to vector<8x128xf32>
      %202 = arith.addf %200, %201 : vector<8x128xf32>
      %203 = arith.negf %202 : vector<8x128xf32>
      %204 = math.exp %203 : vector<8x128xf32>
      %cst_67 = arith.constant 1.000000e+00 : f32
      %205 = vector.broadcast %cst_67 : f32 to vector<8x128xf32>
      %206 = arith.addf %205, %204 : vector<8x128xf32>
      %207 = arith.divf %205, %206 : vector<8x128xf32>
      %208 = vector.extract_strided_slice %190 {offsets = [0, 256], sizes = [8, 128], strides = [1, 1]} : vector<8x384xf32> to vector<8x128xf32>
      %209 = vector.extract_strided_slice %191 {offsets = [0, 256], sizes = [8, 128], strides = [1, 1]} : vector<8x384xf32> to vector<8x128xf32>
      %210 = arith.addf %209, %49 : vector<8x128xf32>
      %211 = arith.mulf %199, %210 : vector<8x128xf32>
      %212 = arith.addf %208, %211 : vector<8x128xf32>
      %213 = math.tanh %212 : vector<8x128xf32>
      %214 = arith.subf %182, %213 : vector<8x128xf32>
      %215 = arith.mulf %207, %214 : vector<8x128xf32>
      %216 = arith.addf %213, %215 : vector<8x128xf32>
      %217 = arith.index_cast %c4_i32 : i32 to index
      %c0_68 = arith.constant 0 : index
      %c0_69 = arith.constant 0 : index
      %218 = vector.load %arg7[%217, %c0_68, %c0_69] : memref<8x8x128xf32, #tpu.memory_space<vmem>>, vector<1x8x128xf32>
      %219 = vector.shape_cast %218 : vector<1x8x128xf32> to vector<8x128xf32>
      %220 = vector.shape_cast %216 : vector<8x128xf32> to vector<1x8x128xf32>
      tpu.vector_store %arg7[%217, %c0_68, %c0_69], %220 {strides = array<i32>} : memref<8x8x128xf32, #tpu.memory_space<vmem>>, vector<1x8x128xf32>,
      %c5_i32 = arith.constant 5 : i32
      %221 = arith.addi %45, %c5_i32 : i32
      %222 = arith.index_cast %221 : i32 to index
      %c0_70 = arith.constant 0 : index
      %c0_71 = arith.constant 0 : index
      %223 = vector.load %arg9[%222, %c0_70, %c0_71] : memref<16x8x384xf32, #tpu.memory_space<vmem>>, vector<1x8x384xf32>
      %224 = vector.shape_cast %223 : vector<1x8x384xf32> to vector<8x384xf32>
      %cst_72 = arith.constant dense<0.000000e+00> : vector<8x384xf32>
      %225 = tpu.matmul %216, %46, %cst_72 {dimension_numbers = #tpu.dot_dimension_numbers<[1], [0], [0], [1], [0, 0, 1, 1], [], []>} : vector<8x128xf32>, vector<128x384xf32>, vector<8x384xf32> -> vector<8x384xf32>
      %226 = vector.extract_strided_slice %224 {offsets = [0, 0], sizes = [8, 128], strides = [1, 1]} : vector<8x384xf32> to vector<8x128xf32>
      %227 = vector.extract_strided_slice %225 {offsets = [0, 0], sizes = [8, 128], strides = [1, 1]} : vector<8x384xf32> to vector<8x128xf32>
      %228 = arith.addf %226, %227 : vector<8x128xf32>
      %229 = arith.negf %228 : vector<8x128xf32>
      %230 = math.exp %229 : vector<8x128xf32>
      %cst_73 = arith.constant 1.000000e+00 : f32
      %231 = vector.broadcast %cst_73 : f32 to vector<8x128xf32>
      %232 = arith.addf %231, %230 : vector<8x128xf32>
      %233 = arith.divf %231, %232 : vector<8x128xf32>
      %234 = vector.extract_strided_slice %224 {offsets = [0, 128], sizes = [8, 128], strides = [1, 1]} : vector<8x384xf32> to vector<8x128xf32>
      %235 = vector.extract_strided_slice %225 {offsets = [0, 128], sizes = [8, 128], strides = [1, 1]} : vector<8x384xf32> to vector<8x128xf32>
      %236 = arith.addf %234, %235 : vector<8x128xf32>
      %237 = arith.negf %236 : vector<8x128xf32>
      %238 = math.exp %237 : vector<8x128xf32>
      %cst_74 = arith.constant 1.000000e+00 : f32
      %239 = vector.broadcast %cst_74 : f32 to vector<8x128xf32>
      %240 = arith.addf %239, %238 : vector<8x128xf32>
      %241 = arith.divf %239, %240 : vector<8x128xf32>
      %242 = vector.extract_strided_slice %224 {offsets = [0, 256], sizes = [8, 128], strides = [1, 1]} : vector<8x384xf32> to vector<8x128xf32>
      %243 = vector.extract_strided_slice %225 {offsets = [0, 256], sizes = [8, 128], strides = [1, 1]} : vector<8x384xf32> to vector<8x128xf32>
      %244 = arith.addf %243, %49 : vector<8x128xf32>
      %245 = arith.mulf %233, %244 : vector<8x128xf32>
      %246 = arith.addf %242, %245 : vector<8x128xf32>
      %247 = math.tanh %246 : vector<8x128xf32>
      %248 = arith.subf %216, %247 : vector<8x128xf32>
      %249 = arith.mulf %241, %248 : vector<8x128xf32>
      %250 = arith.addf %247, %249 : vector<8x128xf32>
      %251 = arith.index_cast %c5_i32 : i32 to index
      %c0_75 = arith.constant 0 : index
      %c0_76 = arith.constant 0 : index
      %252 = vector.load %arg7[%251, %c0_75, %c0_76] : memref<8x8x128xf32, #tpu.memory_space<vmem>>, vector<1x8x128xf32>
      %253 = vector.shape_cast %252 : vector<1x8x128xf32> to vector<8x128xf32>
      %254 = vector.shape_cast %250 : vector<8x128xf32> to vector<1x8x128xf32>
      tpu.vector_store %arg7[%251, %c0_75, %c0_76], %254 {strides = array<i32>} : memref<8x8x128xf32, #tpu.memory_space<vmem>>, vector<1x8x128xf32>,
      %c6_i32 = arith.constant 6 : i32
      %255 = arith.addi %45, %c6_i32 : i32
      %256 = arith.index_cast %255 : i32 to index
      %c0_77 = arith.constant 0 : index
      %c0_78 = arith.constant 0 : index
      %257 = vector.load %arg9[%256, %c0_77, %c0_78] : memref<16x8x384xf32, #tpu.memory_space<vmem>>, vector<1x8x384xf32>
      %258 = vector.shape_cast %257 : vector<1x8x384xf32> to vector<8x384xf32>
      %cst_79 = arith.constant dense<0.000000e+00> : vector<8x384xf32>
      %259 = tpu.matmul %250, %46, %cst_79 {dimension_numbers = #tpu.dot_dimension_numbers<[1], [0], [0], [1], [0, 0, 1, 1], [], []>} : vector<8x128xf32>, vector<128x384xf32>, vector<8x384xf32> -> vector<8x384xf32>
      %260 = vector.extract_strided_slice %258 {offsets = [0, 0], sizes = [8, 128], strides = [1, 1]} : vector<8x384xf32> to vector<8x128xf32>
      %261 = vector.extract_strided_slice %259 {offsets = [0, 0], sizes = [8, 128], strides = [1, 1]} : vector<8x384xf32> to vector<8x128xf32>
      %262 = arith.addf %260, %261 : vector<8x128xf32>
      %263 = arith.negf %262 : vector<8x128xf32>
      %264 = math.exp %263 : vector<8x128xf32>
      %cst_80 = arith.constant 1.000000e+00 : f32
      %265 = vector.broadcast %cst_80 : f32 to vector<8x128xf32>
      %266 = arith.addf %265, %264 : vector<8x128xf32>
      %267 = arith.divf %265, %266 : vector<8x128xf32>
      %268 = vector.extract_strided_slice %258 {offsets = [0, 128], sizes = [8, 128], strides = [1, 1]} : vector<8x384xf32> to vector<8x128xf32>
      %269 = vector.extract_strided_slice %259 {offsets = [0, 128], sizes = [8, 128], strides = [1, 1]} : vector<8x384xf32> to vector<8x128xf32>
      %270 = arith.addf %268, %269 : vector<8x128xf32>
      %271 = arith.negf %270 : vector<8x128xf32>
      %272 = math.exp %271 : vector<8x128xf32>
      %cst_81 = arith.constant 1.000000e+00 : f32
      %273 = vector.broadcast %cst_81 : f32 to vector<8x128xf32>
      %274 = arith.addf %273, %272 : vector<8x128xf32>
      %275 = arith.divf %273, %274 : vector<8x128xf32>
      %276 = vector.extract_strided_slice %258 {offsets = [0, 256], sizes = [8, 128], strides = [1, 1]} : vector<8x384xf32> to vector<8x128xf32>
      %277 = vector.extract_strided_slice %259 {offsets = [0, 256], sizes = [8, 128], strides = [1, 1]} : vector<8x384xf32> to vector<8x128xf32>
      %278 = arith.addf %277, %49 : vector<8x128xf32>
      %279 = arith.mulf %267, %278 : vector<8x128xf32>
      %280 = arith.addf %276, %279 : vector<8x128xf32>
      %281 = math.tanh %280 : vector<8x128xf32>
      %282 = arith.subf %250, %281 : vector<8x128xf32>
      %283 = arith.mulf %275, %282 : vector<8x128xf32>
      %284 = arith.addf %281, %283 : vector<8x128xf32>
      %285 = arith.index_cast %c6_i32 : i32 to index
      %c0_82 = arith.constant 0 : index
      %c0_83 = arith.constant 0 : index
      %286 = vector.load %arg7[%285, %c0_82, %c0_83] : memref<8x8x128xf32, #tpu.memory_space<vmem>>, vector<1x8x128xf32>
      %287 = vector.shape_cast %286 : vector<1x8x128xf32> to vector<8x128xf32>
      %288 = vector.shape_cast %284 : vector<8x128xf32> to vector<1x8x128xf32>
      tpu.vector_store %arg7[%285, %c0_82, %c0_83], %288 {strides = array<i32>} : memref<8x8x128xf32, #tpu.memory_space<vmem>>, vector<1x8x128xf32>,
      %c7_i32 = arith.constant 7 : i32
      %289 = arith.addi %45, %c7_i32 : i32
      %290 = arith.index_cast %289 : i32 to index
      %c0_84 = arith.constant 0 : index
      %c0_85 = arith.constant 0 : index
      %291 = vector.load %arg9[%290, %c0_84, %c0_85] : memref<16x8x384xf32, #tpu.memory_space<vmem>>, vector<1x8x384xf32>
      %292 = vector.shape_cast %291 : vector<1x8x384xf32> to vector<8x384xf32>
      %cst_86 = arith.constant dense<0.000000e+00> : vector<8x384xf32>
      %293 = tpu.matmul %284, %46, %cst_86 {dimension_numbers = #tpu.dot_dimension_numbers<[1], [0], [0], [1], [0, 0, 1, 1], [], []>} : vector<8x128xf32>, vector<128x384xf32>, vector<8x384xf32> -> vector<8x384xf32>
      %294 = vector.extract_strided_slice %292 {offsets = [0, 0], sizes = [8, 128], strides = [1, 1]} : vector<8x384xf32> to vector<8x128xf32>
      %295 = vector.extract_strided_slice %293 {offsets = [0, 0], sizes = [8, 128], strides = [1, 1]} : vector<8x384xf32> to vector<8x128xf32>
      %296 = arith.addf %294, %295 : vector<8x128xf32>
      %297 = arith.negf %296 : vector<8x128xf32>
      %298 = math.exp %297 : vector<8x128xf32>
      %cst_87 = arith.constant 1.000000e+00 : f32
      %299 = vector.broadcast %cst_87 : f32 to vector<8x128xf32>
      %300 = arith.addf %299, %298 : vector<8x128xf32>
      %301 = arith.divf %299, %300 : vector<8x128xf32>
      %302 = vector.extract_strided_slice %292 {offsets = [0, 128], sizes = [8, 128], strides = [1, 1]} : vector<8x384xf32> to vector<8x128xf32>
      %303 = vector.extract_strided_slice %293 {offsets = [0, 128], sizes = [8, 128], strides = [1, 1]} : vector<8x384xf32> to vector<8x128xf32>
      %304 = arith.addf %302, %303 : vector<8x128xf32>
      %305 = arith.negf %304 : vector<8x128xf32>
      %306 = math.exp %305 : vector<8x128xf32>
      %cst_88 = arith.constant 1.000000e+00 : f32
      %307 = vector.broadcast %cst_88 : f32 to vector<8x128xf32>
      %308 = arith.addf %307, %306 : vector<8x128xf32>
      %309 = arith.divf %307, %308 : vector<8x128xf32>
      %310 = vector.extract_strided_slice %292 {offsets = [0, 256], sizes = [8, 128], strides = [1, 1]} : vector<8x384xf32> to vector<8x128xf32>
      %311 = vector.extract_strided_slice %293 {offsets = [0, 256], sizes = [8, 128], strides = [1, 1]} : vector<8x384xf32> to vector<8x128xf32>
      %312 = arith.addf %311, %49 : vector<8x128xf32>
      %313 = arith.mulf %301, %312 : vector<8x128xf32>
      %314 = arith.addf %310, %313 : vector<8x128xf32>
      %315 = math.tanh %314 : vector<8x128xf32>
      %316 = arith.subf %284, %315 : vector<8x128xf32>
      %317 = arith.mulf %309, %316 : vector<8x128xf32>
      %318 = arith.addf %315, %317 : vector<8x128xf32>
      %319 = arith.index_cast %c7_i32 : i32 to index
      %c0_89 = arith.constant 0 : index
      %c0_90 = arith.constant 0 : index
      %320 = vector.load %arg7[%319, %c0_89, %c0_90] : memref<8x8x128xf32, #tpu.memory_space<vmem>>, vector<1x8x128xf32>
      %321 = vector.shape_cast %320 : vector<1x8x128xf32> to vector<8x128xf32>
      %322 = vector.shape_cast %318 : vector<8x128xf32> to vector<1x8x128xf32>
      tpu.vector_store %arg7[%319, %c0_89, %c0_90], %322 {strides = array<i32>} : memref<8x8x128xf32, #tpu.memory_space<vmem>>, vector<1x8x128xf32>,
      %c8_i32_91 = arith.constant 8 : i32
      %c0_92 = arith.constant 0 : index
      %c0_93 = arith.constant 0 : index
      %323 = vector.load %arg8[%c0_92, %c0_93] : memref<8x128xf32, #tpu.memory_space<vmem>>, vector<8x128xf32>
      tpu.vector_store %arg8[%c0_92, %c0_93], %318 {strides = array<i32>} : memref<8x128xf32, #tpu.memory_space<vmem>>, vector<8x128xf32>,
    } else {
    }
    %c1_i32_3 = arith.constant 1 : i32
    %8 = arith.cmpi eq, %arg1, %c1_i32_3 : i32
    %9 = arith.extui %8 : i1 to i32
    %c0_i32_4 = arith.constant 0 : i32
    %10 = arith.cmpi ne, %9, %c0_i32_4 : i32
    scf.if %10 {
      %c1_i32_5 = arith.constant 1 : i32
      %11 = arith.subi %arg1, %c1_i32_5 : i32
      %c2_i32 = arith.constant 2 : i32
      %c0_i32_6 = arith.constant 0 : i32
      %12 = arith.cmpi eq, %c2_i32, %c0_i32_6 : i32
      %c1_i32_7 = arith.constant 1 : i32
      %13 = arith.select %12, %c1_i32_7, %c2_i32 : i32
      %14 = arith.remsi %11, %13 : i32
      %c0_i32_8 = arith.constant 0 : i32
      %15 = arith.cmpi ne, %14, %c0_i32_8 : i32
      %c0_i32_9 = arith.constant 0 : i32
      %16 = arith.cmpi slt, %14, %c0_i32_9 : i32
      %c0_i32_10 = arith.constant 0 : i32
      %17 = arith.cmpi slt, %13, %c0_i32_10 : i32
      %18 = arith.xori %16, %17 : i1
      %19 = arith.andi %18, %15 : i1
      %20 = arith.addi %14, %13 : i32
      %21 = arith.select %19, %20, %14 : i32
      %c8_i32 = arith.constant 8 : i32
      %22 = arith.muli %21, %c8_i32 : i32
      %23 = tpu.assume_multiple %22, 8 : i32
      %c0 = arith.constant 0 : index
      %c0_11 = arith.constant 0 : index
      %24 = vector.load %arg4[%c0, %c0_11] : memref<128x384xf32, #tpu.memory_space<vmem>>, vector<128x384xf32>
      %c0_12 = arith.constant 0 : index
      %c0_13 = arith.constant 0 : index
      %25 = vector.load %arg6[%c0_12, %c0_13] : memref<1x128xf32, #tpu.memory_space<vmem>>, vector<1x128xf32>
      %26 = vector.shape_cast %25 : vector<1x128xf32> to vector<1x128xf32>
      %27 = vector.broadcast %26 : vector<1x128xf32> to vector<8x128xf32>
      %c0_14 = arith.constant 0 : index
      %c0_15 = arith.constant 0 : index
      %28 = vector.load %arg8[%c0_14, %c0_15] : memref<8x128xf32, #tpu.memory_space<vmem>>, vector<8x128xf32>
      %c0_i32_16 = arith.constant 0 : i32
      %29 = arith.addi %23, %c0_i32_16 : i32
      %30 = arith.index_cast %29 : i32 to index
      %c0_17 = arith.constant 0 : index
      %c0_18 = arith.constant 0 : index
      %31 = vector.load %arg9[%30, %c0_17, %c0_18] : memref<16x8x384xf32, #tpu.memory_space<vmem>>, vector<1x8x384xf32>
      %32 = vector.shape_cast %31 : vector<1x8x384xf32> to vector<8x384xf32>
      %cst = arith.constant dense<0.000000e+00> : vector<8x384xf32>
      %33 = tpu.matmul %28, %24, %cst {dimension_numbers = #tpu.dot_dimension_numbers<[1], [0], [0], [1], [0, 0, 1, 1], [], []>} : vector<8x128xf32>, vector<128x384xf32>, vector<8x384xf32> -> vector<8x384xf32>
      %34 = vector.extract_strided_slice %32 {offsets = [0, 0], sizes = [8, 128], strides = [1, 1]} : vector<8x384xf32> to vector<8x128xf32>
      %35 = vector.extract_strided_slice %33 {offsets = [0, 0], sizes = [8, 128], strides = [1, 1]} : vector<8x384xf32> to vector<8x128xf32>
      %36 = arith.addf %34, %35 : vector<8x128xf32>
      %37 = arith.negf %36 : vector<8x128xf32>
      %38 = math.exp %37 : vector<8x128xf32>
      %cst_19 = arith.constant 1.000000e+00 : f32
      %39 = vector.broadcast %cst_19 : f32 to vector<8x128xf32>
      %40 = arith.addf %39, %38 : vector<8x128xf32>
      %41 = arith.divf %39, %40 : vector<8x128xf32>
      %42 = vector.extract_strided_slice %32 {offsets = [0, 128], sizes = [8, 128], strides = [1, 1]} : vector<8x384xf32> to vector<8x128xf32>
      %43 = vector.extract_strided_slice %33 {offsets = [0, 128], sizes = [8, 128], strides = [1, 1]} : vector<8x384xf32> to vector<8x128xf32>
      %44 = arith.addf %42, %43 : vector<8x128xf32>
      %45 = arith.negf %44 : vector<8x128xf32>
      %46 = math.exp %45 : vector<8x128xf32>
      %cst_20 = arith.constant 1.000000e+00 : f32
      %47 = vector.broadcast %cst_20 : f32 to vector<8x128xf32>
      %48 = arith.addf %47, %46 : vector<8x128xf32>
      %49 = arith.divf %47, %48 : vector<8x128xf32>
      %50 = vector.extract_strided_slice %32 {offsets = [0, 256], sizes = [8, 128], strides = [1, 1]} : vector<8x384xf32> to vector<8x128xf32>
      %51 = vector.extract_strided_slice %33 {offsets = [0, 256], sizes = [8, 128], strides = [1, 1]} : vector<8x384xf32> to vector<8x128xf32>
      %52 = arith.addf %51, %27 : vector<8x128xf32>
      %53 = arith.mulf %41, %52 : vector<8x128xf32>
      %54 = arith.addf %50, %53 : vector<8x128xf32>
      %55 = math.tanh %54 : vector<8x128xf32>
      %56 = arith.subf %28, %55 : vector<8x128xf32>
      %57 = arith.mulf %49, %56 : vector<8x128xf32>
      %58 = arith.addf %55, %57 : vector<8x128xf32>
      %59 = arith.index_cast %c0_i32_16 : i32 to index
      %c0_21 = arith.constant 0 : index
      %c0_22 = arith.constant 0 : index
      %60 = vector.load %arg7[%59, %c0_21, %c0_22] : memref<8x8x128xf32, #tpu.memory_space<vmem>>, vector<1x8x128xf32>
      %61 = vector.shape_cast %60 : vector<1x8x128xf32> to vector<8x128xf32>
      %62 = vector.shape_cast %58 : vector<8x128xf32> to vector<1x8x128xf32>
      tpu.vector_store %arg7[%59, %c0_21, %c0_22], %62 {strides = array<i32>} : memref<8x8x128xf32, #tpu.memory_space<vmem>>, vector<1x8x128xf32>,
      %c1_i32_23 = arith.constant 1 : i32
      %63 = arith.addi %23, %c1_i32_23 : i32
      %64 = arith.index_cast %63 : i32 to index
      %c0_24 = arith.constant 0 : index
      %c0_25 = arith.constant 0 : index
      %65 = vector.load %arg9[%64, %c0_24, %c0_25] : memref<16x8x384xf32, #tpu.memory_space<vmem>>, vector<1x8x384xf32>
      %66 = vector.shape_cast %65 : vector<1x8x384xf32> to vector<8x384xf32>
      %cst_26 = arith.constant dense<0.000000e+00> : vector<8x384xf32>
      %67 = tpu.matmul %58, %24, %cst_26 {dimension_numbers = #tpu.dot_dimension_numbers<[1], [0], [0], [1], [0, 0, 1, 1], [], []>} : vector<8x128xf32>, vector<128x384xf32>, vector<8x384xf32> -> vector<8x384xf32>
      %68 = vector.extract_strided_slice %66 {offsets = [0, 0], sizes = [8, 128], strides = [1, 1]} : vector<8x384xf32> to vector<8x128xf32>
      %69 = vector.extract_strided_slice %67 {offsets = [0, 0], sizes = [8, 128], strides = [1, 1]} : vector<8x384xf32> to vector<8x128xf32>
      %70 = arith.addf %68, %69 : vector<8x128xf32>
      %71 = arith.negf %70 : vector<8x128xf32>
      %72 = math.exp %71 : vector<8x128xf32>
      %cst_27 = arith.constant 1.000000e+00 : f32
      %73 = vector.broadcast %cst_27 : f32 to vector<8x128xf32>
      %74 = arith.addf %73, %72 : vector<8x128xf32>
      %75 = arith.divf %73, %74 : vector<8x128xf32>
      %76 = vector.extract_strided_slice %66 {offsets = [0, 128], sizes = [8, 128], strides = [1, 1]} : vector<8x384xf32> to vector<8x128xf32>
      %77 = vector.extract_strided_slice %67 {offsets = [0, 128], sizes = [8, 128], strides = [1, 1]} : vector<8x384xf32> to vector<8x128xf32>
      %78 = arith.addf %76, %77 : vector<8x128xf32>
      %79 = arith.negf %78 : vector<8x128xf32>
      %80 = math.exp %79 : vector<8x128xf32>
      %cst_28 = arith.constant 1.000000e+00 : f32
      %81 = vector.broadcast %cst_28 : f32 to vector<8x128xf32>
      %82 = arith.addf %81, %80 : vector<8x128xf32>
      %83 = arith.divf %81, %82 : vector<8x128xf32>
      %84 = vector.extract_strided_slice %66 {offsets = [0, 256], sizes = [8, 128], strides = [1, 1]} : vector<8x384xf32> to vector<8x128xf32>
      %85 = vector.extract_strided_slice %67 {offsets = [0, 256], sizes = [8, 128], strides = [1, 1]} : vector<8x384xf32> to vector<8x128xf32>
      %86 = arith.addf %85, %27 : vector<8x128xf32>
      %87 = arith.mulf %75, %86 : vector<8x128xf32>
      %88 = arith.addf %84, %87 : vector<8x128xf32>
      %89 = math.tanh %88 : vector<8x128xf32>
      %90 = arith.subf %58, %89 : vector<8x128xf32>
      %91 = arith.mulf %83, %90 : vector<8x128xf32>
      %92 = arith.addf %89, %91 : vector<8x128xf32>
      %93 = arith.index_cast %c1_i32_23 : i32 to index
      %c0_29 = arith.constant 0 : index
      %c0_30 = arith.constant 0 : index
      %94 = vector.load %arg7[%93, %c0_29, %c0_30] : memref<8x8x128xf32, #tpu.memory_space<vmem>>, vector<1x8x128xf32>
      %95 = vector.shape_cast %94 : vector<1x8x128xf32> to vector<8x128xf32>
      %96 = vector.shape_cast %92 : vector<8x128xf32> to vector<1x8x128xf32>
      tpu.vector_store %arg7[%93, %c0_29, %c0_30], %96 {strides = array<i32>} : memref<8x8x128xf32, #tpu.memory_space<vmem>>, vector<1x8x128xf32>,
      %c2_i32_31 = arith.constant 2 : i32
      %97 = arith.addi %23, %c2_i32_31 : i32
      %98 = arith.index_cast %97 : i32 to index
      %c0_32 = arith.constant 0 : index
      %c0_33 = arith.constant 0 : index
      %99 = vector.load %arg9[%98, %c0_32, %c0_33] : memref<16x8x384xf32, #tpu.memory_space<vmem>>, vector<1x8x384xf32>
      %100 = vector.shape_cast %99 : vector<1x8x384xf32> to vector<8x384xf32>
      %cst_34 = arith.constant dense<0.000000e+00> : vector<8x384xf32>
      %101 = tpu.matmul %92, %24, %cst_34 {dimension_numbers = #tpu.dot_dimension_numbers<[1], [0], [0], [1], [0, 0, 1, 1], [], []>} : vector<8x128xf32>, vector<128x384xf32>, vector<8x384xf32> -> vector<8x384xf32>
      %102 = vector.extract_strided_slice %100 {offsets = [0, 0], sizes = [8, 128], strides = [1, 1]} : vector<8x384xf32> to vector<8x128xf32>
      %103 = vector.extract_strided_slice %101 {offsets = [0, 0], sizes = [8, 128], strides = [1, 1]} : vector<8x384xf32> to vector<8x128xf32>
      %104 = arith.addf %102, %103 : vector<8x128xf32>
      %105 = arith.negf %104 : vector<8x128xf32>
      %106 = math.exp %105 : vector<8x128xf32>
      %cst_35 = arith.constant 1.000000e+00 : f32
      %107 = vector.broadcast %cst_35 : f32 to vector<8x128xf32>
      %108 = arith.addf %107, %106 : vector<8x128xf32>
      %109 = arith.divf %107, %108 : vector<8x128xf32>
      %110 = vector.extract_strided_slice %100 {offsets = [0, 128], sizes = [8, 128], strides = [1, 1]} : vector<8x384xf32> to vector<8x128xf32>
      %111 = vector.extract_strided_slice %101 {offsets = [0, 128], sizes = [8, 128], strides = [1, 1]} : vector<8x384xf32> to vector<8x128xf32>
      %112 = arith.addf %110, %111 : vector<8x128xf32>
      %113 = arith.negf %112 : vector<8x128xf32>
      %114 = math.exp %113 : vector<8x128xf32>
      %cst_36 = arith.constant 1.000000e+00 : f32
      %115 = vector.broadcast %cst_36 : f32 to vector<8x128xf32>
      %116 = arith.addf %115, %114 : vector<8x128xf32>
      %117 = arith.divf %115, %116 : vector<8x128xf32>
      %118 = vector.extract_strided_slice %100 {offsets = [0, 256], sizes = [8, 128], strides = [1, 1]} : vector<8x384xf32> to vector<8x128xf32>
      %119 = vector.extract_strided_slice %101 {offsets = [0, 256], sizes = [8, 128], strides = [1, 1]} : vector<8x384xf32> to vector<8x128xf32>
      %120 = arith.addf %119, %27 : vector<8x128xf32>
      %121 = arith.mulf %109, %120 : vector<8x128xf32>
      %122 = arith.addf %118, %121 : vector<8x128xf32>
      %123 = math.tanh %122 : vector<8x128xf32>
      %124 = arith.subf %92, %123 : vector<8x128xf32>
      %125 = arith.mulf %117, %124 : vector<8x128xf32>
      %126 = arith.addf %123, %125 : vector<8x128xf32>
      %127 = arith.index_cast %c2_i32_31 : i32 to index
      %c0_37 = arith.constant 0 : index
      %c0_38 = arith.constant 0 : index
      %128 = vector.load %arg7[%127, %c0_37, %c0_38] : memref<8x8x128xf32, #tpu.memory_space<vmem>>, vector<1x8x128xf32>
      %129 = vector.shape_cast %128 : vector<1x8x128xf32> to vector<8x128xf32>
      %130 = vector.shape_cast %126 : vector<8x128xf32> to vector<1x8x128xf32>
      tpu.vector_store %arg7[%127, %c0_37, %c0_38], %130 {strides = array<i32>} : memref<8x8x128xf32, #tpu.memory_space<vmem>>, vector<1x8x128xf32>,
      %c3_i32 = arith.constant 3 : i32
      %131 = arith.addi %23, %c3_i32 : i32
      %132 = arith.index_cast %131 : i32 to index
      %c0_39 = arith.constant 0 : index
      %c0_40 = arith.constant 0 : index
      %133 = vector.load %arg9[%132, %c0_39, %c0_40] : memref<16x8x384xf32, #tpu.memory_space<vmem>>, vector<1x8x384xf32>
      %134 = vector.shape_cast %133 : vector<1x8x384xf32> to vector<8x384xf32>
      %cst_41 = arith.constant dense<0.000000e+00> : vector<8x384xf32>
      %135 = tpu.matmul %126, %24, %cst_41 {dimension_numbers = #tpu.dot_dimension_numbers<[1], [0], [0], [1], [0, 0, 1, 1], [], []>} : vector<8x128xf32>, vector<128x384xf32>, vector<8x384xf32> -> vector<8x384xf32>
      %136 = vector.extract_strided_slice %134 {offsets = [0, 0], sizes = [8, 128], strides = [1, 1]} : vector<8x384xf32> to vector<8x128xf32>
      %137 = vector.extract_strided_slice %135 {offsets = [0, 0], sizes = [8, 128], strides = [1, 1]} : vector<8x384xf32> to vector<8x128xf32>
      %138 = arith.addf %136, %137 : vector<8x128xf32>
      %139 = arith.negf %138 : vector<8x128xf32>
      %140 = math.exp %139 : vector<8x128xf32>
      %cst_42 = arith.constant 1.000000e+00 : f32
      %141 = vector.broadcast %cst_42 : f32 to vector<8x128xf32>
      %142 = arith.addf %141, %140 : vector<8x128xf32>
      %143 = arith.divf %141, %142 : vector<8x128xf32>
      %144 = vector.extract_strided_slice %134 {offsets = [0, 128], sizes = [8, 128], strides = [1, 1]} : vector<8x384xf32> to vector<8x128xf32>
      %145 = vector.extract_strided_slice %135 {offsets = [0, 128], sizes = [8, 128], strides = [1, 1]} : vector<8x384xf32> to vector<8x128xf32>
      %146 = arith.addf %144, %145 : vector<8x128xf32>
      %147 = arith.negf %146 : vector<8x128xf32>
      %148 = math.exp %147 : vector<8x128xf32>
      %cst_43 = arith.constant 1.000000e+00 : f32
      %149 = vector.broadcast %cst_43 : f32 to vector<8x128xf32>
      %150 = arith.addf %149, %148 : vector<8x128xf32>
      %151 = arith.divf %149, %150 : vector<8x128xf32>
      %152 = vector.extract_strided_slice %134 {offsets = [0, 256], sizes = [8, 128], strides = [1, 1]} : vector<8x384xf32> to vector<8x128xf32>
      %153 = vector.extract_strided_slice %135 {offsets = [0, 256], sizes = [8, 128], strides = [1, 1]} : vector<8x384xf32> to vector<8x128xf32>
      %154 = arith.addf %153, %27 : vector<8x128xf32>
      %155 = arith.mulf %143, %154 : vector<8x128xf32>
      %156 = arith.addf %152, %155 : vector<8x128xf32>
      %157 = math.tanh %156 : vector<8x128xf32>
      %158 = arith.subf %126, %157 : vector<8x128xf32>
      %159 = arith.mulf %151, %158 : vector<8x128xf32>
      %160 = arith.addf %157, %159 : vector<8x128xf32>
      %161 = arith.index_cast %c3_i32 : i32 to index
      %c0_44 = arith.constant 0 : index
      %c0_45 = arith.constant 0 : index
      %162 = vector.load %arg7[%161, %c0_44, %c0_45] : memref<8x8x128xf32, #tpu.memory_space<vmem>>, vector<1x8x128xf32>
      %163 = vector.shape_cast %162 : vector<1x8x128xf32> to vector<8x128xf32>
      %164 = vector.shape_cast %160 : vector<8x128xf32> to vector<1x8x128xf32>
      tpu.vector_store %arg7[%161, %c0_44, %c0_45], %164 {strides = array<i32>} : memref<8x8x128xf32, #tpu.memory_space<vmem>>, vector<1x8x128xf32>,
      %c4_i32 = arith.constant 4 : i32
      %165 = arith.addi %23, %c4_i32 : i32
      %166 = arith.index_cast %165 : i32 to index
      %c0_46 = arith.constant 0 : index
      %c0_47 = arith.constant 0 : index
      %167 = vector.load %arg9[%166, %c0_46, %c0_47] : memref<16x8x384xf32, #tpu.memory_space<vmem>>, vector<1x8x384xf32>
      %168 = vector.shape_cast %167 : vector<1x8x384xf32> to vector<8x384xf32>
      %cst_48 = arith.constant dense<0.000000e+00> : vector<8x384xf32>
      %169 = tpu.matmul %160, %24, %cst_48 {dimension_numbers = #tpu.dot_dimension_numbers<[1], [0], [0], [1], [0, 0, 1, 1], [], []>} : vector<8x128xf32>, vector<128x384xf32>, vector<8x384xf32> -> vector<8x384xf32>
      %170 = vector.extract_strided_slice %168 {offsets = [0, 0], sizes = [8, 128], strides = [1, 1]} : vector<8x384xf32> to vector<8x128xf32>
      %171 = vector.extract_strided_slice %169 {offsets = [0, 0], sizes = [8, 128], strides = [1, 1]} : vector<8x384xf32> to vector<8x128xf32>
      %172 = arith.addf %170, %171 : vector<8x128xf32>
      %173 = arith.negf %172 : vector<8x128xf32>
      %174 = math.exp %173 : vector<8x128xf32>
      %cst_49 = arith.constant 1.000000e+00 : f32
      %175 = vector.broadcast %cst_49 : f32 to vector<8x128xf32>
      %176 = arith.addf %175, %174 : vector<8x128xf32>
      %177 = arith.divf %175, %176 : vector<8x128xf32>
      %178 = vector.extract_strided_slice %168 {offsets = [0, 128], sizes = [8, 128], strides = [1, 1]} : vector<8x384xf32> to vector<8x128xf32>
      %179 = vector.extract_strided_slice %169 {offsets = [0, 128], sizes = [8, 128], strides = [1, 1]} : vector<8x384xf32> to vector<8x128xf32>
      %180 = arith.addf %178, %179 : vector<8x128xf32>
      %181 = arith.negf %180 : vector<8x128xf32>
      %182 = math.exp %181 : vector<8x128xf32>
      %cst_50 = arith.constant 1.000000e+00 : f32
      %183 = vector.broadcast %cst_50 : f32 to vector<8x128xf32>
      %184 = arith.addf %183, %182 : vector<8x128xf32>
      %185 = arith.divf %183, %184 : vector<8x128xf32>
      %186 = vector.extract_strided_slice %168 {offsets = [0, 256], sizes = [8, 128], strides = [1, 1]} : vector<8x384xf32> to vector<8x128xf32>
      %187 = vector.extract_strided_slice %169 {offsets = [0, 256], sizes = [8, 128], strides = [1, 1]} : vector<8x384xf32> to vector<8x128xf32>
      %188 = arith.addf %187, %27 : vector<8x128xf32>
      %189 = arith.mulf %177, %188 : vector<8x128xf32>
      %190 = arith.addf %186, %189 : vector<8x128xf32>
      %191 = math.tanh %190 : vector<8x128xf32>
      %192 = arith.subf %160, %191 : vector<8x128xf32>
      %193 = arith.mulf %185, %192 : vector<8x128xf32>
      %194 = arith.addf %191, %193 : vector<8x128xf32>
      %195 = arith.index_cast %c4_i32 : i32 to index
      %c0_51 = arith.constant 0 : index
      %c0_52 = arith.constant 0 : index
      %196 = vector.load %arg7[%195, %c0_51, %c0_52] : memref<8x8x128xf32, #tpu.memory_space<vmem>>, vector<1x8x128xf32>
      %197 = vector.shape_cast %196 : vector<1x8x128xf32> to vector<8x128xf32>
      %198 = vector.shape_cast %194 : vector<8x128xf32> to vector<1x8x128xf32>
      tpu.vector_store %arg7[%195, %c0_51, %c0_52], %198 {strides = array<i32>} : memref<8x8x128xf32, #tpu.memory_space<vmem>>, vector<1x8x128xf32>,
      %c5_i32 = arith.constant 5 : i32
      %199 = arith.addi %23, %c5_i32 : i32
      %200 = arith.index_cast %199 : i32 to index
      %c0_53 = arith.constant 0 : index
      %c0_54 = arith.constant 0 : index
      %201 = vector.load %arg9[%200, %c0_53, %c0_54] : memref<16x8x384xf32, #tpu.memory_space<vmem>>, vector<1x8x384xf32>
      %202 = vector.shape_cast %201 : vector<1x8x384xf32> to vector<8x384xf32>
      %cst_55 = arith.constant dense<0.000000e+00> : vector<8x384xf32>
      %203 = tpu.matmul %194, %24, %cst_55 {dimension_numbers = #tpu.dot_dimension_numbers<[1], [0], [0], [1], [0, 0, 1, 1], [], []>} : vector<8x128xf32>, vector<128x384xf32>, vector<8x384xf32> -> vector<8x384xf32>
      %204 = vector.extract_strided_slice %202 {offsets = [0, 0], sizes = [8, 128], strides = [1, 1]} : vector<8x384xf32> to vector<8x128xf32>
      %205 = vector.extract_strided_slice %203 {offsets = [0, 0], sizes = [8, 128], strides = [1, 1]} : vector<8x384xf32> to vector<8x128xf32>
      %206 = arith.addf %204, %205 : vector<8x128xf32>
      %207 = arith.negf %206 : vector<8x128xf32>
      %208 = math.exp %207 : vector<8x128xf32>
      %cst_56 = arith.constant 1.000000e+00 : f32
      %209 = vector.broadcast %cst_56 : f32 to vector<8x128xf32>
      %210 = arith.addf %209, %208 : vector<8x128xf32>
      %211 = arith.divf %209, %210 : vector<8x128xf32>
      %212 = vector.extract_strided_slice %202 {offsets = [0, 128], sizes = [8, 128], strides = [1, 1]} : vector<8x384xf32> to vector<8x128xf32>
      %213 = vector.extract_strided_slice %203 {offsets = [0, 128], sizes = [8, 128], strides = [1, 1]} : vector<8x384xf32> to vector<8x128xf32>
      %214 = arith.addf %212, %213 : vector<8x128xf32>
      %215 = arith.negf %214 : vector<8x128xf32>
      %216 = math.exp %215 : vector<8x128xf32>
      %cst_57 = arith.constant 1.000000e+00 : f32
      %217 = vector.broadcast %cst_57 : f32 to vector<8x128xf32>
      %218 = arith.addf %217, %216 : vector<8x128xf32>
      %219 = arith.divf %217, %218 : vector<8x128xf32>
      %220 = vector.extract_strided_slice %202 {offsets = [0, 256], sizes = [8, 128], strides = [1, 1]} : vector<8x384xf32> to vector<8x128xf32>
      %221 = vector.extract_strided_slice %203 {offsets = [0, 256], sizes = [8, 128], strides = [1, 1]} : vector<8x384xf32> to vector<8x128xf32>
      %222 = arith.addf %221, %27 : vector<8x128xf32>
      %223 = arith.mulf %211, %222 : vector<8x128xf32>
      %224 = arith.addf %220, %223 : vector<8x128xf32>
      %225 = math.tanh %224 : vector<8x128xf32>
      %226 = arith.subf %194, %225 : vector<8x128xf32>
      %227 = arith.mulf %219, %226 : vector<8x128xf32>
      %228 = arith.addf %225, %227 : vector<8x128xf32>
      %229 = arith.index_cast %c5_i32 : i32 to index
      %c0_58 = arith.constant 0 : index
      %c0_59 = arith.constant 0 : index
      %230 = vector.load %arg7[%229, %c0_58, %c0_59] : memref<8x8x128xf32, #tpu.memory_space<vmem>>, vector<1x8x128xf32>
      %231 = vector.shape_cast %230 : vector<1x8x128xf32> to vector<8x128xf32>
      %232 = vector.shape_cast %228 : vector<8x128xf32> to vector<1x8x128xf32>
      tpu.vector_store %arg7[%229, %c0_58, %c0_59], %232 {strides = array<i32>} : memref<8x8x128xf32, #tpu.memory_space<vmem>>, vector<1x8x128xf32>,
      %c6_i32 = arith.constant 6 : i32
      %233 = arith.addi %23, %c6_i32 : i32
      %234 = arith.index_cast %233 : i32 to index
      %c0_60 = arith.constant 0 : index
      %c0_61 = arith.constant 0 : index
      %235 = vector.load %arg9[%234, %c0_60, %c0_61] : memref<16x8x384xf32, #tpu.memory_space<vmem>>, vector<1x8x384xf32>
      %236 = vector.shape_cast %235 : vector<1x8x384xf32> to vector<8x384xf32>
      %cst_62 = arith.constant dense<0.000000e+00> : vector<8x384xf32>
      %237 = tpu.matmul %228, %24, %cst_62 {dimension_numbers = #tpu.dot_dimension_numbers<[1], [0], [0], [1], [0, 0, 1, 1], [], []>} : vector<8x128xf32>, vector<128x384xf32>, vector<8x384xf32> -> vector<8x384xf32>
      %238 = vector.extract_strided_slice %236 {offsets = [0, 0], sizes = [8, 128], strides = [1, 1]} : vector<8x384xf32> to vector<8x128xf32>
      %239 = vector.extract_strided_slice %237 {offsets = [0, 0], sizes = [8, 128], strides = [1, 1]} : vector<8x384xf32> to vector<8x128xf32>
      %240 = arith.addf %238, %239 : vector<8x128xf32>
      %241 = arith.negf %240 : vector<8x128xf32>
      %242 = math.exp %241 : vector<8x128xf32>
      %cst_63 = arith.constant 1.000000e+00 : f32
      %243 = vector.broadcast %cst_63 : f32 to vector<8x128xf32>
      %244 = arith.addf %243, %242 : vector<8x128xf32>
      %245 = arith.divf %243, %244 : vector<8x128xf32>
      %246 = vector.extract_strided_slice %236 {offsets = [0, 128], sizes = [8, 128], strides = [1, 1]} : vector<8x384xf32> to vector<8x128xf32>
      %247 = vector.extract_strided_slice %237 {offsets = [0, 128], sizes = [8, 128], strides = [1, 1]} : vector<8x384xf32> to vector<8x128xf32>
      %248 = arith.addf %246, %247 : vector<8x128xf32>
      %249 = arith.negf %248 : vector<8x128xf32>
      %250 = math.exp %249 : vector<8x128xf32>
      %cst_64 = arith.constant 1.000000e+00 : f32
      %251 = vector.broadcast %cst_64 : f32 to vector<8x128xf32>
      %252 = arith.addf %251, %250 : vector<8x128xf32>
      %253 = arith.divf %251, %252 : vector<8x128xf32>
      %254 = vector.extract_strided_slice %236 {offsets = [0, 256], sizes = [8, 128], strides = [1, 1]} : vector<8x384xf32> to vector<8x128xf32>
      %255 = vector.extract_strided_slice %237 {offsets = [0, 256], sizes = [8, 128], strides = [1, 1]} : vector<8x384xf32> to vector<8x128xf32>
      %256 = arith.addf %255, %27 : vector<8x128xf32>
      %257 = arith.mulf %245, %256 : vector<8x128xf32>
      %258 = arith.addf %254, %257 : vector<8x128xf32>
      %259 = math.tanh %258 : vector<8x128xf32>
      %260 = arith.subf %228, %259 : vector<8x128xf32>
      %261 = arith.mulf %253, %260 : vector<8x128xf32>
      %262 = arith.addf %259, %261 : vector<8x128xf32>
      %263 = arith.index_cast %c6_i32 : i32 to index
      %c0_65 = arith.constant 0 : index
      %c0_66 = arith.constant 0 : index
      %264 = vector.load %arg7[%263, %c0_65, %c0_66] : memref<8x8x128xf32, #tpu.memory_space<vmem>>, vector<1x8x128xf32>
      %265 = vector.shape_cast %264 : vector<1x8x128xf32> to vector<8x128xf32>
      %266 = vector.shape_cast %262 : vector<8x128xf32> to vector<1x8x128xf32>
      tpu.vector_store %arg7[%263, %c0_65, %c0_66], %266 {strides = array<i32>} : memref<8x8x128xf32, #tpu.memory_space<vmem>>, vector<1x8x128xf32>,
      %c7_i32 = arith.constant 7 : i32
      %267 = arith.addi %23, %c7_i32 : i32
      %268 = arith.index_cast %267 : i32 to index
      %c0_67 = arith.constant 0 : index
      %c0_68 = arith.constant 0 : index
      %269 = vector.load %arg9[%268, %c0_67, %c0_68] : memref<16x8x384xf32, #tpu.memory_space<vmem>>, vector<1x8x384xf32>
      %270 = vector.shape_cast %269 : vector<1x8x384xf32> to vector<8x384xf32>
      %cst_69 = arith.constant dense<0.000000e+00> : vector<8x384xf32>
      %271 = tpu.matmul %262, %24, %cst_69 {dimension_numbers = #tpu.dot_dimension_numbers<[1], [0], [0], [1], [0, 0, 1, 1], [], []>} : vector<8x128xf32>, vector<128x384xf32>, vector<8x384xf32> -> vector<8x384xf32>
      %272 = vector.extract_strided_slice %270 {offsets = [0, 0], sizes = [8, 128], strides = [1, 1]} : vector<8x384xf32> to vector<8x128xf32>
      %273 = vector.extract_strided_slice %271 {offsets = [0, 0], sizes = [8, 128], strides = [1, 1]} : vector<8x384xf32> to vector<8x128xf32>
      %274 = arith.addf %272, %273 : vector<8x128xf32>
      %275 = arith.negf %274 : vector<8x128xf32>
      %276 = math.exp %275 : vector<8x128xf32>
      %cst_70 = arith.constant 1.000000e+00 : f32
      %277 = vector.broadcast %cst_70 : f32 to vector<8x128xf32>
      %278 = arith.addf %277, %276 : vector<8x128xf32>
      %279 = arith.divf %277, %278 : vector<8x128xf32>
      %280 = vector.extract_strided_slice %270 {offsets = [0, 128], sizes = [8, 128], strides = [1, 1]} : vector<8x384xf32> to vector<8x128xf32>
      %281 = vector.extract_strided_slice %271 {offsets = [0, 128], sizes = [8, 128], strides = [1, 1]} : vector<8x384xf32> to vector<8x128xf32>
      %282 = arith.addf %280, %281 : vector<8x128xf32>
      %283 = arith.negf %282 : vector<8x128xf32>
      %284 = math.exp %283 : vector<8x128xf32>
      %cst_71 = arith.constant 1.000000e+00 : f32
      %285 = vector.broadcast %cst_71 : f32 to vector<8x128xf32>
      %286 = arith.addf %285, %284 : vector<8x128xf32>
      %287 = arith.divf %285, %286 : vector<8x128xf32>
      %288 = vector.extract_strided_slice %270 {offsets = [0, 256], sizes = [8, 128], strides = [1, 1]} : vector<8x384xf32> to vector<8x128xf32>
      %289 = vector.extract_strided_slice %271 {offsets = [0, 256], sizes = [8, 128], strides = [1, 1]} : vector<8x384xf32> to vector<8x128xf32>
      %290 = arith.addf %289, %27 : vector<8x128xf32>
      %291 = arith.mulf %279, %290 : vector<8x128xf32>
      %292 = arith.addf %288, %291 : vector<8x128xf32>
      %293 = math.tanh %292 : vector<8x128xf32>
      %294 = arith.subf %262, %293 : vector<8x128xf32>
      %295 = arith.mulf %287, %294 : vector<8x128xf32>
      %296 = arith.addf %293, %295 : vector<8x128xf32>
      %297 = arith.index_cast %c7_i32 : i32 to index
      %c0_72 = arith.constant 0 : index
      %c0_73 = arith.constant 0 : index
      %298 = vector.load %arg7[%297, %c0_72, %c0_73] : memref<8x8x128xf32, #tpu.memory_space<vmem>>, vector<1x8x128xf32>
      %299 = vector.shape_cast %298 : vector<1x8x128xf32> to vector<8x128xf32>
      %300 = vector.shape_cast %296 : vector<8x128xf32> to vector<1x8x128xf32>
      tpu.vector_store %arg7[%297, %c0_72, %c0_73], %300 {strides = array<i32>} : memref<8x8x128xf32, #tpu.memory_space<vmem>>, vector<1x8x128xf32>,
      %c8_i32_74 = arith.constant 8 : i32
      %c0_75 = arith.constant 0 : index
      %c0_76 = arith.constant 0 : index
      %301 = vector.load %arg8[%c0_75, %c0_76] : memref<8x128xf32, #tpu.memory_space<vmem>>, vector<8x128xf32>
      tpu.vector_store %arg8[%c0_75, %c0_76], %296 {strides = array<i32>} : memref<8x128xf32, #tpu.memory_space<vmem>>, vector<8x128xf32>,
    } else {
    }
    return
  }
  func.func @transform_0(%arg0: i32, %arg1: i32) -> (i32, i32, i32) {
    %c0_i32 = arith.constant 0 : i32
    %0 = arith.minsi %arg1, %c0_i32 : i32
    %c0_i32_0 = arith.constant 0 : i32
    %c0_i32_1 = arith.constant 0 : i32
    return %0, %arg0, %c0_i32_0 : i32, i32, i32
  }
  func.func @transform_1(%arg0: i32, %arg1: i32) -> (i32, i32) {
    %c0_i32 = arith.constant 0 : i32
    %c0_i32_0 = arith.constant 0 : i32
    %c0_i32_1 = arith.constant 0 : i32
    return %c0_i32, %c0_i32_0 : i32, i32
  }
  func.func @transform_2(%arg0: i32, %arg1: i32) -> (i32, i32) {
    %c0_i32 = arith.constant 0 : i32
    %c0_i32_0 = arith.constant 0 : i32
    %c0_i32_1 = arith.constant 0 : i32
    return %c0_i32, %c0_i32_0 : i32, i32
  }
  func.func @transform_3(%arg0: i32, %arg1: i32) -> (i32, i32) {
    %c0_i32 = arith.constant 0 : i32
    %c0_i32_0 = arith.constant 0 : i32
    %c0_i32_1 = arith.constant 0 : i32
    return %c0_i32, %c0_i32_0 : i32, i32
  }
  func.func @transform_4(%arg0: i32, %arg1: i32) -> (i32, i32) {
    %c0_i32 = arith.constant 0 : i32
    %c0_i32_0 = arith.constant 0 : i32
    %c0_i32_1 = arith.constant 0 : i32
    return %c0_i32, %c0_i32_0 : i32, i32
  }
  func.func @transform_5(%arg0: i32, %arg1: i32) -> (i32, i32, i32) {
    %c1_i32 = arith.constant 1 : i32
    %0 = arith.subi %arg1, %c1_i32 : i32
    %c0_i32 = arith.constant 0 : i32
    %1 = arith.maxsi %0, %c0_i32 : i32
    %c0_i32_0 = arith.constant 0 : i32
    %c0_i32_1 = arith.constant 0 : i32
    return %1, %arg0, %c0_i32_0 : i32, i32, i32
  }
}

module attributes {stable_mosaic.version = 11 : i64} {
  func.func @_fc_kernel(%arg0: i32, %arg1: memref<32x128xf32, #tpu.memory_space<vmem>>, %arg2: memref<128x128xf32, #tpu.memory_space<vmem>>, %arg3: memref<1x128xf32, #tpu.memory_space<vmem>>, %arg4: memref<32x128xf32, #tpu.memory_space<vmem>>) attributes {dimension_semantics = [#tpu.dimension_semantics<parallel>], iteration_bounds = array<i64: 1>, scalar_prefetch = 0 : i64, scratch_operands = 0 : i64, tpu.core_type = #tpu.core_type<tc>, window_params = [{transform_indices = @transform_0, window_bounds = array<i64: 32, 128>}, {pipeline_mode = #tpu.pipeline_mode<synchronous>, transform_indices = @transform_1, window_bounds = array<i64: 128, 128>}, {pipeline_mode = #tpu.pipeline_mode<synchronous>, transform_indices = @transform_2, window_bounds = array<i64: 1, 128>}, {transform_indices = @transform_3, window_bounds = array<i64: 32, 128>}]} {
    %c0 = arith.constant 0 : index
    %c0_0 = arith.constant 0 : index
    %0 = vector.load %arg1[%c0, %c0_0] : memref<32x128xf32, #tpu.memory_space<vmem>>, vector<32x128xf32>
    %c0_1 = arith.constant 0 : index
    %c0_2 = arith.constant 0 : index
    %1 = vector.load %arg2[%c0_1, %c0_2] : memref<128x128xf32, #tpu.memory_space<vmem>>, vector<128x128xf32>
    %cst = arith.constant dense<0.000000e+00> : vector<32x128xf32>
    %2 = tpu.matmul %0, %1, %cst {dimension_numbers = #tpu.dot_dimension_numbers<[1], [0], [0], [1], [0, 0, 1, 1], [], []>} : vector<32x128xf32>, vector<128x128xf32>, vector<32x128xf32> -> vector<32x128xf32>
    %c0_3 = arith.constant 0 : index
    %c0_4 = arith.constant 0 : index
    %3 = vector.load %arg3[%c0_3, %c0_4] : memref<1x128xf32, #tpu.memory_space<vmem>>, vector<1x128xf32>
    %4 = vector.broadcast %3 : vector<1x128xf32> to vector<32x128xf32>
    %5 = arith.addf %2, %4 : vector<32x128xf32>
    %c0_5 = arith.constant 0 : index
    %c0_6 = arith.constant 0 : index
    %6 = vector.load %arg4[%c0_5, %c0_6] : memref<32x128xf32, #tpu.memory_space<vmem>>, vector<32x128xf32>
    tpu.vector_store %arg4[%c0_5, %c0_6], %5 {strides = array<i32>} : memref<32x128xf32, #tpu.memory_space<vmem>>, vector<32x128xf32>,
    return
  }
  func.func @transform_0(%arg0: i32) -> (i32, i32) {
    %c0_i32 = arith.constant 0 : i32
    %c0_i32_0 = arith.constant 0 : i32
    return %arg0, %c0_i32 : i32, i32
  }
  func.func @transform_1(%arg0: i32) -> (i32, i32) {
    %c0_i32 = arith.constant 0 : i32
    %c0_i32_0 = arith.constant 0 : i32
    %c0_i32_1 = arith.constant 0 : i32
    return %c0_i32, %c0_i32_0 : i32, i32
  }
  func.func @transform_2(%arg0: i32) -> (i32, i32) {
    %c0_i32 = arith.constant 0 : i32
    %c0_i32_0 = arith.constant 0 : i32
    %c0_i32_1 = arith.constant 0 : i32
    return %c0_i32, %c0_i32_0 : i32, i32
  }
  func.func @transform_3(%arg0: i32) -> (i32, i32) {
    %c0_i32 = arith.constant 0 : i32
    %c0_i32_0 = arith.constant 0 : i32
    return %arg0, %c0_i32 : i32, i32
  }
}

</mosaic_0001>

<llo_original>
// kernel: gru_model_forward.5
$region0: #{gru_model_forward.5}
  #allocation0 [shape = 'u32[]', space=smem, size = 0x4, offset = 0x4, fixed_abs, tag = 'smem constant byte address 0x4 - core index']
  #allocation1 [shape = 'u32[144,128]{1,0:T(1,128)}', space=vmem, size = 0x12000, scoped, tag = 'internal scratch']
  %s0 = inlined_call_operand.vmem [shape: f32[32,128], index: 0, kind: input, shape index: {}]
  %s1 = inlined_call_operand.vmem [shape: f32[128,128], index: 1, kind: input, shape index: {}]
  %s2 = inlined_call_operand.vmem [shape: f32[1,128], index: 2, kind: input, shape index: {}]
  %s3 = inlined_call_operand.vmem [shape: f32[32,128], index: 3, kind: output, shape index: {}]
  %s4 = sld [smem:[#allocation0]]
  $region22: #{gru_model_forward.5} parent=0
    _
  %s6 = ssub.s32 1, %s4
  %s7 = scalar_select 0, %s6, %s4
  // Predicated region
  $region2: #{gru_model_forward.5} parent=0 // pred_check
    _
  $region3: #{gru_model_forward.5} parent=0 // pred_check_branch
    %9 = sbr.rel (0) target = $region5
  $region4: #{gru_model_forward.5} parent=0 // pred_region
    _
  $region5: #{gru_model_forward.5} parent=0 // pred_fallthru
    _
  // Predicated region
  $region6: #{gru_model_forward.5} parent=0 // pred_check
    _
  $region7: #{gru_model_forward.5} parent=0 // pred_check_branch
    %11 = sbr.rel (0) target = $region9
  $region8: #{gru_model_forward.5} parent=0 // pred_region
    _
  $region9: #{gru_model_forward.5} parent=0 // pred_fallthru
    _
  // Predicated region
  $region10: #{gru_model_forward.5} parent=0 // pred_check
    _
  $region11: #{gru_model_forward.5} parent=0 // pred_check_branch
    %13 = sbr.rel (0) target = $region13
  $region12: #{gru_model_forward.5} parent=0 // pred_region
    _
  $region13: #{gru_model_forward.5} parent=0 // pred_fallthru
    _
  %v14 = vld [vmem:[%s0] sm:$0xff]
  %v15 = vld [vmem:[%s0 + $0x8] sm:$0xff]
  %v16 = vld [vmem:[%s0 + $0x10] sm:$0xff]
  %v17 = vld [vmem:[%s0 + $0x18] sm:$0xff]
  %v18 = vld [vmem:[%s1] sm:$0xff]
  %v19 = vld [vmem:[%s1 + $0x8] sm:$0xff]
  %v20 = vld [vmem:[%s1 + $0x10] sm:$0xff]
  %v21 = vld [vmem:[%s1 + $0x18] sm:$0xff]
  %v22 = vld [vmem:[%s1 + $0x20] sm:$0xff]
  %v23 = vld [vmem:[%s1 + $0x28] sm:$0xff]
  %v24 = vld [vmem:[%s1 + $0x30] sm:$0xff]
  %v25 = vld [vmem:[%s1 + $0x38] sm:$0xff]
  %v26 = vld [vmem:[%s1 + $0x40] sm:$0xff]
  %v27 = vld [vmem:[%s1 + $0x48] sm:$0xff]
  %v28 = vld [vmem:[%s1 + $0x50] sm:$0xff]
  %v29 = vld [vmem:[%s1 + $0x58] sm:$0xff]
  %v30 = vld [vmem:[%s1 + $0x60] sm:$0xff]
  %v31 = vld [vmem:[%s1 + $0x68] sm:$0xff]
  %v32 = vld [vmem:[%s1 + $0x70] sm:$0xff]
  %v33 = vld [vmem:[%s1 + $0x78] sm:$0xff]
  %v34 = vld [vmem:[%s2] sm:$0x1]
  %v36 = vlaneseq
  %v37 = vshrl.u32 %v36, 7
  %v38 = vsub.s32 0, %v37
  %v39 = vrot.slane %v34, %v38
  %41 = vmatprep.subr.mxu0 0.0
  %42 = vmatpush1.msra.mxu0 %v18
  %43 = vmatprep.subr.mxu0 0.0
  %44 = vmatpush1.msra.mxu0 %v19
  %45 = vmatprep.subr.mxu0 0.0
  %46 = vmatpush1.msra.mxu0 %v20
  %47 = vmatprep.subr.mxu0 0.0
  %48 = vmatpush1.msra.mxu0 %v21
  %49 = vmatprep.subr.mxu0 0.0
  %50 = vmatpush1.msra.mxu0 %v22
  %51 = vmatprep.subr.mxu0 0.0
  %52 = vmatpush1.msra.mxu0 %v23
  %53 = vmatprep.subr.mxu0 0.0
  %54 = vmatpush1.msra.mxu0 %v24
  %55 = vmatprep.subr.mxu0 0.0
  %56 = vmatpush1.msra.mxu0 %v25
  %57 = vmatprep.subr.mxu0 0.0
  %58 = vmatpush1.msra.mxu0 %v26
  %59 = vmatprep.subr.mxu0 0.0
  %60 = vmatpush1.msra.mxu0 %v27
  %61 = vmatprep.subr.mxu0 0.0
  %62 = vmatpush1.msra.mxu0 %v28
  %63 = vmatprep.subr.mxu0 0.0
  %64 = vmatpush1.msra.mxu0 %v29
  %65 = vmatprep.subr.mxu0 0.0
  %66 = vmatpush1.msra.mxu0 %v30
  %67 = vmatprep.subr.mxu0 0.0
  %68 = vmatpush1.msra.mxu0 %v31
  %69 = vmatprep.subr.mxu0 0.0
  %70 = vmatpush1.msra.mxu0 %v32
  %71 = vmatprep.subr.mxu0 0.0
  %72 = vmatpush1.msra.mxu0 %v33
  %73 = vmatprep.subr.mxu0 0.0
  %74 = vmatpush1.msra.mxu0 0.0
  %75 = vmatprep.subr.mxu0 0.0
  %76 = vmatpush1.msra.mxu0 0.0
  %77 = vmatprep.subr.mxu0 0.0
  %78 = vmatpush1.msra.mxu0 0.0
  %79 = vmatprep.subr.mxu0 0.0
  %80 = vmatpush1.msra.mxu0 0.0
  %81 = vmatprep.subr.mxu0 0.0
  %82 = vmatpush1.msra.mxu0 0.0
  %83 = vmatprep.subr.mxu0 0.0
  %84 = vmatpush1.msra.mxu0 0.0
  %85 = vmatprep.subr.mxu0 0.0
  %86 = vmatpush1.msra.mxu0 0.0
  %87 = vmatprep.subr.mxu0 0.0
  %88 = vmatpush1.msra.mxu0 0.0
  %89 = vmatprep.subr.mxu0 0.0
  %90 = vmatpush1.msra.mxu0 0.0
  %91 = vmatprep.subr.mxu0 0.0
  %92 = vmatpush1.msra.mxu0 0.0
  %93 = vmatprep.subr.mxu0 0.0
  %94 = vmatpush1.msra.mxu0 0.0
  %95 = vmatprep.subr.mxu0 0.0
  %96 = vmatpush1.msra.mxu0 0.0
  %97 = vmatprep.subr.mxu0 0.0
  %98 = vmatpush1.msra.mxu0 0.0
  %99 = vmatprep.subr.mxu0 0.0
  %100 = vmatpush1.msra.mxu0 0.0
  %101 = vmatprep.subr.mxu0 0.0
  %102 = vmatpush1.msra.mxu0 0.0
  %103 = vmatprep.subr.mxu0 0.0
  %104 = vmatpush1.msra.mxu0 0.0
  %105 = vmatprep.mubr.f32.mxu0 0.0
  %106 = vmatmul.mubr.f32.gmra.mrb[0].mxu0 %v14
  %v107 = vpop.f32.mrb[0].mxu0
  %v108 = vadd.f32 %v39, %v107
  %v109 = vpop.f32.mrb[0].mxu0
  %110 = vmatprep.mubr.f32.mxu0 0.0
  %111 = vmatmul.mubr.f32.gmra.mrb[0].mxu0 %v15
  %v112 = vpop.f32.mrb[0].mxu0
  %v113 = vadd.f32 %v39, %v112
  %v114 = vpop.f32.mrb[0].mxu0
  %115 = vmatprep.mubr.f32.mxu0 0.0
  %116 = vmatmul.mubr.f32.gmra.mrb[0].mxu0 %v16
  %v117 = vpop.f32.mrb[0].mxu0
  %v118 = vadd.f32 %v39, %v117
  %v119 = vpop.f32.mrb[0].mxu0
  %120 = vmatprep.mubr.f32.mxu0 0.0
  %121 = vmatmul.mubr.f32.gmra.mrb[0].mxu0 %v17
  %v122 = vpop.f32.mrb[0].mxu0
  %v123 = vadd.f32 %v39, %v122
  %v124 = vpop.f32.mrb[0].mxu0
  %125 = vdwg.mxu0
  %126 = vst [vmem:[%s3] sm:$0xff] %v108
  %127 = vst [vmem:[%s3 + $0x8] sm:$0xff] %v113
  %128 = vst [vmem:[%s3 + $0x10] sm:$0xff] %v118
  %129 = vst [vmem:[%s3 + $0x18] sm:$0xff] %v123
  // Predicated region
  $region14: #{gru_model_forward.5} parent=0 // pred_check
    _
  $region15: #{gru_model_forward.5} parent=0 // pred_check_branch
    %131 = sbr.rel (0) target = $region17
  $region16: #{gru_model_forward.5} parent=0 // pred_region
    _
  $region17: #{gru_model_forward.5} parent=0 // pred_fallthru
    _
  // Predicated region
  $region18: #{gru_model_forward.5} parent=0 // pred_check
    _
  $region19: #{gru_model_forward.5} parent=0 // pred_check_branch
    %133 = sbr.rel (0) target = $region21
  $region20: #{gru_model_forward.5} parent=0 // pred_region
    _
  $region21: #{gru_model_forward.5} parent=0 // pred_fallthru
    _

// kernel: gru_model_forward.3
$region0: #{gru_model_forward.3}
  #allocation0 [shape = 'u32[]', space=smem, size = 0x4, offset = 0x4, fixed_abs, tag = 'smem constant byte address 0x4 - core index']
  #allocation1 [shape = 'u32[144,128]{1,0:T(1,128)}', space=vmem, size = 0x12000, scoped, tag = 'internal scratch']
  #allocation2 [shape = 'f32[8,128]{1,0:T(8,128)}', space=vmem, size = 0x1000, scoped, tag = 'scratch operand']
  #allocation3 [shape = 'f32[16,8,384]{2,1,0:T(8,128)}', space=vmem, size = 0x30000, scoped, tag = 'scratch operand']
  %s0 = inlined_call_operand.vmem [shape: f32[8,8,128], index: 0, kind: input, shape index: {}]
  %s1 = inlined_call_operand.hbm [shape: f32[128,384], index: 1, kind: input, shape index: {}]
  %s2 = inlined_call_operand.hbm [shape: f32[128,384], index: 2, kind: input, shape index: {}]
  %s3 = inlined_call_operand.vmem [shape: f32[1,384], index: 3, kind: input, shape index: {}]
  %s4 = inlined_call_operand.vmem [shape: f32[1,128], index: 4, kind: input, shape index: {}]
  %s5 = inlined_call_operand.vmem [shape: f32[8,8,128], index: 5, kind: output, shape index: {}]
  %s6 = sld [smem:[#allocation0]]
  $region73: #{gru_model_forward.3} parent=0
    _
  %s8 = ssub.s32 1, %s6
  %s9 = scalar_select 0, %s8, %s6
  $region1: #{gru_model_forward.3} parent=0
    #allocation4 [shape = 'u8[196608]{0}', space=vmem, size = 0x30000, scoped, tag = 'input window, operand 1, single buffered']
    #allocation5 [shape = 's32[2]{0}', space=sflag, size = 0x8, scoped, tag = 'scoped memory for gru_model_forward.3']
    #allocation6 [shape = 'u8[196608]{0}', space=vmem, size = 0x30000, scoped, tag = 'input window, operand 2, single buffered']
    #allocation7 [shape = 's32[1]{0}', space=sflag, size = 0x4, scoped, tag = 'scoped memory for gru_model_forward.3']
    %10 = vsyncpa [#allocation5], 0
    %11 = vsyncpa [#allocation7], 0
    loop: start=0, step=1, limit=4
    $region2: #{gru_model_forward.3} parent=1 // loop_pre_header
      _
    $region3: #{gru_model_forward.3} parent=1 // loop_header
      %s13 = sphi 0, %s17
      %p14 = scmp.ge.s32.totalorder %s13, 4
      %s20 = sphi 0, %s32
      %s21 = sphi 0, %s28
      %s22 = sphi 0, %s20
      %s23 = sphi 0, %s21
      %s24 = sphi 0, %s22
      %s25 = sphi 0, %s23
      %s41 = sphi 0, %s43
      %s44 = sphi 0, %s41
      %s45 = sphi 0, %s44
      %s61 = sphi 0, %s45
      %s65 = sphi 0, %s65
      %s67 = sphi 0, %s65
      %s68 = sphi 0, %s67
      %s82 = sphi 0, %s68
      %s86 = sphi 0, %s86
      %s88 = sphi 0, %s86
      %s89 = sphi 0, %s88
      %s103 = sphi 0, %s89
      %s107 = sphi 0, %s107
      %s109 = sphi 0, %s107
      %s110 = sphi 0, %s109
      %s124 = sphi 0, %s110
      %s128 = sphi 0, %s128
      %s130 = sphi 0, %s128
      %s131 = sphi 0, %s130
      %s145 = sphi 0, %s131
      %s159 = sphi 0, %s161
      %s162 = sphi 0, %s159
      %s163 = sphi 0, %s162
      %s179 = sphi 0, %s163
    $region4: #{gru_model_forward.3} parent=1 // loop_header_branch
      %16 = sbr.rel (%p14) target = $region8
    $region5: #{gru_model_forward.3} parent=1 // loop_body
      %s18 = ssub.s32 %s13, 1
      %s19 = ssub.s32 %s13, 2
      %s26 = sadd.s32 1, %s21
      %p27 = scmp.ge.s32.totalorder %s26, 2
      %s28 = scalar_select %p27, 0, %s26
      %s29 = sadd.s32 1, %s20
      %s30 = scalar_select %p27, %s29, %s20
      %p31 = scmp.ge.s32.totalorder %s30, 1
      %s32 = scalar_select %p31, 0, %s30
      %p33 = scmp.lt.s32.totalorder %s21, 0
      %s34 = scalar_select %p33, %s21, 0
      %p35 = scmp.lt.s32.totalorder %s28, 0
      %s36 = scalar_select %p35, %s28, 0
      %s37 = ssub.s32 %s34, %s36
      %s38 = ssub.s32 %s20, %s32
      %s39 = sor.u32 %s37, %s38
      %p40 = scmp.eq.s32.totalorder %s39, 0
      %s42 = sadd.s32 %s41, 1
      %s43 = scalar_select %p40, %s41, %s42
      %p46 = pneg %p40
      %p47 = scmp.eq.s32.totalorder %s13, 1
      %p48 = por %p46, %p47
      %p49 = scmp.ne.s32.totalorder %s41, %s44
      %p50 = scmp.eq.s32.totalorder %s13, 0
      %p51 = por %p49, %p50
      %p52 = scmp.ne.s32.totalorder %s41, %s44
      %p53 = scmp.eq.s32.totalorder %s18, 1
      %p54 = por %p52, %p53
      %p55 = scmp.ne.s32.totalorder %s44, %s45
      %p56 = scmp.eq.s32.totalorder %s18, 0
      %p57 = por %p55, %p56
      %p58 = scmp.ne.s32.totalorder %s44, %s45
      %p59 = scmp.eq.s32.totalorder %s19, 1
      %p60 = por %p58, %p59
      %p62 = scmp.ne.s32.totalorder %s45, %s61
      %p63 = scmp.eq.s32.totalorder %s19, 0
      %p64 = por %p62, %p63
      %s66 = sadd.s32 %s65, 1
      %p69 = scmp.eq.s32.totalorder %s13, 1
      %p70 = scmp.ne.s32.totalorder %s65, %s67
      %p71 = scmp.eq.s32.totalorder %s13, 0
      %p72 = por %p70, %p71
      %p73 = scmp.ne.s32.totalorder %s65, %s67
      %p74 = scmp.eq.s32.totalorder %s18, 1
      %p75 = por %p73, %p74
      %p76 = scmp.ne.s32.totalorder %s67, %s68
      %p77 = scmp.eq.s32.totalorder %s18, 0
      %p78 = por %p76, %p77
      %p79 = scmp.ne.s32.totalorder %s67, %s68
      %p80 = scmp.eq.s32.totalorder %s19, 1
      %p81 = por %p79, %p80
      %p83 = scmp.ne.s32.totalorder %s68, %s82
      %p84 = scmp.eq.s32.totalorder %s19, 0
      %p85 = por %p83, %p84
      %s87 = sadd.s32 %s86, 1
      %p90 = scmp.eq.s32.totalorder %s13, 1
      %p91 = scmp.ne.s32.totalorder %s86, %s88
      %p92 = scmp.eq.s32.totalorder %s13, 0
      %p93 = por %p91, %p92
      %p94 = scmp.ne.s32.totalorder %s86, %s88
      %p95 = scmp.eq.s32.totalorder %s18, 1
      %p96 = por %p94, %p95
      %p97 = scmp.ne.s32.totalorder %s88, %s89
      %p98 = scmp.eq.s32.totalorder %s18, 0
      %p99 = por %p97, %p98
      %p100 = scmp.ne.s32.totalorder %s88, %s89
      %p101 = scmp.eq.s32.totalorder %s19, 1
      %p102 = por %p100, %p101
      %p104 = scmp.ne.s32.totalorder %s89, %s103
      %p105 = scmp.eq.s32.totalorder %s19, 0
      %p106 = por %p104, %p105
      %s108 = sadd.s32 %s107, 1
      %p111 = scmp.eq.s32.totalorder %s13, 1
      %p112 = scmp.ne.s32.totalorder %s107, %s109
      %p113 = scmp.eq.s32.totalorder %s13, 0
      %p114 = por %p112, %p113
      %p115 = scmp.ne.s32.totalorder %s107, %s109
      %p116 = scmp.eq.s32.totalorder %s18, 1
      %p117 = por %p115, %p116
      %p118 = scmp.ne.s32.totalorder %s109, %s110
      %p119 = scmp.eq.s32.totalorder %s18, 0
      %p120 = por %p118, %p119
      %p121 = scmp.ne.s32.totalorder %s109, %s110
      %p122 = scmp.eq.s32.totalorder %s19, 1
      %p123 = por %p121, %p122
      %p125 = scmp.ne.s32.totalorder %s110, %s124
      %p126 = scmp.eq.s32.totalorder %s19, 0
      %p127 = por %p125, %p126
      %s129 = sadd.s32 %s128, 1
      %p132 = scmp.eq.s32.totalorder %s13, 1
      %p133 = scmp.ne.s32.totalorder %s128, %s130
      %p134 = scmp.eq.s32.totalorder %s13, 0
      %p135 = por %p133, %p134
      %p136 = scmp.ne.s32.totalorder %s128, %s130
      %p137 = scmp.eq.s32.totalorder %s18, 1
      %p138 = por %p136, %p137
      %p139 = scmp.ne.s32.totalorder %s130, %s131
      %p140 = scmp.eq.s32.totalorder %s18, 0
      %p141 = por %p139, %p140
      %p142 = scmp.ne.s32.totalorder %s130, %s131
      %p143 = scmp.eq.s32.totalorder %s19, 1
      %p144 = por %p142, %p143
      %p146 = scmp.ne.s32.totalorder %s131, %s145
      %p147 = scmp.eq.s32.totalorder %s19, 0
      %p148 = por %p146, %p147
      %s149 = ssub.s32 %s21, 1
      %p150 = scmp.gt.s32.totalorder %s149, 0
      %s151 = scalar_select %p150, %s149, 0
      %s152 = ssub.s32 %s28, 1
      %p153 = scmp.gt.s32.totalorder %s152, 0
      %s154 = scalar_select %p153, %s152, 0
      %s155 = ssub.s32 %s151, %s154
      %s156 = ssub.s32 %s20, %s32
      %s157 = sor.u32 %s155, %s156
      %p158 = scmp.eq.s32.totalorder %s157, 0
      %s160 = sadd.s32 %s159, 1
      %s161 = scalar_select %p158, %s159, %s160
      %p164 = pneg %p158
      %p165 = scmp.eq.s32.totalorder %s13, 1
      %p166 = por %p164, %p165
      %p167 = scmp.ne.s32.totalorder %s159, %s162
      %p168 = scmp.eq.s32.totalorder %s13, 0
      %p169 = por %p167, %p168
      %p170 = scmp.ne.s32.totalorder %s159, %s162
      %p171 = scmp.eq.s32.totalorder %s18, 1
      %p172 = por %p170, %p171
      %p173 = scmp.ne.s32.totalorder %s162, %s163
      %p174 = scmp.eq.s32.totalorder %s18, 0
      %p175 = por %p173, %p174
      %p176 = scmp.ne.s32.totalorder %s162, %s163
      %p177 = scmp.eq.s32.totalorder %s19, 1
      %p178 = por %p176, %p177
      %p180 = scmp.ne.s32.totalorder %s163, %s179
      %p181 = scmp.eq.s32.totalorder %s19, 0
      %p182 = por %p180, %p181
      %p183 = scmp.le.s32.totalorder 1, %s13
      %p184 = scmp.lt.s32.totalorder %s13, 3
      %p185 = pnand %p183, %p184
      %p186 = pneg %p185
      // Predicated region
      $region9: #{gru_model_forward.3} parent=5 // pred_check
        _
      $region10: #{gru_model_forward.3} parent=5 // pred_check_branch
        %188 = sbr.rel (%p185) target = $region12
      $region11: #{gru_model_forward.3} parent=5 // pred_region
        %s189 = ssub.s32 %s13, 1
        // Predicated region
        $region13: #{gru_model_forward.3} parent=11 // pred_check
          %p190 = pneg %p78
        $region14: #{gru_model_forward.3} parent=11 // pred_check_branch
          %192 = sbr.rel (%p190) target = $region16
        $region15: #{gru_model_forward.3} parent=11 // pred_region
          %s194 = ssub.s32 6144, 6144
          %195 = vsyncadd [#allocation5], %s194
          %s196 = sshll.u32 [#allocation4], 4
          %s197 = int_to_ptr.vmem [resolvable:$true] %s196
          %202 = dma.hbm_to_vmem [thread:$0]  %s1, 6144, %s197, [#allocation5], 384, 384, 24
        $region16: #{gru_model_forward.3} parent=11 // pred_fallthru
          _
        // Predicated region
        $region17: #{gru_model_forward.3} parent=11 // pred_check
          %p203 = pneg %p99
        $region18: #{gru_model_forward.3} parent=11 // pred_check_branch
          %205 = sbr.rel (%p203) target = $region20
        $region19: #{gru_model_forward.3} parent=11 // pred_region
          %s207 = ssub.s32 6144, 6144
          %208 = vsyncadd [#allocation7], %s207
          %s209 = sshll.u32 [#allocation6], 4
          %s210 = int_to_ptr.vmem [resolvable:$true] %s209
          %215 = dma.hbm_to_vmem [thread:$0]  %s2, 6144, %s210, [#allocation7], 384, 384, 24
        $region20: #{gru_model_forward.3} parent=11 // pred_fallthru
          _
        // Predicated region
        $region21: #{gru_model_forward.3} parent=11 // pred_check
          %p216 = pneg %p120
        $region22: #{gru_model_forward.3} parent=11 // pred_check_branch
          %218 = sbr.rel (%p216) target = $region24
        $region23: #{gru_model_forward.3} parent=11 // pred_region
          _
        $region24: #{gru_model_forward.3} parent=11 // pred_fallthru
          _
        // Predicated region
        $region25: #{gru_model_forward.3} parent=11 // pred_check
          %p219 = pneg %p141
        $region26: #{gru_model_forward.3} parent=11 // pred_check_branch
          %221 = sbr.rel (%p219) target = $region28
        $region27: #{gru_model_forward.3} parent=11 // pred_region
          _
        $region28: #{gru_model_forward.3} parent=11 // pred_fallthru
          _
      $region12: #{gru_model_forward.3} parent=5 // pred_fallthru
        _
      %p222 = scmp.lt.s32.totalorder %s13, 2
      // Predicated region
      $region29: #{gru_model_forward.3} parent=5 // pred_check
        %p223 = pneg %p222
      $region30: #{gru_model_forward.3} parent=5 // pred_check_branch
        %225 = sbr.rel (%p223) target = $region32
      $region31: #{gru_model_forward.3} parent=5 // pred_region
        // Predicated region
        $region33: #{gru_model_forward.3} parent=31 // pred_check
          %p226 = pneg %p51
        $region34: #{gru_model_forward.3} parent=31 // pred_check_branch
          %228 = sbr.rel (%p226) target = $region36
        $region35: #{gru_model_forward.3} parent=31 // pred_region
          %p229 = scmp.lt.s32.totalorder %s21, 0
          %s230 = scalar_select %p229, %s21, 0
          %s231 = smul.u32 8, %s230
          %p232 = scmp.lt.s32.totalorder %s231, 7
          %s233 = scalar_select %p232, %s231, 7
          %p234 = scmp.lt.s32.totalorder %s20, 0
          %s235 = scalar_select %p234, %s20, 0
          %s236 = sadd.s32 %s235, %s233
          %s237 = smul.addr %s236, 8
          %s238 = scalar_lea.vmem %s0, %s237
          %p239 = scmp.lt.s32.totalorder %s21, 0
          %s240 = scalar_select %p239, %s21, 0
          %s241 = smul.u32 8, %s240
        $region36: #{gru_model_forward.3} parent=31 // pred_fallthru
          _
      $region32: #{gru_model_forward.3} parent=5 // pred_fallthru
        _
      %p242 = scmp.le.s32.totalorder 1, %s13
      %p243 = scmp.lt.s32.totalorder %s13, 3
      %p244 = pnand %p242, %p243
      %p245 = pneg %p244
      // Predicated region
      $region37: #{gru_model_forward.3} parent=5 // pred_check
        _
      $region38: #{gru_model_forward.3} parent=5 // pred_check_branch
        %247 = sbr.rel (%p244) target = $region40
      $region39: #{gru_model_forward.3} parent=5 // pred_region
        %s248 = ssub.s32 %s13, 1
        // Predicated region
        $region41: #{gru_model_forward.3} parent=39 // pred_check
          %p249 = pneg %p78
        $region42: #{gru_model_forward.3} parent=39 // pred_check_branch
          %251 = sbr.rel (%p249) target = $region44
        $region43: #{gru_model_forward.3} parent=39 // pred_region
          %252 = dma.done [#allocation5], 6144
        $region44: #{gru_model_forward.3} parent=39 // pred_fallthru
          _
        // Predicated region
        $region45: #{gru_model_forward.3} parent=39 // pred_check
          %p253 = pneg %p99
        $region46: #{gru_model_forward.3} parent=39 // pred_check_branch
          %255 = sbr.rel (%p253) target = $region48
        $region47: #{gru_model_forward.3} parent=39 // pred_region
          %256 = dma.done [#allocation7], 6144
        $region48: #{gru_model_forward.3} parent=39 // pred_fallthru
          _
        %p257 = scmp.lt.s32.totalorder %s23, 0
        %s258 = scalar_select %p257, %s23, 0
        %s259 = smul.u32 8, %s258
        %p260 = scmp.lt.s32.totalorder %s259, 7
        %s261 = scalar_select %p260, %s259, 7
        %p262 = scmp.lt.s32.totalorder %s22, 0
        %s263 = scalar_select %p262, %s22, 0
        %s264 = sadd.s32 %s263, %s261
        %s265 = smul.addr %s264, 8
        %s266 = scalar_lea.vmem %s0, %s265
        %p267 = pneg %p57
        %p268 = pneg %p54
        %p269 = pneg %p78
        %p270 = pneg %p75
        %p271 = pneg %p99
        %p272 = pneg %p96
        %p273 = pneg %p120
        %p274 = pneg %p117
        %p275 = pneg %p141
        %p276 = pneg %p138
        %p277 = pneg %p175
        %p278 = pneg %p172
        %s279 = ssub.s32 %s23, 1
        %p280 = scmp.gt.s32.totalorder %s279, 0
        %s281 = scalar_select %p280, %s279, 0
        %s282 = smul.u32 8, %s281
        %p283 = scmp.lt.s32.totalorder %s282, 7
        %s284 = scalar_select %p283, %s282, 7
        %p285 = scmp.lt.s32.totalorder %s22, 0
        %s286 = scalar_select %p285, %s22, 0
        %s287 = sadd.s32 %s286, %s284
        %s288 = smul.addr %s287, 8
        %s289 = scalar_lea.vmem %s5, %s288
        %p290 = scmp.lt.s32.totalorder %s23, 0
        %s291 = scalar_select %p290, %s23, 0
        %s292 = smul.u32 8, %s291
        %p293 = scmp.lt.s32.totalorder %s292, 7
        %s294 = scalar_select %p293, %s292, 7
        %p295 = scmp.lt.s32.totalorder %s22, 0
        %s296 = scalar_select %p295, %s22, 0
        %s297 = sadd.s32 %s296, %s294
        %s298 = smul.addr %s297, 8
        %s299 = scalar_lea.vmem %s0, %s298
        %p300 = scmp.lt.s32.totalorder %s23, 0
        %s301 = scalar_select %p300, %s23, 0
        %s302 = smul.u32 8, %s301
        %s303 = ssub.s32 %s23, 1
        %p304 = scmp.gt.s32.totalorder %s303, 0
        %s305 = scalar_select %p304, %s303, 0
        %s306 = smul.u32 8, %s305
        %p307 = scmp.lt.s32.totalorder %s306, 7
        %s308 = scalar_select %p307, %s306, 7
        %p309 = scmp.lt.s32.totalorder %s22, 0
        %s310 = scalar_select %p309, %s22, 0
        %s311 = sadd.s32 %s310, %s308
        %s312 = smul.addr %s311, 8
        %s313 = scalar_lea.vmem %s5, %s312
        %s314 = ssub.s32 %s23, 1
        %p315 = scmp.gt.s32.totalorder %s314, 0
        %s316 = scalar_select %p315, %s314, 0
        %s317 = smul.u32 8, %s316
        %p318 = scmp.eq.s32.totalorder %s23, 0
        // Predicated region
        $region49: #{gru_model_forward.3} parent=39 // pred_check
          %p319 = pneg %p318
        $region50: #{gru_model_forward.3} parent=39 // pred_check_branch
          %321 = sbr.rel (%p319) target = $region52
        $region51: #{gru_model_forward.3} parent=39 // pred_region
          %322 = vst [vmem:[#allocation2] sm:$0xff] 0.0
          %p323 = scmp.lt.s32.totalorder %s23, 0
          %s324 = ssub.s32 0, %s23
          %s325 = scalar_select %p323, %s324, %s23
          %s326 = sand.u32 %s325, 1
          %s327 = ssub.s32 0, %s326
          %s328 = scalar_select %p323, %s327, %s326
          %p329 = scmp.ne.s32.totalorder %s328, 0
          %p330 = scmp.lt.s32.totalorder %s328, 0
          %p331 = pnand %p330, %p329
          %p332 = pneg %p331
          %s333 = sadd.s32 %s328, 2
          %s334 = scalar_select %p332, %s333, %s328
          %v335 = vld [vmem:[%s299] sm:$0xff]
          %v336 = vld [vmem:[%s299 + $0x8] sm:$0xff]
          %v337 = vld [vmem:[%s299 + $0x10] sm:$0xff]
          %v338 = vld [vmem:[%s299 + $0x18] sm:$0xff]
          %v339 = vld [vmem:[%s299 + $0x20] sm:$0xff]
          %v340 = vld [vmem:[%s299 + $0x28] sm:$0xff]
          %v341 = vld [vmem:[%s299 + $0x30] sm:$0xff]
          %v342 = vld [vmem:[%s299 + $0x38] sm:$0xff]
          %v343 = vld [vmem:[#allocation4] sm:$0xff]
          %v344 = vld [vmem:[#allocation4 + $0x8] sm:$0xff]
          %v345 = vld [vmem:[#allocation4 + $0x10] sm:$0xff]
          %v346 = vld [vmem:[#allocation4 + $0x18] sm:$0xff]
          %v347 = vld [vmem:[#allocation4 + $0x20] sm:$0xff]
          %v348 = vld [vmem:[#allocation4 + $0x28] sm:$0xff]
          %v349 = vld [vmem:[#allocation4 + $0x30] sm:$0xff]
          %v350 = vld [vmem:[#allocation4 + $0x38] sm:$0xff]
          %v351 = vld [vmem:[#allocation4 + $0x40] sm:$0xff]
          %v352 = vld [vmem:[#allocation4 + $0x48] sm:$0xff]
          %v353 = vld [vmem:[#allocation4 + $0x50] sm:$0xff]
          %v354 = vld [vmem:[#allocation4 + $0x58] sm:$0xff]
          %v355 = vld [vmem:[#allocation4 + $0x60] sm:$0xff]
          %v356 = vld [vmem:[#allocation4 + $0x68] sm:$0xff]
          %v357 = vld [vmem:[#allocation4 + $0x70] sm:$0xff]
          %v358 = vld [vmem:[#allocation4 + $0x78] sm:$0xff]
          %v359 = vld [vmem:[#allocation4 + $0x80] sm:$0xff]
          %v360 = vld [vmem:[#allocation4 + $0x88] sm:$0xff]
          %v361 = vld [vmem:[#allocation4 + $0x90] sm:$0xff]
          %v362 = vld [vmem:[#allocation4 + $0x98] sm:$0xff]
          %v363 = vld [vmem:[#allocation4 + $0xa0] sm:$0xff]
          %v364 = vld [vmem:[#allocation4 + $0xa8] sm:$0xff]
          %v365 = vld [vmem:[#allocation4 + $0xb0] sm:$0xff]
          %v366 = vld [vmem:[#allocation4 + $0xb8] sm:$0xff]
          %v367 = vld [vmem:[#allocation4 + $0xc0] sm:$0xff]
          %v368 = vld [vmem:[#allocation4 + $0xc8] sm:$0xff]
          %v369 = vld [vmem:[#allocation4 + $0xd0] sm:$0xff]
          %v370 = vld [vmem:[#allocation4 + $0xd8] sm:$0xff]
          %v371 = vld [vmem:[#allocation4 + $0xe0] sm:$0xff]
          %v372 = vld [vmem:[#allocation4 + $0xe8] sm:$0xff]
          %v373 = vld [vmem:[#allocation4 + $0xf0] sm:$0xff]
          %v374 = vld [vmem:[#allocation4 + $0xf8] sm:$0xff]
          %v375 = vld [vmem:[#allocation4 + $0x100] sm:$0xff]
          %v376 = vld [vmem:[#allocation4 + $0x108] sm:$0xff]
          %v377 = vld [vmem:[#allocation4 + $0x110] sm:$0xff]
          %v378 = vld [vmem:[#allocation4 + $0x118] sm:$0xff]
          %v379 = vld [vmem:[#allocation4 + $0x120] sm:$0xff]
          %v380 = vld [vmem:[#allocation4 + $0x128] sm:$0xff]
          %v381 = vld [vmem:[#allocation4 + $0x130] sm:$0xff]
          %v382 = vld [vmem:[#allocation4 + $0x138] sm:$0xff]
          %v383 = vld [vmem:[#allocation4 + $0x140] sm:$0xff]
          %v384 = vld [vmem:[#allocation4 + $0x148] sm:$0xff]
          %v385 = vld [vmem:[#allocation4 + $0x150] sm:$0xff]
          %v386 = vld [vmem:[#allocation4 + $0x158] sm:$0xff]
          %v387 = vld [vmem:[#allocation4 + $0x160] sm:$0xff]
          %v388 = vld [vmem:[#allocation4 + $0x168] sm:$0xff]
          %v389 = vld [vmem:[#allocation4 + $0x170] sm:$0xff]
          %v390 = vld [vmem:[#allocation4 + $0x178] sm:$0xff]
          %v391 = vld [vmem:[%s3] sm:$0x7]
          %v393 = vlaneseq
          %v394 = vshrl.u32 %v393, 7
          %v395 = vsub.s32 0, %v394
          %v396 = vrot.slane %v391, %v395
          %v397 = vlaneseq
          %v398 = vshrl.u32 %v397, 7
          %v399 = vsub.s32 1, %v398
          %v400 = vrot.slane %v391, %v399
          %v401 = vlaneseq
          %v402 = vshrl.u32 %v401, 7
          %v403 = vsub.s32 2, %v402
          %v404 = vrot.slane %v391, %v403
          %408 = vmatprep.subr.mxu0 %v344
          %409 = vmatpush1.msra.mxu0 %v343
          %410 = vmatprep.subr.mxu0 %v347
          %411 = vmatpush1.msra.mxu0 %v346
          %412 = vmatprep.subr.mxu0 %v350
          %413 = vmatpush1.msra.mxu0 %v349
          %414 = vmatprep.subr.mxu0 %v353
          %415 = vmatpush1.msra.mxu0 %v352
          %416 = vmatprep.subr.mxu0 %v356
          %417 = vmatpush1.msra.mxu0 %v355
          %418 = vmatprep.subr.mxu0 %v359
          %419 = vmatpush1.msra.mxu0 %v358
          %420 = vmatprep.subr.mxu0 %v362
          %421 = vmatpush1.msra.mxu0 %v361
          %422 = vmatprep.subr.mxu0 %v365
          %423 = vmatpush1.msra.mxu0 %v364
          %424 = vmatprep.subr.mxu0 %v368
          %425 = vmatpush1.msra.mxu0 %v367
          %426 = vmatprep.subr.mxu0 %v371
          %427 = vmatpush1.msra.mxu0 %v370
          %428 = vmatprep.subr.mxu0 %v374
          %429 = vmatpush1.msra.mxu0 %v373
          %430 = vmatprep.subr.mxu0 %v377
          %431 = vmatpush1.msra.mxu0 %v376
          %432 = vmatprep.subr.mxu0 %v380
          %433 = vmatpush1.msra.mxu0 %v379
          %434 = vmatprep.subr.mxu0 %v383
          %435 = vmatpush1.msra.mxu0 %v382
          %436 = vmatprep.subr.mxu0 %v386
          %437 = vmatpush1.msra.mxu0 %v385
          %438 = vmatprep.subr.mxu0 %v389
          %439 = vmatpush1.msra.mxu0 %v388
          %440 = vmatprep.subr.mxu0 0.0
          %441 = vmatpush1.msra.mxu0 0.0
          %442 = vmatprep.subr.mxu0 0.0
          %443 = vmatpush1.msra.mxu0 0.0
          %444 = vmatprep.subr.mxu0 0.0
          %445 = vmatpush1.msra.mxu0 0.0
          %446 = vmatprep.subr.mxu0 0.0
          %447 = vmatpush1.msra.mxu0 0.0
          %448 = vmatprep.subr.mxu0 0.0
          %449 = vmatpush1.msra.mxu0 0.0
          %450 = vmatprep.subr.mxu0 0.0
          %451 = vmatpush1.msra.mxu0 0.0
          %452 = vmatprep.subr.mxu0 0.0
          %453 = vmatpush1.msra.mxu0 0.0
          %454 = vmatprep.subr.mxu0 0.0
          %455 = vmatpush1.msra.mxu0 0.0
          %456 = vmatprep.subr.mxu0 0.0
          %457 = vmatpush1.msra.mxu0 0.0
          %458 = vmatprep.subr.mxu0 0.0
          %459 = vmatpush1.msra.mxu0 0.0
          %460 = vmatprep.subr.mxu0 0.0
          %461 = vmatpush1.msra.mxu0 0.0
          %462 = vmatprep.subr.mxu0 0.0
          %463 = vmatpush1.msra.mxu0 0.0
          %464 = vmatprep.subr.mxu0 0.0
          %465 = vmatpush1.msra.mxu0 0.0
          %466 = vmatprep.subr.mxu0 0.0
          %467 = vmatpush1.msra.mxu0 0.0
          %468 = vmatprep.subr.mxu0 0.0
          %469 = vmatpush1.msra.mxu0 0.0
          %470 = vmatprep.subr.mxu0 0.0
          %471 = vmatpush1.msra.mxu0 0.0
          %472 = vmatprep.mubr.f32.mxu0 0.0
          %473 = vmatmul.mubr.f32.gmra.mrb[0].mxu0 %v335
          %v474 = vpop.f32.mrb[0].mxu0
          %v475 = vadd.f32 %v396, %v474
          %v476 = vpop.f32.mrb[0].mxu0
          %v477 = vadd.f32 %v400, %v476
          %478 = vmatprep.mubr.f32.mxu0 0.0
          %479 = vmatmul.mubr.f32.gmra.mrb[0].mxu0 %v336
          %v480 = vpop.f32.mrb[0].mxu0
          %v481 = vadd.f32 %v396, %v480
          %v482 = vpop.f32.mrb[0].mxu0
          %v483 = vadd.f32 %v400, %v482
          %484 = vmatprep.mubr.f32.mxu0 0.0
          %485 = vmatmul.mubr.f32.gmra.mrb[0].mxu0 %v337
          %v486 = vpop.f32.mrb[0].mxu0
          %v487 = vadd.f32 %v396, %v486
          %v488 = vpop.f32.mrb[0].mxu0
          %v489 = vadd.f32 %v400, %v488
          %490 = vmatprep.mubr.f32.mxu0 0.0
          %491 = vmatmul.mubr.f32.gmra.mrb[0].mxu0 %v338
          %v492 = vpop.f32.mrb[0].mxu0
          %v493 = vadd.f32 %v396, %v492
          %v494 = vpop.f32.mrb[0].mxu0
          %v495 = vadd.f32 %v400, %v494
          %496 = vmatprep.mubr.f32.mxu0 0.0
          %497 = vmatmul.mubr.f32.gmra.mrb[0].mxu0 %v339
          %v498 = vpop.f32.mrb[0].mxu0
          %v499 = vadd.f32 %v396, %v498
          %v500 = vpop.f32.mrb[0].mxu0
          %v501 = vadd.f32 %v400, %v500
          %502 = vmatprep.mubr.f32.mxu0 0.0
          %503 = vmatmul.mubr.f32.gmra.mrb[0].mxu0 %v340
          %v504 = vpop.f32.mrb[0].mxu0
          %v505 = vadd.f32 %v396, %v504
          %v506 = vpop.f32.mrb[0].mxu0
          %v507 = vadd.f32 %v400, %v506
          %508 = vmatprep.mubr.f32.mxu0 0.0
          %509 = vmatmul.mubr.f32.gmra.mrb[0].mxu0 %v341
          %v510 = vpop.f32.mrb[0].mxu0
          %v511 = vadd.f32 %v396, %v510
          %v512 = vpop.f32.mrb[0].mxu0
          %v513 = vadd.f32 %v400, %v512
          %514 = vmatprep.mubr.f32.mxu0 0.0
          %515 = vmatmul.mubr.f32.gmra.mrb[0].mxu0 %v342
          %v516 = vpop.f32.mrb[0].mxu0
          %v517 = vadd.f32 %v396, %v516
          %v518 = vpop.f32.mrb[0].mxu0
          %v519 = vadd.f32 %v400, %v518
          %520 = vdwg.mxu0
          %521 = vmatprep.subr.mxu0 0.0
          %522 = vmatpush1.msra.mxu0 %v345
          %523 = vmatprep.subr.mxu0 0.0
          %524 = vmatpush1.msra.mxu0 %v348
          %525 = vmatprep.subr.mxu0 0.0
          %526 = vmatpush1.msra.mxu0 %v351
          %527 = vmatprep.subr.mxu0 0.0
          %528 = vmatpush1.msra.mxu0 %v354
          %529 = vmatprep.subr.mxu0 0.0
          %530 = vmatpush1.msra.mxu0 %v357
          %531 = vmatprep.subr.mxu0 0.0
          %532 = vmatpush1.msra.mxu0 %v360
          %533 = vmatprep.subr.mxu0 0.0
          %534 = vmatpush1.msra.mxu0 %v363
          %535 = vmatprep.subr.mxu0 0.0
          %536 = vmatpush1.msra.mxu0 %v366
          %537 = vmatprep.subr.mxu0 0.0
          %538 = vmatpush1.msra.mxu0 %v369
          %539 = vmatprep.subr.mxu0 0.0
          %540 = vmatpush1.msra.mxu0 %v372
          %541 = vmatprep.subr.mxu0 0.0
          %542 = vmatpush1.msra.mxu0 %v375
          %543 = vmatprep.subr.mxu0 0.0
          %544 = vmatpush1.msra.mxu0 %v378
          %545 = vmatprep.subr.mxu0 0.0
          %546 = vmatpush1.msra.mxu0 %v381
          %547 = vmatprep.subr.mxu0 0.0
          %548 = vmatpush1.msra.mxu0 %v384
          %549 = vmatprep.subr.mxu0 0.0
          %550 = vmatpush1.msra.mxu0 %v387
          %551 = vmatprep.subr.mxu0 0.0
          %552 = vmatpush1.msra.mxu0 %v390
          %553 = vmatprep.subr.mxu0 0.0
          %554 = vmatpush1.msra.mxu0 0.0
          %555 = vmatprep.subr.mxu0 0.0
          %556 = vmatpush1.msra.mxu0 0.0
          %557 = vmatprep.subr.mxu0 0.0
          %558 = vmatpush1.msra.mxu0 0.0
          %559 = vmatprep.subr.mxu0 0.0
          %560 = vmatpush1.msra.mxu0 0.0
          %561 = vmatprep.subr.mxu0 0.0
          %562 = vmatpush1.msra.mxu0 0.0
          %563 = vmatprep.subr.mxu0 0.0
          %564 = vmatpush1.msra.mxu0 0.0
          %565 = vmatprep.subr.mxu0 0.0
          %566 = vmatpush1.msra.mxu0 0.0
          %567 = vmatprep.subr.mxu0 0.0
          %568 = vmatpush1.msra.mxu0 0.0
          %569 = vmatprep.subr.mxu0 0.0
          %570 = vmatpush1.msra.mxu0 0.0
          %571 = vmatprep.subr.mxu0 0.0
          %572 = vmatpush1.msra.mxu0 0.0
          %573 = vmatprep.subr.mxu0 0.0
          %574 = vmatpush1.msra.mxu0 0.0
          %575 = vmatprep.subr.mxu0 0.0
          %576 = vmatpush1.msra.mxu0 0.0
          %577 = vmatprep.subr.mxu0 0.0
          %578 = vmatpush1.msra.mxu0 0.0
          %579 = vmatprep.subr.mxu0 0.0
          %580 = vmatpush1.msra.mxu0 0.0
          %581 = vmatprep.subr.mxu0 0.0
          %582 = vmatpush1.msra.mxu0 0.0
          %583 = vmatprep.subr.mxu0 0.0
          %584 = vmatpush1.msra.mxu0 0.0
          %585 = vmatprep.mubr.f32.mxu0 0.0
          %586 = vmatmul.mubr.f32.gmra.mrb[0].mxu0 %v335
          %v587 = vpop.f32.mrb[0].mxu0
          %v588 = vadd.f32 %v404, %v587
          %v589 = vpop.f32.mrb[0].mxu0
          %590 = vmatprep.mubr.f32.mxu0 0.0
          %591 = vmatmul.mubr.f32.gmra.mrb[0].mxu0 %v336
          %v592 = vpop.f32.mrb[0].mxu0
          %v593 = vadd.f32 %v404, %v592
          %v594 = vpop.f32.mrb[0].mxu0
          %595 = vmatprep.mubr.f32.mxu0 0.0
          %596 = vmatmul.mubr.f32.gmra.mrb[0].mxu0 %v337
          %v597 = vpop.f32.mrb[0].mxu0
          %v598 = vadd.f32 %v404, %v597
          %v599 = vpop.f32.mrb[0].mxu0
          %600 = vmatprep.mubr.f32.mxu0 0.0
          %601 = vmatmul.mubr.f32.gmra.mrb[0].mxu0 %v338
          %v602 = vpop.f32.mrb[0].mxu0
          %v603 = vadd.f32 %v404, %v602
          %v604 = vpop.f32.mrb[0].mxu0
          %605 = vmatprep.mubr.f32.mxu0 0.0
          %606 = vmatmul.mubr.f32.gmra.mrb[0].mxu0 %v339
          %v607 = vpop.f32.mrb[0].mxu0
          %v608 = vadd.f32 %v404, %v607
          %v609 = vpop.f32.mrb[0].mxu0
          %610 = vmatprep.mubr.f32.mxu0 0.0
          %611 = vmatmul.mubr.f32.gmra.mrb[0].mxu0 %v340
          %v612 = vpop.f32.mrb[0].mxu0
          %v613 = vadd.f32 %v404, %v612
          %v614 = vpop.f32.mrb[0].mxu0
          %615 = vmatprep.mubr.f32.mxu0 0.0
          %616 = vmatmul.mubr.f32.gmra.mrb[0].mxu0 %v341
          %v617 = vpop.f32.mrb[0].mxu0
          %v618 = vadd.f32 %v404, %v617
          %v619 = vpop.f32.mrb[0].mxu0
          %620 = vmatprep.mubr.f32.mxu0 0.0
          %621 = vmatmul.mubr.f32.gmra.mrb[0].mxu0 %v342
          %v622 = vpop.f32.mrb[0].mxu0
          %v623 = vadd.f32 %v404, %v622
          %v624 = vpop.f32.mrb[0].mxu0
          %625 = vdwg.mxu0
          %s626 = smul.u32 %s334, 8
          %s627 = smul.u32 %s626, 3
          %s628 = smul.addr %s627, 8
          %s629 = scalar_lea.vmem [#allocation3], %s628
          %630 = vst [vmem:[%s629] sm:$0xff] %v475
          %631 = vst [vmem:[%s629 + $0x8] sm:$0xff] %v477
          %632 = vst [vmem:[%s629 + $0x10] sm:$0xff] %v588
          %633 = vst [vmem:[%s629 + $0x18] sm:$0xff] %v481
          %634 = vst [vmem:[%s629 + $0x20] sm:$0xff] %v483
          %635 = vst [vmem:[%s629 + $0x28] sm:$0xff] %v593
          %636 = vst [vmem:[%s629 + $0x30] sm:$0xff] %v487
          %637 = vst [vmem:[%s629 + $0x38] sm:$0xff] %v489
          %638 = vst [vmem:[%s629 + $0x40] sm:$0xff] %v598
          %639 = vst [vmem:[%s629 + $0x48] sm:$0xff] %v493
          %640 = vst [vmem:[%s629 + $0x50] sm:$0xff] %v495
          %641 = vst [vmem:[%s629 + $0x58] sm:$0xff] %v603
          %642 = vst [vmem:[%s629 + $0x60] sm:$0xff] %v499
          %643 = vst [vmem:[%s629 + $0x68] sm:$0xff] %v501
          %644 = vst [vmem:[%s629 + $0x70] sm:$0xff] %v608
          %645 = vst [vmem:[%s629 + $0x78] sm:$0xff] %v505
          %646 = vst [vmem:[%s629 + $0x80] sm:$0xff] %v507
          %647 = vst [vmem:[%s629 + $0x88] sm:$0xff] %v613
          %648 = vst [vmem:[%s629 + $0x90] sm:$0xff] %v511
          %649 = vst [vmem:[%s629 + $0x98] sm:$0xff] %v513
          %650 = vst [vmem:[%s629 + $0xa0] sm:$0xff] %v618
          %651 = vst [vmem:[%s629 + $0xa8] sm:$0xff] %v517
          %652 = vst [vmem:[%s629 + $0xb0] sm:$0xff] %v519
          %653 = vst [vmem:[%s629 + $0xb8] sm:$0xff] %v623
        $region52: #{gru_model_forward.3} parent=39 // pred_fallthru
          _
        %p654 = scmp.gt.s32.totalorder %s23, 0
        %p655 = scmp.lt.s32.totalorder %s23, 1
        %p656 = pnand %p654, %p655
        %p657 = pneg %p656
        // Predicated region
        $region53: #{gru_model_forward.3} parent=39 // pred_check
          _
        $region54: #{gru_model_forward.3} parent=39 // pred_check_branch
          %659 = sbr.rel (%p656) target = $region56
        $region55: #{gru_model_forward.3} parent=39 // pred_region
          %p660 = scmp.lt.s32.totalorder %s23, 0
          %s661 = ssub.s32 0, %s23
          %s662 = scalar_select %p660, %s661, %s23
          %s663 = sand.u32 %s662, 1
          %s664 = ssub.s32 0, %s663
          %s665 = scalar_select %p660, %s664, %s663
          %p666 = scmp.ne.s32.totalorder %s665, 0
          %p667 = scmp.lt.s32.totalorder %s665, 0
          %p668 = pnand %p667, %p666
          %p669 = pneg %p668
          %s670 = sadd.s32 %s665, 2
          %s671 = scalar_select %p669, %s670, %s665
          %v672 = vld [vmem:[%s299] sm:$0xff]
          %v673 = vld [vmem:[%s299 + $0x8] sm:$0xff]
          %v674 = vld [vmem:[%s299 + $0x10] sm:$0xff]
          %v675 = vld [vmem:[%s299 + $0x18] sm:$0xff]
          %v676 = vld [vmem:[%s299 + $0x20] sm:$0xff]
          %v677 = vld [vmem:[%s299 + $0x28] sm:$0xff]
          %v678 = vld [vmem:[%s299 + $0x30] sm:$0xff]
          %v679 = vld [vmem:[%s299 + $0x38] sm:$0xff]
          %v680 = vld [vmem:[#allocation4] sm:$0xff]
          %v681 = vld [vmem:[#allocation4 + $0x8] sm:$0xff]
          %v682 = vld [vmem:[#allocation4 + $0x10] sm:$0xff]
          %v683 = vld [vmem:[#allocation4 + $0x18] sm:$0xff]
          %v684 = vld [vmem:[#allocation4 + $0x20] sm:$0xff]
          %v685 = vld [vmem:[#allocation4 + $0x28] sm:$0xff]
          %v686 = vld [vmem:[#allocation4 + $0x30] sm:$0xff]
          %v687 = vld [vmem:[#allocation4 + $0x38] sm:$0xff]
          %v688 = vld [vmem:[#allocation4 + $0x40] sm:$0xff]
          %v689 = vld [vmem:[#allocation4 + $0x48] sm:$0xff]
          %v690 = vld [vmem:[#allocation4 + $0x50] sm:$0xff]
          %v691 = vld [vmem:[#allocation4 + $0x58] sm:$0xff]
          %v692 = vld [vmem:[#allocation4 + $0x60] sm:$0xff]
          %v693 = vld [vmem:[#allocation4 + $0x68] sm:$0xff]
          %v694 = vld [vmem:[#allocation4 + $0x70] sm:$0xff]
          %v695 = vld [vmem:[#allocation4 + $0x78] sm:$0xff]
          %v696 = vld [vmem:[#allocation4 + $0x80] sm:$0xff]
          %v697 = vld [vmem:[#allocation4 + $0x88] sm:$0xff]
          %v698 = vld [vmem:[#allocation4 + $0x90] sm:$0xff]
          %v699 = vld [vmem:[#allocation4 + $0x98] sm:$0xff]
          %v700 = vld [vmem:[#allocation4 + $0xa0] sm:$0xff]
          %v701 = vld [vmem:[#allocation4 + $0xa8] sm:$0xff]
          %v702 = vld [vmem:[#allocation4 + $0xb0] sm:$0xff]
          %v703 = vld [vmem:[#allocation4 + $0xb8] sm:$0xff]
          %v704 = vld [vmem:[#allocation4 + $0xc0] sm:$0xff]
          %v705 = vld [vmem:[#allocation4 + $0xc8] sm:$0xff]
          %v706 = vld [vmem:[#allocation4 + $0xd0] sm:$0xff]
          %v707 = vld [vmem:[#allocation4 + $0xd8] sm:$0xff]
          %v708 = vld [vmem:[#allocation4 + $0xe0] sm:$0xff]
          %v709 = vld [vmem:[#allocation4 + $0xe8] sm:$0xff]
          %v710 = vld [vmem:[#allocation4 + $0xf0] sm:$0xff]
          %v711 = vld [vmem:[#allocation4 + $0xf8] sm:$0xff]
          %v712 = vld [vmem:[#allocation4 + $0x100] sm:$0xff]
          %v713 = vld [vmem:[#allocation4 + $0x108] sm:$0xff]
          %v714 = vld [vmem:[#allocation4 + $0x110] sm:$0xff]
          %v715 = vld [vmem:[#allocation4 + $0x118] sm:$0xff]
          %v716 = vld [vmem:[#allocation4 + $0x120] sm:$0xff]
          %v717 = vld [vmem:[#allocation4 + $0x128] sm:$0xff]
          %v718 = vld [vmem:[#allocation4 + $0x130] sm:$0xff]
          %v719 = vld [vmem:[#allocation4 + $0x138] sm:$0xff]
          %v720 = vld [vmem:[#allocation4 + $0x140] sm:$0xff]
          %v721 = vld [vmem:[#allocation4 + $0x148] sm:$0xff]
          %v722 = vld [vmem:[#allocation4 + $0x150] sm:$0xff]
          %v723 = vld [vmem:[#allocation4 + $0x158] sm:$0xff]
          %v724 = vld [vmem:[#allocation4 + $0x160] sm:$0xff]
          %v725 = vld [vmem:[#allocation4 + $0x168] sm:$0xff]
          %v726 = vld [vmem:[#allocation4 + $0x170] sm:$0xff]
          %v727 = vld [vmem:[#allocation4 + $0x178] sm:$0xff]
          %v728 = vld [vmem:[%s3] sm:$0x7]
          %v730 = vlaneseq
          %v731 = vshrl.u32 %v730, 7
          %v732 = vsub.s32 0, %v731
          %v733 = vrot.slane %v728, %v732
          %v734 = vlaneseq
          %v735 = vshrl.u32 %v734, 7
          %v736 = vsub.s32 1, %v735
          %v737 = vrot.slane %v728, %v736
          %v738 = vlaneseq
          %v739 = vshrl.u32 %v738, 7
          %v740 = vsub.s32 2, %v739
          %v741 = vrot.slane %v728, %v740
          %745 = vmatprep.subr.mxu0 %v681
          %746 = vmatpush1.msra.mxu0 %v680
          %747 = vmatprep.subr.mxu0 %v684
          %748 = vmatpush1.msra.mxu0 %v683
          %749 = vmatprep.subr.mxu0 %v687
          %750 = vmatpush1.msra.mxu0 %v686
          %751 = vmatprep.subr.mxu0 %v690
          %752 = vmatpush1.msra.mxu0 %v689
          %753 = vmatprep.subr.mxu0 %v693
          %754 = vmatpush1.msra.mxu0 %v692
          %755 = vmatprep.subr.mxu0 %v696
          %756 = vmatpush1.msra.mxu0 %v695
          %757 = vmatprep.subr.mxu0 %v699
          %758 = vmatpush1.msra.mxu0 %v698
          %759 = vmatprep.subr.mxu0 %v702
          %760 = vmatpush1.msra.mxu0 %v701
          %761 = vmatprep.subr.mxu0 %v705
          %762 = vmatpush1.msra.mxu0 %v704
          %763 = vmatprep.subr.mxu0 %v708
          %764 = vmatpush1.msra.mxu0 %v707
          %765 = vmatprep.subr.mxu0 %v711
          %766 = vmatpush1.msra.mxu0 %v710
          %767 = vmatprep.subr.mxu0 %v714
          %768 = vmatpush1.msra.mxu0 %v713
          %769 = vmatprep.subr.mxu0 %v717
          %770 = vmatpush1.msra.mxu0 %v716
          %771 = vmatprep.subr.mxu0 %v720
          %772 = vmatpush1.msra.mxu0 %v719
          %773 = vmatprep.subr.mxu0 %v723
          %774 = vmatpush1.msra.mxu0 %v722
          %775 = vmatprep.subr.mxu0 %v726
          %776 = vmatpush1.msra.mxu0 %v725
          %777 = vmatprep.subr.mxu0 0.0
          %778 = vmatpush1.msra.mxu0 0.0
          %779 = vmatprep.subr.mxu0 0.0
          %780 = vmatpush1.msra.mxu0 0.0
          %781 = vmatprep.subr.mxu0 0.0
          %782 = vmatpush1.msra.mxu0 0.0
          %783 = vmatprep.subr.mxu0 0.0
          %784 = vmatpush1.msra.mxu0 0.0
          %785 = vmatprep.subr.mxu0 0.0
          %786 = vmatpush1.msra.mxu0 0.0
          %787 = vmatprep.subr.mxu0 0.0
          %788 = vmatpush1.msra.mxu0 0.0
          %789 = vmatprep.subr.mxu0 0.0
          %790 = vmatpush1.msra.mxu0 0.0
          %791 = vmatprep.subr.mxu0 0.0
          %792 = vmatpush1.msra.mxu0 0.0
          %793 = vmatprep.subr.mxu0 0.0
          %794 = vmatpush1.msra.mxu0 0.0
          %795 = vmatprep.subr.mxu0 0.0
          %796 = vmatpush1.msra.mxu0 0.0
          %797 = vmatprep.subr.mxu0 0.0
          %798 = vmatpush1.msra.mxu0 0.0
          %799 = vmatprep.subr.mxu0 0.0
          %800 = vmatpush1.msra.mxu0 0.0
          %801 = vmatprep.subr.mxu0 0.0
          %802 = vmatpush1.msra.mxu0 0.0
          %803 = vmatprep.subr.mxu0 0.0
          %804 = vmatpush1.msra.mxu0 0.0
          %805 = vmatprep.subr.mxu0 0.0
          %806 = vmatpush1.msra.mxu0 0.0
          %807 = vmatprep.subr.mxu0 0.0
          %808 = vmatpush1.msra.mxu0 0.0
          %809 = vmatprep.mubr.f32.mxu0 0.0
          %810 = vmatmul.mubr.f32.gmra.mrb[0].mxu0 %v672
          %v811 = vpop.f32.mrb[0].mxu0
          %v812 = vadd.f32 %v733, %v811
          %v813 = vpop.f32.mrb[0].mxu0
          %v814 = vadd.f32 %v737, %v813
          %815 = vmatprep.mubr.f32.mxu0 0.0
          %816 = vmatmul.mubr.f32.gmra.mrb[0].mxu0 %v673
          %v817 = vpop.f32.mrb[0].mxu0
          %v818 = vadd.f32 %v733, %v817
          %v819 = vpop.f32.mrb[0].mxu0
          %v820 = vadd.f32 %v737, %v819
          %821 = vmatprep.mubr.f32.mxu0 0.0
          %822 = vmatmul.mubr.f32.gmra.mrb[0].mxu0 %v674
          %v823 = vpop.f32.mrb[0].mxu0
          %v824 = vadd.f32 %v733, %v823
          %v825 = vpop.f32.mrb[0].mxu0
          %v826 = vadd.f32 %v737, %v825
          %827 = vmatprep.mubr.f32.mxu0 0.0
          %828 = vmatmul.mubr.f32.gmra.mrb[0].mxu0 %v675
          %v829 = vpop.f32.mrb[0].mxu0
          %v830 = vadd.f32 %v733, %v829
          %v831 = vpop.f32.mrb[0].mxu0
          %v832 = vadd.f32 %v737, %v831
          %833 = vmatprep.mubr.f32.mxu0 0.0
          %834 = vmatmul.mubr.f32.gmra.mrb[0].mxu0 %v676
          %v835 = vpop.f32.mrb[0].mxu0
          %v836 = vadd.f32 %v733, %v835
          %v837 = vpop.f32.mrb[0].mxu0
          %v838 = vadd.f32 %v737, %v837
          %839 = vmatprep.mubr.f32.mxu0 0.0
          %840 = vmatmul.mubr.f32.gmra.mrb[0].mxu0 %v677
          %v841 = vpop.f32.mrb[0].mxu0
          %v842 = vadd.f32 %v733, %v841
          %v843 = vpop.f32.mrb[0].mxu0
          %v844 = vadd.f32 %v737, %v843
          %845 = vmatprep.mubr.f32.mxu0 0.0
          %846 = vmatmul.mubr.f32.gmra.mrb[0].mxu0 %v678
          %v847 = vpop.f32.mrb[0].mxu0
          %v848 = vadd.f32 %v733, %v847
          %v849 = vpop.f32.mrb[0].mxu0
          %v850 = vadd.f32 %v737, %v849
          %851 = vmatprep.mubr.f32.mxu0 0.0
          %852 = vmatmul.mubr.f32.gmra.mrb[0].mxu0 %v679
          %v853 = vpop.f32.mrb[0].mxu0
          %v854 = vadd.f32 %v733, %v853
          %v855 = vpop.f32.mrb[0].mxu0
          %v856 = vadd.f32 %v737, %v855
          %857 = vdwg.mxu0
          %858 = vmatprep.subr.mxu0 0.0
          %859 = vmatpush1.msra.mxu0 %v682
          %860 = vmatprep.subr.mxu0 0.0
          %861 = vmatpush1.msra.mxu0 %v685
          %862 = vmatprep.subr.mxu0 0.0
          %863 = vmatpush1.msra.mxu0 %v688
          %864 = vmatprep.subr.mxu0 0.0
          %865 = vmatpush1.msra.mxu0 %v691
          %866 = vmatprep.subr.mxu0 0.0
          %867 = vmatpush1.msra.mxu0 %v694
          %868 = vmatprep.subr.mxu0 0.0
          %869 = vmatpush1.msra.mxu0 %v697
          %870 = vmatprep.subr.mxu0 0.0
          %871 = vmatpush1.msra.mxu0 %v700
          %872 = vmatprep.subr.mxu0 0.0
          %873 = vmatpush1.msra.mxu0 %v703
          %874 = vmatprep.subr.mxu0 0.0
          %875 = vmatpush1.msra.mxu0 %v706
          %876 = vmatprep.subr.mxu0 0.0
          %877 = vmatpush1.msra.mxu0 %v709
          %878 = vmatprep.subr.mxu0 0.0
          %879 = vmatpush1.msra.mxu0 %v712
          %880 = vmatprep.subr.mxu0 0.0
          %881 = vmatpush1.msra.mxu0 %v715
          %882 = vmatprep.subr.mxu0 0.0
          %883 = vmatpush1.msra.mxu0 %v718
          %884 = vmatprep.subr.mxu0 0.0
          %885 = vmatpush1.msra.mxu0 %v721
          %886 = vmatprep.subr.mxu0 0.0
          %887 = vmatpush1.msra.mxu0 %v724
          %888 = vmatprep.subr.mxu0 0.0
          %889 = vmatpush1.msra.mxu0 %v727
          %890 = vmatprep.subr.mxu0 0.0
          %891 = vmatpush1.msra.mxu0 0.0
          %892 = vmatprep.subr.mxu0 0.0
          %893 = vmatpush1.msra.mxu0 0.0
          %894 = vmatprep.subr.mxu0 0.0
          %895 = vmatpush1.msra.mxu0 0.0
          %896 = vmatprep.subr.mxu0 0.0
          %897 = vmatpush1.msra.mxu0 0.0
          %898 = vmatprep.subr.mxu0 0.0
          %899 = vmatpush1.msra.mxu0 0.0
          %900 = vmatprep.subr.mxu0 0.0
          %901 = vmatpush1.msra.mxu0 0.0
          %902 = vmatprep.subr.mxu0 0.0
          %903 = vmatpush1.msra.mxu0 0.0
          %904 = vmatprep.subr.mxu0 0.0
          %905 = vmatpush1.msra.mxu0 0.0
          %906 = vmatprep.subr.mxu0 0.0
          %907 = vmatpush1.msra.mxu0 0.0
          %908 = vmatprep.subr.mxu0 0.0
          %909 = vmatpush1.msra.mxu0 0.0
          %910 = vmatprep.subr.mxu0 0.0
          %911 = vmatpush1.msra.mxu0 0.0
          %912 = vmatprep.subr.mxu0 0.0
          %913 = vmatpush1.msra.mxu0 0.0
          %914 = vmatprep.subr.mxu0 0.0
          %915 = vmatpush1.msra.mxu0 0.0
          %916 = vmatprep.subr.mxu0 0.0
          %917 = vmatpush1.msra.mxu0 0.0
          %918 = vmatprep.subr.mxu0 0.0
          %919 = vmatpush1.msra.mxu0 0.0
          %920 = vmatprep.subr.mxu0 0.0
          %921 = vmatpush1.msra.mxu0 0.0
          %922 = vmatprep.mubr.f32.mxu0 0.0
          %923 = vmatmul.mubr.f32.gmra.mrb[0].mxu0 %v672
          %v924 = vpop.f32.mrb[0].mxu0
          %v925 = vadd.f32 %v741, %v924
          %v926 = vpop.f32.mrb[0].mxu0
          %927 = vmatprep.mubr.f32.mxu0 0.0
          %928 = vmatmul.mubr.f32.gmra.mrb[0].mxu0 %v673
          %v929 = vpop.f32.mrb[0].mxu0
          %v930 = vadd.f32 %v741, %v929
          %v931 = vpop.f32.mrb[0].mxu0
          %932 = vmatprep.mubr.f32.mxu0 0.0
          %933 = vmatmul.mubr.f32.gmra.mrb[0].mxu0 %v674
          %v934 = vpop.f32.mrb[0].mxu0
          %v935 = vadd.f32 %v741, %v934
          %v936 = vpop.f32.mrb[0].mxu0
          %937 = vmatprep.mubr.f32.mxu0 0.0
          %938 = vmatmul.mubr.f32.gmra.mrb[0].mxu0 %v675
          %v939 = vpop.f32.mrb[0].mxu0
          %v940 = vadd.f32 %v741, %v939
          %v941 = vpop.f32.mrb[0].mxu0
          %942 = vmatprep.mubr.f32.mxu0 0.0
          %943 = vmatmul.mubr.f32.gmra.mrb[0].mxu0 %v676
          %v944 = vpop.f32.mrb[0].mxu0
          %v945 = vadd.f32 %v741, %v944
          %v946 = vpop.f32.mrb[0].mxu0
          %947 = vmatprep.mubr.f32.mxu0 0.0
          %948 = vmatmul.mubr.f32.gmra.mrb[0].mxu0 %v677
          %v949 = vpop.f32.mrb[0].mxu0
          %v950 = vadd.f32 %v741, %v949
          %v951 = vpop.f32.mrb[0].mxu0
          %952 = vmatprep.mubr.f32.mxu0 0.0
          %953 = vmatmul.mubr.f32.gmra.mrb[0].mxu0 %v678
          %v954 = vpop.f32.mrb[0].mxu0
          %v955 = vadd.f32 %v741, %v954
          %v956 = vpop.f32.mrb[0].mxu0
          %957 = vmatprep.mubr.f32.mxu0 0.0
          %958 = vmatmul.mubr.f32.gmra.mrb[0].mxu0 %v679
          %v959 = vpop.f32.mrb[0].mxu0
          %v960 = vadd.f32 %v741, %v959
          %v961 = vpop.f32.mrb[0].mxu0
          %962 = vdwg.mxu0
          %s963 = smul.u32 %s671, 8
          %s964 = smul.u32 %s963, 3
          %s965 = smul.addr %s964, 8
          %s966 = scalar_lea.vmem [#allocation3], %s965
          %967 = vst [vmem:[%s966] sm:$0xff] %v812
          %968 = vst [vmem:[%s966 + $0x8] sm:$0xff] %v814
          %969 = vst [vmem:[%s966 + $0x10] sm:$0xff] %v925
          %970 = vst [vmem:[%s966 + $0x18] sm:$0xff] %v818
          %971 = vst [vmem:[%s966 + $0x20] sm:$0xff] %v820
          %972 = vst [vmem:[%s966 + $0x28] sm:$0xff] %v930
          %973 = vst [vmem:[%s966 + $0x30] sm:$0xff] %v824
          %974 = vst [vmem:[%s966 + $0x38] sm:$0xff] %v826
          %975 = vst [vmem:[%s966 + $0x40] sm:$0xff] %v935
          %976 = vst [vmem:[%s966 + $0x48] sm:$0xff] %v830
          %977 = vst [vmem:[%s966 + $0x50] sm:$0xff] %v832
          %978 = vst [vmem:[%s966 + $0x58] sm:$0xff] %v940
          %979 = vst [vmem:[%s966 + $0x60] sm:$0xff] %v836
          %980 = vst [vmem:[%s966 + $0x68] sm:$0xff] %v838
          %981 = vst [vmem:[%s966 + $0x70] sm:$0xff] %v945
          %982 = vst [vmem:[%s966 + $0x78] sm:$0xff] %v842
          %983 = vst [vmem:[%s966 + $0x80] sm:$0xff] %v844
          %984 = vst [vmem:[%s966 + $0x88] sm:$0xff] %v950
          %985 = vst [vmem:[%s966 + $0x90] sm:$0xff] %v848
          %986 = vst [vmem:[%s966 + $0x98] sm:$0xff] %v850
          %987 = vst [vmem:[%s966 + $0xa0] sm:$0xff] %v955
          %988 = vst [vmem:[%s966 + $0xa8] sm:$0xff] %v854
          %989 = vst [vmem:[%s966 + $0xb0] sm:$0xff] %v856
          %990 = vst [vmem:[%s966 + $0xb8] sm:$0xff] %v960
          %s991 = ssub.s32 %s23, 1
          %p992 = scmp.lt.s32.totalorder %s991, 0
          %s993 = ssub.s32 0, %s991
          %s994 = scalar_select %p992, %s993, %s991
          %s995 = sand.u32 %s994, 1
          %s996 = ssub.s32 0, %s995
          %s997 = scalar_select %p992, %s996, %s995
          %p998 = scmp.ne.s32.totalorder %s997, 0
          %p999 = scmp.lt.s32.totalorder %s997, 0
          %p1000 = pnand %p999, %p998
          %p1001 = pneg %p1000
          %s1002 = sadd.s32 %s997, 2
          %s1003 = scalar_select %p1001, %s1002, %s997
          %s1004 = smul.u32 %s1003, 8
          %v1005 = vld [vmem:[#allocation6] sm:$0xff]
          %v1006 = vld [vmem:[#allocation6 + $0x8] sm:$0xff]
          %v1007 = vld [vmem:[#allocation6 + $0x10] sm:$0xff]
          %v1008 = vld [vmem:[#allocation6 + $0x18] sm:$0xff]
          %v1009 = vld [vmem:[#allocation6 + $0x20] sm:$0xff]
          %v1010 = vld [vmem:[#allocation6 + $0x28] sm:$0xff]
          %v1011 = vld [vmem:[#allocation6 + $0x30] sm:$0xff]
          %v1012 = vld [vmem:[#allocation6 + $0x38] sm:$0xff]
          %v1013 = vld [vmem:[#allocation6 + $0x40] sm:$0xff]
          %v1014 = vld [vmem:[#allocation6 + $0x48] sm:$0xff]
          %v1015 = vld [vmem:[#allocation6 + $0x50] sm:$0xff]
          %v1016 = vld [vmem:[#allocation6 + $0x58] sm:$0xff]
          %v1017 = vld [vmem:[#allocation6 + $0x60] sm:$0xff]
          %v1018 = vld [vmem:[#allocation6 + $0x68] sm:$0xff]
          %v1019 = vld [vmem:[#allocation6 + $0x70] sm:$0xff]
          %v1020 = vld [vmem:[#allocation6 + $0x78] sm:$0xff]
          %v1021 = vld [vmem:[#allocation6 + $0x80] sm:$0xff]
          %v1022 = vld [vmem:[#allocation6 + $0x88] sm:$0xff]
          %v1023 = vld [vmem:[#allocation6 + $0x90] sm:$0xff]
          %v1024 = vld [vmem:[#allocation6 + $0x98] sm:$0xff]
          %v1025 = vld [vmem:[#allocation6 + $0xa0] sm:$0xff]
          %v1026 = vld [vmem:[#allocation6 + $0xa8] sm:$0xff]
          %v1027 = vld [vmem:[#allocation6 + $0xb0] sm:$0xff]
          %v1028 = vld [vmem:[#allocation6 + $0xb8] sm:$0xff]
          %v1029 = vld [vmem:[#allocation6 + $0xc0] sm:$0xff]
          %v1030 = vld [vmem:[#allocation6 + $0xc8] sm:$0xff]
          %v1031 = vld [vmem:[#allocation6 + $0xd0] sm:$0xff]
          %v1032 = vld [vmem:[#allocation6 + $0xd8] sm:$0xff]
          %v1033 = vld [vmem:[#allocation6 + $0xe0] sm:$0xff]
          %v1034 = vld [vmem:[#allocation6 + $0xe8] sm:$0xff]
          %v1035 = vld [vmem:[#allocation6 + $0xf0] sm:$0xff]
          %v1036 = vld [vmem:[#allocation6 + $0xf8] sm:$0xff]
          %v1037 = vld [vmem:[#allocation6 + $0x100] sm:$0xff]
          %v1038 = vld [vmem:[#allocation6 + $0x108] sm:$0xff]
          %v1039 = vld [vmem:[#allocation6 + $0x110] sm:$0xff]
          %v1040 = vld [vmem:[#allocation6 + $0x118] sm:$0xff]
          %v1041 = vld [vmem:[#allocation6 + $0x120] sm:$0xff]
          %v1042 = vld [vmem:[#allocation6 + $0x128] sm:$0xff]
          %v1043 = vld [vmem:[#allocation6 + $0x130] sm:$0xff]
          %v1044 = vld [vmem:[#allocation6 + $0x138] sm:$0xff]
          %v1045 = vld [vmem:[#allocation6 + $0x140] sm:$0xff]
          %v1046 = vld [vmem:[#allocation6 + $0x148] sm:$0xff]
          %v1047 = vld [vmem:[#allocation6 + $0x150] sm:$0xff]
          %v1048 = vld [vmem:[#allocation6 + $0x158] sm:$0xff]
          %v1049 = vld [vmem:[#allocation6 + $0x160] sm:$0xff]
          %v1050 = vld [vmem:[#allocation6 + $0x168] sm:$0xff]
          %v1051 = vld [vmem:[#allocation6 + $0x170] sm:$0xff]
          %v1052 = vld [vmem:[#allocation6 + $0x178] sm:$0xff]
          %v1053 = vld [vmem:[%s4] sm:$0x1]
          %v1055 = vlaneseq
          %v1056 = vshrl.u32 %v1055, 7
          %v1057 = vsub.s32 0, %v1056
          %v1058 = vrot.slane %v1053, %v1057
          %v1060 = vld [vmem:[#allocation2] sm:$0xff]
          %s1061 = smul.u32 %s1004, 3
          %s1062 = smul.addr %s1061, 8
          %s1063 = scalar_lea.vmem [#allocation3], %s1062
          %v1064 = vld [vmem:[%s1063] sm:$0xff]
          %v1065 = vld [vmem:[%s1063 + $0x8] sm:$0xff]
          %v1066 = vld [vmem:[%s1063 + $0x10] sm:$0xff]
          %1067 = vmatprep.subr.mxu0 %v1006
          %1068 = vmatpush1.msra.mxu0 %v1005
          %1069 = vmatprep.subr.mxu0 %v1009
          %1070 = vmatpush1.msra.mxu0 %v1008
          %1071 = vmatprep.subr.mxu0 %v1012
          %1072 = vmatpush1.msra.mxu0 %v1011
          %1073 = vmatprep.subr.mxu0 %v1015
          %1074 = vmatpush1.msra.mxu0 %v1014
          %1075 = vmatprep.subr.mxu0 %v1018
          %1076 = vmatpush1.msra.mxu0 %v1017
          %1077 = vmatprep.subr.mxu0 %v1021
          %1078 = vmatpush1.msra.mxu0 %v1020
          %1079 = vmatprep.subr.mxu0 %v1024
          %1080 = vmatpush1.msra.mxu0 %v1023
          %1081 = vmatprep.subr.mxu0 %v1027
          %1082 = vmatpush1.msra.mxu0 %v1026
          %1083 = vmatprep.subr.mxu0 %v1030
          %1084 = vmatpush1.msra.mxu0 %v1029
          %1085 = vmatprep.subr.mxu0 %v1033
          %1086 = vmatpush1.msra.mxu0 %v1032
          %1087 = vmatprep.subr.mxu0 %v1036
          %1088 = vmatpush1.msra.mxu0 %v1035
          %1089 = vmatprep.subr.mxu0 %v1039
          %1090 = vmatpush1.msra.mxu0 %v1038
          %1091 = vmatprep.subr.mxu0 %v1042
          %1092 = vmatpush1.msra.mxu0 %v1041
          %1093 = vmatprep.subr.mxu0 %v1045
          %1094 = vmatpush1.msra.mxu0 %v1044
          %1095 = vmatprep.subr.mxu0 %v1048
          %1096 = vmatpush1.msra.mxu0 %v1047
          %1097 = vmatprep.subr.mxu0 %v1051
          %1098 = vmatpush1.msra.mxu0 %v1050
          %1099 = vmatprep.subr.mxu0 0.0
          %1100 = vmatpush1.msra.mxu0 0.0
          %1101 = vmatprep.subr.mxu0 0.0
          %1102 = vmatpush1.msra.mxu0 0.0
          %1103 = vmatprep.subr.mxu0 0.0
          %1104 = vmatpush1.msra.mxu0 0.0
          %1105 = vmatprep.subr.mxu0 0.0
          %1106 = vmatpush1.msra.mxu0 0.0
          %1107 = vmatprep.subr.mxu0 0.0
          %1108 = vmatpush1.msra.mxu0 0.0
          %1109 = vmatprep.subr.mxu0 0.0
          %1110 = vmatpush1.msra.mxu0 0.0
          %1111 = vmatprep.subr.mxu0 0.0
          %1112 = vmatpush1.msra.mxu0 0.0
          %1113 = vmatprep.subr.mxu0 0.0
          %1114 = vmatpush1.msra.mxu0 0.0
          %1115 = vmatprep.subr.mxu0 0.0
          %1116 = vmatpush1.msra.mxu0 0.0
          %1117 = vmatprep.subr.mxu0 0.0
          %1118 = vmatpush1.msra.mxu0 0.0
          %1119 = vmatprep.subr.mxu0 0.0
          %1120 = vmatpush1.msra.mxu0 0.0
          %1121 = vmatprep.subr.mxu0 0.0
          %1122 = vmatpush1.msra.mxu0 0.0
          %1123 = vmatprep.subr.mxu0 0.0
          %1124 = vmatpush1.msra.mxu0 0.0
          %1125 = vmatprep.subr.mxu0 0.0
          %1126 = vmatpush1.msra.mxu0 0.0
          %1127 = vmatprep.subr.mxu0 0.0
          %1128 = vmatpush1.msra.mxu0 0.0
          %1129 = vmatprep.subr.mxu0 0.0
          %1130 = vmatpush1.msra.mxu0 0.0
          %1131 = vmatprep.mubr.f32.mxu0 0.0
          %1132 = vmatmul.mubr.f32.gmra.mrb[0].mxu0 %v1060
          %v1133 = vpop.f32.mrb[0].mxu0
          %v1134 = vadd.f32 0.0, %v1133
          %v1135 = vpop.f32.mrb[0].mxu0
          %v1136 = vadd.f32 0.0, %v1135
          %1137 = vdwg.mxu0
          %1138 = vmatprep.subr.mxu0 0.0
          %1139 = vmatpush1.msra.mxu0 %v1007
          %1140 = vmatprep.subr.mxu0 0.0
          %1141 = vmatpush1.msra.mxu0 %v1010
          %1142 = vmatprep.subr.mxu0 0.0
          %1143 = vmatpush1.msra.mxu0 %v1013
          %1144 = vmatprep.subr.mxu0 0.0
          %1145 = vmatpush1.msra.mxu0 %v1016
          %1146 = vmatprep.subr.mxu0 0.0
          %1147 = vmatpush1.msra.mxu0 %v1019
          %1148 = vmatprep.subr.mxu0 0.0
          %1149 = vmatpush1.msra.mxu0 %v1022
          %1150 = vmatprep.subr.mxu0 0.0
          %1151 = vmatpush1.msra.mxu0 %v1025
          %1152 = vmatprep.subr.mxu0 0.0
          %1153 = vmatpush1.msra.mxu0 %v1028
          %1154 = vmatprep.subr.mxu0 0.0
          %1155 = vmatpush1.msra.mxu0 %v1031
          %1156 = vmatprep.subr.mxu0 0.0
          %1157 = vmatpush1.msra.mxu0 %v1034
          %1158 = vmatprep.subr.mxu0 0.0
          %1159 = vmatpush1.msra.mxu0 %v1037
          %1160 = vmatprep.subr.mxu0 0.0
          %1161 = vmatpush1.msra.mxu0 %v1040
          %1162 = vmatprep.subr.mxu0 0.0
          %1163 = vmatpush1.msra.mxu0 %v1043
          %1164 = vmatprep.subr.mxu0 0.0
          %1165 = vmatpush1.msra.mxu0 %v1046
          %1166 = vmatprep.subr.mxu0 0.0
          %1167 = vmatpush1.msra.mxu0 %v1049
          %1168 = vmatprep.subr.mxu0 0.0
          %1169 = vmatpush1.msra.mxu0 %v1052
          %1170 = vmatprep.subr.mxu0 0.0
          %1171 = vmatpush1.msra.mxu0 0.0
          %1172 = vmatprep.subr.mxu0 0.0
          %1173 = vmatpush1.msra.mxu0 0.0
          %1174 = vmatprep.subr.mxu0 0.0
          %1175 = vmatpush1.msra.mxu0 0.0
          %1176 = vmatprep.subr.mxu0 0.0
          %1177 = vmatpush1.msra.mxu0 0.0
          %1178 = vmatprep.subr.mxu0 0.0
          %1179 = vmatpush1.msra.mxu0 0.0
          %1180 = vmatprep.subr.mxu0 0.0
          %1181 = vmatpush1.msra.mxu0 0.0
          %1182 = vmatprep.subr.mxu0 0.0
          %1183 = vmatpush1.msra.mxu0 0.0
          %1184 = vmatprep.subr.mxu0 0.0
          %1185 = vmatpush1.msra.mxu0 0.0
          %1186 = vmatprep.subr.mxu0 0.0
          %1187 = vmatpush1.msra.mxu0 0.0
          %1188 = vmatprep.subr.mxu0 0.0
          %1189 = vmatpush1.msra.mxu0 0.0
          %1190 = vmatprep.subr.mxu0 0.0
          %1191 = vmatpush1.msra.mxu0 0.0
          %1192 = vmatprep.subr.mxu0 0.0
          %1193 = vmatpush1.msra.mxu0 0.0
          %1194 = vmatprep.subr.mxu0 0.0
          %1195 = vmatpush1.msra.mxu0 0.0
          %1196 = vmatprep.subr.mxu0 0.0
          %1197 = vmatpush1.msra.mxu0 0.0
          %1198 = vmatprep.subr.mxu0 0.0
          %1199 = vmatpush1.msra.mxu0 0.0
          %1200 = vmatprep.subr.mxu0 0.0
          %1201 = vmatpush1.msra.mxu0 0.0
          %1202 = vmatprep.mubr.f32.mxu0 0.0
          %1203 = vmatmul.mubr.f32.gmra.mrb[0].mxu0 %v1060
          %v1204 = vpop.f32.mrb[0].mxu0
          %v1205 = vadd.f32 0.0, %v1204
          %v1206 = vpop.f32.mrb[0].mxu0
          %1207 = vdwg.mxu0
          %v1208 = vadd.f32 %v1064, %v1134
          %v1209 = vxor.u32 %v1208, 2147483648
          %v1210 = vmul.f32 %v1209, 1.442695
          %v1211 = vpow.pop %v1210
          %v1212 = vadd.f32 %v1211, 1.0
          %v1213 = vrcp.pop %v1212
          %v1214 = vmul.f32 1.0, %v1213
          %v1215 = vadd.f32 %v1065, %v1136
          %v1216 = vxor.u32 %v1215, 2147483648
          %v1217 = vmul.f32 %v1216, 1.442695
          %v1218 = vpow.pop %v1217
          %v1219 = vadd.f32 %v1218, 1.0
          %v1220 = vrcp.pop %v1219
          %v1221 = vmul.f32 1.0, %v1220
          %v1222 = vadd.f32 %v1205, %v1058
          %v1223 = vmul.f32 %v1214, %v1222
          %v1224 = vadd.f32 %v1066, %v1223
          %v1225 = vtanh.pop %v1224
          %v1226 = vsub.f32 %v1060, %v1225
          %v1227 = vmul.f32 %v1221, %v1226
          %v1228 = vadd.f32 %v1225, %v1227
          %1229 = vst [vmem:[%s313] sm:$0xff] %v1228
          %s1230 = sadd.s32 %s1004, 1
          %s1231 = smul.u32 %s1230, 3
          %s1232 = smul.addr %s1231, 8
          %s1233 = scalar_lea.vmem [#allocation3], %s1232
          %v1234 = vld [vmem:[%s1233] sm:$0xff]
          %v1235 = vld [vmem:[%s1233 + $0x8] sm:$0xff]
          %v1236 = vld [vmem:[%s1233 + $0x10] sm:$0xff]
          %1237 = vmatprep.subr.mxu0 %v1006
          %1238 = vmatpush1.msra.mxu0 %v1005
          %1239 = vmatprep.subr.mxu0 %v1009
          %1240 = vmatpush1.msra.mxu0 %v1008
          %1241 = vmatprep.subr.mxu0 %v1012
          %1242 = vmatpush1.msra.mxu0 %v1011
          %1243 = vmatprep.subr.mxu0 %v1015
          %1244 = vmatpush1.msra.mxu0 %v1014
          %1245 = vmatprep.subr.mxu0 %v1018
          %1246 = vmatpush1.msra.mxu0 %v1017
          %1247 = vmatprep.subr.mxu0 %v1021
          %1248 = vmatpush1.msra.mxu0 %v1020
          %1249 = vmatprep.subr.mxu0 %v1024
          %1250 = vmatpush1.msra.mxu0 %v1023
          %1251 = vmatprep.subr.mxu0 %v1027
          %1252 = vmatpush1.msra.mxu0 %v1026
          %1253 = vmatprep.subr.mxu0 %v1030
          %1254 = vmatpush1.msra.mxu0 %v1029
          %1255 = vmatprep.subr.mxu0 %v1033
          %1256 = vmatpush1.msra.mxu0 %v1032
          %1257 = vmatprep.subr.mxu0 %v1036
          %1258 = vmatpush1.msra.mxu0 %v1035
          %1259 = vmatprep.subr.mxu0 %v1039
          %1260 = vmatpush1.msra.mxu0 %v1038
          %1261 = vmatprep.subr.mxu0 %v1042
          %1262 = vmatpush1.msra.mxu0 %v1041
          %1263 = vmatprep.subr.mxu0 %v1045
          %1264 = vmatpush1.msra.mxu0 %v1044
          %1265 = vmatprep.subr.mxu0 %v1048
          %1266 = vmatpush1.msra.mxu0 %v1047
          %1267 = vmatprep.subr.mxu0 %v1051
          %1268 = vmatpush1.msra.mxu0 %v1050
          %1269 = vmatprep.subr.mxu0 0.0
          %1270 = vmatpush1.msra.mxu0 0.0
          %1271 = vmatprep.subr.mxu0 0.0
          %1272 = vmatpush1.msra.mxu0 0.0
          %1273 = vmatprep.subr.mxu0 0.0
          %1274 = vmatpush1.msra.mxu0 0.0
          %1275 = vmatprep.subr.mxu0 0.0
          %1276 = vmatpush1.msra.mxu0 0.0
          %1277 = vmatprep.subr.mxu0 0.0
          %1278 = vmatpush1.msra.mxu0 0.0
          %1279 = vmatprep.subr.mxu0 0.0
          %1280 = vmatpush1.msra.mxu0 0.0
          %1281 = vmatprep.subr.mxu0 0.0
          %1282 = vmatpush1.msra.mxu0 0.0
          %1283 = vmatprep.subr.mxu0 0.0
          %1284 = vmatpush1.msra.mxu0 0.0
          %1285 = vmatprep.subr.mxu0 0.0
          %1286 = vmatpush1.msra.mxu0 0.0
          %1287 = vmatprep.subr.mxu0 0.0
          %1288 = vmatpush1.msra.mxu0 0.0
          %1289 = vmatprep.subr.mxu0 0.0
          %1290 = vmatpush1.msra.mxu0 0.0
          %1291 = vmatprep.subr.mxu0 0.0
          %1292 = vmatpush1.msra.mxu0 0.0
          %1293 = vmatprep.subr.mxu0 0.0
          %1294 = vmatpush1.msra.mxu0 0.0
          %1295 = vmatprep.subr.mxu0 0.0
          %1296 = vmatpush1.msra.mxu0 0.0
          %1297 = vmatprep.subr.mxu0 0.0
          %1298 = vmatpush1.msra.mxu0 0.0
          %1299 = vmatprep.subr.mxu0 0.0
          %1300 = vmatpush1.msra.mxu0 0.0
          %1301 = vmatprep.mubr.f32.mxu0 0.0
          %1302 = vmatmul.mubr.f32.gmra.mrb[0].mxu0 %v1228
          %v1303 = vpop.f32.mrb[0].mxu0
          %v1304 = vadd.f32 0.0, %v1303
          %v1305 = vpop.f32.mrb[0].mxu0
          %v1306 = vadd.f32 0.0, %v1305
          %1307 = vdwg.mxu0
          %1308 = vmatprep.subr.mxu0 0.0
          %1309 = vmatpush1.msra.mxu0 %v1007
          %1310 = vmatprep.subr.mxu0 0.0
          %1311 = vmatpush1.msra.mxu0 %v1010
          %1312 = vmatprep.subr.mxu0 0.0
          %1313 = vmatpush1.msra.mxu0 %v1013
          %1314 = vmatprep.subr.mxu0 0.0
          %1315 = vmatpush1.msra.mxu0 %v1016
          %1316 = vmatprep.subr.mxu0 0.0
          %1317 = vmatpush1.msra.mxu0 %v1019
          %1318 = vmatprep.subr.mxu0 0.0
          %1319 = vmatpush1.msra.mxu0 %v1022
          %1320 = vmatprep.subr.mxu0 0.0
          %1321 = vmatpush1.msra.mxu0 %v1025
          %1322 = vmatprep.subr.mxu0 0.0
          %1323 = vmatpush1.msra.mxu0 %v1028
          %1324 = vmatprep.subr.mxu0 0.0
          %1325 = vmatpush1.msra.mxu0 %v1031
          %1326 = vmatprep.subr.mxu0 0.0
          %1327 = vmatpush1.msra.mxu0 %v1034
          %1328 = vmatprep.subr.mxu0 0.0
          %1329 = vmatpush1.msra.mxu0 %v1037
          %1330 = vmatprep.subr.mxu0 0.0
          %1331 = vmatpush1.msra.mxu0 %v1040
          %1332 = vmatprep.subr.mxu0 0.0
          %1333 = vmatpush1.msra.mxu0 %v1043
          %1334 = vmatprep.subr.mxu0 0.0
          %1335 = vmatpush1.msra.mxu0 %v1046
          %1336 = vmatprep.subr.mxu0 0.0
          %1337 = vmatpush1.msra.mxu0 %v1049
          %1338 = vmatprep.subr.mxu0 0.0
          %1339 = vmatpush1.msra.mxu0 %v1052
          %1340 = vmatprep.subr.mxu0 0.0
          %1341 = vmatpush1.msra.mxu0 0.0
          %1342 = vmatprep.subr.mxu0 0.0
          %1343 = vmatpush1.msra.mxu0 0.0
          %1344 = vmatprep.subr.mxu0 0.0
          %1345 = vmatpush1.msra.mxu0 0.0
          %1346 = vmatprep.subr.mxu0 0.0
          %1347 = vmatpush1.msra.mxu0 0.0
          %1348 = vmatprep.subr.mxu0 0.0
          %1349 = vmatpush1.msra.mxu0 0.0
          %1350 = vmatprep.subr.mxu0 0.0
          %1351 = vmatpush1.msra.mxu0 0.0
          %1352 = vmatprep.subr.mxu0 0.0
          %1353 = vmatpush1.msra.mxu0 0.0
          %1354 = vmatprep.subr.mxu0 0.0
          %1355 = vmatpush1.msra.mxu0 0.0
          %1356 = vmatprep.subr.mxu0 0.0
          %1357 = vmatpush1.msra.mxu0 0.0
          %1358 = vmatprep.subr.mxu0 0.0
          %1359 = vmatpush1.msra.mxu0 0.0
          %1360 = vmatprep.subr.mxu0 0.0
          %1361 = vmatpush1.msra.mxu0 0.0
          %1362 = vmatprep.subr.mxu0 0.0
          %1363 = vmatpush1.msra.mxu0 0.0
          %1364 = vmatprep.subr.mxu0 0.0
          %1365 = vmatpush1.msra.mxu0 0.0
          %1366 = vmatprep.subr.mxu0 0.0
          %1367 = vmatpush1.msra.mxu0 0.0
          %1368 = vmatprep.subr.mxu0 0.0
          %1369 = vmatpush1.msra.mxu0 0.0
          %1370 = vmatprep.subr.mxu0 0.0
          %1371 = vmatpush1.msra.mxu0 0.0
          %1372 = vmatprep.mubr.f32.mxu0 0.0
          %1373 = vmatmul.mubr.f32.gmra.mrb[0].mxu0 %v1228
          %v1374 = vpop.f32.mrb[0].mxu0
          %v1375 = vadd.f32 0.0, %v1374
          %v1376 = vpop.f32.mrb[0].mxu0
          %1377 = vdwg.mxu0
          %v1378 = vadd.f32 %v1234, %v1304
          %v1379 = vxor.u32 %v1378, 2147483648
          %v1380 = vmul.f32 %v1379, 1.442695
          %v1381 = vpow.pop %v1380
          %v1382 = vadd.f32 %v1381, 1.0
          %v1383 = vrcp.pop %v1382
          %v1384 = vmul.f32 1.0, %v1383
          %v1385 = vadd.f32 %v1235, %v1306
          %v1386 = vxor.u32 %v1385, 2147483648
          %v1387 = vmul.f32 %v1386, 1.442695
          %v1388 = vpow.pop %v1387
          %v1389 = vadd.f32 %v1388, 1.0
          %v1390 = vrcp.pop %v1389
          %v1391 = vmul.f32 1.0, %v1390
          %v1392 = vadd.f32 %v1375, %v1058
          %v1393 = vmul.f32 %v1384, %v1392
          %v1394 = vadd.f32 %v1236, %v1393
          %v1395 = vtanh.pop %v1394
          %v1396 = vsub.f32 %v1228, %v1395
          %v1397 = vmul.f32 %v1391, %v1396
          %v1398 = vadd.f32 %v1395, %v1397
          %s1399 = scalar_lea.vmem %s313, 8
          %1400 = vst [vmem:[%s1399] sm:$0xff] %v1398
          %s1401 = sadd.s32 %s1004, 2
          %s1402 = smul.u32 %s1401, 3
          %s1403 = smul.addr %s1402, 8
          %s1404 = scalar_lea.vmem [#allocation3], %s1403
          %v1405 = vld [vmem:[%s1404] sm:$0xff]
          %v1406 = vld [vmem:[%s1404 + $0x8] sm:$0xff]
          %v1407 = vld [vmem:[%s1404 + $0x10] sm:$0xff]
          %1408 = vmatprep.subr.mxu0 %v1006
          %1409 = vmatpush1.msra.mxu0 %v1005
          %1410 = vmatprep.subr.mxu0 %v1009
          %1411 = vmatpush1.msra.mxu0 %v1008
          %1412 = vmatprep.subr.mxu0 %v1012
          %1413 = vmatpush1.msra.mxu0 %v1011
          %1414 = vmatprep.subr.mxu0 %v1015
          %1415 = vmatpush1.msra.mxu0 %v1014
          %1416 = vmatprep.subr.mxu0 %v1018
          %1417 = vmatpush1.msra.mxu0 %v1017
          %1418 = vmatprep.subr.mxu0 %v1021
          %1419 = vmatpush1.msra.mxu0 %v1020
          %1420 = vmatprep.subr.mxu0 %v1024
          %1421 = vmatpush1.msra.mxu0 %v1023
          %1422 = vmatprep.subr.mxu0 %v1027
          %1423 = vmatpush1.msra.mxu0 %v1026
          %1424 = vmatprep.subr.mxu0 %v1030
          %1425 = vmatpush1.msra.mxu0 %v1029
          %1426 = vmatprep.subr.mxu0 %v1033
          %1427 = vmatpush1.msra.mxu0 %v1032
          %1428 = vmatprep.subr.mxu0 %v1036
          %1429 = vmatpush1.msra.mxu0 %v1035
          %1430 = vmatprep.subr.mxu0 %v1039
          %1431 = vmatpush1.msra.mxu0 %v1038
          %1432 = vmatprep.subr.mxu0 %v1042
          %1433 = vmatpush1.msra.mxu0 %v1041
          %1434 = vmatprep.subr.mxu0 %v1045
          %1435 = vmatpush1.msra.mxu0 %v1044
          %1436 = vmatprep.subr.mxu0 %v1048
          %1437 = vmatpush1.msra.mxu0 %v1047
          %1438 = vmatprep.subr.mxu0 %v1051
          %1439 = vmatpush1.msra.mxu0 %v1050
          %1440 = vmatprep.subr.mxu0 0.0
          %1441 = vmatpush1.msra.mxu0 0.0
          %1442 = vmatprep.subr.mxu0 0.0
          %1443 = vmatpush1.msra.mxu0 0.0
          %1444 = vmatprep.subr.mxu0 0.0
          %1445 = vmatpush1.msra.mxu0 0.0
          %1446 = vmatprep.subr.mxu0 0.0
          %1447 = vmatpush1.msra.mxu0 0.0
          %1448 = vmatprep.subr.mxu0 0.0
          %1449 = vmatpush1.msra.mxu0 0.0
          %1450 = vmatprep.subr.mxu0 0.0
          %1451 = vmatpush1.msra.mxu0 0.0
          %1452 = vmatprep.subr.mxu0 0.0
          %1453 = vmatpush1.msra.mxu0 0.0
          %1454 = vmatprep.subr.mxu0 0.0
          %1455 = vmatpush1.msra.mxu0 0.0
          %1456 = vmatprep.subr.mxu0 0.0
          %1457 = vmatpush1.msra.mxu0 0.0
          %1458 = vmatprep.subr.mxu0 0.0
          %1459 = vmatpush1.msra.mxu0 0.0
          %1460 = vmatprep.subr.mxu0 0.0
          %1461 = vmatpush1.msra.mxu0 0.0
          %1462 = vmatprep.subr.mxu0 0.0
          %1463 = vmatpush1.msra.mxu0 0.0
          %1464 = vmatprep.subr.mxu0 0.0
          %1465 = vmatpush1.msra.mxu0 0.0
          %1466 = vmatprep.subr.mxu0 0.0
          %1467 = vmatpush1.msra.mxu0 0.0
          %1468 = vmatprep.subr.mxu0 0.0
          %1469 = vmatpush1.msra.mxu0 0.0
          %1470 = vmatprep.subr.mxu0 0.0
          %1471 = vmatpush1.msra.mxu0 0.0
          %1472 = vmatprep.mubr.f32.mxu0 0.0
          %1473 = vmatmul.mubr.f32.gmra.mrb[0].mxu0 %v1398
          %v1474 = vpop.f32.mrb[0].mxu0
          %v1475 = vadd.f32 0.0, %v1474
          %v1476 = vpop.f32.mrb[0].mxu0
          %v1477 = vadd.f32 0.0, %v1476
          %1478 = vdwg.mxu0
          %1479 = vmatprep.subr.mxu0 0.0
          %1480 = vmatpush1.msra.mxu0 %v1007
          %1481 = vmatprep.subr.mxu0 0.0
          %1482 = vmatpush1.msra.mxu0 %v1010
          %1483 = vmatprep.subr.mxu0 0.0
          %1484 = vmatpush1.msra.mxu0 %v1013
          %1485 = vmatprep.subr.mxu0 0.0
          %1486 = vmatpush1.msra.mxu0 %v1016
          %1487 = vmatprep.subr.mxu0 0.0
          %1488 = vmatpush1.msra.mxu0 %v1019
          %1489 = vmatprep.subr.mxu0 0.0
          %1490 = vmatpush1.msra.mxu0 %v1022
          %1491 = vmatprep.subr.mxu0 0.0
          %1492 = vmatpush1.msra.mxu0 %v1025
          %1493 = vmatprep.subr.mxu0 0.0
          %1494 = vmatpush1.msra.mxu0 %v1028
          %1495 = vmatprep.subr.mxu0 0.0
          %1496 = vmatpush1.msra.mxu0 %v1031
          %1497 = vmatprep.subr.mxu0 0.0
          %1498 = vmatpush1.msra.mxu0 %v1034
          %1499 = vmatprep.subr.mxu0 0.0
          %1500 = vmatpush1.msra.mxu0 %v1037
          %1501 = vmatprep.subr.mxu0 0.0
          %1502 = vmatpush1.msra.mxu0 %v1040
          %1503 = vmatprep.subr.mxu0 0.0
          %1504 = vmatpush1.msra.mxu0 %v1043
          %1505 = vmatprep.subr.mxu0 0.0
          %1506 = vmatpush1.msra.mxu0 %v1046
          %1507 = vmatprep.subr.mxu0 0.0
          %1508 = vmatpush1.msra.mxu0 %v1049
          %1509 = vmatprep.subr.mxu0 0.0
          %1510 = vmatpush1.msra.mxu0 %v1052
          %1511 = vmatprep.subr.mxu0 0.0
          %1512 = vmatpush1.msra.mxu0 0.0
          %1513 = vmatprep.subr.mxu0 0.0
          %1514 = vmatpush1.msra.mxu0 0.0
          %1515 = vmatprep.subr.mxu0 0.0
          %1516 = vmatpush1.msra.mxu0 0.0
          %1517 = vmatprep.subr.mxu0 0.0
          %1518 = vmatpush1.msra.mxu0 0.0
          %1519 = vmatprep.subr.mxu0 0.0
          %1520 = vmatpush1.msra.mxu0 0.0
          %1521 = vmatprep.subr.mxu0 0.0
          %1522 = vmatpush1.msra.mxu0 0.0
          %1523 = vmatprep.subr.mxu0 0.0
          %1524 = vmatpush1.msra.mxu0 0.0
          %1525 = vmatprep.subr.mxu0 0.0
          %1526 = vmatpush1.msra.mxu0 0.0
          %1527 = vmatprep.subr.mxu0 0.0
          %1528 = vmatpush1.msra.mxu0 0.0
          %1529 = vmatprep.subr.mxu0 0.0
          %1530 = vmatpush1.msra.mxu0 0.0
          %1531 = vmatprep.subr.mxu0 0.0
          %1532 = vmatpush1.msra.mxu0 0.0
          %1533 = vmatprep.subr.mxu0 0.0
          %1534 = vmatpush1.msra.mxu0 0.0
          %1535 = vmatprep.subr.mxu0 0.0
          %1536 = vmatpush1.msra.mxu0 0.0
          %1537 = vmatprep.subr.mxu0 0.0
          %1538 = vmatpush1.msra.mxu0 0.0
          %1539 = vmatprep.subr.mxu0 0.0
          %1540 = vmatpush1.msra.mxu0 0.0
          %1541 = vmatprep.subr.mxu0 0.0
          %1542 = vmatpush1.msra.mxu0 0.0
          %1543 = vmatprep.mubr.f32.mxu0 0.0
          %1544 = vmatmul.mubr.f32.gmra.mrb[0].mxu0 %v1398
          %v1545 = vpop.f32.mrb[0].mxu0
          %v1546 = vadd.f32 0.0, %v1545
          %v1547 = vpop.f32.mrb[0].mxu0
          %1548 = vdwg.mxu0
          %v1549 = vadd.f32 %v1405, %v1475
          %v1550 = vxor.u32 %v1549, 2147483648
          %v1551 = vmul.f32 %v1550, 1.442695
          %v1552 = vpow.pop %v1551
          %v1553 = vadd.f32 %v1552, 1.0
          %v1554 = vrcp.pop %v1553
          %v1555 = vmul.f32 1.0, %v1554
          %v1556 = vadd.f32 %v1406, %v1477
          %v1557 = vxor.u32 %v1556, 2147483648
          %v1558 = vmul.f32 %v1557, 1.442695
          %v1559 = vpow.pop %v1558
          %v1560 = vadd.f32 %v1559, 1.0
          %v1561 = vrcp.pop %v1560
          %v1562 = vmul.f32 1.0, %v1561
          %v1563 = vadd.f32 %v1546, %v1058
          %v1564 = vmul.f32 %v1555, %v1563
          %v1565 = vadd.f32 %v1407, %v1564
          %v1566 = vtanh.pop %v1565
          %v1567 = vsub.f32 %v1398, %v1566
          %v1568 = vmul.f32 %v1562, %v1567
          %v1569 = vadd.f32 %v1566, %v1568
          %s1570 = scalar_lea.vmem %s313, 16
          %1571 = vst [vmem:[%s1570] sm:$0xff] %v1569
          %s1572 = sadd.s32 %s1004, 3
          %s1573 = smul.u32 %s1572, 3
          %s1574 = smul.addr %s1573, 8
          %s1575 = scalar_lea.vmem [#allocation3], %s1574
          %v1576 = vld [vmem:[%s1575] sm:$0xff]
          %v1577 = vld [vmem:[%s1575 + $0x8] sm:$0xff]
          %v1578 = vld [vmem:[%s1575 + $0x10] sm:$0xff]
          %1579 = vmatprep.subr.mxu0 %v1006
          %1580 = vmatpush1.msra.mxu0 %v1005
          %1581 = vmatprep.subr.mxu0 %v1009
          %1582 = vmatpush1.msra.mxu0 %v1008
          %1583 = vmatprep.subr.mxu0 %v1012
          %1584 = vmatpush1.msra.mxu0 %v1011
          %1585 = vmatprep.subr.mxu0 %v1015
          %1586 = vmatpush1.msra.mxu0 %v1014
          %1587 = vmatprep.subr.mxu0 %v1018
          %1588 = vmatpush1.msra.mxu0 %v1017
          %1589 = vmatprep.subr.mxu0 %v1021
          %1590 = vmatpush1.msra.mxu0 %v1020
          %1591 = vmatprep.subr.mxu0 %v1024
          %1592 = vmatpush1.msra.mxu0 %v1023
          %1593 = vmatprep.subr.mxu0 %v1027
          %1594 = vmatpush1.msra.mxu0 %v1026
          %1595 = vmatprep.subr.mxu0 %v1030
          %1596 = vmatpush1.msra.mxu0 %v1029
          %1597 = vmatprep.subr.mxu0 %v1033
          %1598 = vmatpush1.msra.mxu0 %v1032
          %1599 = vmatprep.subr.mxu0 %v1036
          %1600 = vmatpush1.msra.mxu0 %v1035
          %1601 = vmatprep.subr.mxu0 %v1039
          %1602 = vmatpush1.msra.mxu0 %v1038
          %1603 = vmatprep.subr.mxu0 %v1042
          %1604 = vmatpush1.msra.mxu0 %v1041
          %1605 = vmatprep.subr.mxu0 %v1045
          %1606 = vmatpush1.msra.mxu0 %v1044
          %1607 = vmatprep.subr.mxu0 %v1048
          %1608 = vmatpush1.msra.mxu0 %v1047
          %1609 = vmatprep.subr.mxu0 %v1051
          %1610 = vmatpush1.msra.mxu0 %v1050
          %1611 = vmatprep.subr.mxu0 0.0
          %1612 = vmatpush1.msra.mxu0 0.0
          %1613 = vmatprep.subr.mxu0 0.0
          %1614 = vmatpush1.msra.mxu0 0.0
          %1615 = vmatprep.subr.mxu0 0.0
          %1616 = vmatpush1.msra.mxu0 0.0
          %1617 = vmatprep.subr.mxu0 0.0
          %1618 = vmatpush1.msra.mxu0 0.0
          %1619 = vmatprep.subr.mxu0 0.0
          %1620 = vmatpush1.msra.mxu0 0.0
          %1621 = vmatprep.subr.mxu0 0.0
          %1622 = vmatpush1.msra.mxu0 0.0
          %1623 = vmatprep.subr.mxu0 0.0
          %1624 = vmatpush1.msra.mxu0 0.0
          %1625 = vmatprep.subr.mxu0 0.0
          %1626 = vmatpush1.msra.mxu0 0.0
          %1627 = vmatprep.subr.mxu0 0.0
          %1628 = vmatpush1.msra.mxu0 0.0
          %1629 = vmatprep.subr.mxu0 0.0
          %1630 = vmatpush1.msra.mxu0 0.0
          %1631 = vmatprep.subr.mxu0 0.0
          %1632 = vmatpush1.msra.mxu0 0.0
          %1633 = vmatprep.subr.mxu0 0.0
          %1634 = vmatpush1.msra.mxu0 0.0
          %1635 = vmatprep.subr.mxu0 0.0
          %1636 = vmatpush1.msra.mxu0 0.0
          %1637 = vmatprep.subr.mxu0 0.0
          %1638 = vmatpush1.msra.mxu0 0.0
          %1639 = vmatprep.subr.mxu0 0.0
          %1640 = vmatpush1.msra.mxu0 0.0
          %1641 = vmatprep.subr.mxu0 0.0
          %1642 = vmatpush1.msra.mxu0 0.0
          %1643 = vmatprep.mubr.f32.mxu0 0.0
          %1644 = vmatmul.mubr.f32.gmra.mrb[0].mxu0 %v1569
          %v1645 = vpop.f32.mrb[0].mxu0
          %v1646 = vadd.f32 0.0, %v1645
          %v1647 = vpop.f32.mrb[0].mxu0
          %v1648 = vadd.f32 0.0, %v1647
          %1649 = vdwg.mxu0
          %1650 = vmatprep.subr.mxu0 0.0
          %1651 = vmatpush1.msra.mxu0 %v1007
          %1652 = vmatprep.subr.mxu0 0.0
          %1653 = vmatpush1.msra.mxu0 %v1010
          %1654 = vmatprep.subr.mxu0 0.0
          %1655 = vmatpush1.msra.mxu0 %v1013
          %1656 = vmatprep.subr.mxu0 0.0
          %1657 = vmatpush1.msra.mxu0 %v1016
          %1658 = vmatprep.subr.mxu0 0.0
          %1659 = vmatpush1.msra.mxu0 %v1019
          %1660 = vmatprep.subr.mxu0 0.0
          %1661 = vmatpush1.msra.mxu0 %v1022
          %1662 = vmatprep.subr.mxu0 0.0
          %1663 = vmatpush1.msra.mxu0 %v1025
          %1664 = vmatprep.subr.mxu0 0.0
          %1665 = vmatpush1.msra.mxu0 %v1028
          %1666 = vmatprep.subr.mxu0 0.0
          %1667 = vmatpush1.msra.mxu0 %v1031
          %1668 = vmatprep.subr.mxu0 0.0
          %1669 = vmatpush1.msra.mxu0 %v1034
          %1670 = vmatprep.subr.mxu0 0.0
          %1671 = vmatpush1.msra.mxu0 %v1037
          %1672 = vmatprep.subr.mxu0 0.0
          %1673 = vmatpush1.msra.mxu0 %v1040
          %1674 = vmatprep.subr.mxu0 0.0
          %1675 = vmatpush1.msra.mxu0 %v1043
          %1676 = vmatprep.subr.mxu0 0.0
          %1677 = vmatpush1.msra.mxu0 %v1046
          %1678 = vmatprep.subr.mxu0 0.0
          %1679 = vmatpush1.msra.mxu0 %v1049
          %1680 = vmatprep.subr.mxu0 0.0
          %1681 = vmatpush1.msra.mxu0 %v1052
          %1682 = vmatprep.subr.mxu0 0.0
          %1683 = vmatpush1.msra.mxu0 0.0
          %1684 = vmatprep.subr.mxu0 0.0
          %1685 = vmatpush1.msra.mxu0 0.0
          %1686 = vmatprep.subr.mxu0 0.0
          %1687 = vmatpush1.msra.mxu0 0.0
          %1688 = vmatprep.subr.mxu0 0.0
          %1689 = vmatpush1.msra.mxu0 0.0
          %1690 = vmatprep.subr.mxu0 0.0
          %1691 = vmatpush1.msra.mxu0 0.0
          %1692 = vmatprep.subr.mxu0 0.0
          %1693 = vmatpush1.msra.mxu0 0.0
          %1694 = vmatprep.subr.mxu0 0.0
          %1695 = vmatpush1.msra.mxu0 0.0
          %1696 = vmatprep.subr.mxu0 0.0
          %1697 = vmatpush1.msra.mxu0 0.0
          %1698 = vmatprep.subr.mxu0 0.0
          %1699 = vmatpush1.msra.mxu0 0.0
          %1700 = vmatprep.subr.mxu0 0.0
          %1701 = vmatpush1.msra.mxu0 0.0
          %1702 = vmatprep.subr.mxu0 0.0
          %1703 = vmatpush1.msra.mxu0 0.0
          %1704 = vmatprep.subr.mxu0 0.0
          %1705 = vmatpush1.msra.mxu0 0.0
          %1706 = vmatprep.subr.mxu0 0.0
          %1707 = vmatpush1.msra.mxu0 0.0
          %1708 = vmatprep.subr.mxu0 0.0
          %1709 = vmatpush1.msra.mxu0 0.0
          %1710 = vmatprep.subr.mxu0 0.0
          %1711 = vmatpush1.msra.mxu0 0.0
          %1712 = vmatprep.subr.mxu0 0.0
          %1713 = vmatpush1.msra.mxu0 0.0
          %1714 = vmatprep.mubr.f32.mxu0 0.0
          %1715 = vmatmul.mubr.f32.gmra.mrb[0].mxu0 %v1569
          %v1716 = vpop.f32.mrb[0].mxu0
          %v1717 = vadd.f32 0.0, %v1716
          %v1718 = vpop.f32.mrb[0].mxu0
          %1719 = vdwg.mxu0
          %v1720 = vadd.f32 %v1576, %v1646
          %v1721 = vxor.u32 %v1720, 2147483648
          %v1722 = vmul.f32 %v1721, 1.442695
          %v1723 = vpow.pop %v1722
          %v1724 = vadd.f32 %v1723, 1.0
          %v1725 = vrcp.pop %v1724
          %v1726 = vmul.f32 1.0, %v1725
          %v1727 = vadd.f32 %v1577, %v1648
          %v1728 = vxor.u32 %v1727, 2147483648
          %v1729 = vmul.f32 %v1728, 1.442695
          %v1730 = vpow.pop %v1729
          %v1731 = vadd.f32 %v1730, 1.0
          %v1732 = vrcp.pop %v1731
          %v1733 = vmul.f32 1.0, %v1732
          %v1734 = vadd.f32 %v1717, %v1058
          %v1735 = vmul.f32 %v1726, %v1734
          %v1736 = vadd.f32 %v1578, %v1735
          %v1737 = vtanh.pop %v1736
          %v1738 = vsub.f32 %v1569, %v1737
          %v1739 = vmul.f32 %v1733, %v1738
          %v1740 = vadd.f32 %v1737, %v1739
          %s1741 = scalar_lea.vmem %s313, 24
          %1742 = vst [vmem:[%s1741] sm:$0xff] %v1740
          %s1743 = sadd.s32 %s1004, 4
          %s1744 = smul.u32 %s1743, 3
          %s1745 = smul.addr %s1744, 8
          %s1746 = scalar_lea.vmem [#allocation3], %s1745
          %v1747 = vld [vmem:[%s1746] sm:$0xff]
          %v1748 = vld [vmem:[%s1746 + $0x8] sm:$0xff]
          %v1749 = vld [vmem:[%s1746 + $0x10] sm:$0xff]
          %1750 = vmatprep.subr.mxu0 %v1006
          %1751 = vmatpush1.msra.mxu0 %v1005
          %1752 = vmatprep.subr.mxu0 %v1009
          %1753 = vmatpush1.msra.mxu0 %v1008
          %1754 = vmatprep.subr.mxu0 %v1012
          %1755 = vmatpush1.msra.mxu0 %v1011
          %1756 = vmatprep.subr.mxu0 %v1015
          %1757 = vmatpush1.msra.mxu0 %v1014
          %1758 = vmatprep.subr.mxu0 %v1018
          %1759 = vmatpush1.msra.mxu0 %v1017
          %1760 = vmatprep.subr.mxu0 %v1021
          %1761 = vmatpush1.msra.mxu0 %v1020
          %1762 = vmatprep.subr.mxu0 %v1024
          %1763 = vmatpush1.msra.mxu0 %v1023
          %1764 = vmatprep.subr.mxu0 %v1027
          %1765 = vmatpush1.msra.mxu0 %v1026
          %1766 = vmatprep.subr.mxu0 %v1030
          %1767 = vmatpush1.msra.mxu0 %v1029
          %1768 = vmatprep.subr.mxu0 %v1033
          %1769 = vmatpush1.msra.mxu0 %v1032
          %1770 = vmatprep.subr.mxu0 %v1036
          %1771 = vmatpush1.msra.mxu0 %v1035
          %1772 = vmatprep.subr.mxu0 %v1039
          %1773 = vmatpush1.msra.mxu0 %v1038
          %1774 = vmatprep.subr.mxu0 %v1042
          %1775 = vmatpush1.msra.mxu0 %v1041
          %1776 = vmatprep.subr.mxu0 %v1045
          %1777 = vmatpush1.msra.mxu0 %v1044
          %1778 = vmatprep.subr.mxu0 %v1048
          %1779 = vmatpush1.msra.mxu0 %v1047
          %1780 = vmatprep.subr.mxu0 %v1051
          %1781 = vmatpush1.msra.mxu0 %v1050
          %1782 = vmatprep.subr.mxu0 0.0
          %1783 = vmatpush1.msra.mxu0 0.0
          %1784 = vmatprep.subr.mxu0 0.0
          %1785 = vmatpush1.msra.mxu0 0.0
          %1786 = vmatprep.subr.mxu0 0.0
          %1787 = vmatpush1.msra.mxu0 0.0
          %1788 = vmatprep.subr.mxu0 0.0
          %1789 = vmatpush1.msra.mxu0 0.0
          %1790 = vmatprep.subr.mxu0 0.0
          %1791 = vmatpush1.msra.mxu0 0.0
          %1792 = vmatprep.subr.mxu0 0.0
          %1793 = vmatpush1.msra.mxu0 0.0
          %1794 = vmatprep.subr.mxu0 0.0
          %1795 = vmatpush1.msra.mxu0 0.0
          %1796 = vmatprep.subr.mxu0 0.0
          %1797 = vmatpush1.msra.mxu0 0.0
          %1798 = vmatprep.subr.mxu0 0.0
          %1799 = vmatpush1.msra.mxu0 0.0
          %1800 = vmatprep.subr.mxu0 0.0
          %1801 = vmatpush1.msra.mxu0 0.0
          %1802 = vmatprep.subr.mxu0 0.0
          %1803 = vmatpush1.msra.mxu0 0.0
          %1804 = vmatprep.subr.mxu0 0.0
          %1805 = vmatpush1.msra.mxu0 0.0
          %1806 = vmatprep.subr.mxu0 0.0
          %1807 = vmatpush1.msra.mxu0 0.0
          %1808 = vmatprep.subr.mxu0 0.0
          %1809 = vmatpush1.msra.mxu0 0.0
          %1810 = vmatprep.subr.mxu0 0.0
          %1811 = vmatpush1.msra.mxu0 0.0
          %1812 = vmatprep.subr.mxu0 0.0
          %1813 = vmatpush1.msra.mxu0 0.0
          %1814 = vmatprep.mubr.f32.mxu0 0.0
          %1815 = vmatmul.mubr.f32.gmra.mrb[0].mxu0 %v1740
          %v1816 = vpop.f32.mrb[0].mxu0
          %v1817 = vadd.f32 0.0, %v1816
          %v1818 = vpop.f32.mrb[0].mxu0
          %v1819 = vadd.f32 0.0, %v1818
          %1820 = vdwg.mxu0
          %1821 = vmatprep.subr.mxu0 0.0
          %1822 = vmatpush1.msra.mxu0 %v1007
          %1823 = vmatprep.subr.mxu0 0.0
          %1824 = vmatpush1.msra.mxu0 %v1010
          %1825 = vmatprep.subr.mxu0 0.0
          %1826 = vmatpush1.msra.mxu0 %v1013
          %1827 = vmatprep.subr.mxu0 0.0
          %1828 = vmatpush1.msra.mxu0 %v1016
          %1829 = vmatprep.subr.mxu0 0.0
          %1830 = vmatpush1.msra.mxu0 %v1019
          %1831 = vmatprep.subr.mxu0 0.0
          %1832 = vmatpush1.msra.mxu0 %v1022
          %1833 = vmatprep.subr.mxu0 0.0
          %1834 = vmatpush1.msra.mxu0 %v1025
          %1835 = vmatprep.subr.mxu0 0.0
          %1836 = vmatpush1.msra.mxu0 %v1028
          %1837 = vmatprep.subr.mxu0 0.0
          %1838 = vmatpush1.msra.mxu0 %v1031
          %1839 = vmatprep.subr.mxu0 0.0
          %1840 = vmatpush1.msra.mxu0 %v1034
          %1841 = vmatprep.subr.mxu0 0.0
          %1842 = vmatpush1.msra.mxu0 %v1037
          %1843 = vmatprep.subr.mxu0 0.0
          %1844 = vmatpush1.msra.mxu0 %v1040
          %1845 = vmatprep.subr.mxu0 0.0
          %1846 = vmatpush1.msra.mxu0 %v1043
          %1847 = vmatprep.subr.mxu0 0.0
          %1848 = vmatpush1.msra.mxu0 %v1046
          %1849 = vmatprep.subr.mxu0 0.0
          %1850 = vmatpush1.msra.mxu0 %v1049
          %1851 = vmatprep.subr.mxu0 0.0
          %1852 = vmatpush1.msra.mxu0 %v1052
          %1853 = vmatprep.subr.mxu0 0.0
          %1854 = vmatpush1.msra.mxu0 0.0
          %1855 = vmatprep.subr.mxu0 0.0
          %1856 = vmatpush1.msra.mxu0 0.0
          %1857 = vmatprep.subr.mxu0 0.0
          %1858 = vmatpush1.msra.mxu0 0.0
          %1859 = vmatprep.subr.mxu0 0.0
          %1860 = vmatpush1.msra.mxu0 0.0
          %1861 = vmatprep.subr.mxu0 0.0
          %1862 = vmatpush1.msra.mxu0 0.0
          %1863 = vmatprep.subr.mxu0 0.0
          %1864 = vmatpush1.msra.mxu0 0.0
          %1865 = vmatprep.subr.mxu0 0.0
          %1866 = vmatpush1.msra.mxu0 0.0
          %1867 = vmatprep.subr.mxu0 0.0
          %1868 = vmatpush1.msra.mxu0 0.0
          %1869 = vmatprep.subr.mxu0 0.0
          %1870 = vmatpush1.msra.mxu0 0.0
          %1871 = vmatprep.subr.mxu0 0.0
          %1872 = vmatpush1.msra.mxu0 0.0
          %1873 = vmatprep.subr.mxu0 0.0
          %1874 = vmatpush1.msra.mxu0 0.0
          %1875 = vmatprep.subr.mxu0 0.0
          %1876 = vmatpush1.msra.mxu0 0.0
          %1877 = vmatprep.subr.mxu0 0.0
          %1878 = vmatpush1.msra.mxu0 0.0
          %1879 = vmatprep.subr.mxu0 0.0
          %1880 = vmatpush1.msra.mxu0 0.0
          %1881 = vmatprep.subr.mxu0 0.0
          %1882 = vmatpush1.msra.mxu0 0.0
          %1883 = vmatprep.subr.mxu0 0.0
          %1884 = vmatpush1.msra.mxu0 0.0
          %1885 = vmatprep.mubr.f32.mxu0 0.0
          %1886 = vmatmul.mubr.f32.gmra.mrb[0].mxu0 %v1740
          %v1887 = vpop.f32.mrb[0].mxu0
          %v1888 = vadd.f32 0.0, %v1887
          %v1889 = vpop.f32.mrb[0].mxu0
          %1890 = vdwg.mxu0
          %v1891 = vadd.f32 %v1747, %v1817
          %v1892 = vxor.u32 %v1891, 2147483648
          %v1893 = vmul.f32 %v1892, 1.442695
          %v1894 = vpow.pop %v1893
          %v1895 = vadd.f32 %v1894, 1.0
          %v1896 = vrcp.pop %v1895
          %v1897 = vmul.f32 1.0, %v1896
          %v1898 = vadd.f32 %v1748, %v1819
          %v1899 = vxor.u32 %v1898, 2147483648
          %v1900 = vmul.f32 %v1899, 1.442695
          %v1901 = vpow.pop %v1900
          %v1902 = vadd.f32 %v1901, 1.0
          %v1903 = vrcp.pop %v1902
          %v1904 = vmul.f32 1.0, %v1903
          %v1905 = vadd.f32 %v1888, %v1058
          %v1906 = vmul.f32 %v1897, %v1905
          %v1907 = vadd.f32 %v1749, %v1906
          %v1908 = vtanh.pop %v1907
          %v1909 = vsub.f32 %v1740, %v1908
          %v1910 = vmul.f32 %v1904, %v1909
          %v1911 = vadd.f32 %v1908, %v1910
          %s1912 = scalar_lea.vmem %s313, 32
          %1913 = vst [vmem:[%s1912] sm:$0xff] %v1911
          %s1914 = sadd.s32 %s1004, 5
          %s1915 = smul.u32 %s1914, 3
          %s1916 = smul.addr %s1915, 8
          %s1917 = scalar_lea.vmem [#allocation3], %s1916
          %v1918 = vld [vmem:[%s1917] sm:$0xff]
          %v1919 = vld [vmem:[%s1917 + $0x8] sm:$0xff]
          %v1920 = vld [vmem:[%s1917 + $0x10] sm:$0xff]
          %1921 = vmatprep.subr.mxu0 %v1006
          %1922 = vmatpush1.msra.mxu0 %v1005
          %1923 = vmatprep.subr.mxu0 %v1009
          %1924 = vmatpush1.msra.mxu0 %v1008
          %1925 = vmatprep.subr.mxu0 %v1012
          %1926 = vmatpush1.msra.mxu0 %v1011
          %1927 = vmatprep.subr.mxu0 %v1015
          %1928 = vmatpush1.msra.mxu0 %v1014
          %1929 = vmatprep.subr.mxu0 %v1018
          %1930 = vmatpush1.msra.mxu0 %v1017
          %1931 = vmatprep.subr.mxu0 %v1021
          %1932 = vmatpush1.msra.mxu0 %v1020
          %1933 = vmatprep.subr.mxu0 %v1024
          %1934 = vmatpush1.msra.mxu0 %v1023
          %1935 = vmatprep.subr.mxu0 %v1027
          %1936 = vmatpush1.msra.mxu0 %v1026
          %1937 = vmatprep.subr.mxu0 %v1030
          %1938 = vmatpush1.msra.mxu0 %v1029
          %1939 = vmatprep.subr.mxu0 %v1033
          %1940 = vmatpush1.msra.mxu0 %v1032
          %1941 = vmatprep.subr.mxu0 %v1036
          %1942 = vmatpush1.msra.mxu0 %v1035
          %1943 = vmatprep.subr.mxu0 %v1039
          %1944 = vmatpush1.msra.mxu0 %v1038
          %1945 = vmatprep.subr.mxu0 %v1042
          %1946 = vmatpush1.msra.mxu0 %v1041
          %1947 = vmatprep.subr.mxu0 %v1045
          %1948 = vmatpush1.msra.mxu0 %v1044
          %1949 = vmatprep.subr.mxu0 %v1048
          %1950 = vmatpush1.msra.mxu0 %v1047
          %1951 = vmatprep.subr.mxu0 %v1051
          %1952 = vmatpush1.msra.mxu0 %v1050
          %1953 = vmatprep.subr.mxu0 0.0
          %1954 = vmatpush1.msra.mxu0 0.0
          %1955 = vmatprep.subr.mxu0 0.0
          %1956 = vmatpush1.msra.mxu0 0.0
          %1957 = vmatprep.subr.mxu0 0.0
          %1958 = vmatpush1.msra.mxu0 0.0
          %1959 = vmatprep.subr.mxu0 0.0
          %1960 = vmatpush1.msra.mxu0 0.0
          %1961 = vmatprep.subr.mxu0 0.0
          %1962 = vmatpush1.msra.mxu0 0.0
          %1963 = vmatprep.subr.mxu0 0.0
          %1964 = vmatpush1.msra.mxu0 0.0
          %1965 = vmatprep.subr.mxu0 0.0
          %1966 = vmatpush1.msra.mxu0 0.0
          %1967 = vmatprep.subr.mxu0 0.0
          %1968 = vmatpush1.msra.mxu0 0.0
          %1969 = vmatprep.subr.mxu0 0.0
          %1970 = vmatpush1.msra.mxu0 0.0
          %1971 = vmatprep.subr.mxu0 0.0
          %1972 = vmatpush1.msra.mxu0 0.0
          %1973 = vmatprep.subr.mxu0 0.0
          %1974 = vmatpush1.msra.mxu0 0.0
          %1975 = vmatprep.subr.mxu0 0.0
          %1976 = vmatpush1.msra.mxu0 0.0
          %1977 = vmatprep.subr.mxu0 0.0
          %1978 = vmatpush1.msra.mxu0 0.0
          %1979 = vmatprep.subr.mxu0 0.0
          %1980 = vmatpush1.msra.mxu0 0.0
          %1981 = vmatprep.subr.mxu0 0.0
          %1982 = vmatpush1.msra.mxu0 0.0
          %1983 = vmatprep.subr.mxu0 0.0
          %1984 = vmatpush1.msra.mxu0 0.0
          %1985 = vmatprep.mubr.f32.mxu0 0.0
          %1986 = vmatmul.mubr.f32.gmra.mrb[0].mxu0 %v1911
          %v1987 = vpop.f32.mrb[0].mxu0
          %v1988 = vadd.f32 0.0, %v1987
          %v1989 = vpop.f32.mrb[0].mxu0
          %v1990 = vadd.f32 0.0, %v1989
          %1991 = vdwg.mxu0
          %1992 = vmatprep.subr.mxu0 0.0
          %1993 = vmatpush1.msra.mxu0 %v1007
          %1994 = vmatprep.subr.mxu0 0.0
          %1995 = vmatpush1.msra.mxu0 %v1010
          %1996 = vmatprep.subr.mxu0 0.0
          %1997 = vmatpush1.msra.mxu0 %v1013
          %1998 = vmatprep.subr.mxu0 0.0
          %1999 = vmatpush1.msra.mxu0 %v1016
          %2000 = vmatprep.subr.mxu0 0.0
          %2001 = vmatpush1.msra.mxu0 %v1019
          %2002 = vmatprep.subr.mxu0 0.0
          %2003 = vmatpush1.msra.mxu0 %v1022
          %2004 = vmatprep.subr.mxu0 0.0
          %2005 = vmatpush1.msra.mxu0 %v1025
          %2006 = vmatprep.subr.mxu0 0.0
          %2007 = vmatpush1.msra.mxu0 %v1028
          %2008 = vmatprep.subr.mxu0 0.0
          %2009 = vmatpush1.msra.mxu0 %v1031
          %2010 = vmatprep.subr.mxu0 0.0
          %2011 = vmatpush1.msra.mxu0 %v1034
          %2012 = vmatprep.subr.mxu0 0.0
          %2013 = vmatpush1.msra.mxu0 %v1037
          %2014 = vmatprep.subr.mxu0 0.0
          %2015 = vmatpush1.msra.mxu0 %v1040
          %2016 = vmatprep.subr.mxu0 0.0
          %2017 = vmatpush1.msra.mxu0 %v1043
          %2018 = vmatprep.subr.mxu0 0.0
          %2019 = vmatpush1.msra.mxu0 %v1046
          %2020 = vmatprep.subr.mxu0 0.0
          %2021 = vmatpush1.msra.mxu0 %v1049
          %2022 = vmatprep.subr.mxu0 0.0
          %2023 = vmatpush1.msra.mxu0 %v1052
          %2024 = vmatprep.subr.mxu0 0.0
          %2025 = vmatpush1.msra.mxu0 0.0
          %2026 = vmatprep.subr.mxu0 0.0
          %2027 = vmatpush1.msra.mxu0 0.0
          %2028 = vmatprep.subr.mxu0 0.0
          %2029 = vmatpush1.msra.mxu0 0.0
          %2030 = vmatprep.subr.mxu0 0.0
          %2031 = vmatpush1.msra.mxu0 0.0
          %2032 = vmatprep.subr.mxu0 0.0
          %2033 = vmatpush1.msra.mxu0 0.0
          %2034 = vmatprep.subr.mxu0 0.0
          %2035 = vmatpush1.msra.mxu0 0.0
          %2036 = vmatprep.subr.mxu0 0.0
          %2037 = vmatpush1.msra.mxu0 0.0
          %2038 = vmatprep.subr.mxu0 0.0
          %2039 = vmatpush1.msra.mxu0 0.0
          %2040 = vmatprep.subr.mxu0 0.0
          %2041 = vmatpush1.msra.mxu0 0.0
          %2042 = vmatprep.subr.mxu0 0.0
          %2043 = vmatpush1.msra.mxu0 0.0
          %2044 = vmatprep.subr.mxu0 0.0
          %2045 = vmatpush1.msra.mxu0 0.0
          %2046 = vmatprep.subr.mxu0 0.0
          %2047 = vmatpush1.msra.mxu0 0.0
          %2048 = vmatprep.subr.mxu0 0.0
          %2049 = vmatpush1.msra.mxu0 0.0
          %2050 = vmatprep.subr.mxu0 0.0
          %2051 = vmatpush1.msra.mxu0 0.0
          %2052 = vmatprep.subr.mxu0 0.0
          %2053 = vmatpush1.msra.mxu0 0.0
          %2054 = vmatprep.subr.mxu0 0.0
          %2055 = vmatpush1.msra.mxu0 0.0
          %2056 = vmatprep.mubr.f32.mxu0 0.0
          %2057 = vmatmul.mubr.f32.gmra.mrb[0].mxu0 %v1911
          %v2058 = vpop.f32.mrb[0].mxu0
          %v2059 = vadd.f32 0.0, %v2058
          %v2060 = vpop.f32.mrb[0].mxu0
          %2061 = vdwg.mxu0
          %v2062 = vadd.f32 %v1918, %v1988
          %v2063 = vxor.u32 %v2062, 2147483648
          %v2064 = vmul.f32 %v2063, 1.442695
          %v2065 = vpow.pop %v2064
          %v2066 = vadd.f32 %v2065, 1.0
          %v2067 = vrcp.pop %v2066
          %v2068 = vmul.f32 1.0, %v2067
          %v2069 = vadd.f32 %v1919, %v1990
          %v2070 = vxor.u32 %v2069, 2147483648
          %v2071 = vmul.f32 %v2070, 1.442695
          %v2072 = vpow.pop %v2071
          %v2073 = vadd.f32 %v2072, 1.0
          %v2074 = vrcp.pop %v2073
          %v2075 = vmul.f32 1.0, %v2074
          %v2076 = vadd.f32 %v2059, %v1058
          %v2077 = vmul.f32 %v2068, %v2076
          %v2078 = vadd.f32 %v1920, %v2077
          %v2079 = vtanh.pop %v2078
          %v2080 = vsub.f32 %v1911, %v2079
          %v2081 = vmul.f32 %v2075, %v2080
          %v2082 = vadd.f32 %v2079, %v2081
          %s2083 = scalar_lea.vmem %s313, 40
          %2084 = vst [vmem:[%s2083] sm:$0xff] %v2082
          %s2085 = sadd.s32 %s1004, 6
          %s2086 = smul.u32 %s2085, 3
          %s2087 = smul.addr %s2086, 8
          %s2088 = scalar_lea.vmem [#allocation3], %s2087
          %v2089 = vld [vmem:[%s2088] sm:$0xff]
          %v2090 = vld [vmem:[%s2088 + $0x8] sm:$0xff]
          %v2091 = vld [vmem:[%s2088 + $0x10] sm:$0xff]
          %2092 = vmatprep.subr.mxu0 %v1006
          %2093 = vmatpush1.msra.mxu0 %v1005
          %2094 = vmatprep.subr.mxu0 %v1009
          %2095 = vmatpush1.msra.mxu0 %v1008
          %2096 = vmatprep.subr.mxu0 %v1012
          %2097 = vmatpush1.msra.mxu0 %v1011
          %2098 = vmatprep.subr.mxu0 %v1015
          %2099 = vmatpush1.msra.mxu0 %v1014
          %2100 = vmatprep.subr.mxu0 %v1018
          %2101 = vmatpush1.msra.mxu0 %v1017
          %2102 = vmatprep.subr.mxu0 %v1021
          %2103 = vmatpush1.msra.mxu0 %v1020
          %2104 = vmatprep.subr.mxu0 %v1024
          %2105 = vmatpush1.msra.mxu0 %v1023
          %2106 = vmatprep.subr.mxu0 %v1027
          %2107 = vmatpush1.msra.mxu0 %v1026
          %2108 = vmatprep.subr.mxu0 %v1030
          %2109 = vmatpush1.msra.mxu0 %v1029
          %2110 = vmatprep.subr.mxu0 %v1033
          %2111 = vmatpush1.msra.mxu0 %v1032
          %2112 = vmatprep.subr.mxu0 %v1036
          %2113 = vmatpush1.msra.mxu0 %v1035
          %2114 = vmatprep.subr.mxu0 %v1039
          %2115 = vmatpush1.msra.mxu0 %v1038
          %2116 = vmatprep.subr.mxu0 %v1042
          %2117 = vmatpush1.msra.mxu0 %v1041
          %2118 = vmatprep.subr.mxu0 %v1045
          %2119 = vmatpush1.msra.mxu0 %v1044
          %2120 = vmatprep.subr.mxu0 %v1048
          %2121 = vmatpush1.msra.mxu0 %v1047
          %2122 = vmatprep.subr.mxu0 %v1051
          %2123 = vmatpush1.msra.mxu0 %v1050
          %2124 = vmatprep.subr.mxu0 0.0
          %2125 = vmatpush1.msra.mxu0 0.0
          %2126 = vmatprep.subr.mxu0 0.0
          %2127 = vmatpush1.msra.mxu0 0.0
          %2128 = vmatprep.subr.mxu0 0.0
          %2129 = vmatpush1.msra.mxu0 0.0
          %2130 = vmatprep.subr.mxu0 0.0
          %2131 = vmatpush1.msra.mxu0 0.0
          %2132 = vmatprep.subr.mxu0 0.0
          %2133 = vmatpush1.msra.mxu0 0.0
          %2134 = vmatprep.subr.mxu0 0.0
          %2135 = vmatpush1.msra.mxu0 0.0
          %2136 = vmatprep.subr.mxu0 0.0
          %2137 = vmatpush1.msra.mxu0 0.0
          %2138 = vmatprep.subr.mxu0 0.0
          %2139 = vmatpush1.msra.mxu0 0.0
          %2140 = vmatprep.subr.mxu0 0.0
          %2141 = vmatpush1.msra.mxu0 0.0
          %2142 = vmatprep.subr.mxu0 0.0
          %2143 = vmatpush1.msra.mxu0 0.0
          %2144 = vmatprep.subr.mxu0 0.0
          %2145 = vmatpush1.msra.mxu0 0.0
          %2146 = vmatprep.subr.mxu0 0.0
          %2147 = vmatpush1.msra.mxu0 0.0
          %2148 = vmatprep.subr.mxu0 0.0
          %2149 = vmatpush1.msra.mxu0 0.0
          %2150 = vmatprep.subr.mxu0 0.0
          %2151 = vmatpush1.msra.mxu0 0.0
          %2152 = vmatprep.subr.mxu0 0.0
          %2153 = vmatpush1.msra.mxu0 0.0
          %2154 = vmatprep.subr.mxu0 0.0
          %2155 = vmatpush1.msra.mxu0 0.0
          %2156 = vmatprep.mubr.f32.mxu0 0.0
          %2157 = vmatmul.mubr.f32.gmra.mrb[0].mxu0 %v2082
          %v2158 = vpop.f32.mrb[0].mxu0
          %v2159 = vadd.f32 0.0, %v2158
          %v2160 = vpop.f32.mrb[0].mxu0
          %v2161 = vadd.f32 0.0, %v2160
          %2162 = vdwg.mxu0
          %2163 = vmatprep.subr.mxu0 0.0
          %2164 = vmatpush1.msra.mxu0 %v1007
          %2165 = vmatprep.subr.mxu0 0.0
          %2166 = vmatpush1.msra.mxu0 %v1010
          %2167 = vmatprep.subr.mxu0 0.0
          %2168 = vmatpush1.msra.mxu0 %v1013
          %2169 = vmatprep.subr.mxu0 0.0
          %2170 = vmatpush1.msra.mxu0 %v1016
          %2171 = vmatprep.subr.mxu0 0.0
          %2172 = vmatpush1.msra.mxu0 %v1019
          %2173 = vmatprep.subr.mxu0 0.0
          %2174 = vmatpush1.msra.mxu0 %v1022
          %2175 = vmatprep.subr.mxu0 0.0
          %2176 = vmatpush1.msra.mxu0 %v1025
          %2177 = vmatprep.subr.mxu0 0.0
          %2178 = vmatpush1.msra.mxu0 %v1028
          %2179 = vmatprep.subr.mxu0 0.0
          %2180 = vmatpush1.msra.mxu0 %v1031
          %2181 = vmatprep.subr.mxu0 0.0
          %2182 = vmatpush1.msra.mxu0 %v1034
          %2183 = vmatprep.subr.mxu0 0.0
          %2184 = vmatpush1.msra.mxu0 %v1037
          %2185 = vmatprep.subr.mxu0 0.0
          %2186 = vmatpush1.msra.mxu0 %v1040
          %2187 = vmatprep.subr.mxu0 0.0
          %2188 = vmatpush1.msra.mxu0 %v1043
          %2189 = vmatprep.subr.mxu0 0.0
          %2190 = vmatpush1.msra.mxu0 %v1046
          %2191 = vmatprep.subr.mxu0 0.0
          %2192 = vmatpush1.msra.mxu0 %v1049
          %2193 = vmatprep.subr.mxu0 0.0
          %2194 = vmatpush1.msra.mxu0 %v1052
          %2195 = vmatprep.subr.mxu0 0.0
          %2196 = vmatpush1.msra.mxu0 0.0
          %2197 = vmatprep.subr.mxu0 0.0
          %2198 = vmatpush1.msra.mxu0 0.0
          %2199 = vmatprep.subr.mxu0 0.0
          %2200 = vmatpush1.msra.mxu0 0.0
          %2201 = vmatprep.subr.mxu0 0.0
          %2202 = vmatpush1.msra.mxu0 0.0
          %2203 = vmatprep.subr.mxu0 0.0
          %2204 = vmatpush1.msra.mxu0 0.0
          %2205 = vmatprep.subr.mxu0 0.0
          %2206 = vmatpush1.msra.mxu0 0.0
          %2207 = vmatprep.subr.mxu0 0.0
          %2208 = vmatpush1.msra.mxu0 0.0
          %2209 = vmatprep.subr.mxu0 0.0
          %2210 = vmatpush1.msra.mxu0 0.0
          %2211 = vmatprep.subr.mxu0 0.0
          %2212 = vmatpush1.msra.mxu0 0.0
          %2213 = vmatprep.subr.mxu0 0.0
          %2214 = vmatpush1.msra.mxu0 0.0
          %2215 = vmatprep.subr.mxu0 0.0
          %2216 = vmatpush1.msra.mxu0 0.0
          %2217 = vmatprep.subr.mxu0 0.0
          %2218 = vmatpush1.msra.mxu0 0.0
          %2219 = vmatprep.subr.mxu0 0.0
          %2220 = vmatpush1.msra.mxu0 0.0
          %2221 = vmatprep.subr.mxu0 0.0
          %2222 = vmatpush1.msra.mxu0 0.0
          %2223 = vmatprep.subr.mxu0 0.0
          %2224 = vmatpush1.msra.mxu0 0.0
          %2225 = vmatprep.subr.mxu0 0.0
          %2226 = vmatpush1.msra.mxu0 0.0
          %2227 = vmatprep.mubr.f32.mxu0 0.0
          %2228 = vmatmul.mubr.f32.gmra.mrb[0].mxu0 %v2082
          %v2229 = vpop.f32.mrb[0].mxu0
          %v2230 = vadd.f32 0.0, %v2229
          %v2231 = vpop.f32.mrb[0].mxu0
          %2232 = vdwg.mxu0
          %v2233 = vadd.f32 %v2089, %v2159
          %v2234 = vxor.u32 %v2233, 2147483648
          %v2235 = vmul.f32 %v2234, 1.442695
          %v2236 = vpow.pop %v2235
          %v2237 = vadd.f32 %v2236, 1.0
          %v2238 = vrcp.pop %v2237
          %v2239 = vmul.f32 1.0, %v2238
          %v2240 = vadd.f32 %v2090, %v2161
          %v2241 = vxor.u32 %v2240, 2147483648
          %v2242 = vmul.f32 %v2241, 1.442695
          %v2243 = vpow.pop %v2242
          %v2244 = vadd.f32 %v2243, 1.0
          %v2245 = vrcp.pop %v2244
          %v2246 = vmul.f32 1.0, %v2245
          %v2247 = vadd.f32 %v2230, %v1058
          %v2248 = vmul.f32 %v2239, %v2247
          %v2249 = vadd.f32 %v2091, %v2248
          %v2250 = vtanh.pop %v2249
          %v2251 = vsub.f32 %v2082, %v2250
          %v2252 = vmul.f32 %v2246, %v2251
          %v2253 = vadd.f32 %v2250, %v2252
          %s2254 = scalar_lea.vmem %s313, 48
          %2255 = vst [vmem:[%s2254] sm:$0xff] %v2253
          %s2256 = sadd.s32 %s1004, 7
          %s2257 = smul.u32 %s2256, 3
          %s2258 = smul.addr %s2257, 8
          %s2259 = scalar_lea.vmem [#allocation3], %s2258
          %v2260 = vld [vmem:[%s2259] sm:$0xff]
          %v2261 = vld [vmem:[%s2259 + $0x8] sm:$0xff]
          %v2262 = vld [vmem:[%s2259 + $0x10] sm:$0xff]
          %2263 = vmatprep.subr.mxu0 %v1006
          %2264 = vmatpush1.msra.mxu0 %v1005
          %2265 = vmatprep.subr.mxu0 %v1009
          %2266 = vmatpush1.msra.mxu0 %v1008
          %2267 = vmatprep.subr.mxu0 %v1012
          %2268 = vmatpush1.msra.mxu0 %v1011
          %2269 = vmatprep.subr.mxu0 %v1015
          %2270 = vmatpush1.msra.mxu0 %v1014
          %2271 = vmatprep.subr.mxu0 %v1018
          %2272 = vmatpush1.msra.mxu0 %v1017
          %2273 = vmatprep.subr.mxu0 %v1021
          %2274 = vmatpush1.msra.mxu0 %v1020
          %2275 = vmatprep.subr.mxu0 %v1024
          %2276 = vmatpush1.msra.mxu0 %v1023
          %2277 = vmatprep.subr.mxu0 %v1027
          %2278 = vmatpush1.msra.mxu0 %v1026
          %2279 = vmatprep.subr.mxu0 %v1030
          %2280 = vmatpush1.msra.mxu0 %v1029
          %2281 = vmatprep.subr.mxu0 %v1033
          %2282 = vmatpush1.msra.mxu0 %v1032
          %2283 = vmatprep.subr.mxu0 %v1036
          %2284 = vmatpush1.msra.mxu0 %v1035
          %2285 = vmatprep.subr.mxu0 %v1039
          %2286 = vmatpush1.msra.mxu0 %v1038
          %2287 = vmatprep.subr.mxu0 %v1042
          %2288 = vmatpush1.msra.mxu0 %v1041
          %2289 = vmatprep.subr.mxu0 %v1045
          %2290 = vmatpush1.msra.mxu0 %v1044
          %2291 = vmatprep.subr.mxu0 %v1048
          %2292 = vmatpush1.msra.mxu0 %v1047
          %2293 = vmatprep.subr.mxu0 %v1051
          %2294 = vmatpush1.msra.mxu0 %v1050
          %2295 = vmatprep.subr.mxu0 0.0
          %2296 = vmatpush1.msra.mxu0 0.0
          %2297 = vmatprep.subr.mxu0 0.0
          %2298 = vmatpush1.msra.mxu0 0.0
          %2299 = vmatprep.subr.mxu0 0.0
          %2300 = vmatpush1.msra.mxu0 0.0
          %2301 = vmatprep.subr.mxu0 0.0
          %2302 = vmatpush1.msra.mxu0 0.0
          %2303 = vmatprep.subr.mxu0 0.0
          %2304 = vmatpush1.msra.mxu0 0.0
          %2305 = vmatprep.subr.mxu0 0.0
          %2306 = vmatpush1.msra.mxu0 0.0
          %2307 = vmatprep.subr.mxu0 0.0
          %2308 = vmatpush1.msra.mxu0 0.0
          %2309 = vmatprep.subr.mxu0 0.0
          %2310 = vmatpush1.msra.mxu0 0.0
          %2311 = vmatprep.subr.mxu0 0.0
          %2312 = vmatpush1.msra.mxu0 0.0
          %2313 = vmatprep.subr.mxu0 0.0
          %2314 = vmatpush1.msra.mxu0 0.0
          %2315 = vmatprep.subr.mxu0 0.0
          %2316 = vmatpush1.msra.mxu0 0.0
          %2317 = vmatprep.subr.mxu0 0.0
          %2318 = vmatpush1.msra.mxu0 0.0
          %2319 = vmatprep.subr.mxu0 0.0
          %2320 = vmatpush1.msra.mxu0 0.0
          %2321 = vmatprep.subr.mxu0 0.0
          %2322 = vmatpush1.msra.mxu0 0.0
          %2323 = vmatprep.subr.mxu0 0.0
          %2324 = vmatpush1.msra.mxu0 0.0
          %2325 = vmatprep.subr.mxu0 0.0
          %2326 = vmatpush1.msra.mxu0 0.0
          %2327 = vmatprep.mubr.f32.mxu0 0.0
          %2328 = vmatmul.mubr.f32.gmra.mrb[0].mxu0 %v2253
          %v2329 = vpop.f32.mrb[0].mxu0
          %v2330 = vadd.f32 0.0, %v2329
          %v2331 = vpop.f32.mrb[0].mxu0
          %v2332 = vadd.f32 0.0, %v2331
          %2333 = vdwg.mxu0
          %2334 = vmatprep.subr.mxu0 0.0
          %2335 = vmatpush1.msra.mxu0 %v1007
          %2336 = vmatprep.subr.mxu0 0.0
          %2337 = vmatpush1.msra.mxu0 %v1010
          %2338 = vmatprep.subr.mxu0 0.0
          %2339 = vmatpush1.msra.mxu0 %v1013
          %2340 = vmatprep.subr.mxu0 0.0
          %2341 = vmatpush1.msra.mxu0 %v1016
          %2342 = vmatprep.subr.mxu0 0.0
          %2343 = vmatpush1.msra.mxu0 %v1019
          %2344 = vmatprep.subr.mxu0 0.0
          %2345 = vmatpush1.msra.mxu0 %v1022
          %2346 = vmatprep.subr.mxu0 0.0
          %2347 = vmatpush1.msra.mxu0 %v1025
          %2348 = vmatprep.subr.mxu0 0.0
          %2349 = vmatpush1.msra.mxu0 %v1028
          %2350 = vmatprep.subr.mxu0 0.0
          %2351 = vmatpush1.msra.mxu0 %v1031
          %2352 = vmatprep.subr.mxu0 0.0
          %2353 = vmatpush1.msra.mxu0 %v1034
          %2354 = vmatprep.subr.mxu0 0.0
          %2355 = vmatpush1.msra.mxu0 %v1037
          %2356 = vmatprep.subr.mxu0 0.0
          %2357 = vmatpush1.msra.mxu0 %v1040
          %2358 = vmatprep.subr.mxu0 0.0
          %2359 = vmatpush1.msra.mxu0 %v1043
          %2360 = vmatprep.subr.mxu0 0.0
          %2361 = vmatpush1.msra.mxu0 %v1046
          %2362 = vmatprep.subr.mxu0 0.0
          %2363 = vmatpush1.msra.mxu0 %v1049
          %2364 = vmatprep.subr.mxu0 0.0
          %2365 = vmatpush1.msra.mxu0 %v1052
          %2366 = vmatprep.subr.mxu0 0.0
          %2367 = vmatpush1.msra.mxu0 0.0
          %2368 = vmatprep.subr.mxu0 0.0
          %2369 = vmatpush1.msra.mxu0 0.0
          %2370 = vmatprep.subr.mxu0 0.0
          %2371 = vmatpush1.msra.mxu0 0.0
          %2372 = vmatprep.subr.mxu0 0.0
          %2373 = vmatpush1.msra.mxu0 0.0
          %2374 = vmatprep.subr.mxu0 0.0
          %2375 = vmatpush1.msra.mxu0 0.0
          %2376 = vmatprep.subr.mxu0 0.0
          %2377 = vmatpush1.msra.mxu0 0.0
          %2378 = vmatprep.subr.mxu0 0.0
          %2379 = vmatpush1.msra.mxu0 0.0
          %2380 = vmatprep.subr.mxu0 0.0
          %2381 = vmatpush1.msra.mxu0 0.0
          %2382 = vmatprep.subr.mxu0 0.0
          %2383 = vmatpush1.msra.mxu0 0.0
          %2384 = vmatprep.subr.mxu0 0.0
          %2385 = vmatpush1.msra.mxu0 0.0
          %2386 = vmatprep.subr.mxu0 0.0
          %2387 = vmatpush1.msra.mxu0 0.0
          %2388 = vmatprep.subr.mxu0 0.0
          %2389 = vmatpush1.msra.mxu0 0.0
          %2390 = vmatprep.subr.mxu0 0.0
          %2391 = vmatpush1.msra.mxu0 0.0
          %2392 = vmatprep.subr.mxu0 0.0
          %2393 = vmatpush1.msra.mxu0 0.0
          %2394 = vmatprep.subr.mxu0 0.0
          %2395 = vmatpush1.msra.mxu0 0.0
          %2396 = vmatprep.subr.mxu0 0.0
          %2397 = vmatpush1.msra.mxu0 0.0
          %2398 = vmatprep.mubr.f32.mxu0 0.0
          %2399 = vmatmul.mubr.f32.gmra.mrb[0].mxu0 %v2253
          %v2400 = vpop.f32.mrb[0].mxu0
          %v2401 = vadd.f32 0.0, %v2400
          %v2402 = vpop.f32.mrb[0].mxu0
          %2403 = vdwg.mxu0
          %v2404 = vadd.f32 %v2260, %v2330
          %v2405 = vxor.u32 %v2404, 2147483648
          %v2406 = vmul.f32 %v2405, 1.442695
          %v2407 = vpow.pop %v2406
          %v2408 = vadd.f32 %v2407, 1.0
          %v2409 = vrcp.pop %v2408
          %v2410 = vmul.f32 1.0, %v2409
          %v2411 = vadd.f32 %v2261, %v2332
          %v2412 = vxor.u32 %v2411, 2147483648
          %v2413 = vmul.f32 %v2412, 1.442695
          %v2414 = vpow.pop %v2413
          %v2415 = vadd.f32 %v2414, 1.0
          %v2416 = vrcp.pop %v2415
          %v2417 = vmul.f32 1.0, %v2416
          %v2418 = vadd.f32 %v2401, %v1058
          %v2419 = vmul.f32 %v2410, %v2418
          %v2420 = vadd.f32 %v2262, %v2419
          %v2421 = vtanh.pop %v2420
          %v2422 = vsub.f32 %v2253, %v2421
          %v2423 = vmul.f32 %v2417, %v2422
          %v2424 = vadd.f32 %v2421, %v2423
          %s2425 = scalar_lea.vmem %s313, 56
          %2426 = vst [vmem:[%s2425] sm:$0xff] %v2424
          %2427 = vst [vmem:[#allocation2] sm:$0xff] %v2424
        $region56: #{gru_model_forward.3} parent=39 // pred_fallthru
          _
        %p2428 = scmp.eq.s32.totalorder %s23, 1
        // Predicated region
        $region57: #{gru_model_forward.3} parent=39 // pred_check
          %p2429 = pneg %p2428
        $region58: #{gru_model_forward.3} parent=39 // pred_check_branch
          %2431 = sbr.rel (%p2429) target = $region60
        $region59: #{gru_model_forward.3} parent=39 // pred_region
          %s2432 = ssub.s32 %s23, 1
          %p2433 = scmp.lt.s32.totalorder %s2432, 0
          %s2434 = ssub.s32 0, %s2432
          %s2435 = scalar_select %p2433, %s2434, %s2432
          %s2436 = sand.u32 %s2435, 1
          %s2437 = ssub.s32 0, %s2436
          %s2438 = scalar_select %p2433, %s2437, %s2436
          %p2439 = scmp.ne.s32.totalorder %s2438, 0
          %p2440 = scmp.lt.s32.totalorder %s2438, 0
          %p2441 = pnand %p2440, %p2439
          %p2442 = pneg %p2441
          %s2443 = sadd.s32 %s2438, 2
          %s2444 = scalar_select %p2442, %s2443, %s2438
          %s2445 = smul.u32 %s2444, 8
          %v2446 = vld [vmem:[#allocation6] sm:$0xff]
          %v2447 = vld [vmem:[#allocation6 + $0x8] sm:$0xff]
          %v2448 = vld [vmem:[#allocation6 + $0x10] sm:$0xff]
          %v2449 = vld [vmem:[#allocation6 + $0x18] sm:$0xff]
          %v2450 = vld [vmem:[#allocation6 + $0x20] sm:$0xff]
          %v2451 = vld [vmem:[#allocation6 + $0x28] sm:$0xff]
          %v2452 = vld [vmem:[#allocation6 + $0x30] sm:$0xff]
          %v2453 = vld [vmem:[#allocation6 + $0x38] sm:$0xff]
          %v2454 = vld [vmem:[#allocation6 + $0x40] sm:$0xff]
          %v2455 = vld [vmem:[#allocation6 + $0x48] sm:$0xff]
          %v2456 = vld [vmem:[#allocation6 + $0x50] sm:$0xff]
          %v2457 = vld [vmem:[#allocation6 + $0x58] sm:$0xff]
          %v2458 = vld [vmem:[#allocation6 + $0x60] sm:$0xff]
          %v2459 = vld [vmem:[#allocation6 + $0x68] sm:$0xff]
          %v2460 = vld [vmem:[#allocation6 + $0x70] sm:$0xff]
          %v2461 = vld [vmem:[#allocation6 + $0x78] sm:$0xff]
          %v2462 = vld [vmem:[#allocation6 + $0x80] sm:$0xff]
          %v2463 = vld [vmem:[#allocation6 + $0x88] sm:$0xff]
          %v2464 = vld [vmem:[#allocation6 + $0x90] sm:$0xff]
          %v2465 = vld [vmem:[#allocation6 + $0x98] sm:$0xff]
          %v2466 = vld [vmem:[#allocation6 + $0xa0] sm:$0xff]
          %v2467 = vld [vmem:[#allocation6 + $0xa8] sm:$0xff]
          %v2468 = vld [vmem:[#allocation6 + $0xb0] sm:$0xff]
          %v2469 = vld [vmem:[#allocation6 + $0xb8] sm:$0xff]
          %v2470 = vld [vmem:[#allocation6 + $0xc0] sm:$0xff]
          %v2471 = vld [vmem:[#allocation6 + $0xc8] sm:$0xff]
          %v2472 = vld [vmem:[#allocation6 + $0xd0] sm:$0xff]
          %v2473 = vld [vmem:[#allocation6 + $0xd8] sm:$0xff]
          %v2474 = vld [vmem:[#allocation6 + $0xe0] sm:$0xff]
          %v2475 = vld [vmem:[#allocation6 + $0xe8] sm:$0xff]
          %v2476 = vld [vmem:[#allocation6 + $0xf0] sm:$0xff]
          %v2477 = vld [vmem:[#allocation6 + $0xf8] sm:$0xff]
          %v2478 = vld [vmem:[#allocation6 + $0x100] sm:$0xff]
          %v2479 = vld [vmem:[#allocation6 + $0x108] sm:$0xff]
          %v2480 = vld [vmem:[#allocation6 + $0x110] sm:$0xff]
          %v2481 = vld [vmem:[#allocation6 + $0x118] sm:$0xff]
          %v2482 = vld [vmem:[#allocation6 + $0x120] sm:$0xff]
          %v2483 = vld [vmem:[#allocation6 + $0x128] sm:$0xff]
          %v2484 = vld [vmem:[#allocation6 + $0x130] sm:$0xff]
          %v2485 = vld [vmem:[#allocation6 + $0x138] sm:$0xff]
          %v2486 = vld [vmem:[#allocation6 + $0x140] sm:$0xff]
          %v2487 = vld [vmem:[#allocation6 + $0x148] sm:$0xff]
          %v2488 = vld [vmem:[#allocation6 + $0x150] sm:$0xff]
          %v2489 = vld [vmem:[#allocation6 + $0x158] sm:$0xff]
          %v2490 = vld [vmem:[#allocation6 + $0x160] sm:$0xff]
          %v2491 = vld [vmem:[#allocation6 + $0x168] sm:$0xff]
          %v2492 = vld [vmem:[#allocation6 + $0x170] sm:$0xff]
          %v2493 = vld [vmem:[#allocation6 + $0x178] sm:$0xff]
          %v2494 = vld [vmem:[%s4] sm:$0x1]
          %v2496 = vlaneseq
          %v2497 = vshrl.u32 %v2496, 7
          %v2498 = vsub.s32 0, %v2497
          %v2499 = vrot.slane %v2494, %v2498
          %v2501 = vld [vmem:[#allocation2] sm:$0xff]
          %s2502 = smul.u32 %s2445, 3
          %s2503 = smul.addr %s2502, 8
          %s2504 = scalar_lea.vmem [#allocation3], %s2503
          %v2505 = vld [vmem:[%s2504] sm:$0xff]
          %v2506 = vld [vmem:[%s2504 + $0x8] sm:$0xff]
          %v2507 = vld [vmem:[%s2504 + $0x10] sm:$0xff]
          %2508 = vmatprep.subr.mxu0 %v2447
          %2509 = vmatpush1.msra.mxu0 %v2446
          %2510 = vmatprep.subr.mxu0 %v2450
          %2511 = vmatpush1.msra.mxu0 %v2449
          %2512 = vmatprep.subr.mxu0 %v2453
          %2513 = vmatpush1.msra.mxu0 %v2452
          %2514 = vmatprep.subr.mxu0 %v2456
          %2515 = vmatpush1.msra.mxu0 %v2455
          %2516 = vmatprep.subr.mxu0 %v2459
          %2517 = vmatpush1.msra.mxu0 %v2458
          %2518 = vmatprep.subr.mxu0 %v2462
          %2519 = vmatpush1.msra.mxu0 %v2461
          %2520 = vmatprep.subr.mxu0 %v2465
          %2521 = vmatpush1.msra.mxu0 %v2464
          %2522 = vmatprep.subr.mxu0 %v2468
          %2523 = vmatpush1.msra.mxu0 %v2467
          %2524 = vmatprep.subr.mxu0 %v2471
          %2525 = vmatpush1.msra.mxu0 %v2470
          %2526 = vmatprep.subr.mxu0 %v2474
          %2527 = vmatpush1.msra.mxu0 %v2473
          %2528 = vmatprep.subr.mxu0 %v2477
          %2529 = vmatpush1.msra.mxu0 %v2476
          %2530 = vmatprep.subr.mxu0 %v2480
          %2531 = vmatpush1.msra.mxu0 %v2479
          %2532 = vmatprep.subr.mxu0 %v2483
          %2533 = vmatpush1.msra.mxu0 %v2482
          %2534 = vmatprep.subr.mxu0 %v2486
          %2535 = vmatpush1.msra.mxu0 %v2485
          %2536 = vmatprep.subr.mxu0 %v2489
          %2537 = vmatpush1.msra.mxu0 %v2488
          %2538 = vmatprep.subr.mxu0 %v2492
          %2539 = vmatpush1.msra.mxu0 %v2491
          %2540 = vmatprep.subr.mxu0 0.0
          %2541 = vmatpush1.msra.mxu0 0.0
          %2542 = vmatprep.subr.mxu0 0.0
          %2543 = vmatpush1.msra.mxu0 0.0
          %2544 = vmatprep.subr.mxu0 0.0
          %2545 = vmatpush1.msra.mxu0 0.0
          %2546 = vmatprep.subr.mxu0 0.0
          %2547 = vmatpush1.msra.mxu0 0.0
          %2548 = vmatprep.subr.mxu0 0.0
          %2549 = vmatpush1.msra.mxu0 0.0
          %2550 = vmatprep.subr.mxu0 0.0
          %2551 = vmatpush1.msra.mxu0 0.0
          %2552 = vmatprep.subr.mxu0 0.0
          %2553 = vmatpush1.msra.mxu0 0.0
          %2554 = vmatprep.subr.mxu0 0.0
          %2555 = vmatpush1.msra.mxu0 0.0
          %2556 = vmatprep.subr.mxu0 0.0
          %2557 = vmatpush1.msra.mxu0 0.0
          %2558 = vmatprep.subr.mxu0 0.0
          %2559 = vmatpush1.msra.mxu0 0.0
          %2560 = vmatprep.subr.mxu0 0.0
          %2561 = vmatpush1.msra.mxu0 0.0
          %2562 = vmatprep.subr.mxu0 0.0
          %2563 = vmatpush1.msra.mxu0 0.0
          %2564 = vmatprep.subr.mxu0 0.0
          %2565 = vmatpush1.msra.mxu0 0.0
          %2566 = vmatprep.subr.mxu0 0.0
          %2567 = vmatpush1.msra.mxu0 0.0
          %2568 = vmatprep.subr.mxu0 0.0
          %2569 = vmatpush1.msra.mxu0 0.0
          %2570 = vmatprep.subr.mxu0 0.0
          %2571 = vmatpush1.msra.mxu0 0.0
          %2572 = vmatprep.mubr.f32.mxu0 0.0
          %2573 = vmatmul.mubr.f32.gmra.mrb[0].mxu0 %v2501
          %v2574 = vpop.f32.mrb[0].mxu0
          %v2575 = vadd.f32 0.0, %v2574
          %v2576 = vpop.f32.mrb[0].mxu0
          %v2577 = vadd.f32 0.0, %v2576
          %2578 = vdwg.mxu0
          %2579 = vmatprep.subr.mxu0 0.0
          %2580 = vmatpush1.msra.mxu0 %v2448
          %2581 = vmatprep.subr.mxu0 0.0
          %2582 = vmatpush1.msra.mxu0 %v2451
          %2583 = vmatprep.subr.mxu0 0.0
          %2584 = vmatpush1.msra.mxu0 %v2454
          %2585 = vmatprep.subr.mxu0 0.0
          %2586 = vmatpush1.msra.mxu0 %v2457
          %2587 = vmatprep.subr.mxu0 0.0
          %2588 = vmatpush1.msra.mxu0 %v2460
          %2589 = vmatprep.subr.mxu0 0.0
          %2590 = vmatpush1.msra.mxu0 %v2463
          %2591 = vmatprep.subr.mxu0 0.0
          %2592 = vmatpush1.msra.mxu0 %v2466
          %2593 = vmatprep.subr.mxu0 0.0
          %2594 = vmatpush1.msra.mxu0 %v2469
          %2595 = vmatprep.subr.mxu0 0.0
          %2596 = vmatpush1.msra.mxu0 %v2472
          %2597 = vmatprep.subr.mxu0 0.0
          %2598 = vmatpush1.msra.mxu0 %v2475
          %2599 = vmatprep.subr.mxu0 0.0
          %2600 = vmatpush1.msra.mxu0 %v2478
          %2601 = vmatprep.subr.mxu0 0.0
          %2602 = vmatpush1.msra.mxu0 %v2481
          %2603 = vmatprep.subr.mxu0 0.0
          %2604 = vmatpush1.msra.mxu0 %v2484
          %2605 = vmatprep.subr.mxu0 0.0
          %2606 = vmatpush1.msra.mxu0 %v2487
          %2607 = vmatprep.subr.mxu0 0.0
          %2608 = vmatpush1.msra.mxu0 %v2490
          %2609 = vmatprep.subr.mxu0 0.0
          %2610 = vmatpush1.msra.mxu0 %v2493
          %2611 = vmatprep.subr.mxu0 0.0
          %2612 = vmatpush1.msra.mxu0 0.0
          %2613 = vmatprep.subr.mxu0 0.0
          %2614 = vmatpush1.msra.mxu0 0.0
          %2615 = vmatprep.subr.mxu0 0.0
          %2616 = vmatpush1.msra.mxu0 0.0
          %2617 = vmatprep.subr.mxu0 0.0
          %2618 = vmatpush1.msra.mxu0 0.0
          %2619 = vmatprep.subr.mxu0 0.0
          %2620 = vmatpush1.msra.mxu0 0.0
          %2621 = vmatprep.subr.mxu0 0.0
          %2622 = vmatpush1.msra.mxu0 0.0
          %2623 = vmatprep.subr.mxu0 0.0
          %2624 = vmatpush1.msra.mxu0 0.0
          %2625 = vmatprep.subr.mxu0 0.0
          %2626 = vmatpush1.msra.mxu0 0.0
          %2627 = vmatprep.subr.mxu0 0.0
          %2628 = vmatpush1.msra.mxu0 0.0
          %2629 = vmatprep.subr.mxu0 0.0
          %2630 = vmatpush1.msra.mxu0 0.0
          %2631 = vmatprep.subr.mxu0 0.0
          %2632 = vmatpush1.msra.mxu0 0.0
          %2633 = vmatprep.subr.mxu0 0.0
          %2634 = vmatpush1.msra.mxu0 0.0
          %2635 = vmatprep.subr.mxu0 0.0
          %2636 = vmatpush1.msra.mxu0 0.0
          %2637 = vmatprep.subr.mxu0 0.0
          %2638 = vmatpush1.msra.mxu0 0.0
          %2639 = vmatprep.subr.mxu0 0.0
          %2640 = vmatpush1.msra.mxu0 0.0
          %2641 = vmatprep.subr.mxu0 0.0
          %2642 = vmatpush1.msra.mxu0 0.0
          %2643 = vmatprep.mubr.f32.mxu0 0.0
          %2644 = vmatmul.mubr.f32.gmra.mrb[0].mxu0 %v2501
          %v2645 = vpop.f32.mrb[0].mxu0
          %v2646 = vadd.f32 0.0, %v2645
          %v2647 = vpop.f32.mrb[0].mxu0
          %2648 = vdwg.mxu0
          %v2649 = vadd.f32 %v2505, %v2575
          %v2650 = vxor.u32 %v2649, 2147483648
          %v2651 = vmul.f32 %v2650, 1.442695
          %v2652 = vpow.pop %v2651
          %v2653 = vadd.f32 %v2652, 1.0
          %v2654 = vrcp.pop %v2653
          %v2655 = vmul.f32 1.0, %v2654
          %v2656 = vadd.f32 %v2506, %v2577
          %v2657 = vxor.u32 %v2656, 2147483648
          %v2658 = vmul.f32 %v2657, 1.442695
          %v2659 = vpow.pop %v2658
          %v2660 = vadd.f32 %v2659, 1.0
          %v2661 = vrcp.pop %v2660
          %v2662 = vmul.f32 1.0, %v2661
          %v2663 = vadd.f32 %v2646, %v2499
          %v2664 = vmul.f32 %v2655, %v2663
          %v2665 = vadd.f32 %v2507, %v2664
          %v2666 = vtanh.pop %v2665
          %v2667 = vsub.f32 %v2501, %v2666
          %v2668 = vmul.f32 %v2662, %v2667
          %v2669 = vadd.f32 %v2666, %v2668
          %2670 = vst [vmem:[%s313] sm:$0xff] %v2669
          %s2671 = sadd.s32 %s2445, 1
          %s2672 = smul.u32 %s2671, 3
          %s2673 = smul.addr %s2672, 8
          %s2674 = scalar_lea.vmem [#allocation3], %s2673
          %v2675 = vld [vmem:[%s2674] sm:$0xff]
          %v2676 = vld [vmem:[%s2674 + $0x8] sm:$0xff]
          %v2677 = vld [vmem:[%s2674 + $0x10] sm:$0xff]
          %2678 = vmatprep.subr.mxu0 %v2447
          %2679 = vmatpush1.msra.mxu0 %v2446
          %2680 = vmatprep.subr.mxu0 %v2450
          %2681 = vmatpush1.msra.mxu0 %v2449
          %2682 = vmatprep.subr.mxu0 %v2453
          %2683 = vmatpush1.msra.mxu0 %v2452
          %2684 = vmatprep.subr.mxu0 %v2456
          %2685 = vmatpush1.msra.mxu0 %v2455
          %2686 = vmatprep.subr.mxu0 %v2459
          %2687 = vmatpush1.msra.mxu0 %v2458
          %2688 = vmatprep.subr.mxu0 %v2462
          %2689 = vmatpush1.msra.mxu0 %v2461
          %2690 = vmatprep.subr.mxu0 %v2465
          %2691 = vmatpush1.msra.mxu0 %v2464
          %2692 = vmatprep.subr.mxu0 %v2468
          %2693 = vmatpush1.msra.mxu0 %v2467
          %2694 = vmatprep.subr.mxu0 %v2471
          %2695 = vmatpush1.msra.mxu0 %v2470
          %2696 = vmatprep.subr.mxu0 %v2474
          %2697 = vmatpush1.msra.mxu0 %v2473
          %2698 = vmatprep.subr.mxu0 %v2477
          %2699 = vmatpush1.msra.mxu0 %v2476
          %2700 = vmatprep.subr.mxu0 %v2480
          %2701 = vmatpush1.msra.mxu0 %v2479
          %2702 = vmatprep.subr.mxu0 %v2483
          %2703 = vmatpush1.msra.mxu0 %v2482
          %2704 = vmatprep.subr.mxu0 %v2486
          %2705 = vmatpush1.msra.mxu0 %v2485
          %2706 = vmatprep.subr.mxu0 %v2489
          %2707 = vmatpush1.msra.mxu0 %v2488
          %2708 = vmatprep.subr.mxu0 %v2492
          %2709 = vmatpush1.msra.mxu0 %v2491
          %2710 = vmatprep.subr.mxu0 0.0
          %2711 = vmatpush1.msra.mxu0 0.0
          %2712 = vmatprep.subr.mxu0 0.0
          %2713 = vmatpush1.msra.mxu0 0.0
          %2714 = vmatprep.subr.mxu0 0.0
          %2715 = vmatpush1.msra.mxu0 0.0
          %2716 = vmatprep.subr.mxu0 0.0
          %2717 = vmatpush1.msra.mxu0 0.0
          %2718 = vmatprep.subr.mxu0 0.0
          %2719 = vmatpush1.msra.mxu0 0.0
          %2720 = vmatprep.subr.mxu0 0.0
          %2721 = vmatpush1.msra.mxu0 0.0
          %2722 = vmatprep.subr.mxu0 0.0
          %2723 = vmatpush1.msra.mxu0 0.0
          %2724 = vmatprep.subr.mxu0 0.0
          %2725 = vmatpush1.msra.mxu0 0.0
          %2726 = vmatprep.subr.mxu0 0.0
          %2727 = vmatpush1.msra.mxu0 0.0
          %2728 = vmatprep.subr.mxu0 0.0
          %2729 = vmatpush1.msra.mxu0 0.0
          %2730 = vmatprep.subr.mxu0 0.0
          %2731 = vmatpush1.msra.mxu0 0.0
          %2732 = vmatprep.subr.mxu0 0.0
          %2733 = vmatpush1.msra.mxu0 0.0
          %2734 = vmatprep.subr.mxu0 0.0
          %2735 = vmatpush1.msra.mxu0 0.0
          %2736 = vmatprep.subr.mxu0 0.0
          %2737 = vmatpush1.msra.mxu0 0.0
          %2738 = vmatprep.subr.mxu0 0.0
          %2739 = vmatpush1.msra.mxu0 0.0
          %2740 = vmatprep.subr.mxu0 0.0
          %2741 = vmatpush1.msra.mxu0 0.0
          %2742 = vmatprep.mubr.f32.mxu0 0.0
          %2743 = vmatmul.mubr.f32.gmra.mrb[0].mxu0 %v2669
          %v2744 = vpop.f32.mrb[0].mxu0
          %v2745 = vadd.f32 0.0, %v2744
          %v2746 = vpop.f32.mrb[0].mxu0
          %v2747 = vadd.f32 0.0, %v2746
          %2748 = vdwg.mxu0
          %2749 = vmatprep.subr.mxu0 0.0
          %2750 = vmatpush1.msra.mxu0 %v2448
          %2751 = vmatprep.subr.mxu0 0.0
          %2752 = vmatpush1.msra.mxu0 %v2451
          %2753 = vmatprep.subr.mxu0 0.0
          %2754 = vmatpush1.msra.mxu0 %v2454
          %2755 = vmatprep.subr.mxu0 0.0
          %2756 = vmatpush1.msra.mxu0 %v2457
          %2757 = vmatprep.subr.mxu0 0.0
          %2758 = vmatpush1.msra.mxu0 %v2460
          %2759 = vmatprep.subr.mxu0 0.0
          %2760 = vmatpush1.msra.mxu0 %v2463
          %2761 = vmatprep.subr.mxu0 0.0
          %2762 = vmatpush1.msra.mxu0 %v2466
          %2763 = vmatprep.subr.mxu0 0.0
          %2764 = vmatpush1.msra.mxu0 %v2469
          %2765 = vmatprep.subr.mxu0 0.0
          %2766 = vmatpush1.msra.mxu0 %v2472
          %2767 = vmatprep.subr.mxu0 0.0
          %2768 = vmatpush1.msra.mxu0 %v2475
          %2769 = vmatprep.subr.mxu0 0.0
          %2770 = vmatpush1.msra.mxu0 %v2478
          %2771 = vmatprep.subr.mxu0 0.0
          %2772 = vmatpush1.msra.mxu0 %v2481
          %2773 = vmatprep.subr.mxu0 0.0
          %2774 = vmatpush1.msra.mxu0 %v2484
          %2775 = vmatprep.subr.mxu0 0.0
          %2776 = vmatpush1.msra.mxu0 %v2487
          %2777 = vmatprep.subr.mxu0 0.0
          %2778 = vmatpush1.msra.mxu0 %v2490
          %2779 = vmatprep.subr.mxu0 0.0
          %2780 = vmatpush1.msra.mxu0 %v2493
          %2781 = vmatprep.subr.mxu0 0.0
          %2782 = vmatpush1.msra.mxu0 0.0
          %2783 = vmatprep.subr.mxu0 0.0
          %2784 = vmatpush1.msra.mxu0 0.0
          %2785 = vmatprep.subr.mxu0 0.0
          %2786 = vmatpush1.msra.mxu0 0.0
          %2787 = vmatprep.subr.mxu0 0.0
          %2788 = vmatpush1.msra.mxu0 0.0
          %2789 = vmatprep.subr.mxu0 0.0
          %2790 = vmatpush1.msra.mxu0 0.0
          %2791 = vmatprep.subr.mxu0 0.0
          %2792 = vmatpush1.msra.mxu0 0.0
          %2793 = vmatprep.subr.mxu0 0.0
          %2794 = vmatpush1.msra.mxu0 0.0
          %2795 = vmatprep.subr.mxu0 0.0
          %2796 = vmatpush1.msra.mxu0 0.0
          %2797 = vmatprep.subr.mxu0 0.0
          %2798 = vmatpush1.msra.mxu0 0.0
          %2799 = vmatprep.subr.mxu0 0.0
          %2800 = vmatpush1.msra.mxu0 0.0
          %2801 = vmatprep.subr.mxu0 0.0
          %2802 = vmatpush1.msra.mxu0 0.0
          %2803 = vmatprep.subr.mxu0 0.0
          %2804 = vmatpush1.msra.mxu0 0.0
          %2805 = vmatprep.subr.mxu0 0.0
          %2806 = vmatpush1.msra.mxu0 0.0
          %2807 = vmatprep.subr.mxu0 0.0
          %2808 = vmatpush1.msra.mxu0 0.0
          %2809 = vmatprep.subr.mxu0 0.0
          %2810 = vmatpush1.msra.mxu0 0.0
          %2811 = vmatprep.subr.mxu0 0.0
          %2812 = vmatpush1.msra.mxu0 0.0
          %2813 = vmatprep.mubr.f32.mxu0 0.0
          %2814 = vmatmul.mubr.f32.gmra.mrb[0].mxu0 %v2669
          %v2815 = vpop.f32.mrb[0].mxu0
          %v2816 = vadd.f32 0.0, %v2815
          %v2817 = vpop.f32.mrb[0].mxu0
          %2818 = vdwg.mxu0
          %v2819 = vadd.f32 %v2675, %v2745
          %v2820 = vxor.u32 %v2819, 2147483648
          %v2821 = vmul.f32 %v2820, 1.442695
          %v2822 = vpow.pop %v2821
          %v2823 = vadd.f32 %v2822, 1.0
          %v2824 = vrcp.pop %v2823
          %v2825 = vmul.f32 1.0, %v2824
          %v2826 = vadd.f32 %v2676, %v2747
          %v2827 = vxor.u32 %v2826, 2147483648
          %v2828 = vmul.f32 %v2827, 1.442695
          %v2829 = vpow.pop %v2828
          %v2830 = vadd.f32 %v2829, 1.0
          %v2831 = vrcp.pop %v2830
          %v2832 = vmul.f32 1.0, %v2831
          %v2833 = vadd.f32 %v2816, %v2499
          %v2834 = vmul.f32 %v2825, %v2833
          %v2835 = vadd.f32 %v2677, %v2834
          %v2836 = vtanh.pop %v2835
          %v2837 = vsub.f32 %v2669, %v2836
          %v2838 = vmul.f32 %v2832, %v2837
          %v2839 = vadd.f32 %v2836, %v2838
          %s2840 = scalar_lea.vmem %s313, 8
          %2841 = vst [vmem:[%s2840] sm:$0xff] %v2839
          %s2842 = sadd.s32 %s2445, 2
          %s2843 = smul.u32 %s2842, 3
          %s2844 = smul.addr %s2843, 8
          %s2845 = scalar_lea.vmem [#allocation3], %s2844
          %v2846 = vld [vmem:[%s2845] sm:$0xff]
          %v2847 = vld [vmem:[%s2845 + $0x8] sm:$0xff]
          %v2848 = vld [vmem:[%s2845 + $0x10] sm:$0xff]
          %2849 = vmatprep.subr.mxu0 %v2447
          %2850 = vmatpush1.msra.mxu0 %v2446
          %2851 = vmatprep.subr.mxu0 %v2450
          %2852 = vmatpush1.msra.mxu0 %v2449
          %2853 = vmatprep.subr.mxu0 %v2453
          %2854 = vmatpush1.msra.mxu0 %v2452
          %2855 = vmatprep.subr.mxu0 %v2456
          %2856 = vmatpush1.msra.mxu0 %v2455
          %2857 = vmatprep.subr.mxu0 %v2459
          %2858 = vmatpush1.msra.mxu0 %v2458
          %2859 = vmatprep.subr.mxu0 %v2462
          %2860 = vmatpush1.msra.mxu0 %v2461
          %2861 = vmatprep.subr.mxu0 %v2465
          %2862 = vmatpush1.msra.mxu0 %v2464
          %2863 = vmatprep.subr.mxu0 %v2468
          %2864 = vmatpush1.msra.mxu0 %v2467
          %2865 = vmatprep.subr.mxu0 %v2471
          %2866 = vmatpush1.msra.mxu0 %v2470
          %2867 = vmatprep.subr.mxu0 %v2474
          %2868 = vmatpush1.msra.mxu0 %v2473
          %2869 = vmatprep.subr.mxu0 %v2477
          %2870 = vmatpush1.msra.mxu0 %v2476
          %2871 = vmatprep.subr.mxu0 %v2480
          %2872 = vmatpush1.msra.mxu0 %v2479
          %2873 = vmatprep.subr.mxu0 %v2483
          %2874 = vmatpush1.msra.mxu0 %v2482
          %2875 = vmatprep.subr.mxu0 %v2486
          %2876 = vmatpush1.msra.mxu0 %v2485
          %2877 = vmatprep.subr.mxu0 %v2489
          %2878 = vmatpush1.msra.mxu0 %v2488
          %2879 = vmatprep.subr.mxu0 %v2492
          %2880 = vmatpush1.msra.mxu0 %v2491
          %2881 = vmatprep.subr.mxu0 0.0
          %2882 = vmatpush1.msra.mxu0 0.0
          %2883 = vmatprep.subr.mxu0 0.0
          %2884 = vmatpush1.msra.mxu0 0.0
          %2885 = vmatprep.subr.mxu0 0.0
          %2886 = vmatpush1.msra.mxu0 0.0
          %2887 = vmatprep.subr.mxu0 0.0
          %2888 = vmatpush1.msra.mxu0 0.0
          %2889 = vmatprep.subr.mxu0 0.0
          %2890 = vmatpush1.msra.mxu0 0.0
          %2891 = vmatprep.subr.mxu0 0.0
          %2892 = vmatpush1.msra.mxu0 0.0
          %2893 = vmatprep.subr.mxu0 0.0
          %2894 = vmatpush1.msra.mxu0 0.0
          %2895 = vmatprep.subr.mxu0 0.0
          %2896 = vmatpush1.msra.mxu0 0.0
          %2897 = vmatprep.subr.mxu0 0.0
          %2898 = vmatpush1.msra.mxu0 0.0
          %2899 = vmatprep.subr.mxu0 0.0
          %2900 = vmatpush1.msra.mxu0 0.0
          %2901 = vmatprep.subr.mxu0 0.0
          %2902 = vmatpush1.msra.mxu0 0.0
          %2903 = vmatprep.subr.mxu0 0.0
          %2904 = vmatpush1.msra.mxu0 0.0
          %2905 = vmatprep.subr.mxu0 0.0
          %2906 = vmatpush1.msra.mxu0 0.0
          %2907 = vmatprep.subr.mxu0 0.0
          %2908 = vmatpush1.msra.mxu0 0.0
          %2909 = vmatprep.subr.mxu0 0.0
          %2910 = vmatpush1.msra.mxu0 0.0
          %2911 = vmatprep.subr.mxu0 0.0
          %2912 = vmatpush1.msra.mxu0 0.0
          %2913 = vmatprep.mubr.f32.mxu0 0.0
          %2914 = vmatmul.mubr.f32.gmra.mrb[0].mxu0 %v2839
          %v2915 = vpop.f32.mrb[0].mxu0
          %v2916 = vadd.f32 0.0, %v2915
          %v2917 = vpop.f32.mrb[0].mxu0
          %v2918 = vadd.f32 0.0, %v2917
          %2919 = vdwg.mxu0
          %2920 = vmatprep.subr.mxu0 0.0
          %2921 = vmatpush1.msra.mxu0 %v2448
          %2922 = vmatprep.subr.mxu0 0.0
          %2923 = vmatpush1.msra.mxu0 %v2451
          %2924 = vmatprep.subr.mxu0 0.0
          %2925 = vmatpush1.msra.mxu0 %v2454
          %2926 = vmatprep.subr.mxu0 0.0
          %2927 = vmatpush1.msra.mxu0 %v2457
          %2928 = vmatprep.subr.mxu0 0.0
          %2929 = vmatpush1.msra.mxu0 %v2460
          %2930 = vmatprep.subr.mxu0 0.0
          %2931 = vmatpush1.msra.mxu0 %v2463
          %2932 = vmatprep.subr.mxu0 0.0
          %2933 = vmatpush1.msra.mxu0 %v2466
          %2934 = vmatprep.subr.mxu0 0.0
          %2935 = vmatpush1.msra.mxu0 %v2469
          %2936 = vmatprep.subr.mxu0 0.0
          %2937 = vmatpush1.msra.mxu0 %v2472
          %2938 = vmatprep.subr.mxu0 0.0
          %2939 = vmatpush1.msra.mxu0 %v2475
          %2940 = vmatprep.subr.mxu0 0.0
          %2941 = vmatpush1.msra.mxu0 %v2478
          %2942 = vmatprep.subr.mxu0 0.0
          %2943 = vmatpush1.msra.mxu0 %v2481
          %2944 = vmatprep.subr.mxu0 0.0
          %2945 = vmatpush1.msra.mxu0 %v2484
          %2946 = vmatprep.subr.mxu0 0.0
          %2947 = vmatpush1.msra.mxu0 %v2487
          %2948 = vmatprep.subr.mxu0 0.0
          %2949 = vmatpush1.msra.mxu0 %v2490
          %2950 = vmatprep.subr.mxu0 0.0
          %2951 = vmatpush1.msra.mxu0 %v2493
          %2952 = vmatprep.subr.mxu0 0.0
          %2953 = vmatpush1.msra.mxu0 0.0
          %2954 = vmatprep.subr.mxu0 0.0
          %2955 = vmatpush1.msra.mxu0 0.0
          %2956 = vmatprep.subr.mxu0 0.0
          %2957 = vmatpush1.msra.mxu0 0.0
          %2958 = vmatprep.subr.mxu0 0.0
          %2959 = vmatpush1.msra.mxu0 0.0
          %2960 = vmatprep.subr.mxu0 0.0
          %2961 = vmatpush1.msra.mxu0 0.0
          %2962 = vmatprep.subr.mxu0 0.0
          %2963 = vmatpush1.msra.mxu0 0.0
          %2964 = vmatprep.subr.mxu0 0.0
          %2965 = vmatpush1.msra.mxu0 0.0
          %2966 = vmatprep.subr.mxu0 0.0
          %2967 = vmatpush1.msra.mxu0 0.0
          %2968 = vmatprep.subr.mxu0 0.0
          %2969 = vmatpush1.msra.mxu0 0.0
          %2970 = vmatprep.subr.mxu0 0.0
          %2971 = vmatpush1.msra.mxu0 0.0
          %2972 = vmatprep.subr.mxu0 0.0
          %2973 = vmatpush1.msra.mxu0 0.0
          %2974 = vmatprep.subr.mxu0 0.0
          %2975 = vmatpush1.msra.mxu0 0.0
          %2976 = vmatprep.subr.mxu0 0.0
          %2977 = vmatpush1.msra.mxu0 0.0
          %2978 = vmatprep.subr.mxu0 0.0
          %2979 = vmatpush1.msra.mxu0 0.0
          %2980 = vmatprep.subr.mxu0 0.0
          %2981 = vmatpush1.msra.mxu0 0.0
          %2982 = vmatprep.subr.mxu0 0.0
          %2983 = vmatpush1.msra.mxu0 0.0
          %2984 = vmatprep.mubr.f32.mxu0 0.0
          %2985 = vmatmul.mubr.f32.gmra.mrb[0].mxu0 %v2839
          %v2986 = vpop.f32.mrb[0].mxu0
          %v2987 = vadd.f32 0.0, %v2986
          %v2988 = vpop.f32.mrb[0].mxu0
          %2989 = vdwg.mxu0
          %v2990 = vadd.f32 %v2846, %v2916
          %v2991 = vxor.u32 %v2990, 2147483648
          %v2992 = vmul.f32 %v2991, 1.442695
          %v2993 = vpow.pop %v2992
          %v2994 = vadd.f32 %v2993, 1.0
          %v2995 = vrcp.pop %v2994
          %v2996 = vmul.f32 1.0, %v2995
          %v2997 = vadd.f32 %v2847, %v2918
          %v2998 = vxor.u32 %v2997, 2147483648
          %v2999 = vmul.f32 %v2998, 1.442695
          %v3000 = vpow.pop %v2999
          %v3001 = vadd.f32 %v3000, 1.0
          %v3002 = vrcp.pop %v3001
          %v3003 = vmul.f32 1.0, %v3002
          %v3004 = vadd.f32 %v2987, %v2499
          %v3005 = vmul.f32 %v2996, %v3004
          %v3006 = vadd.f32 %v2848, %v3005
          %v3007 = vtanh.pop %v3006
          %v3008 = vsub.f32 %v2839, %v3007
          %v3009 = vmul.f32 %v3003, %v3008
          %v3010 = vadd.f32 %v3007, %v3009
          %s3011 = scalar_lea.vmem %s313, 16
          %3012 = vst [vmem:[%s3011] sm:$0xff] %v3010
          %s3013 = sadd.s32 %s2445, 3
          %s3014 = smul.u32 %s3013, 3
          %s3015 = smul.addr %s3014, 8
          %s3016 = scalar_lea.vmem [#allocation3], %s3015
          %v3017 = vld [vmem:[%s3016] sm:$0xff]
          %v3018 = vld [vmem:[%s3016 + $0x8] sm:$0xff]
          %v3019 = vld [vmem:[%s3016 + $0x10] sm:$0xff]
          %3020 = vmatprep.subr.mxu0 %v2447
          %3021 = vmatpush1.msra.mxu0 %v2446
          %3022 = vmatprep.subr.mxu0 %v2450
          %3023 = vmatpush1.msra.mxu0 %v2449
          %3024 = vmatprep.subr.mxu0 %v2453
          %3025 = vmatpush1.msra.mxu0 %v2452
          %3026 = vmatprep.subr.mxu0 %v2456
          %3027 = vmatpush1.msra.mxu0 %v2455
          %3028 = vmatprep.subr.mxu0 %v2459
          %3029 = vmatpush1.msra.mxu0 %v2458
          %3030 = vmatprep.subr.mxu0 %v2462
          %3031 = vmatpush1.msra.mxu0 %v2461
          %3032 = vmatprep.subr.mxu0 %v2465
          %3033 = vmatpush1.msra.mxu0 %v2464
          %3034 = vmatprep.subr.mxu0 %v2468
          %3035 = vmatpush1.msra.mxu0 %v2467
          %3036 = vmatprep.subr.mxu0 %v2471
          %3037 = vmatpush1.msra.mxu0 %v2470
          %3038 = vmatprep.subr.mxu0 %v2474
          %3039 = vmatpush1.msra.mxu0 %v2473
          %3040 = vmatprep.subr.mxu0 %v2477
          %3041 = vmatpush1.msra.mxu0 %v2476
          %3042 = vmatprep.subr.mxu0 %v2480
          %3043 = vmatpush1.msra.mxu0 %v2479
          %3044 = vmatprep.subr.mxu0 %v2483
          %3045 = vmatpush1.msra.mxu0 %v2482
          %3046 = vmatprep.subr.mxu0 %v2486
          %3047 = vmatpush1.msra.mxu0 %v2485
          %3048 = vmatprep.subr.mxu0 %v2489
          %3049 = vmatpush1.msra.mxu0 %v2488
          %3050 = vmatprep.subr.mxu0 %v2492
          %3051 = vmatpush1.msra.mxu0 %v2491
          %3052 = vmatprep.subr.mxu0 0.0
          %3053 = vmatpush1.msra.mxu0 0.0
          %3054 = vmatprep.subr.mxu0 0.0
          %3055 = vmatpush1.msra.mxu0 0.0
          %3056 = vmatprep.subr.mxu0 0.0
          %3057 = vmatpush1.msra.mxu0 0.0
          %3058 = vmatprep.subr.mxu0 0.0
          %3059 = vmatpush1.msra.mxu0 0.0
          %3060 = vmatprep.subr.mxu0 0.0
          %3061 = vmatpush1.msra.mxu0 0.0
          %3062 = vmatprep.subr.mxu0 0.0
          %3063 = vmatpush1.msra.mxu0 0.0
          %3064 = vmatprep.subr.mxu0 0.0
          %3065 = vmatpush1.msra.mxu0 0.0
          %3066 = vmatprep.subr.mxu0 0.0
          %3067 = vmatpush1.msra.mxu0 0.0
          %3068 = vmatprep.subr.mxu0 0.0
          %3069 = vmatpush1.msra.mxu0 0.0
          %3070 = vmatprep.subr.mxu0 0.0
          %3071 = vmatpush1.msra.mxu0 0.0
          %3072 = vmatprep.subr.mxu0 0.0
          %3073 = vmatpush1.msra.mxu0 0.0
          %3074 = vmatprep.subr.mxu0 0.0
          %3075 = vmatpush1.msra.mxu0 0.0
          %3076 = vmatprep.subr.mxu0 0.0
          %3077 = vmatpush1.msra.mxu0 0.0
          %3078 = vmatprep.subr.mxu0 0.0
          %3079 = vmatpush1.msra.mxu0 0.0
          %3080 = vmatprep.subr.mxu0 0.0
          %3081 = vmatpush1.msra.mxu0 0.0
          %3082 = vmatprep.subr.mxu0 0.0
          %3083 = vmatpush1.msra.mxu0 0.0
          %3084 = vmatprep.mubr.f32.mxu0 0.0
          %3085 = vmatmul.mubr.f32.gmra.mrb[0].mxu0 %v3010
          %v3086 = vpop.f32.mrb[0].mxu0
          %v3087 = vadd.f32 0.0, %v3086
          %v3088 = vpop.f32.mrb[0].mxu0
          %v3089 = vadd.f32 0.0, %v3088
          %3090 = vdwg.mxu0
          %3091 = vmatprep.subr.mxu0 0.0
          %3092 = vmatpush1.msra.mxu0 %v2448
          %3093 = vmatprep.subr.mxu0 0.0
          %3094 = vmatpush1.msra.mxu0 %v2451
          %3095 = vmatprep.subr.mxu0 0.0
          %3096 = vmatpush1.msra.mxu0 %v2454
          %3097 = vmatprep.subr.mxu0 0.0
          %3098 = vmatpush1.msra.mxu0 %v2457
          %3099 = vmatprep.subr.mxu0 0.0
          %3100 = vmatpush1.msra.mxu0 %v2460
          %3101 = vmatprep.subr.mxu0 0.0
          %3102 = vmatpush1.msra.mxu0 %v2463
          %3103 = vmatprep.subr.mxu0 0.0
          %3104 = vmatpush1.msra.mxu0 %v2466
          %3105 = vmatprep.subr.mxu0 0.0
          %3106 = vmatpush1.msra.mxu0 %v2469
          %3107 = vmatprep.subr.mxu0 0.0
          %3108 = vmatpush1.msra.mxu0 %v2472
          %3109 = vmatprep.subr.mxu0 0.0
          %3110 = vmatpush1.msra.mxu0 %v2475
          %3111 = vmatprep.subr.mxu0 0.0
          %3112 = vmatpush1.msra.mxu0 %v2478
          %3113 = vmatprep.subr.mxu0 0.0
          %3114 = vmatpush1.msra.mxu0 %v2481
          %3115 = vmatprep.subr.mxu0 0.0
          %3116 = vmatpush1.msra.mxu0 %v2484
          %3117 = vmatprep.subr.mxu0 0.0
          %3118 = vmatpush1.msra.mxu0 %v2487
          %3119 = vmatprep.subr.mxu0 0.0
          %3120 = vmatpush1.msra.mxu0 %v2490
          %3121 = vmatprep.subr.mxu0 0.0
          %3122 = vmatpush1.msra.mxu0 %v2493
          %3123 = vmatprep.subr.mxu0 0.0
          %3124 = vmatpush1.msra.mxu0 0.0
          %3125 = vmatprep.subr.mxu0 0.0
          %3126 = vmatpush1.msra.mxu0 0.0
          %3127 = vmatprep.subr.mxu0 0.0
          %3128 = vmatpush1.msra.mxu0 0.0
          %3129 = vmatprep.subr.mxu0 0.0
          %3130 = vmatpush1.msra.mxu0 0.0
          %3131 = vmatprep.subr.mxu0 0.0
          %3132 = vmatpush1.msra.mxu0 0.0
          %3133 = vmatprep.subr.mxu0 0.0
          %3134 = vmatpush1.msra.mxu0 0.0
          %3135 = vmatprep.subr.mxu0 0.0
          %3136 = vmatpush1.msra.mxu0 0.0
          %3137 = vmatprep.subr.mxu0 0.0
          %3138 = vmatpush1.msra.mxu0 0.0
          %3139 = vmatprep.subr.mxu0 0.0
          %3140 = vmatpush1.msra.mxu0 0.0
          %3141 = vmatprep.subr.mxu0 0.0
          %3142 = vmatpush1.msra.mxu0 0.0
          %3143 = vmatprep.subr.mxu0 0.0
          %3144 = vmatpush1.msra.mxu0 0.0
          %3145 = vmatprep.subr.mxu0 0.0
          %3146 = vmatpush1.msra.mxu0 0.0
          %3147 = vmatprep.subr.mxu0 0.0
          %3148 = vmatpush1.msra.mxu0 0.0
          %3149 = vmatprep.subr.mxu0 0.0
          %3150 = vmatpush1.msra.mxu0 0.0
          %3151 = vmatprep.subr.mxu0 0.0
          %3152 = vmatpush1.msra.mxu0 0.0
          %3153 = vmatprep.subr.mxu0 0.0
          %3154 = vmatpush1.msra.mxu0 0.0
          %3155 = vmatprep.mubr.f32.mxu0 0.0
          %3156 = vmatmul.mubr.f32.gmra.mrb[0].mxu0 %v3010
          %v3157 = vpop.f32.mrb[0].mxu0
          %v3158 = vadd.f32 0.0, %v3157
          %v3159 = vpop.f32.mrb[0].mxu0
          %3160 = vdwg.mxu0
          %v3161 = vadd.f32 %v3017, %v3087
          %v3162 = vxor.u32 %v3161, 2147483648
          %v3163 = vmul.f32 %v3162, 1.442695
          %v3164 = vpow.pop %v3163
          %v3165 = vadd.f32 %v3164, 1.0
          %v3166 = vrcp.pop %v3165
          %v3167 = vmul.f32 1.0, %v3166
          %v3168 = vadd.f32 %v3018, %v3089
          %v3169 = vxor.u32 %v3168, 2147483648
          %v3170 = vmul.f32 %v3169, 1.442695
          %v3171 = vpow.pop %v3170
          %v3172 = vadd.f32 %v3171, 1.0
          %v3173 = vrcp.pop %v3172
          %v3174 = vmul.f32 1.0, %v3173
          %v3175 = vadd.f32 %v3158, %v2499
          %v3176 = vmul.f32 %v3167, %v3175
          %v3177 = vadd.f32 %v3019, %v3176
          %v3178 = vtanh.pop %v3177
          %v3179 = vsub.f32 %v3010, %v3178
          %v3180 = vmul.f32 %v3174, %v3179
          %v3181 = vadd.f32 %v3178, %v3180
          %s3182 = scalar_lea.vmem %s313, 24
          %3183 = vst [vmem:[%s3182] sm:$0xff] %v3181
          %s3184 = sadd.s32 %s2445, 4
          %s3185 = smul.u32 %s3184, 3
          %s3186 = smul.addr %s3185, 8
          %s3187 = scalar_lea.vmem [#allocation3], %s3186
          %v3188 = vld [vmem:[%s3187] sm:$0xff]
          %v3189 = vld [vmem:[%s3187 + $0x8] sm:$0xff]
          %v3190 = vld [vmem:[%s3187 + $0x10] sm:$0xff]
          %3191 = vmatprep.subr.mxu0 %v2447
          %3192 = vmatpush1.msra.mxu0 %v2446
          %3193 = vmatprep.subr.mxu0 %v2450
          %3194 = vmatpush1.msra.mxu0 %v2449
          %3195 = vmatprep.subr.mxu0 %v2453
          %3196 = vmatpush1.msra.mxu0 %v2452
          %3197 = vmatprep.subr.mxu0 %v2456
          %3198 = vmatpush1.msra.mxu0 %v2455
          %3199 = vmatprep.subr.mxu0 %v2459
          %3200 = vmatpush1.msra.mxu0 %v2458
          %3201 = vmatprep.subr.mxu0 %v2462
          %3202 = vmatpush1.msra.mxu0 %v2461
          %3203 = vmatprep.subr.mxu0 %v2465
          %3204 = vmatpush1.msra.mxu0 %v2464
          %3205 = vmatprep.subr.mxu0 %v2468
          %3206 = vmatpush1.msra.mxu0 %v2467
          %3207 = vmatprep.subr.mxu0 %v2471
          %3208 = vmatpush1.msra.mxu0 %v2470
          %3209 = vmatprep.subr.mxu0 %v2474
          %3210 = vmatpush1.msra.mxu0 %v2473
          %3211 = vmatprep.subr.mxu0 %v2477
          %3212 = vmatpush1.msra.mxu0 %v2476
          %3213 = vmatprep.subr.mxu0 %v2480
          %3214 = vmatpush1.msra.mxu0 %v2479
          %3215 = vmatprep.subr.mxu0 %v2483
          %3216 = vmatpush1.msra.mxu0 %v2482
          %3217 = vmatprep.subr.mxu0 %v2486
          %3218 = vmatpush1.msra.mxu0 %v2485
          %3219 = vmatprep.subr.mxu0 %v2489
          %3220 = vmatpush1.msra.mxu0 %v2488
          %3221 = vmatprep.subr.mxu0 %v2492
          %3222 = vmatpush1.msra.mxu0 %v2491
          %3223 = vmatprep.subr.mxu0 0.0
          %3224 = vmatpush1.msra.mxu0 0.0
          %3225 = vmatprep.subr.mxu0 0.0
          %3226 = vmatpush1.msra.mxu0 0.0
          %3227 = vmatprep.subr.mxu0 0.0
          %3228 = vmatpush1.msra.mxu0 0.0
          %3229 = vmatprep.subr.mxu0 0.0
          %3230 = vmatpush1.msra.mxu0 0.0
          %3231 = vmatprep.subr.mxu0 0.0
          %3232 = vmatpush1.msra.mxu0 0.0
          %3233 = vmatprep.subr.mxu0 0.0
          %3234 = vmatpush1.msra.mxu0 0.0
          %3235 = vmatprep.subr.mxu0 0.0
          %3236 = vmatpush1.msra.mxu0 0.0
          %3237 = vmatprep.subr.mxu0 0.0
          %3238 = vmatpush1.msra.mxu0 0.0
          %3239 = vmatprep.subr.mxu0 0.0
          %3240 = vmatpush1.msra.mxu0 0.0
          %3241 = vmatprep.subr.mxu0 0.0
          %3242 = vmatpush1.msra.mxu0 0.0
          %3243 = vmatprep.subr.mxu0 0.0
          %3244 = vmatpush1.msra.mxu0 0.0
          %3245 = vmatprep.subr.mxu0 0.0
          %3246 = vmatpush1.msra.mxu0 0.0
          %3247 = vmatprep.subr.mxu0 0.0
          %3248 = vmatpush1.msra.mxu0 0.0
          %3249 = vmatprep.subr.mxu0 0.0
          %3250 = vmatpush1.msra.mxu0 0.0
          %3251 = vmatprep.subr.mxu0 0.0
          %3252 = vmatpush1.msra.mxu0 0.0
          %3253 = vmatprep.subr.mxu0 0.0
          %3254 = vmatpush1.msra.mxu0 0.0
          %3255 = vmatprep.mubr.f32.mxu0 0.0
          %3256 = vmatmul.mubr.f32.gmra.mrb[0].mxu0 %v3181
          %v3257 = vpop.f32.mrb[0].mxu0
          %v3258 = vadd.f32 0.0, %v3257
          %v3259 = vpop.f32.mrb[0].mxu0
          %v3260 = vadd.f32 0.0, %v3259
          %3261 = vdwg.mxu0
          %3262 = vmatprep.subr.mxu0 0.0
          %3263 = vmatpush1.msra.mxu0 %v2448
          %3264 = vmatprep.subr.mxu0 0.0
          %3265 = vmatpush1.msra.mxu0 %v2451
          %3266 = vmatprep.subr.mxu0 0.0
          %3267 = vmatpush1.msra.mxu0 %v2454
          %3268 = vmatprep.subr.mxu0 0.0
          %3269 = vmatpush1.msra.mxu0 %v2457
          %3270 = vmatprep.subr.mxu0 0.0
          %3271 = vmatpush1.msra.mxu0 %v2460
          %3272 = vmatprep.subr.mxu0 0.0
          %3273 = vmatpush1.msra.mxu0 %v2463
          %3274 = vmatprep.subr.mxu0 0.0
          %3275 = vmatpush1.msra.mxu0 %v2466
          %3276 = vmatprep.subr.mxu0 0.0
          %3277 = vmatpush1.msra.mxu0 %v2469
          %3278 = vmatprep.subr.mxu0 0.0
          %3279 = vmatpush1.msra.mxu0 %v2472
          %3280 = vmatprep.subr.mxu0 0.0
          %3281 = vmatpush1.msra.mxu0 %v2475
          %3282 = vmatprep.subr.mxu0 0.0
          %3283 = vmatpush1.msra.mxu0 %v2478
          %3284 = vmatprep.subr.mxu0 0.0
          %3285 = vmatpush1.msra.mxu0 %v2481
          %3286 = vmatprep.subr.mxu0 0.0
          %3287 = vmatpush1.msra.mxu0 %v2484
          %3288 = vmatprep.subr.mxu0 0.0
          %3289 = vmatpush1.msra.mxu0 %v2487
          %3290 = vmatprep.subr.mxu0 0.0
          %3291 = vmatpush1.msra.mxu0 %v2490
          %3292 = vmatprep.subr.mxu0 0.0
          %3293 = vmatpush1.msra.mxu0 %v2493
          %3294 = vmatprep.subr.mxu0 0.0
          %3295 = vmatpush1.msra.mxu0 0.0
          %3296 = vmatprep.subr.mxu0 0.0
          %3297 = vmatpush1.msra.mxu0 0.0
          %3298 = vmatprep.subr.mxu0 0.0
          %3299 = vmatpush1.msra.mxu0 0.0
          %3300 = vmatprep.subr.mxu0 0.0
          %3301 = vmatpush1.msra.mxu0 0.0
          %3302 = vmatprep.subr.mxu0 0.0
          %3303 = vmatpush1.msra.mxu0 0.0
          %3304 = vmatprep.subr.mxu0 0.0
          %3305 = vmatpush1.msra.mxu0 0.0
          %3306 = vmatprep.subr.mxu0 0.0
          %3307 = vmatpush1.msra.mxu0 0.0
          %3308 = vmatprep.subr.mxu0 0.0
          %3309 = vmatpush1.msra.mxu0 0.0
          %3310 = vmatprep.subr.mxu0 0.0
          %3311 = vmatpush1.msra.mxu0 0.0
          %3312 = vmatprep.subr.mxu0 0.0
          %3313 = vmatpush1.msra.mxu0 0.0
          %3314 = vmatprep.subr.mxu0 0.0
          %3315 = vmatpush1.msra.mxu0 0.0
          %3316 = vmatprep.subr.mxu0 0.0
          %3317 = vmatpush1.msra.mxu0 0.0
          %3318 = vmatprep.subr.mxu0 0.0
          %3319 = vmatpush1.msra.mxu0 0.0
          %3320 = vmatprep.subr.mxu0 0.0
          %3321 = vmatpush1.msra.mxu0 0.0
          %3322 = vmatprep.subr.mxu0 0.0
          %3323 = vmatpush1.msra.mxu0 0.0
          %3324 = vmatprep.subr.mxu0 0.0
          %3325 = vmatpush1.msra.mxu0 0.0
          %3326 = vmatprep.mubr.f32.mxu0 0.0
          %3327 = vmatmul.mubr.f32.gmra.mrb[0].mxu0 %v3181
          %v3328 = vpop.f32.mrb[0].mxu0
          %v3329 = vadd.f32 0.0, %v3328
          %v3330 = vpop.f32.mrb[0].mxu0
          %3331 = vdwg.mxu0
          %v3332 = vadd.f32 %v3188, %v3258
          %v3333 = vxor.u32 %v3332, 2147483648
          %v3334 = vmul.f32 %v3333, 1.442695
          %v3335 = vpow.pop %v3334
          %v3336 = vadd.f32 %v3335, 1.0
          %v3337 = vrcp.pop %v3336
          %v3338 = vmul.f32 1.0, %v3337
          %v3339 = vadd.f32 %v3189, %v3260
          %v3340 = vxor.u32 %v3339, 2147483648
          %v3341 = vmul.f32 %v3340, 1.442695
          %v3342 = vpow.pop %v3341
          %v3343 = vadd.f32 %v3342, 1.0
          %v3344 = vrcp.pop %v3343
          %v3345 = vmul.f32 1.0, %v3344
          %v3346 = vadd.f32 %v3329, %v2499
          %v3347 = vmul.f32 %v3338, %v3346
          %v3348 = vadd.f32 %v3190, %v3347
          %v3349 = vtanh.pop %v3348
          %v3350 = vsub.f32 %v3181, %v3349
          %v3351 = vmul.f32 %v3345, %v3350
          %v3352 = vadd.f32 %v3349, %v3351
          %s3353 = scalar_lea.vmem %s313, 32
          %3354 = vst [vmem:[%s3353] sm:$0xff] %v3352
          %s3355 = sadd.s32 %s2445, 5
          %s3356 = smul.u32 %s3355, 3
          %s3357 = smul.addr %s3356, 8
          %s3358 = scalar_lea.vmem [#allocation3], %s3357
          %v3359 = vld [vmem:[%s3358] sm:$0xff]
          %v3360 = vld [vmem:[%s3358 + $0x8] sm:$0xff]
          %v3361 = vld [vmem:[%s3358 + $0x10] sm:$0xff]
          %3362 = vmatprep.subr.mxu0 %v2447
          %3363 = vmatpush1.msra.mxu0 %v2446
          %3364 = vmatprep.subr.mxu0 %v2450
          %3365 = vmatpush1.msra.mxu0 %v2449
          %3366 = vmatprep.subr.mxu0 %v2453
          %3367 = vmatpush1.msra.mxu0 %v2452
          %3368 = vmatprep.subr.mxu0 %v2456
          %3369 = vmatpush1.msra.mxu0 %v2455
          %3370 = vmatprep.subr.mxu0 %v2459
          %3371 = vmatpush1.msra.mxu0 %v2458
          %3372 = vmatprep.subr.mxu0 %v2462
          %3373 = vmatpush1.msra.mxu0 %v2461
          %3374 = vmatprep.subr.mxu0 %v2465
          %3375 = vmatpush1.msra.mxu0 %v2464
          %3376 = vmatprep.subr.mxu0 %v2468
          %3377 = vmatpush1.msra.mxu0 %v2467
          %3378 = vmatprep.subr.mxu0 %v2471
          %3379 = vmatpush1.msra.mxu0 %v2470
          %3380 = vmatprep.subr.mxu0 %v2474
          %3381 = vmatpush1.msra.mxu0 %v2473
          %3382 = vmatprep.subr.mxu0 %v2477
          %3383 = vmatpush1.msra.mxu0 %v2476
          %3384 = vmatprep.subr.mxu0 %v2480
          %3385 = vmatpush1.msra.mxu0 %v2479
          %3386 = vmatprep.subr.mxu0 %v2483
          %3387 = vmatpush1.msra.mxu0 %v2482
          %3388 = vmatprep.subr.mxu0 %v2486
          %3389 = vmatpush1.msra.mxu0 %v2485
          %3390 = vmatprep.subr.mxu0 %v2489
          %3391 = vmatpush1.msra.mxu0 %v2488
          %3392 = vmatprep.subr.mxu0 %v2492
          %3393 = vmatpush1.msra.mxu0 %v2491
          %3394 = vmatprep.subr.mxu0 0.0
          %3395 = vmatpush1.msra.mxu0 0.0
          %3396 = vmatprep.subr.mxu0 0.0
          %3397 = vmatpush1.msra.mxu0 0.0
          %3398 = vmatprep.subr.mxu0 0.0
          %3399 = vmatpush1.msra.mxu0 0.0
          %3400 = vmatprep.subr.mxu0 0.0
          %3401 = vmatpush1.msra.mxu0 0.0
          %3402 = vmatprep.subr.mxu0 0.0
          %3403 = vmatpush1.msra.mxu0 0.0
          %3404 = vmatprep.subr.mxu0 0.0
          %3405 = vmatpush1.msra.mxu0 0.0
          %3406 = vmatprep.subr.mxu0 0.0
          %3407 = vmatpush1.msra.mxu0 0.0
          %3408 = vmatprep.subr.mxu0 0.0
          %3409 = vmatpush1.msra.mxu0 0.0
          %3410 = vmatprep.subr.mxu0 0.0
          %3411 = vmatpush1.msra.mxu0 0.0
          %3412 = vmatprep.subr.mxu0 0.0
          %3413 = vmatpush1.msra.mxu0 0.0
          %3414 = vmatprep.subr.mxu0 0.0
          %3415 = vmatpush1.msra.mxu0 0.0
          %3416 = vmatprep.subr.mxu0 0.0
          %3417 = vmatpush1.msra.mxu0 0.0
          %3418 = vmatprep.subr.mxu0 0.0
          %3419 = vmatpush1.msra.mxu0 0.0
          %3420 = vmatprep.subr.mxu0 0.0
          %3421 = vmatpush1.msra.mxu0 0.0
          %3422 = vmatprep.subr.mxu0 0.0
          %3423 = vmatpush1.msra.mxu0 0.0
          %3424 = vmatprep.subr.mxu0 0.0
          %3425 = vmatpush1.msra.mxu0 0.0
          %3426 = vmatprep.mubr.f32.mxu0 0.0
          %3427 = vmatmul.mubr.f32.gmra.mrb[0].mxu0 %v3352
          %v3428 = vpop.f32.mrb[0].mxu0
          %v3429 = vadd.f32 0.0, %v3428
          %v3430 = vpop.f32.mrb[0].mxu0
          %v3431 = vadd.f32 0.0, %v3430
          %3432 = vdwg.mxu0
          %3433 = vmatprep.subr.mxu0 0.0
          %3434 = vmatpush1.msra.mxu0 %v2448
          %3435 = vmatprep.subr.mxu0 0.0
          %3436 = vmatpush1.msra.mxu0 %v2451
          %3437 = vmatprep.subr.mxu0 0.0
          %3438 = vmatpush1.msra.mxu0 %v2454
          %3439 = vmatprep.subr.mxu0 0.0
          %3440 = vmatpush1.msra.mxu0 %v2457
          %3441 = vmatprep.subr.mxu0 0.0
          %3442 = vmatpush1.msra.mxu0 %v2460
          %3443 = vmatprep.subr.mxu0 0.0
          %3444 = vmatpush1.msra.mxu0 %v2463
          %3445 = vmatprep.subr.mxu0 0.0
          %3446 = vmatpush1.msra.mxu0 %v2466
          %3447 = vmatprep.subr.mxu0 0.0
          %3448 = vmatpush1.msra.mxu0 %v2469
          %3449 = vmatprep.subr.mxu0 0.0
          %3450 = vmatpush1.msra.mxu0 %v2472
          %3451 = vmatprep.subr.mxu0 0.0
          %3452 = vmatpush1.msra.mxu0 %v2475
          %3453 = vmatprep.subr.mxu0 0.0
          %3454 = vmatpush1.msra.mxu0 %v2478
          %3455 = vmatprep.subr.mxu0 0.0
          %3456 = vmatpush1.msra.mxu0 %v2481
          %3457 = vmatprep.subr.mxu0 0.0
          %3458 = vmatpush1.msra.mxu0 %v2484
          %3459 = vmatprep.subr.mxu0 0.0
          %3460 = vmatpush1.msra.mxu0 %v2487
          %3461 = vmatprep.subr.mxu0 0.0
          %3462 = vmatpush1.msra.mxu0 %v2490
          %3463 = vmatprep.subr.mxu0 0.0
          %3464 = vmatpush1.msra.mxu0 %v2493
          %3465 = vmatprep.subr.mxu0 0.0
          %3466 = vmatpush1.msra.mxu0 0.0
          %3467 = vmatprep.subr.mxu0 0.0
          %3468 = vmatpush1.msra.mxu0 0.0
          %3469 = vmatprep.subr.mxu0 0.0
          %3470 = vmatpush1.msra.mxu0 0.0
          %3471 = vmatprep.subr.mxu0 0.0
          %3472 = vmatpush1.msra.mxu0 0.0
          %3473 = vmatprep.subr.mxu0 0.0
          %3474 = vmatpush1.msra.mxu0 0.0
          %3475 = vmatprep.subr.mxu0 0.0
          %3476 = vmatpush1.msra.mxu0 0.0
          %3477 = vmatprep.subr.mxu0 0.0
          %3478 = vmatpush1.msra.mxu0 0.0
          %3479 = vmatprep.subr.mxu0 0.0
          %3480 = vmatpush1.msra.mxu0 0.0
          %3481 = vmatprep.subr.mxu0 0.0
          %3482 = vmatpush1.msra.mxu0 0.0
          %3483 = vmatprep.subr.mxu0 0.0
          %3484 = vmatpush1.msra.mxu0 0.0
          %3485 = vmatprep.subr.mxu0 0.0
          %3486 = vmatpush1.msra.mxu0 0.0
          %3487 = vmatprep.subr.mxu0 0.0
          %3488 = vmatpush1.msra.mxu0 0.0
          %3489 = vmatprep.subr.mxu0 0.0
          %3490 = vmatpush1.msra.mxu0 0.0
          %3491 = vmatprep.subr.mxu0 0.0
          %3492 = vmatpush1.msra.mxu0 0.0
          %3493 = vmatprep.subr.mxu0 0.0
          %3494 = vmatpush1.msra.mxu0 0.0
          %3495 = vmatprep.subr.mxu0 0.0
          %3496 = vmatpush1.msra.mxu0 0.0
          %3497 = vmatprep.mubr.f32.mxu0 0.0
          %3498 = vmatmul.mubr.f32.gmra.mrb[0].mxu0 %v3352
          %v3499 = vpop.f32.mrb[0].mxu0
          %v3500 = vadd.f32 0.0, %v3499
          %v3501 = vpop.f32.mrb[0].mxu0
          %3502 = vdwg.mxu0
          %v3503 = vadd.f32 %v3359, %v3429
          %v3504 = vxor.u32 %v3503, 2147483648
          %v3505 = vmul.f32 %v3504, 1.442695
          %v3506 = vpow.pop %v3505
          %v3507 = vadd.f32 %v3506, 1.0
          %v3508 = vrcp.pop %v3507
          %v3509 = vmul.f32 1.0, %v3508
          %v3510 = vadd.f32 %v3360, %v3431
          %v3511 = vxor.u32 %v3510, 2147483648
          %v3512 = vmul.f32 %v3511, 1.442695
          %v3513 = vpow.pop %v3512
          %v3514 = vadd.f32 %v3513, 1.0
          %v3515 = vrcp.pop %v3514
          %v3516 = vmul.f32 1.0, %v3515
          %v3517 = vadd.f32 %v3500, %v2499
          %v3518 = vmul.f32 %v3509, %v3517
          %v3519 = vadd.f32 %v3361, %v3518
          %v3520 = vtanh.pop %v3519
          %v3521 = vsub.f32 %v3352, %v3520
          %v3522 = vmul.f32 %v3516, %v3521
          %v3523 = vadd.f32 %v3520, %v3522
          %s3524 = scalar_lea.vmem %s313, 40
          %3525 = vst [vmem:[%s3524] sm:$0xff] %v3523
          %s3526 = sadd.s32 %s2445, 6
          %s3527 = smul.u32 %s3526, 3
          %s3528 = smul.addr %s3527, 8
          %s3529 = scalar_lea.vmem [#allocation3], %s3528
          %v3530 = vld [vmem:[%s3529] sm:$0xff]
          %v3531 = vld [vmem:[%s3529 + $0x8] sm:$0xff]
          %v3532 = vld [vmem:[%s3529 + $0x10] sm:$0xff]
          %3533 = vmatprep.subr.mxu0 %v2447
          %3534 = vmatpush1.msra.mxu0 %v2446
          %3535 = vmatprep.subr.mxu0 %v2450
          %3536 = vmatpush1.msra.mxu0 %v2449
          %3537 = vmatprep.subr.mxu0 %v2453
          %3538 = vmatpush1.msra.mxu0 %v2452
          %3539 = vmatprep.subr.mxu0 %v2456
          %3540 = vmatpush1.msra.mxu0 %v2455
          %3541 = vmatprep.subr.mxu0 %v2459
          %3542 = vmatpush1.msra.mxu0 %v2458
          %3543 = vmatprep.subr.mxu0 %v2462
          %3544 = vmatpush1.msra.mxu0 %v2461
          %3545 = vmatprep.subr.mxu0 %v2465
          %3546 = vmatpush1.msra.mxu0 %v2464
          %3547 = vmatprep.subr.mxu0 %v2468
          %3548 = vmatpush1.msra.mxu0 %v2467
          %3549 = vmatprep.subr.mxu0 %v2471
          %3550 = vmatpush1.msra.mxu0 %v2470
          %3551 = vmatprep.subr.mxu0 %v2474
          %3552 = vmatpush1.msra.mxu0 %v2473
          %3553 = vmatprep.subr.mxu0 %v2477
          %3554 = vmatpush1.msra.mxu0 %v2476
          %3555 = vmatprep.subr.mxu0 %v2480
          %3556 = vmatpush1.msra.mxu0 %v2479
          %3557 = vmatprep.subr.mxu0 %v2483
          %3558 = vmatpush1.msra.mxu0 %v2482
          %3559 = vmatprep.subr.mxu0 %v2486
          %3560 = vmatpush1.msra.mxu0 %v2485
          %3561 = vmatprep.subr.mxu0 %v2489
          %3562 = vmatpush1.msra.mxu0 %v2488
          %3563 = vmatprep.subr.mxu0 %v2492
          %3564 = vmatpush1.msra.mxu0 %v2491
          %3565 = vmatprep.subr.mxu0 0.0
          %3566 = vmatpush1.msra.mxu0 0.0
          %3567 = vmatprep.subr.mxu0 0.0
          %3568 = vmatpush1.msra.mxu0 0.0
          %3569 = vmatprep.subr.mxu0 0.0
          %3570 = vmatpush1.msra.mxu0 0.0
          %3571 = vmatprep.subr.mxu0 0.0
          %3572 = vmatpush1.msra.mxu0 0.0
          %3573 = vmatprep.subr.mxu0 0.0
          %3574 = vmatpush1.msra.mxu0 0.0
          %3575 = vmatprep.subr.mxu0 0.0
          %3576 = vmatpush1.msra.mxu0 0.0
          %3577 = vmatprep.subr.mxu0 0.0
          %3578 = vmatpush1.msra.mxu0 0.0
          %3579 = vmatprep.subr.mxu0 0.0
          %3580 = vmatpush1.msra.mxu0 0.0
          %3581 = vmatprep.subr.mxu0 0.0
          %3582 = vmatpush1.msra.mxu0 0.0
          %3583 = vmatprep.subr.mxu0 0.0
          %3584 = vmatpush1.msra.mxu0 0.0
          %3585 = vmatprep.subr.mxu0 0.0
          %3586 = vmatpush1.msra.mxu0 0.0
          %3587 = vmatprep.subr.mxu0 0.0
          %3588 = vmatpush1.msra.mxu0 0.0
          %3589 = vmatprep.subr.mxu0 0.0
          %3590 = vmatpush1.msra.mxu0 0.0
          %3591 = vmatprep.subr.mxu0 0.0
          %3592 = vmatpush1.msra.mxu0 0.0
          %3593 = vmatprep.subr.mxu0 0.0
          %3594 = vmatpush1.msra.mxu0 0.0
          %3595 = vmatprep.subr.mxu0 0.0
          %3596 = vmatpush1.msra.mxu0 0.0
          %3597 = vmatprep.mubr.f32.mxu0 0.0
          %3598 = vmatmul.mubr.f32.gmra.mrb[0].mxu0 %v3523
          %v3599 = vpop.f32.mrb[0].mxu0
          %v3600 = vadd.f32 0.0, %v3599
          %v3601 = vpop.f32.mrb[0].mxu0
          %v3602 = vadd.f32 0.0, %v3601
          %3603 = vdwg.mxu0
          %3604 = vmatprep.subr.mxu0 0.0
          %3605 = vmatpush1.msra.mxu0 %v2448
          %3606 = vmatprep.subr.mxu0 0.0
          %3607 = vmatpush1.msra.mxu0 %v2451
          %3608 = vmatprep.subr.mxu0 0.0
          %3609 = vmatpush1.msra.mxu0 %v2454
          %3610 = vmatprep.subr.mxu0 0.0
          %3611 = vmatpush1.msra.mxu0 %v2457
          %3612 = vmatprep.subr.mxu0 0.0
          %3613 = vmatpush1.msra.mxu0 %v2460
          %3614 = vmatprep.subr.mxu0 0.0
          %3615 = vmatpush1.msra.mxu0 %v2463
          %3616 = vmatprep.subr.mxu0 0.0
          %3617 = vmatpush1.msra.mxu0 %v2466
          %3618 = vmatprep.subr.mxu0 0.0
          %3619 = vmatpush1.msra.mxu0 %v2469
          %3620 = vmatprep.subr.mxu0 0.0
          %3621 = vmatpush1.msra.mxu0 %v2472
          %3622 = vmatprep.subr.mxu0 0.0
          %3623 = vmatpush1.msra.mxu0 %v2475
          %3624 = vmatprep.subr.mxu0 0.0
          %3625 = vmatpush1.msra.mxu0 %v2478
          %3626 = vmatprep.subr.mxu0 0.0
          %3627 = vmatpush1.msra.mxu0 %v2481
          %3628 = vmatprep.subr.mxu0 0.0
          %3629 = vmatpush1.msra.mxu0 %v2484
          %3630 = vmatprep.subr.mxu0 0.0
          %3631 = vmatpush1.msra.mxu0 %v2487
          %3632 = vmatprep.subr.mxu0 0.0
          %3633 = vmatpush1.msra.mxu0 %v2490
          %3634 = vmatprep.subr.mxu0 0.0
          %3635 = vmatpush1.msra.mxu0 %v2493
          %3636 = vmatprep.subr.mxu0 0.0
          %3637 = vmatpush1.msra.mxu0 0.0
          %3638 = vmatprep.subr.mxu0 0.0
          %3639 = vmatpush1.msra.mxu0 0.0
          %3640 = vmatprep.subr.mxu0 0.0
          %3641 = vmatpush1.msra.mxu0 0.0
          %3642 = vmatprep.subr.mxu0 0.0
          %3643 = vmatpush1.msra.mxu0 0.0
          %3644 = vmatprep.subr.mxu0 0.0
          %3645 = vmatpush1.msra.mxu0 0.0
          %3646 = vmatprep.subr.mxu0 0.0
          %3647 = vmatpush1.msra.mxu0 0.0
          %3648 = vmatprep.subr.mxu0 0.0
          %3649 = vmatpush1.msra.mxu0 0.0
          %3650 = vmatprep.subr.mxu0 0.0
          %3651 = vmatpush1.msra.mxu0 0.0
          %3652 = vmatprep.subr.mxu0 0.0
          %3653 = vmatpush1.msra.mxu0 0.0
          %3654 = vmatprep.subr.mxu0 0.0
          %3655 = vmatpush1.msra.mxu0 0.0
          %3656 = vmatprep.subr.mxu0 0.0
          %3657 = vmatpush1.msra.mxu0 0.0
          %3658 = vmatprep.subr.mxu0 0.0
          %3659 = vmatpush1.msra.mxu0 0.0
          %3660 = vmatprep.subr.mxu0 0.0
          %3661 = vmatpush1.msra.mxu0 0.0
          %3662 = vmatprep.subr.mxu0 0.0
          %3663 = vmatpush1.msra.mxu0 0.0
          %3664 = vmatprep.subr.mxu0 0.0
          %3665 = vmatpush1.msra.mxu0 0.0
          %3666 = vmatprep.subr.mxu0 0.0
          %3667 = vmatpush1.msra.mxu0 0.0
          %3668 = vmatprep.mubr.f32.mxu0 0.0
          %3669 = vmatmul.mubr.f32.gmra.mrb[0].mxu0 %v3523
          %v3670 = vpop.f32.mrb[0].mxu0
          %v3671 = vadd.f32 0.0, %v3670
          %v3672 = vpop.f32.mrb[0].mxu0
          %3673 = vdwg.mxu0
          %v3674 = vadd.f32 %v3530, %v3600
          %v3675 = vxor.u32 %v3674, 2147483648
          %v3676 = vmul.f32 %v3675, 1.442695
          %v3677 = vpow.pop %v3676
          %v3678 = vadd.f32 %v3677, 1.0
          %v3679 = vrcp.pop %v3678
          %v3680 = vmul.f32 1.0, %v3679
          %v3681 = vadd.f32 %v3531, %v3602
          %v3682 = vxor.u32 %v3681, 2147483648
          %v3683 = vmul.f32 %v3682, 1.442695
          %v3684 = vpow.pop %v3683
          %v3685 = vadd.f32 %v3684, 1.0
          %v3686 = vrcp.pop %v3685
          %v3687 = vmul.f32 1.0, %v3686
          %v3688 = vadd.f32 %v3671, %v2499
          %v3689 = vmul.f32 %v3680, %v3688
          %v3690 = vadd.f32 %v3532, %v3689
          %v3691 = vtanh.pop %v3690
          %v3692 = vsub.f32 %v3523, %v3691
          %v3693 = vmul.f32 %v3687, %v3692
          %v3694 = vadd.f32 %v3691, %v3693
          %s3695 = scalar_lea.vmem %s313, 48
          %3696 = vst [vmem:[%s3695] sm:$0xff] %v3694
          %s3697 = sadd.s32 %s2445, 7
          %s3698 = smul.u32 %s3697, 3
          %s3699 = smul.addr %s3698, 8
          %s3700 = scalar_lea.vmem [#allocation3], %s3699
          %v3701 = vld [vmem:[%s3700] sm:$0xff]
          %v3702 = vld [vmem:[%s3700 + $0x8] sm:$0xff]
          %v3703 = vld [vmem:[%s3700 + $0x10] sm:$0xff]
          %3704 = vmatprep.subr.mxu0 %v2447
          %3705 = vmatpush1.msra.mxu0 %v2446
          %3706 = vmatprep.subr.mxu0 %v2450
          %3707 = vmatpush1.msra.mxu0 %v2449
          %3708 = vmatprep.subr.mxu0 %v2453
          %3709 = vmatpush1.msra.mxu0 %v2452
          %3710 = vmatprep.subr.mxu0 %v2456
          %3711 = vmatpush1.msra.mxu0 %v2455
          %3712 = vmatprep.subr.mxu0 %v2459
          %3713 = vmatpush1.msra.mxu0 %v2458
          %3714 = vmatprep.subr.mxu0 %v2462
          %3715 = vmatpush1.msra.mxu0 %v2461
          %3716 = vmatprep.subr.mxu0 %v2465
          %3717 = vmatpush1.msra.mxu0 %v2464
          %3718 = vmatprep.subr.mxu0 %v2468
          %3719 = vmatpush1.msra.mxu0 %v2467
          %3720 = vmatprep.subr.mxu0 %v2471
          %3721 = vmatpush1.msra.mxu0 %v2470
          %3722 = vmatprep.subr.mxu0 %v2474
          %3723 = vmatpush1.msra.mxu0 %v2473
          %3724 = vmatprep.subr.mxu0 %v2477
          %3725 = vmatpush1.msra.mxu0 %v2476
          %3726 = vmatprep.subr.mxu0 %v2480
          %3727 = vmatpush1.msra.mxu0 %v2479
          %3728 = vmatprep.subr.mxu0 %v2483
          %3729 = vmatpush1.msra.mxu0 %v2482
          %3730 = vmatprep.subr.mxu0 %v2486
          %3731 = vmatpush1.msra.mxu0 %v2485
          %3732 = vmatprep.subr.mxu0 %v2489
          %3733 = vmatpush1.msra.mxu0 %v2488
          %3734 = vmatprep.subr.mxu0 %v2492
          %3735 = vmatpush1.msra.mxu0 %v2491
          %3736 = vmatprep.subr.mxu0 0.0
          %3737 = vmatpush1.msra.mxu0 0.0
          %3738 = vmatprep.subr.mxu0 0.0
          %3739 = vmatpush1.msra.mxu0 0.0
          %3740 = vmatprep.subr.mxu0 0.0
          %3741 = vmatpush1.msra.mxu0 0.0
          %3742 = vmatprep.subr.mxu0 0.0
          %3743 = vmatpush1.msra.mxu0 0.0
          %3744 = vmatprep.subr.mxu0 0.0
          %3745 = vmatpush1.msra.mxu0 0.0
          %3746 = vmatprep.subr.mxu0 0.0
          %3747 = vmatpush1.msra.mxu0 0.0
          %3748 = vmatprep.subr.mxu0 0.0
          %3749 = vmatpush1.msra.mxu0 0.0
          %3750 = vmatprep.subr.mxu0 0.0
          %3751 = vmatpush1.msra.mxu0 0.0
          %3752 = vmatprep.subr.mxu0 0.0
          %3753 = vmatpush1.msra.mxu0 0.0
          %3754 = vmatprep.subr.mxu0 0.0
          %3755 = vmatpush1.msra.mxu0 0.0
          %3756 = vmatprep.subr.mxu0 0.0
          %3757 = vmatpush1.msra.mxu0 0.0
          %3758 = vmatprep.subr.mxu0 0.0
          %3759 = vmatpush1.msra.mxu0 0.0
          %3760 = vmatprep.subr.mxu0 0.0
          %3761 = vmatpush1.msra.mxu0 0.0
          %3762 = vmatprep.subr.mxu0 0.0
          %3763 = vmatpush1.msra.mxu0 0.0
          %3764 = vmatprep.subr.mxu0 0.0
          %3765 = vmatpush1.msra.mxu0 0.0
          %3766 = vmatprep.subr.mxu0 0.0
          %3767 = vmatpush1.msra.mxu0 0.0
          %3768 = vmatprep.mubr.f32.mxu0 0.0
          %3769 = vmatmul.mubr.f32.gmra.mrb[0].mxu0 %v3694
          %v3770 = vpop.f32.mrb[0].mxu0
          %v3771 = vadd.f32 0.0, %v3770
          %v3772 = vpop.f32.mrb[0].mxu0
          %v3773 = vadd.f32 0.0, %v3772
          %3774 = vdwg.mxu0
          %3775 = vmatprep.subr.mxu0 0.0
          %3776 = vmatpush1.msra.mxu0 %v2448
          %3777 = vmatprep.subr.mxu0 0.0
          %3778 = vmatpush1.msra.mxu0 %v2451
          %3779 = vmatprep.subr.mxu0 0.0
          %3780 = vmatpush1.msra.mxu0 %v2454
          %3781 = vmatprep.subr.mxu0 0.0
          %3782 = vmatpush1.msra.mxu0 %v2457
          %3783 = vmatprep.subr.mxu0 0.0
          %3784 = vmatpush1.msra.mxu0 %v2460
          %3785 = vmatprep.subr.mxu0 0.0
          %3786 = vmatpush1.msra.mxu0 %v2463
          %3787 = vmatprep.subr.mxu0 0.0
          %3788 = vmatpush1.msra.mxu0 %v2466
          %3789 = vmatprep.subr.mxu0 0.0
          %3790 = vmatpush1.msra.mxu0 %v2469
          %3791 = vmatprep.subr.mxu0 0.0
          %3792 = vmatpush1.msra.mxu0 %v2472
          %3793 = vmatprep.subr.mxu0 0.0
          %3794 = vmatpush1.msra.mxu0 %v2475
          %3795 = vmatprep.subr.mxu0 0.0
          %3796 = vmatpush1.msra.mxu0 %v2478
          %3797 = vmatprep.subr.mxu0 0.0
          %3798 = vmatpush1.msra.mxu0 %v2481
          %3799 = vmatprep.subr.mxu0 0.0
          %3800 = vmatpush1.msra.mxu0 %v2484
          %3801 = vmatprep.subr.mxu0 0.0
          %3802 = vmatpush1.msra.mxu0 %v2487
          %3803 = vmatprep.subr.mxu0 0.0
          %3804 = vmatpush1.msra.mxu0 %v2490
          %3805 = vmatprep.subr.mxu0 0.0
          %3806 = vmatpush1.msra.mxu0 %v2493
          %3807 = vmatprep.subr.mxu0 0.0
          %3808 = vmatpush1.msra.mxu0 0.0
          %3809 = vmatprep.subr.mxu0 0.0
          %3810 = vmatpush1.msra.mxu0 0.0
          %3811 = vmatprep.subr.mxu0 0.0
          %3812 = vmatpush1.msra.mxu0 0.0
          %3813 = vmatprep.subr.mxu0 0.0
          %3814 = vmatpush1.msra.mxu0 0.0
          %3815 = vmatprep.subr.mxu0 0.0
          %3816 = vmatpush1.msra.mxu0 0.0
          %3817 = vmatprep.subr.mxu0 0.0
          %3818 = vmatpush1.msra.mxu0 0.0
          %3819 = vmatprep.subr.mxu0 0.0
          %3820 = vmatpush1.msra.mxu0 0.0
          %3821 = vmatprep.subr.mxu0 0.0
          %3822 = vmatpush1.msra.mxu0 0.0
          %3823 = vmatprep.subr.mxu0 0.0
          %3824 = vmatpush1.msra.mxu0 0.0
          %3825 = vmatprep.subr.mxu0 0.0
          %3826 = vmatpush1.msra.mxu0 0.0
          %3827 = vmatprep.subr.mxu0 0.0
          %3828 = vmatpush1.msra.mxu0 0.0
          %3829 = vmatprep.subr.mxu0 0.0
          %3830 = vmatpush1.msra.mxu0 0.0
          %3831 = vmatprep.subr.mxu0 0.0
          %3832 = vmatpush1.msra.mxu0 0.0
          %3833 = vmatprep.subr.mxu0 0.0
          %3834 = vmatpush1.msra.mxu0 0.0
          %3835 = vmatprep.subr.mxu0 0.0
          %3836 = vmatpush1.msra.mxu0 0.0
          %3837 = vmatprep.subr.mxu0 0.0
          %3838 = vmatpush1.msra.mxu0 0.0
          %3839 = vmatprep.mubr.f32.mxu0 0.0
          %3840 = vmatmul.mubr.f32.gmra.mrb[0].mxu0 %v3694
          %v3841 = vpop.f32.mrb[0].mxu0
          %v3842 = vadd.f32 0.0, %v3841
          %v3843 = vpop.f32.mrb[0].mxu0
          %3844 = vdwg.mxu0
          %v3845 = vadd.f32 %v3701, %v3771
          %v3846 = vxor.u32 %v3845, 2147483648
          %v3847 = vmul.f32 %v3846, 1.442695
          %v3848 = vpow.pop %v3847
          %v3849 = vadd.f32 %v3848, 1.0
          %v3850 = vrcp.pop %v3849
          %v3851 = vmul.f32 1.0, %v3850
          %v3852 = vadd.f32 %v3702, %v3773
          %v3853 = vxor.u32 %v3852, 2147483648
          %v3854 = vmul.f32 %v3853, 1.442695
          %v3855 = vpow.pop %v3854
          %v3856 = vadd.f32 %v3855, 1.0
          %v3857 = vrcp.pop %v3856
          %v3858 = vmul.f32 1.0, %v3857
          %v3859 = vadd.f32 %v3842, %v2499
          %v3860 = vmul.f32 %v3851, %v3859
          %v3861 = vadd.f32 %v3703, %v3860
          %v3862 = vtanh.pop %v3861
          %v3863 = vsub.f32 %v3694, %v3862
          %v3864 = vmul.f32 %v3858, %v3863
          %v3865 = vadd.f32 %v3862, %v3864
          %s3866 = scalar_lea.vmem %s313, 56
          %3867 = vst [vmem:[%s3866] sm:$0xff] %v3865
          %3868 = vst [vmem:[#allocation2] sm:$0xff] %v3865
        $region60: #{gru_model_forward.3} parent=39 // pred_fallthru
          _
        %s3869 = ssub.s32 %s23, 1
        %p3870 = scmp.gt.s32.totalorder %s3869, 0
        %s3871 = scalar_select %p3870, %s3869, 0
        %s3872 = smul.u32 8, %s3871
        %p3873 = scmp.lt.s32.totalorder %s3872, 7
        %s3874 = scalar_select %p3873, %s3872, 7
        %p3875 = scmp.lt.s32.totalorder %s22, 0
        %s3876 = scalar_select %p3875, %s22, 0
        %s3877 = sadd.s32 %s3876, %s3874
        %s3878 = smul.addr %s3877, 8
        %s3879 = scalar_lea.vmem %s5, %s3878
        // Predicated region
        $region61: #{gru_model_forward.3} parent=39 // pred_check
          %p3880 = pneg %p172
        $region62: #{gru_model_forward.3} parent=39 // pred_check_branch
          %3882 = sbr.rel (%p3880) target = $region64
        $region63: #{gru_model_forward.3} parent=39 // pred_region
          %s3883 = ssub.s32 %s23, 1
          %p3884 = scmp.gt.s32.totalorder %s3883, 0
          %s3885 = scalar_select %p3884, %s3883, 0
          %s3886 = smul.u32 8, %s3885
        $region64: #{gru_model_forward.3} parent=39 // pred_fallthru
          _
      $region40: #{gru_model_forward.3} parent=5 // pred_fallthru
        _
      %p3887 = scmp.le.s32.totalorder 2, %s13
      // Predicated region
      $region65: #{gru_model_forward.3} parent=5 // pred_check
        %p3888 = pneg %p3887
      $region66: #{gru_model_forward.3} parent=5 // pred_check_branch
        %3890 = sbr.rel (%p3888) target = $region68
      $region67: #{gru_model_forward.3} parent=5 // pred_region
        %s3891 = ssub.s32 %s13, 2
        // Predicated region
        $region69: #{gru_model_forward.3} parent=67 // pred_check
          %p3892 = pneg %p178
        $region70: #{gru_model_forward.3} parent=67 // pred_check_branch
          %3894 = sbr.rel (%p3892) target = $region72
        $region71: #{gru_model_forward.3} parent=67 // pred_region
          %s3895 = ssub.s32 %s25, 1
          %p3896 = scmp.gt.s32.totalorder %s3895, 0
          %s3897 = scalar_select %p3896, %s3895, 0
          %s3898 = smul.u32 8, %s3897
          %p3899 = scmp.lt.s32.totalorder %s3898, 7
          %s3900 = scalar_select %p3899, %s3898, 7
          %p3901 = scmp.lt.s32.totalorder %s24, 0
          %s3902 = scalar_select %p3901, %s24, 0
          %s3903 = sadd.s32 %s3902, %s3900
          %s3904 = smul.addr %s3903, 8
          %s3905 = scalar_lea.vmem %s5, %s3904
        $region72: #{gru_model_forward.3} parent=67 // pred_fallthru
          _
      $region68: #{gru_model_forward.3} parent=5 // pred_fallthru
        _
    $region6: #{gru_model_forward.3} parent=1 // loop_footer
      %s17 = sadd.s32 1, %s13
    $region7: #{gru_model_forward.3} parent=1 // loop_footer_branch
      %12 = sbr.rel target = $region3
    $region8: #{gru_model_forward.3} parent=1 // loop_exit
      _
    %3906 = vsyncpa [#allocation5], 1
    %s3907 = scalar_lea.sflag [#allocation5], 1
    %3908 = vsyncpa %s3907, 1
    %3909 = vsyncpa [#allocation7], 1

// kernel: gru_model_forward.4
$region0: #{gru_model_forward.4}
  #allocation0 [shape = 'u32[]', space=smem, size = 0x4, offset = 0x4, fixed_abs, tag = 'smem constant byte address 0x4 - core index']
  #allocation1 [shape = 'u32[144,128]{1,0:T(1,128)}', space=vmem, size = 0x12000, scoped, tag = 'internal scratch']
  #allocation2 [shape = 'f32[8,128]{1,0:T(8,128)}', space=vmem, size = 0x1000, scoped, tag = 'scratch operand']
  #allocation3 [shape = 'f32[16,8,384]{2,1,0:T(8,128)}', space=vmem, size = 0x30000, scoped, tag = 'scratch operand']
  %s0 = inlined_call_operand.vmem [shape: f32[8,8,128], index: 0, kind: input, shape index: {}]
  %s1 = inlined_call_operand.vmem [shape: f32[128,384], index: 1, kind: input, shape index: {}]
  %s2 = inlined_call_operand.vmem [shape: f32[128,384], index: 2, kind: input, shape index: {}]
  %s3 = inlined_call_operand.vmem [shape: f32[1,384], index: 3, kind: input, shape index: {}]
  %s4 = inlined_call_operand.vmem [shape: f32[1,128], index: 4, kind: input, shape index: {}]
  %s5 = inlined_call_operand.vmem [shape: f32[8,8,128], index: 5, kind: output, shape index: {}]
  %s6 = sld [smem:[#allocation0]]
  $region65: #{gru_model_forward.4} parent=0
    _
  %s8 = ssub.s32 1, %s6
  %s9 = scalar_select 0, %s8, %s6
  loop: start=0, step=1, limit=4
  $region2: #{gru_model_forward.4} parent=0 // loop_pre_header
    _
  $region3: #{gru_model_forward.4} parent=0 // loop_header
    %s11 = sphi 0, %s15
    %p12 = scmp.ge.s32.totalorder %s11, 4
    %s18 = sphi 0, %s30
    %s19 = sphi 0, %s26
    %s20 = sphi 0, %s18
    %s21 = sphi 0, %s19
    %s22 = sphi 0, %s20
    %s23 = sphi 0, %s21
    %s39 = sphi 0, %s41
    %s42 = sphi 0, %s39
    %s43 = sphi 0, %s42
    %s59 = sphi 0, %s43
    %s63 = sphi 0, %s63
    %s65 = sphi 0, %s63
    %s66 = sphi 0, %s65
    %s80 = sphi 0, %s66
    %s84 = sphi 0, %s84
    %s86 = sphi 0, %s84
    %s87 = sphi 0, %s86
    %s101 = sphi 0, %s87
    %s105 = sphi 0, %s105
    %s107 = sphi 0, %s105
    %s108 = sphi 0, %s107
    %s122 = sphi 0, %s108
    %s126 = sphi 0, %s126
    %s128 = sphi 0, %s126
    %s129 = sphi 0, %s128
    %s143 = sphi 0, %s129
    %s157 = sphi 0, %s159
    %s160 = sphi 0, %s157
    %s161 = sphi 0, %s160
    %s177 = sphi 0, %s161
  $region4: #{gru_model_forward.4} parent=0 // loop_header_branch
    %14 = sbr.rel (%p12) target = $region8
  $region5: #{gru_model_forward.4} parent=0 // loop_body
    %s16 = ssub.s32 %s11, 1
    %s17 = ssub.s32 %s11, 2
    %s24 = sadd.s32 1, %s19
    %p25 = scmp.ge.s32.totalorder %s24, 2
    %s26 = scalar_select %p25, 0, %s24
    %s27 = sadd.s32 1, %s18
    %s28 = scalar_select %p25, %s27, %s18
    %p29 = scmp.ge.s32.totalorder %s28, 1
    %s30 = scalar_select %p29, 0, %s28
    %p31 = scmp.lt.s32.totalorder %s19, 0
    %s32 = scalar_select %p31, %s19, 0
    %p33 = scmp.lt.s32.totalorder %s26, 0
    %s34 = scalar_select %p33, %s26, 0
    %s35 = ssub.s32 %s32, %s34
    %s36 = ssub.s32 %s18, %s30
    %s37 = sor.u32 %s35, %s36
    %p38 = scmp.eq.s32.totalorder %s37, 0
    %s40 = sadd.s32 %s39, 1
    %s41 = scalar_select %p38, %s39, %s40
    %p44 = pneg %p38
    %p45 = scmp.eq.s32.totalorder %s11, 1
    %p46 = por %p44, %p45
    %p47 = scmp.ne.s32.totalorder %s39, %s42
    %p48 = scmp.eq.s32.totalorder %s11, 0
    %p49 = por %p47, %p48
    %p50 = scmp.ne.s32.totalorder %s39, %s42
    %p51 = scmp.eq.s32.totalorder %s16, 1
    %p52 = por %p50, %p51
    %p53 = scmp.ne.s32.totalorder %s42, %s43
    %p54 = scmp.eq.s32.totalorder %s16, 0
    %p55 = por %p53, %p54
    %p56 = scmp.ne.s32.totalorder %s42, %s43
    %p57 = scmp.eq.s32.totalorder %s17, 1
    %p58 = por %p56, %p57
    %p60 = scmp.ne.s32.totalorder %s43, %s59
    %p61 = scmp.eq.s32.totalorder %s17, 0
    %p62 = por %p60, %p61
    %s64 = sadd.s32 %s63, 1
    %p67 = scmp.eq.s32.totalorder %s11, 1
    %p68 = scmp.ne.s32.totalorder %s63, %s65
    %p69 = scmp.eq.s32.totalorder %s11, 0
    %p70 = por %p68, %p69
    %p71 = scmp.ne.s32.totalorder %s63, %s65
    %p72 = scmp.eq.s32.totalorder %s16, 1
    %p73 = por %p71, %p72
    %p74 = scmp.ne.s32.totalorder %s65, %s66
    %p75 = scmp.eq.s32.totalorder %s16, 0
    %p76 = por %p74, %p75
    %p77 = scmp.ne.s32.totalorder %s65, %s66
    %p78 = scmp.eq.s32.totalorder %s17, 1
    %p79 = por %p77, %p78
    %p81 = scmp.ne.s32.totalorder %s66, %s80
    %p82 = scmp.eq.s32.totalorder %s17, 0
    %p83 = por %p81, %p82
    %s85 = sadd.s32 %s84, 1
    %p88 = scmp.eq.s32.totalorder %s11, 1
    %p89 = scmp.ne.s32.totalorder %s84, %s86
    %p90 = scmp.eq.s32.totalorder %s11, 0
    %p91 = por %p89, %p90
    %p92 = scmp.ne.s32.totalorder %s84, %s86
    %p93 = scmp.eq.s32.totalorder %s16, 1
    %p94 = por %p92, %p93
    %p95 = scmp.ne.s32.totalorder %s86, %s87
    %p96 = scmp.eq.s32.totalorder %s16, 0
    %p97 = por %p95, %p96
    %p98 = scmp.ne.s32.totalorder %s86, %s87
    %p99 = scmp.eq.s32.totalorder %s17, 1
    %p100 = por %p98, %p99
    %p102 = scmp.ne.s32.totalorder %s87, %s101
    %p103 = scmp.eq.s32.totalorder %s17, 0
    %p104 = por %p102, %p103
    %s106 = sadd.s32 %s105, 1
    %p109 = scmp.eq.s32.totalorder %s11, 1
    %p110 = scmp.ne.s32.totalorder %s105, %s107
    %p111 = scmp.eq.s32.totalorder %s11, 0
    %p112 = por %p110, %p111
    %p113 = scmp.ne.s32.totalorder %s105, %s107
    %p114 = scmp.eq.s32.totalorder %s16, 1
    %p115 = por %p113, %p114
    %p116 = scmp.ne.s32.totalorder %s107, %s108
    %p117 = scmp.eq.s32.totalorder %s16, 0
    %p118 = por %p116, %p117
    %p119 = scmp.ne.s32.totalorder %s107, %s108
    %p120 = scmp.eq.s32.totalorder %s17, 1
    %p121 = por %p119, %p120
    %p123 = scmp.ne.s32.totalorder %s108, %s122
    %p124 = scmp.eq.s32.totalorder %s17, 0
    %p125 = por %p123, %p124
    %s127 = sadd.s32 %s126, 1
    %p130 = scmp.eq.s32.totalorder %s11, 1
    %p131 = scmp.ne.s32.totalorder %s126, %s128
    %p132 = scmp.eq.s32.totalorder %s11, 0
    %p133 = por %p131, %p132
    %p134 = scmp.ne.s32.totalorder %s126, %s128
    %p135 = scmp.eq.s32.totalorder %s16, 1
    %p136 = por %p134, %p135
    %p137 = scmp.ne.s32.totalorder %s128, %s129
    %p138 = scmp.eq.s32.totalorder %s16, 0
    %p139 = por %p137, %p138
    %p140 = scmp.ne.s32.totalorder %s128, %s129
    %p141 = scmp.eq.s32.totalorder %s17, 1
    %p142 = por %p140, %p141
    %p144 = scmp.ne.s32.totalorder %s129, %s143
    %p145 = scmp.eq.s32.totalorder %s17, 0
    %p146 = por %p144, %p145
    %s147 = ssub.s32 %s19, 1
    %p148 = scmp.gt.s32.totalorder %s147, 0
    %s149 = scalar_select %p148, %s147, 0
    %s150 = ssub.s32 %s26, 1
    %p151 = scmp.gt.s32.totalorder %s150, 0
    %s152 = scalar_select %p151, %s150, 0
    %s153 = ssub.s32 %s149, %s152
    %s154 = ssub.s32 %s18, %s30
    %s155 = sor.u32 %s153, %s154
    %p156 = scmp.eq.s32.totalorder %s155, 0
    %s158 = sadd.s32 %s157, 1
    %s159 = scalar_select %p156, %s157, %s158
    %p162 = pneg %p156
    %p163 = scmp.eq.s32.totalorder %s11, 1
    %p164 = por %p162, %p163
    %p165 = scmp.ne.s32.totalorder %s157, %s160
    %p166 = scmp.eq.s32.totalorder %s11, 0
    %p167 = por %p165, %p166
    %p168 = scmp.ne.s32.totalorder %s157, %s160
    %p169 = scmp.eq.s32.totalorder %s16, 1
    %p170 = por %p168, %p169
    %p171 = scmp.ne.s32.totalorder %s160, %s161
    %p172 = scmp.eq.s32.totalorder %s16, 0
    %p173 = por %p171, %p172
    %p174 = scmp.ne.s32.totalorder %s160, %s161
    %p175 = scmp.eq.s32.totalorder %s17, 1
    %p176 = por %p174, %p175
    %p178 = scmp.ne.s32.totalorder %s161, %s177
    %p179 = scmp.eq.s32.totalorder %s17, 0
    %p180 = por %p178, %p179
    %p181 = scmp.le.s32.totalorder 1, %s11
    %p182 = scmp.lt.s32.totalorder %s11, 3
    %p183 = pnand %p181, %p182
    %p184 = pneg %p183
    // Predicated region
    $region9: #{gru_model_forward.4} parent=5 // pred_check
      _
    $region10: #{gru_model_forward.4} parent=5 // pred_check_branch
      %186 = sbr.rel (%p183) target = $region12
    $region11: #{gru_model_forward.4} parent=5 // pred_region
      %s187 = ssub.s32 %s11, 1
      // Predicated region
      $region13: #{gru_model_forward.4} parent=11 // pred_check
        %p188 = pneg %p76
      $region14: #{gru_model_forward.4} parent=11 // pred_check_branch
        %190 = sbr.rel (%p188) target = $region16
      $region15: #{gru_model_forward.4} parent=11 // pred_region
        _
      $region16: #{gru_model_forward.4} parent=11 // pred_fallthru
        _
      // Predicated region
      $region17: #{gru_model_forward.4} parent=11 // pred_check
        %p191 = pneg %p97
      $region18: #{gru_model_forward.4} parent=11 // pred_check_branch
        %193 = sbr.rel (%p191) target = $region20
      $region19: #{gru_model_forward.4} parent=11 // pred_region
        _
      $region20: #{gru_model_forward.4} parent=11 // pred_fallthru
        _
      // Predicated region
      $region21: #{gru_model_forward.4} parent=11 // pred_check
        %p194 = pneg %p118
      $region22: #{gru_model_forward.4} parent=11 // pred_check_branch
        %196 = sbr.rel (%p194) target = $region24
      $region23: #{gru_model_forward.4} parent=11 // pred_region
        _
      $region24: #{gru_model_forward.4} parent=11 // pred_fallthru
        _
      // Predicated region
      $region25: #{gru_model_forward.4} parent=11 // pred_check
        %p197 = pneg %p139
      $region26: #{gru_model_forward.4} parent=11 // pred_check_branch
        %199 = sbr.rel (%p197) target = $region28
      $region27: #{gru_model_forward.4} parent=11 // pred_region
        _
      $region28: #{gru_model_forward.4} parent=11 // pred_fallthru
        _
    $region12: #{gru_model_forward.4} parent=5 // pred_fallthru
      _
    %p200 = scmp.lt.s32.totalorder %s11, 2
    // Predicated region
    $region29: #{gru_model_forward.4} parent=5 // pred_check
      %p201 = pneg %p200
    $region30: #{gru_model_forward.4} parent=5 // pred_check_branch
      %203 = sbr.rel (%p201) target = $region32
    $region31: #{gru_model_forward.4} parent=5 // pred_region
      // Predicated region
      $region33: #{gru_model_forward.4} parent=31 // pred_check
        %p204 = pneg %p49
      $region34: #{gru_model_forward.4} parent=31 // pred_check_branch
        %206 = sbr.rel (%p204) target = $region36
      $region35: #{gru_model_forward.4} parent=31 // pred_region
        %p207 = scmp.lt.s32.totalorder %s19, 0
        %s208 = scalar_select %p207, %s19, 0
        %s209 = smul.u32 8, %s208
        %p210 = scmp.lt.s32.totalorder %s209, 7
        %s211 = scalar_select %p210, %s209, 7
        %p212 = scmp.lt.s32.totalorder %s18, 0
        %s213 = scalar_select %p212, %s18, 0
        %s214 = sadd.s32 %s213, %s211
        %s215 = smul.addr %s214, 8
        %s216 = scalar_lea.vmem %s0, %s215
        %p217 = scmp.lt.s32.totalorder %s19, 0
        %s218 = scalar_select %p217, %s19, 0
        %s219 = smul.u32 8, %s218
      $region36: #{gru_model_forward.4} parent=31 // pred_fallthru
        _
    $region32: #{gru_model_forward.4} parent=5 // pred_fallthru
      _
    %p220 = scmp.le.s32.totalorder 1, %s11
    %p221 = scmp.lt.s32.totalorder %s11, 3
    %p222 = pnand %p220, %p221
    %p223 = pneg %p222
    // Predicated region
    $region37: #{gru_model_forward.4} parent=5 // pred_check
      _
    $region38: #{gru_model_forward.4} parent=5 // pred_check_branch
      %225 = sbr.rel (%p222) target = $region40
    $region39: #{gru_model_forward.4} parent=5 // pred_region
      %s226 = ssub.s32 %s11, 1
      %p227 = scmp.lt.s32.totalorder %s21, 0
      %s228 = scalar_select %p227, %s21, 0
      %s229 = smul.u32 8, %s228
      %p230 = scmp.lt.s32.totalorder %s229, 7
      %s231 = scalar_select %p230, %s229, 7
      %p232 = scmp.lt.s32.totalorder %s20, 0
      %s233 = scalar_select %p232, %s20, 0
      %s234 = sadd.s32 %s233, %s231
      %s235 = smul.addr %s234, 8
      %s236 = scalar_lea.vmem %s0, %s235
      %p237 = pneg %p55
      %p238 = pneg %p52
      %p239 = pneg %p76
      %p240 = pneg %p73
      %p241 = pneg %p97
      %p242 = pneg %p94
      %p243 = pneg %p118
      %p244 = pneg %p115
      %p245 = pneg %p139
      %p246 = pneg %p136
      %p247 = pneg %p173
      %p248 = pneg %p170
      %s249 = ssub.s32 %s21, 1
      %p250 = scmp.gt.s32.totalorder %s249, 0
      %s251 = scalar_select %p250, %s249, 0
      %s252 = smul.u32 8, %s251
      %p253 = scmp.lt.s32.totalorder %s252, 7
      %s254 = scalar_select %p253, %s252, 7
      %p255 = scmp.lt.s32.totalorder %s20, 0
      %s256 = scalar_select %p255, %s20, 0
      %s257 = sadd.s32 %s256, %s254
      %s258 = smul.addr %s257, 8
      %s259 = scalar_lea.vmem %s5, %s258
      %p260 = scmp.lt.s32.totalorder %s21, 0
      %s261 = scalar_select %p260, %s21, 0
      %s262 = smul.u32 8, %s261
      %p263 = scmp.lt.s32.totalorder %s262, 7
      %s264 = scalar_select %p263, %s262, 7
      %p265 = scmp.lt.s32.totalorder %s20, 0
      %s266 = scalar_select %p265, %s20, 0
      %s267 = sadd.s32 %s266, %s264
      %s268 = smul.addr %s267, 8
      %s269 = scalar_lea.vmem %s0, %s268
      %p270 = scmp.lt.s32.totalorder %s21, 0
      %s271 = scalar_select %p270, %s21, 0
      %s272 = smul.u32 8, %s271
      %s273 = ssub.s32 %s21, 1
      %p274 = scmp.gt.s32.totalorder %s273, 0
      %s275 = scalar_select %p274, %s273, 0
      %s276 = smul.u32 8, %s275
      %p277 = scmp.lt.s32.totalorder %s276, 7
      %s278 = scalar_select %p277, %s276, 7
      %p279 = scmp.lt.s32.totalorder %s20, 0
      %s280 = scalar_select %p279, %s20, 0
      %s281 = sadd.s32 %s280, %s278
      %s282 = smul.addr %s281, 8
      %s283 = scalar_lea.vmem %s5, %s282
      %s284 = ssub.s32 %s21, 1
      %p285 = scmp.gt.s32.totalorder %s284, 0
      %s286 = scalar_select %p285, %s284, 0
      %s287 = smul.u32 8, %s286
      %p288 = scmp.eq.s32.totalorder %s21, 0
      // Predicated region
      $region41: #{gru_model_forward.4} parent=39 // pred_check
        %p289 = pneg %p288
      $region42: #{gru_model_forward.4} parent=39 // pred_check_branch
        %291 = sbr.rel (%p289) target = $region44
      $region43: #{gru_model_forward.4} parent=39 // pred_region
        %292 = vst [vmem:[#allocation2] sm:$0xff] 0.0
        %p293 = scmp.lt.s32.totalorder %s21, 0
        %s294 = ssub.s32 0, %s21
        %s295 = scalar_select %p293, %s294, %s21
        %s296 = sand.u32 %s295, 1
        %s297 = ssub.s32 0, %s296
        %s298 = scalar_select %p293, %s297, %s296
        %p299 = scmp.ne.s32.totalorder %s298, 0
        %p300 = scmp.lt.s32.totalorder %s298, 0
        %p301 = pnand %p300, %p299
        %p302 = pneg %p301
        %s303 = sadd.s32 %s298, 2
        %s304 = scalar_select %p302, %s303, %s298
        %v305 = vld [vmem:[%s269] sm:$0xff]
        %v306 = vld [vmem:[%s269 + $0x8] sm:$0xff]
        %v307 = vld [vmem:[%s269 + $0x10] sm:$0xff]
        %v308 = vld [vmem:[%s269 + $0x18] sm:$0xff]
        %v309 = vld [vmem:[%s269 + $0x20] sm:$0xff]
        %v310 = vld [vmem:[%s269 + $0x28] sm:$0xff]
        %v311 = vld [vmem:[%s269 + $0x30] sm:$0xff]
        %v312 = vld [vmem:[%s269 + $0x38] sm:$0xff]
        %v313 = vld [vmem:[%s1] sm:$0xff]
        %v314 = vld [vmem:[%s1 + $0x8] sm:$0xff]
        %v315 = vld [vmem:[%s1 + $0x10] sm:$0xff]
        %v316 = vld [vmem:[%s1 + $0x18] sm:$0xff]
        %v317 = vld [vmem:[%s1 + $0x20] sm:$0xff]
        %v318 = vld [vmem:[%s1 + $0x28] sm:$0xff]
        %v319 = vld [vmem:[%s1 + $0x30] sm:$0xff]
        %v320 = vld [vmem:[%s1 + $0x38] sm:$0xff]
        %v321 = vld [vmem:[%s1 + $0x40] sm:$0xff]
        %v322 = vld [vmem:[%s1 + $0x48] sm:$0xff]
        %v323 = vld [vmem:[%s1 + $0x50] sm:$0xff]
        %v324 = vld [vmem:[%s1 + $0x58] sm:$0xff]
        %v325 = vld [vmem:[%s1 + $0x60] sm:$0xff]
        %v326 = vld [vmem:[%s1 + $0x68] sm:$0xff]
        %v327 = vld [vmem:[%s1 + $0x70] sm:$0xff]
        %v328 = vld [vmem:[%s1 + $0x78] sm:$0xff]
        %v329 = vld [vmem:[%s1 + $0x80] sm:$0xff]
        %v330 = vld [vmem:[%s1 + $0x88] sm:$0xff]
        %v331 = vld [vmem:[%s1 + $0x90] sm:$0xff]
        %v332 = vld [vmem:[%s1 + $0x98] sm:$0xff]
        %v333 = vld [vmem:[%s1 + $0xa0] sm:$0xff]
        %v334 = vld [vmem:[%s1 + $0xa8] sm:$0xff]
        %v335 = vld [vmem:[%s1 + $0xb0] sm:$0xff]
        %v336 = vld [vmem:[%s1 + $0xb8] sm:$0xff]
        %v337 = vld [vmem:[%s1 + $0xc0] sm:$0xff]
        %v338 = vld [vmem:[%s1 + $0xc8] sm:$0xff]
        %v339 = vld [vmem:[%s1 + $0xd0] sm:$0xff]
        %v340 = vld [vmem:[%s1 + $0xd8] sm:$0xff]
        %v341 = vld [vmem:[%s1 + $0xe0] sm:$0xff]
        %v342 = vld [vmem:[%s1 + $0xe8] sm:$0xff]
        %v343 = vld [vmem:[%s1 + $0xf0] sm:$0xff]
        %v344 = vld [vmem:[%s1 + $0xf8] sm:$0xff]
        %v345 = vld [vmem:[%s1 + $0x100] sm:$0xff]
        %v346 = vld [vmem:[%s1 + $0x108] sm:$0xff]
        %v347 = vld [vmem:[%s1 + $0x110] sm:$0xff]
        %v348 = vld [vmem:[%s1 + $0x118] sm:$0xff]
        %v349 = vld [vmem:[%s1 + $0x120] sm:$0xff]
        %v350 = vld [vmem:[%s1 + $0x128] sm:$0xff]
        %v351 = vld [vmem:[%s1 + $0x130] sm:$0xff]
        %v352 = vld [vmem:[%s1 + $0x138] sm:$0xff]
        %v353 = vld [vmem:[%s1 + $0x140] sm:$0xff]
        %v354 = vld [vmem:[%s1 + $0x148] sm:$0xff]
        %v355 = vld [vmem:[%s1 + $0x150] sm:$0xff]
        %v356 = vld [vmem:[%s1 + $0x158] sm:$0xff]
        %v357 = vld [vmem:[%s1 + $0x160] sm:$0xff]
        %v358 = vld [vmem:[%s1 + $0x168] sm:$0xff]
        %v359 = vld [vmem:[%s1 + $0x170] sm:$0xff]
        %v360 = vld [vmem:[%s1 + $0x178] sm:$0xff]
        %v361 = vld [vmem:[%s3] sm:$0x7]
        %v363 = vlaneseq
        %v364 = vshrl.u32 %v363, 7
        %v365 = vsub.s32 0, %v364
        %v366 = vrot.slane %v361, %v365
        %v367 = vlaneseq
        %v368 = vshrl.u32 %v367, 7
        %v369 = vsub.s32 1, %v368
        %v370 = vrot.slane %v361, %v369
        %v371 = vlaneseq
        %v372 = vshrl.u32 %v371, 7
        %v373 = vsub.s32 2, %v372
        %v374 = vrot.slane %v361, %v373
        %378 = vmatprep.subr.mxu0 %v314
        %379 = vmatpush1.msra.mxu0 %v313
        %380 = vmatprep.subr.mxu0 %v317
        %381 = vmatpush1.msra.mxu0 %v316
        %382 = vmatprep.subr.mxu0 %v320
        %383 = vmatpush1.msra.mxu0 %v319
        %384 = vmatprep.subr.mxu0 %v323
        %385 = vmatpush1.msra.mxu0 %v322
        %386 = vmatprep.subr.mxu0 %v326
        %387 = vmatpush1.msra.mxu0 %v325
        %388 = vmatprep.subr.mxu0 %v329
        %389 = vmatpush1.msra.mxu0 %v328
        %390 = vmatprep.subr.mxu0 %v332
        %391 = vmatpush1.msra.mxu0 %v331
        %392 = vmatprep.subr.mxu0 %v335
        %393 = vmatpush1.msra.mxu0 %v334
        %394 = vmatprep.subr.mxu0 %v338
        %395 = vmatpush1.msra.mxu0 %v337
        %396 = vmatprep.subr.mxu0 %v341
        %397 = vmatpush1.msra.mxu0 %v340
        %398 = vmatprep.subr.mxu0 %v344
        %399 = vmatpush1.msra.mxu0 %v343
        %400 = vmatprep.subr.mxu0 %v347
        %401 = vmatpush1.msra.mxu0 %v346
        %402 = vmatprep.subr.mxu0 %v350
        %403 = vmatpush1.msra.mxu0 %v349
        %404 = vmatprep.subr.mxu0 %v353
        %405 = vmatpush1.msra.mxu0 %v352
        %406 = vmatprep.subr.mxu0 %v356
        %407 = vmatpush1.msra.mxu0 %v355
        %408 = vmatprep.subr.mxu0 %v359
        %409 = vmatpush1.msra.mxu0 %v358
        %410 = vmatprep.subr.mxu0 0.0
        %411 = vmatpush1.msra.mxu0 0.0
        %412 = vmatprep.subr.mxu0 0.0
        %413 = vmatpush1.msra.mxu0 0.0
        %414 = vmatprep.subr.mxu0 0.0
        %415 = vmatpush1.msra.mxu0 0.0
        %416 = vmatprep.subr.mxu0 0.0
        %417 = vmatpush1.msra.mxu0 0.0
        %418 = vmatprep.subr.mxu0 0.0
        %419 = vmatpush1.msra.mxu0 0.0
        %420 = vmatprep.subr.mxu0 0.0
        %421 = vmatpush1.msra.mxu0 0.0
        %422 = vmatprep.subr.mxu0 0.0
        %423 = vmatpush1.msra.mxu0 0.0
        %424 = vmatprep.subr.mxu0 0.0
        %425 = vmatpush1.msra.mxu0 0.0
        %426 = vmatprep.subr.mxu0 0.0
        %427 = vmatpush1.msra.mxu0 0.0
        %428 = vmatprep.subr.mxu0 0.0
        %429 = vmatpush1.msra.mxu0 0.0
        %430 = vmatprep.subr.mxu0 0.0
        %431 = vmatpush1.msra.mxu0 0.0
        %432 = vmatprep.subr.mxu0 0.0
        %433 = vmatpush1.msra.mxu0 0.0
        %434 = vmatprep.subr.mxu0 0.0
        %435 = vmatpush1.msra.mxu0 0.0
        %436 = vmatprep.subr.mxu0 0.0
        %437 = vmatpush1.msra.mxu0 0.0
        %438 = vmatprep.subr.mxu0 0.0
        %439 = vmatpush1.msra.mxu0 0.0
        %440 = vmatprep.subr.mxu0 0.0
        %441 = vmatpush1.msra.mxu0 0.0
        %442 = vmatprep.mubr.f32.mxu0 0.0
        %443 = vmatmul.mubr.f32.gmra.mrb[0].mxu0 %v305
        %v444 = vpop.f32.mrb[0].mxu0
        %v445 = vadd.f32 %v366, %v444
        %v446 = vpop.f32.mrb[0].mxu0
        %v447 = vadd.f32 %v370, %v446
        %448 = vmatprep.mubr.f32.mxu0 0.0
        %449 = vmatmul.mubr.f32.gmra.mrb[0].mxu0 %v306
        %v450 = vpop.f32.mrb[0].mxu0
        %v451 = vadd.f32 %v366, %v450
        %v452 = vpop.f32.mrb[0].mxu0
        %v453 = vadd.f32 %v370, %v452
        %454 = vmatprep.mubr.f32.mxu0 0.0
        %455 = vmatmul.mubr.f32.gmra.mrb[0].mxu0 %v307
        %v456 = vpop.f32.mrb[0].mxu0
        %v457 = vadd.f32 %v366, %v456
        %v458 = vpop.f32.mrb[0].mxu0
        %v459 = vadd.f32 %v370, %v458
        %460 = vmatprep.mubr.f32.mxu0 0.0
        %461 = vmatmul.mubr.f32.gmra.mrb[0].mxu0 %v308
        %v462 = vpop.f32.mrb[0].mxu0
        %v463 = vadd.f32 %v366, %v462
        %v464 = vpop.f32.mrb[0].mxu0
        %v465 = vadd.f32 %v370, %v464
        %466 = vmatprep.mubr.f32.mxu0 0.0
        %467 = vmatmul.mubr.f32.gmra.mrb[0].mxu0 %v309
        %v468 = vpop.f32.mrb[0].mxu0
        %v469 = vadd.f32 %v366, %v468
        %v470 = vpop.f32.mrb[0].mxu0
        %v471 = vadd.f32 %v370, %v470
        %472 = vmatprep.mubr.f32.mxu0 0.0
        %473 = vmatmul.mubr.f32.gmra.mrb[0].mxu0 %v310
        %v474 = vpop.f32.mrb[0].mxu0
        %v475 = vadd.f32 %v366, %v474
        %v476 = vpop.f32.mrb[0].mxu0
        %v477 = vadd.f32 %v370, %v476
        %478 = vmatprep.mubr.f32.mxu0 0.0
        %479 = vmatmul.mubr.f32.gmra.mrb[0].mxu0 %v311
        %v480 = vpop.f32.mrb[0].mxu0
        %v481 = vadd.f32 %v366, %v480
        %v482 = vpop.f32.mrb[0].mxu0
        %v483 = vadd.f32 %v370, %v482
        %484 = vmatprep.mubr.f32.mxu0 0.0
        %485 = vmatmul.mubr.f32.gmra.mrb[0].mxu0 %v312
        %v486 = vpop.f32.mrb[0].mxu0
        %v487 = vadd.f32 %v366, %v486
        %v488 = vpop.f32.mrb[0].mxu0
        %v489 = vadd.f32 %v370, %v488
        %490 = vdwg.mxu0
        %491 = vmatprep.subr.mxu0 0.0
        %492 = vmatpush1.msra.mxu0 %v315
        %493 = vmatprep.subr.mxu0 0.0
        %494 = vmatpush1.msra.mxu0 %v318
        %495 = vmatprep.subr.mxu0 0.0
        %496 = vmatpush1.msra.mxu0 %v321
        %497 = vmatprep.subr.mxu0 0.0
        %498 = vmatpush1.msra.mxu0 %v324
        %499 = vmatprep.subr.mxu0 0.0
        %500 = vmatpush1.msra.mxu0 %v327
        %501 = vmatprep.subr.mxu0 0.0
        %502 = vmatpush1.msra.mxu0 %v330
        %503 = vmatprep.subr.mxu0 0.0
        %504 = vmatpush1.msra.mxu0 %v333
        %505 = vmatprep.subr.mxu0 0.0
        %506 = vmatpush1.msra.mxu0 %v336
        %507 = vmatprep.subr.mxu0 0.0
        %508 = vmatpush1.msra.mxu0 %v339
        %509 = vmatprep.subr.mxu0 0.0
        %510 = vmatpush1.msra.mxu0 %v342
        %511 = vmatprep.subr.mxu0 0.0
        %512 = vmatpush1.msra.mxu0 %v345
        %513 = vmatprep.subr.mxu0 0.0
        %514 = vmatpush1.msra.mxu0 %v348
        %515 = vmatprep.subr.mxu0 0.0
        %516 = vmatpush1.msra.mxu0 %v351
        %517 = vmatprep.subr.mxu0 0.0
        %518 = vmatpush1.msra.mxu0 %v354
        %519 = vmatprep.subr.mxu0 0.0
        %520 = vmatpush1.msra.mxu0 %v357
        %521 = vmatprep.subr.mxu0 0.0
        %522 = vmatpush1.msra.mxu0 %v360
        %523 = vmatprep.subr.mxu0 0.0
        %524 = vmatpush1.msra.mxu0 0.0
        %525 = vmatprep.subr.mxu0 0.0
        %526 = vmatpush1.msra.mxu0 0.0
        %527 = vmatprep.subr.mxu0 0.0
        %528 = vmatpush1.msra.mxu0 0.0
        %529 = vmatprep.subr.mxu0 0.0
        %530 = vmatpush1.msra.mxu0 0.0
        %531 = vmatprep.subr.mxu0 0.0
        %532 = vmatpush1.msra.mxu0 0.0
        %533 = vmatprep.subr.mxu0 0.0
        %534 = vmatpush1.msra.mxu0 0.0
        %535 = vmatprep.subr.mxu0 0.0
        %536 = vmatpush1.msra.mxu0 0.0
        %537 = vmatprep.subr.mxu0 0.0
        %538 = vmatpush1.msra.mxu0 0.0
        %539 = vmatprep.subr.mxu0 0.0
        %540 = vmatpush1.msra.mxu0 0.0
        %541 = vmatprep.subr.mxu0 0.0
        %542 = vmatpush1.msra.mxu0 0.0
        %543 = vmatprep.subr.mxu0 0.0
        %544 = vmatpush1.msra.mxu0 0.0
        %545 = vmatprep.subr.mxu0 0.0
        %546 = vmatpush1.msra.mxu0 0.0
        %547 = vmatprep.subr.mxu0 0.0
        %548 = vmatpush1.msra.mxu0 0.0
        %549 = vmatprep.subr.mxu0 0.0
        %550 = vmatpush1.msra.mxu0 0.0
        %551 = vmatprep.subr.mxu0 0.0
        %552 = vmatpush1.msra.mxu0 0.0
        %553 = vmatprep.subr.mxu0 0.0
        %554 = vmatpush1.msra.mxu0 0.0
        %555 = vmatprep.mubr.f32.mxu0 0.0
        %556 = vmatmul.mubr.f32.gmra.mrb[0].mxu0 %v305
        %v557 = vpop.f32.mrb[0].mxu0
        %v558 = vadd.f32 %v374, %v557
        %v559 = vpop.f32.mrb[0].mxu0
        %560 = vmatprep.mubr.f32.mxu0 0.0
        %561 = vmatmul.mubr.f32.gmra.mrb[0].mxu0 %v306
        %v562 = vpop.f32.mrb[0].mxu0
        %v563 = vadd.f32 %v374, %v562
        %v564 = vpop.f32.mrb[0].mxu0
        %565 = vmatprep.mubr.f32.mxu0 0.0
        %566 = vmatmul.mubr.f32.gmra.mrb[0].mxu0 %v307
        %v567 = vpop.f32.mrb[0].mxu0
        %v568 = vadd.f32 %v374, %v567
        %v569 = vpop.f32.mrb[0].mxu0
        %570 = vmatprep.mubr.f32.mxu0 0.0
        %571 = vmatmul.mubr.f32.gmra.mrb[0].mxu0 %v308
        %v572 = vpop.f32.mrb[0].mxu0
        %v573 = vadd.f32 %v374, %v572
        %v574 = vpop.f32.mrb[0].mxu0
        %575 = vmatprep.mubr.f32.mxu0 0.0
        %576 = vmatmul.mubr.f32.gmra.mrb[0].mxu0 %v309
        %v577 = vpop.f32.mrb[0].mxu0
        %v578 = vadd.f32 %v374, %v577
        %v579 = vpop.f32.mrb[0].mxu0
        %580 = vmatprep.mubr.f32.mxu0 0.0
        %581 = vmatmul.mubr.f32.gmra.mrb[0].mxu0 %v310
        %v582 = vpop.f32.mrb[0].mxu0
        %v583 = vadd.f32 %v374, %v582
        %v584 = vpop.f32.mrb[0].mxu0
        %585 = vmatprep.mubr.f32.mxu0 0.0
        %586 = vmatmul.mubr.f32.gmra.mrb[0].mxu0 %v311
        %v587 = vpop.f32.mrb[0].mxu0
        %v588 = vadd.f32 %v374, %v587
        %v589 = vpop.f32.mrb[0].mxu0
        %590 = vmatprep.mubr.f32.mxu0 0.0
        %591 = vmatmul.mubr.f32.gmra.mrb[0].mxu0 %v312
        %v592 = vpop.f32.mrb[0].mxu0
        %v593 = vadd.f32 %v374, %v592
        %v594 = vpop.f32.mrb[0].mxu0
        %595 = vdwg.mxu0
        %s596 = smul.u32 %s304, 8
        %s597 = smul.u32 %s596, 3
        %s598 = smul.addr %s597, 8
        %s599 = scalar_lea.vmem [#allocation3], %s598
        %600 = vst [vmem:[%s599] sm:$0xff] %v445
        %601 = vst [vmem:[%s599 + $0x8] sm:$0xff] %v447
        %602 = vst [vmem:[%s599 + $0x10] sm:$0xff] %v558
        %603 = vst [vmem:[%s599 + $0x18] sm:$0xff] %v451
        %604 = vst [vmem:[%s599 + $0x20] sm:$0xff] %v453
        %605 = vst [vmem:[%s599 + $0x28] sm:$0xff] %v563
        %606 = vst [vmem:[%s599 + $0x30] sm:$0xff] %v457
        %607 = vst [vmem:[%s599 + $0x38] sm:$0xff] %v459
        %608 = vst [vmem:[%s599 + $0x40] sm:$0xff] %v568
        %609 = vst [vmem:[%s599 + $0x48] sm:$0xff] %v463
        %610 = vst [vmem:[%s599 + $0x50] sm:$0xff] %v465
        %611 = vst [vmem:[%s599 + $0x58] sm:$0xff] %v573
        %612 = vst [vmem:[%s599 + $0x60] sm:$0xff] %v469
        %613 = vst [vmem:[%s599 + $0x68] sm:$0xff] %v471
        %614 = vst [vmem:[%s599 + $0x70] sm:$0xff] %v578
        %615 = vst [vmem:[%s599 + $0x78] sm:$0xff] %v475
        %616 = vst [vmem:[%s599 + $0x80] sm:$0xff] %v477
        %617 = vst [vmem:[%s599 + $0x88] sm:$0xff] %v583
        %618 = vst [vmem:[%s599 + $0x90] sm:$0xff] %v481
        %619 = vst [vmem:[%s599 + $0x98] sm:$0xff] %v483
        %620 = vst [vmem:[%s599 + $0xa0] sm:$0xff] %v588
        %621 = vst [vmem:[%s599 + $0xa8] sm:$0xff] %v487
        %622 = vst [vmem:[%s599 + $0xb0] sm:$0xff] %v489
        %623 = vst [vmem:[%s599 + $0xb8] sm:$0xff] %v593
      $region44: #{gru_model_forward.4} parent=39 // pred_fallthru
        _
      %p624 = scmp.gt.s32.totalorder %s21, 0
      %p625 = scmp.lt.s32.totalorder %s21, 1
      %p626 = pnand %p624, %p625
      %p627 = pneg %p626
      // Predicated region
      $region45: #{gru_model_forward.4} parent=39 // pred_check
        _
      $region46: #{gru_model_forward.4} parent=39 // pred_check_branch
        %629 = sbr.rel (%p626) target = $region48
      $region47: #{gru_model_forward.4} parent=39 // pred_region
        %p630 = scmp.lt.s32.totalorder %s21, 0
        %s631 = ssub.s32 0, %s21
        %s632 = scalar_select %p630, %s631, %s21
        %s633 = sand.u32 %s632, 1
        %s634 = ssub.s32 0, %s633
        %s635 = scalar_select %p630, %s634, %s633
        %p636 = scmp.ne.s32.totalorder %s635, 0
        %p637 = scmp.lt.s32.totalorder %s635, 0
        %p638 = pnand %p637, %p636
        %p639 = pneg %p638
        %s640 = sadd.s32 %s635, 2
        %s641 = scalar_select %p639, %s640, %s635
        %v642 = vld [vmem:[%s269] sm:$0xff]
        %v643 = vld [vmem:[%s269 + $0x8] sm:$0xff]
        %v644 = vld [vmem:[%s269 + $0x10] sm:$0xff]
        %v645 = vld [vmem:[%s269 + $0x18] sm:$0xff]
        %v646 = vld [vmem:[%s269 + $0x20] sm:$0xff]
        %v647 = vld [vmem:[%s269 + $0x28] sm:$0xff]
        %v648 = vld [vmem:[%s269 + $0x30] sm:$0xff]
        %v649 = vld [vmem:[%s269 + $0x38] sm:$0xff]
        %v650 = vld [vmem:[%s1] sm:$0xff]
        %v651 = vld [vmem:[%s1 + $0x8] sm:$0xff]
        %v652 = vld [vmem:[%s1 + $0x10] sm:$0xff]
        %v653 = vld [vmem:[%s1 + $0x18] sm:$0xff]
        %v654 = vld [vmem:[%s1 + $0x20] sm:$0xff]
        %v655 = vld [vmem:[%s1 + $0x28] sm:$0xff]
        %v656 = vld [vmem:[%s1 + $0x30] sm:$0xff]
        %v657 = vld [vmem:[%s1 + $0x38] sm:$0xff]
        %v658 = vld [vmem:[%s1 + $0x40] sm:$0xff]
        %v659 = vld [vmem:[%s1 + $0x48] sm:$0xff]
        %v660 = vld [vmem:[%s1 + $0x50] sm:$0xff]
        %v661 = vld [vmem:[%s1 + $0x58] sm:$0xff]
        %v662 = vld [vmem:[%s1 + $0x60] sm:$0xff]
        %v663 = vld [vmem:[%s1 + $0x68] sm:$0xff]
        %v664 = vld [vmem:[%s1 + $0x70] sm:$0xff]
        %v665 = vld [vmem:[%s1 + $0x78] sm:$0xff]
        %v666 = vld [vmem:[%s1 + $0x80] sm:$0xff]
        %v667 = vld [vmem:[%s1 + $0x88] sm:$0xff]
        %v668 = vld [vmem:[%s1 + $0x90] sm:$0xff]
        %v669 = vld [vmem:[%s1 + $0x98] sm:$0xff]
        %v670 = vld [vmem:[%s1 + $0xa0] sm:$0xff]
        %v671 = vld [vmem:[%s1 + $0xa8] sm:$0xff]
        %v672 = vld [vmem:[%s1 + $0xb0] sm:$0xff]
        %v673 = vld [vmem:[%s1 + $0xb8] sm:$0xff]
        %v674 = vld [vmem:[%s1 + $0xc0] sm:$0xff]
        %v675 = vld [vmem:[%s1 + $0xc8] sm:$0xff]
        %v676 = vld [vmem:[%s1 + $0xd0] sm:$0xff]
        %v677 = vld [vmem:[%s1 + $0xd8] sm:$0xff]
        %v678 = vld [vmem:[%s1 + $0xe0] sm:$0xff]
        %v679 = vld [vmem:[%s1 + $0xe8] sm:$0xff]
        %v680 = vld [vmem:[%s1 + $0xf0] sm:$0xff]
        %v681 = vld [vmem:[%s1 + $0xf8] sm:$0xff]
        %v682 = vld [vmem:[%s1 + $0x100] sm:$0xff]
        %v683 = vld [vmem:[%s1 + $0x108] sm:$0xff]
        %v684 = vld [vmem:[%s1 + $0x110] sm:$0xff]
        %v685 = vld [vmem:[%s1 + $0x118] sm:$0xff]
        %v686 = vld [vmem:[%s1 + $0x120] sm:$0xff]
        %v687 = vld [vmem:[%s1 + $0x128] sm:$0xff]
        %v688 = vld [vmem:[%s1 + $0x130] sm:$0xff]
        %v689 = vld [vmem:[%s1 + $0x138] sm:$0xff]
        %v690 = vld [vmem:[%s1 + $0x140] sm:$0xff]
        %v691 = vld [vmem:[%s1 + $0x148] sm:$0xff]
        %v692 = vld [vmem:[%s1 + $0x150] sm:$0xff]
        %v693 = vld [vmem:[%s1 + $0x158] sm:$0xff]
        %v694 = vld [vmem:[%s1 + $0x160] sm:$0xff]
        %v695 = vld [vmem:[%s1 + $0x168] sm:$0xff]
        %v696 = vld [vmem:[%s1 + $0x170] sm:$0xff]
        %v697 = vld [vmem:[%s1 + $0x178] sm:$0xff]
        %v698 = vld [vmem:[%s3] sm:$0x7]
        %v700 = vlaneseq
        %v701 = vshrl.u32 %v700, 7
        %v702 = vsub.s32 0, %v701
        %v703 = vrot.slane %v698, %v702
        %v704 = vlaneseq
        %v705 = vshrl.u32 %v704, 7
        %v706 = vsub.s32 1, %v705
        %v707 = vrot.slane %v698, %v706
        %v708 = vlaneseq
        %v709 = vshrl.u32 %v708, 7
        %v710 = vsub.s32 2, %v709
        %v711 = vrot.slane %v698, %v710
        %715 = vmatprep.subr.mxu0 %v651
        %716 = vmatpush1.msra.mxu0 %v650
        %717 = vmatprep.subr.mxu0 %v654
        %718 = vmatpush1.msra.mxu0 %v653
        %719 = vmatprep.subr.mxu0 %v657
        %720 = vmatpush1.msra.mxu0 %v656
        %721 = vmatprep.subr.mxu0 %v660
        %722 = vmatpush1.msra.mxu0 %v659
        %723 = vmatprep.subr.mxu0 %v663
        %724 = vmatpush1.msra.mxu0 %v662
        %725 = vmatprep.subr.mxu0 %v666
        %726 = vmatpush1.msra.mxu0 %v665
        %727 = vmatprep.subr.mxu0 %v669
        %728 = vmatpush1.msra.mxu0 %v668
        %729 = vmatprep.subr.mxu0 %v672
        %730 = vmatpush1.msra.mxu0 %v671
        %731 = vmatprep.subr.mxu0 %v675
        %732 = vmatpush1.msra.mxu0 %v674
        %733 = vmatprep.subr.mxu0 %v678
        %734 = vmatpush1.msra.mxu0 %v677
        %735 = vmatprep.subr.mxu0 %v681
        %736 = vmatpush1.msra.mxu0 %v680
        %737 = vmatprep.subr.mxu0 %v684
        %738 = vmatpush1.msra.mxu0 %v683
        %739 = vmatprep.subr.mxu0 %v687
        %740 = vmatpush1.msra.mxu0 %v686
        %741 = vmatprep.subr.mxu0 %v690
        %742 = vmatpush1.msra.mxu0 %v689
        %743 = vmatprep.subr.mxu0 %v693
        %744 = vmatpush1.msra.mxu0 %v692
        %745 = vmatprep.subr.mxu0 %v696
        %746 = vmatpush1.msra.mxu0 %v695
        %747 = vmatprep.subr.mxu0 0.0
        %748 = vmatpush1.msra.mxu0 0.0
        %749 = vmatprep.subr.mxu0 0.0
        %750 = vmatpush1.msra.mxu0 0.0
        %751 = vmatprep.subr.mxu0 0.0
        %752 = vmatpush1.msra.mxu0 0.0
        %753 = vmatprep.subr.mxu0 0.0
        %754 = vmatpush1.msra.mxu0 0.0
        %755 = vmatprep.subr.mxu0 0.0
        %756 = vmatpush1.msra.mxu0 0.0
        %757 = vmatprep.subr.mxu0 0.0
        %758 = vmatpush1.msra.mxu0 0.0
        %759 = vmatprep.subr.mxu0 0.0
        %760 = vmatpush1.msra.mxu0 0.0
        %761 = vmatprep.subr.mxu0 0.0
        %762 = vmatpush1.msra.mxu0 0.0
        %763 = vmatprep.subr.mxu0 0.0
        %764 = vmatpush1.msra.mxu0 0.0
        %765 = vmatprep.subr.mxu0 0.0
        %766 = vmatpush1.msra.mxu0 0.0
        %767 = vmatprep.subr.mxu0 0.0
        %768 = vmatpush1.msra.mxu0 0.0
        %769 = vmatprep.subr.mxu0 0.0
        %770 = vmatpush1.msra.mxu0 0.0
        %771 = vmatprep.subr.mxu0 0.0
        %772 = vmatpush1.msra.mxu0 0.0
        %773 = vmatprep.subr.mxu0 0.0
        %774 = vmatpush1.msra.mxu0 0.0
        %775 = vmatprep.subr.mxu0 0.0
        %776 = vmatpush1.msra.mxu0 0.0
        %777 = vmatprep.subr.mxu0 0.0
        %778 = vmatpush1.msra.mxu0 0.0
        %779 = vmatprep.mubr.f32.mxu0 0.0
        %780 = vmatmul.mubr.f32.gmra.mrb[0].mxu0 %v642
        %v781 = vpop.f32.mrb[0].mxu0
        %v782 = vadd.f32 %v703, %v781
        %v783 = vpop.f32.mrb[0].mxu0
        %v784 = vadd.f32 %v707, %v783
        %785 = vmatprep.mubr.f32.mxu0 0.0
        %786 = vmatmul.mubr.f32.gmra.mrb[0].mxu0 %v643
        %v787 = vpop.f32.mrb[0].mxu0
        %v788 = vadd.f32 %v703, %v787
        %v789 = vpop.f32.mrb[0].mxu0
        %v790 = vadd.f32 %v707, %v789
        %791 = vmatprep.mubr.f32.mxu0 0.0
        %792 = vmatmul.mubr.f32.gmra.mrb[0].mxu0 %v644
        %v793 = vpop.f32.mrb[0].mxu0
        %v794 = vadd.f32 %v703, %v793
        %v795 = vpop.f32.mrb[0].mxu0
        %v796 = vadd.f32 %v707, %v795
        %797 = vmatprep.mubr.f32.mxu0 0.0
        %798 = vmatmul.mubr.f32.gmra.mrb[0].mxu0 %v645
        %v799 = vpop.f32.mrb[0].mxu0
        %v800 = vadd.f32 %v703, %v799
        %v801 = vpop.f32.mrb[0].mxu0
        %v802 = vadd.f32 %v707, %v801
        %803 = vmatprep.mubr.f32.mxu0 0.0
        %804 = vmatmul.mubr.f32.gmra.mrb[0].mxu0 %v646
        %v805 = vpop.f32.mrb[0].mxu0
        %v806 = vadd.f32 %v703, %v805
        %v807 = vpop.f32.mrb[0].mxu0
        %v808 = vadd.f32 %v707, %v807
        %809 = vmatprep.mubr.f32.mxu0 0.0
        %810 = vmatmul.mubr.f32.gmra.mrb[0].mxu0 %v647
        %v811 = vpop.f32.mrb[0].mxu0
        %v812 = vadd.f32 %v703, %v811
        %v813 = vpop.f32.mrb[0].mxu0
        %v814 = vadd.f32 %v707, %v813
        %815 = vmatprep.mubr.f32.mxu0 0.0
        %816 = vmatmul.mubr.f32.gmra.mrb[0].mxu0 %v648
        %v817 = vpop.f32.mrb[0].mxu0
        %v818 = vadd.f32 %v703, %v817
        %v819 = vpop.f32.mrb[0].mxu0
        %v820 = vadd.f32 %v707, %v819
        %821 = vmatprep.mubr.f32.mxu0 0.0
        %822 = vmatmul.mubr.f32.gmra.mrb[0].mxu0 %v649
        %v823 = vpop.f32.mrb[0].mxu0
        %v824 = vadd.f32 %v703, %v823
        %v825 = vpop.f32.mrb[0].mxu0
        %v826 = vadd.f32 %v707, %v825
        %827 = vdwg.mxu0
        %828 = vmatprep.subr.mxu0 0.0
        %829 = vmatpush1.msra.mxu0 %v652
        %830 = vmatprep.subr.mxu0 0.0
        %831 = vmatpush1.msra.mxu0 %v655
        %832 = vmatprep.subr.mxu0 0.0
        %833 = vmatpush1.msra.mxu0 %v658
        %834 = vmatprep.subr.mxu0 0.0
        %835 = vmatpush1.msra.mxu0 %v661
        %836 = vmatprep.subr.mxu0 0.0
        %837 = vmatpush1.msra.mxu0 %v664
        %838 = vmatprep.subr.mxu0 0.0
        %839 = vmatpush1.msra.mxu0 %v667
        %840 = vmatprep.subr.mxu0 0.0
        %841 = vmatpush1.msra.mxu0 %v670
        %842 = vmatprep.subr.mxu0 0.0
        %843 = vmatpush1.msra.mxu0 %v673
        %844 = vmatprep.subr.mxu0 0.0
        %845 = vmatpush1.msra.mxu0 %v676
        %846 = vmatprep.subr.mxu0 0.0
        %847 = vmatpush1.msra.mxu0 %v679
        %848 = vmatprep.subr.mxu0 0.0
        %849 = vmatpush1.msra.mxu0 %v682
        %850 = vmatprep.subr.mxu0 0.0
        %851 = vmatpush1.msra.mxu0 %v685
        %852 = vmatprep.subr.mxu0 0.0
        %853 = vmatpush1.msra.mxu0 %v688
        %854 = vmatprep.subr.mxu0 0.0
        %855 = vmatpush1.msra.mxu0 %v691
        %856 = vmatprep.subr.mxu0 0.0
        %857 = vmatpush1.msra.mxu0 %v694
        %858 = vmatprep.subr.mxu0 0.0
        %859 = vmatpush1.msra.mxu0 %v697
        %860 = vmatprep.subr.mxu0 0.0
        %861 = vmatpush1.msra.mxu0 0.0
        %862 = vmatprep.subr.mxu0 0.0
        %863 = vmatpush1.msra.mxu0 0.0
        %864 = vmatprep.subr.mxu0 0.0
        %865 = vmatpush1.msra.mxu0 0.0
        %866 = vmatprep.subr.mxu0 0.0
        %867 = vmatpush1.msra.mxu0 0.0
        %868 = vmatprep.subr.mxu0 0.0
        %869 = vmatpush1.msra.mxu0 0.0
        %870 = vmatprep.subr.mxu0 0.0
        %871 = vmatpush1.msra.mxu0 0.0
        %872 = vmatprep.subr.mxu0 0.0
        %873 = vmatpush1.msra.mxu0 0.0
        %874 = vmatprep.subr.mxu0 0.0
        %875 = vmatpush1.msra.mxu0 0.0
        %876 = vmatprep.subr.mxu0 0.0
        %877 = vmatpush1.msra.mxu0 0.0
        %878 = vmatprep.subr.mxu0 0.0
        %879 = vmatpush1.msra.mxu0 0.0
        %880 = vmatprep.subr.mxu0 0.0
        %881 = vmatpush1.msra.mxu0 0.0
        %882 = vmatprep.subr.mxu0 0.0
        %883 = vmatpush1.msra.mxu0 0.0
        %884 = vmatprep.subr.mxu0 0.0
        %885 = vmatpush1.msra.mxu0 0.0
        %886 = vmatprep.subr.mxu0 0.0
        %887 = vmatpush1.msra.mxu0 0.0
        %888 = vmatprep.subr.mxu0 0.0
        %889 = vmatpush1.msra.mxu0 0.0
        %890 = vmatprep.subr.mxu0 0.0
        %891 = vmatpush1.msra.mxu0 0.0
        %892 = vmatprep.mubr.f32.mxu0 0.0
        %893 = vmatmul.mubr.f32.gmra.mrb[0].mxu0 %v642
        %v894 = vpop.f32.mrb[0].mxu0
        %v895 = vadd.f32 %v711, %v894
        %v896 = vpop.f32.mrb[0].mxu0
        %897 = vmatprep.mubr.f32.mxu0 0.0
        %898 = vmatmul.mubr.f32.gmra.mrb[0].mxu0 %v643
        %v899 = vpop.f32.mrb[0].mxu0
        %v900 = vadd.f32 %v711, %v899
        %v901 = vpop.f32.mrb[0].mxu0
        %902 = vmatprep.mubr.f32.mxu0 0.0
        %903 = vmatmul.mubr.f32.gmra.mrb[0].mxu0 %v644
        %v904 = vpop.f32.mrb[0].mxu0
        %v905 = vadd.f32 %v711, %v904
        %v906 = vpop.f32.mrb[0].mxu0
        %907 = vmatprep.mubr.f32.mxu0 0.0
        %908 = vmatmul.mubr.f32.gmra.mrb[0].mxu0 %v645
        %v909 = vpop.f32.mrb[0].mxu0
        %v910 = vadd.f32 %v711, %v909
        %v911 = vpop.f32.mrb[0].mxu0
        %912 = vmatprep.mubr.f32.mxu0 0.0
        %913 = vmatmul.mubr.f32.gmra.mrb[0].mxu0 %v646
        %v914 = vpop.f32.mrb[0].mxu0
        %v915 = vadd.f32 %v711, %v914
        %v916 = vpop.f32.mrb[0].mxu0
        %917 = vmatprep.mubr.f32.mxu0 0.0
        %918 = vmatmul.mubr.f32.gmra.mrb[0].mxu0 %v647
        %v919 = vpop.f32.mrb[0].mxu0
        %v920 = vadd.f32 %v711, %v919
        %v921 = vpop.f32.mrb[0].mxu0
        %922 = vmatprep.mubr.f32.mxu0 0.0
        %923 = vmatmul.mubr.f32.gmra.mrb[0].mxu0 %v648
        %v924 = vpop.f32.mrb[0].mxu0
        %v925 = vadd.f32 %v711, %v924
        %v926 = vpop.f32.mrb[0].mxu0
        %927 = vmatprep.mubr.f32.mxu0 0.0
        %928 = vmatmul.mubr.f32.gmra.mrb[0].mxu0 %v649
        %v929 = vpop.f32.mrb[0].mxu0
        %v930 = vadd.f32 %v711, %v929
        %v931 = vpop.f32.mrb[0].mxu0
        %932 = vdwg.mxu0
        %s933 = smul.u32 %s641, 8
        %s934 = smul.u32 %s933, 3
        %s935 = smul.addr %s934, 8
        %s936 = scalar_lea.vmem [#allocation3], %s935
        %937 = vst [vmem:[%s936] sm:$0xff] %v782
        %938 = vst [vmem:[%s936 + $0x8] sm:$0xff] %v784
        %939 = vst [vmem:[%s936 + $0x10] sm:$0xff] %v895
        %940 = vst [vmem:[%s936 + $0x18] sm:$0xff] %v788
        %941 = vst [vmem:[%s936 + $0x20] sm:$0xff] %v790
        %942 = vst [vmem:[%s936 + $0x28] sm:$0xff] %v900
        %943 = vst [vmem:[%s936 + $0x30] sm:$0xff] %v794
        %944 = vst [vmem:[%s936 + $0x38] sm:$0xff] %v796
        %945 = vst [vmem:[%s936 + $0x40] sm:$0xff] %v905
        %946 = vst [vmem:[%s936 + $0x48] sm:$0xff] %v800
        %947 = vst [vmem:[%s936 + $0x50] sm:$0xff] %v802
        %948 = vst [vmem:[%s936 + $0x58] sm:$0xff] %v910
        %949 = vst [vmem:[%s936 + $0x60] sm:$0xff] %v806
        %950 = vst [vmem:[%s936 + $0x68] sm:$0xff] %v808
        %951 = vst [vmem:[%s936 + $0x70] sm:$0xff] %v915
        %952 = vst [vmem:[%s936 + $0x78] sm:$0xff] %v812
        %953 = vst [vmem:[%s936 + $0x80] sm:$0xff] %v814
        %954 = vst [vmem:[%s936 + $0x88] sm:$0xff] %v920
        %955 = vst [vmem:[%s936 + $0x90] sm:$0xff] %v818
        %956 = vst [vmem:[%s936 + $0x98] sm:$0xff] %v820
        %957 = vst [vmem:[%s936 + $0xa0] sm:$0xff] %v925
        %958 = vst [vmem:[%s936 + $0xa8] sm:$0xff] %v824
        %959 = vst [vmem:[%s936 + $0xb0] sm:$0xff] %v826
        %960 = vst [vmem:[%s936 + $0xb8] sm:$0xff] %v930
        %s961 = ssub.s32 %s21, 1
        %p962 = scmp.lt.s32.totalorder %s961, 0
        %s963 = ssub.s32 0, %s961
        %s964 = scalar_select %p962, %s963, %s961
        %s965 = sand.u32 %s964, 1
        %s966 = ssub.s32 0, %s965
        %s967 = scalar_select %p962, %s966, %s965
        %p968 = scmp.ne.s32.totalorder %s967, 0
        %p969 = scmp.lt.s32.totalorder %s967, 0
        %p970 = pnand %p969, %p968
        %p971 = pneg %p970
        %s972 = sadd.s32 %s967, 2
        %s973 = scalar_select %p971, %s972, %s967
        %s974 = smul.u32 %s973, 8
        %v975 = vld [vmem:[%s2] sm:$0xff]
        %v976 = vld [vmem:[%s2 + $0x8] sm:$0xff]
        %v977 = vld [vmem:[%s2 + $0x10] sm:$0xff]
        %v978 = vld [vmem:[%s2 + $0x18] sm:$0xff]
        %v979 = vld [vmem:[%s2 + $0x20] sm:$0xff]
        %v980 = vld [vmem:[%s2 + $0x28] sm:$0xff]
        %v981 = vld [vmem:[%s2 + $0x30] sm:$0xff]
        %v982 = vld [vmem:[%s2 + $0x38] sm:$0xff]
        %v983 = vld [vmem:[%s2 + $0x40] sm:$0xff]
        %v984 = vld [vmem:[%s2 + $0x48] sm:$0xff]
        %v985 = vld [vmem:[%s2 + $0x50] sm:$0xff]
        %v986 = vld [vmem:[%s2 + $0x58] sm:$0xff]
        %v987 = vld [vmem:[%s2 + $0x60] sm:$0xff]
        %v988 = vld [vmem:[%s2 + $0x68] sm:$0xff]
        %v989 = vld [vmem:[%s2 + $0x70] sm:$0xff]
        %v990 = vld [vmem:[%s2 + $0x78] sm:$0xff]
        %v991 = vld [vmem:[%s2 + $0x80] sm:$0xff]
        %v992 = vld [vmem:[%s2 + $0x88] sm:$0xff]
        %v993 = vld [vmem:[%s2 + $0x90] sm:$0xff]
        %v994 = vld [vmem:[%s2 + $0x98] sm:$0xff]
        %v995 = vld [vmem:[%s2 + $0xa0] sm:$0xff]
        %v996 = vld [vmem:[%s2 + $0xa8] sm:$0xff]
        %v997 = vld [vmem:[%s2 + $0xb0] sm:$0xff]
        %v998 = vld [vmem:[%s2 + $0xb8] sm:$0xff]
        %v999 = vld [vmem:[%s2 + $0xc0] sm:$0xff]
        %v1000 = vld [vmem:[%s2 + $0xc8] sm:$0xff]
        %v1001 = vld [vmem:[%s2 + $0xd0] sm:$0xff]
        %v1002 = vld [vmem:[%s2 + $0xd8] sm:$0xff]
        %v1003 = vld [vmem:[%s2 + $0xe0] sm:$0xff]
        %v1004 = vld [vmem:[%s2 + $0xe8] sm:$0xff]
        %v1005 = vld [vmem:[%s2 + $0xf0] sm:$0xff]
        %v1006 = vld [vmem:[%s2 + $0xf8] sm:$0xff]
        %v1007 = vld [vmem:[%s2 + $0x100] sm:$0xff]
        %v1008 = vld [vmem:[%s2 + $0x108] sm:$0xff]
        %v1009 = vld [vmem:[%s2 + $0x110] sm:$0xff]
        %v1010 = vld [vmem:[%s2 + $0x118] sm:$0xff]
        %v1011 = vld [vmem:[%s2 + $0x120] sm:$0xff]
        %v1012 = vld [vmem:[%s2 + $0x128] sm:$0xff]
        %v1013 = vld [vmem:[%s2 + $0x130] sm:$0xff]
        %v1014 = vld [vmem:[%s2 + $0x138] sm:$0xff]
        %v1015 = vld [vmem:[%s2 + $0x140] sm:$0xff]
        %v1016 = vld [vmem:[%s2 + $0x148] sm:$0xff]
        %v1017 = vld [vmem:[%s2 + $0x150] sm:$0xff]
        %v1018 = vld [vmem:[%s2 + $0x158] sm:$0xff]
        %v1019 = vld [vmem:[%s2 + $0x160] sm:$0xff]
        %v1020 = vld [vmem:[%s2 + $0x168] sm:$0xff]
        %v1021 = vld [vmem:[%s2 + $0x170] sm:$0xff]
        %v1022 = vld [vmem:[%s2 + $0x178] sm:$0xff]
        %v1023 = vld [vmem:[%s4] sm:$0x1]
        %v1025 = vlaneseq
        %v1026 = vshrl.u32 %v1025, 7
        %v1027 = vsub.s32 0, %v1026
        %v1028 = vrot.slane %v1023, %v1027
        %v1030 = vld [vmem:[#allocation2] sm:$0xff]
        %s1031 = smul.u32 %s974, 3
        %s1032 = smul.addr %s1031, 8
        %s1033 = scalar_lea.vmem [#allocation3], %s1032
        %v1034 = vld [vmem:[%s1033] sm:$0xff]
        %v1035 = vld [vmem:[%s1033 + $0x8] sm:$0xff]
        %v1036 = vld [vmem:[%s1033 + $0x10] sm:$0xff]
        %1037 = vmatprep.subr.mxu0 %v976
        %1038 = vmatpush1.msra.mxu0 %v975
        %1039 = vmatprep.subr.mxu0 %v979
        %1040 = vmatpush1.msra.mxu0 %v978
        %1041 = vmatprep.subr.mxu0 %v982
        %1042 = vmatpush1.msra.mxu0 %v981
        %1043 = vmatprep.subr.mxu0 %v985
        %1044 = vmatpush1.msra.mxu0 %v984
        %1045 = vmatprep.subr.mxu0 %v988
        %1046 = vmatpush1.msra.mxu0 %v987
        %1047 = vmatprep.subr.mxu0 %v991
        %1048 = vmatpush1.msra.mxu0 %v990
        %1049 = vmatprep.subr.mxu0 %v994
        %1050 = vmatpush1.msra.mxu0 %v993
        %1051 = vmatprep.subr.mxu0 %v997
        %1052 = vmatpush1.msra.mxu0 %v996
        %1053 = vmatprep.subr.mxu0 %v1000
        %1054 = vmatpush1.msra.mxu0 %v999
        %1055 = vmatprep.subr.mxu0 %v1003
        %1056 = vmatpush1.msra.mxu0 %v1002
        %1057 = vmatprep.subr.mxu0 %v1006
        %1058 = vmatpush1.msra.mxu0 %v1005
        %1059 = vmatprep.subr.mxu0 %v1009
        %1060 = vmatpush1.msra.mxu0 %v1008
        %1061 = vmatprep.subr.mxu0 %v1012
        %1062 = vmatpush1.msra.mxu0 %v1011
        %1063 = vmatprep.subr.mxu0 %v1015
        %1064 = vmatpush1.msra.mxu0 %v1014
        %1065 = vmatprep.subr.mxu0 %v1018
        %1066 = vmatpush1.msra.mxu0 %v1017
        %1067 = vmatprep.subr.mxu0 %v1021
        %1068 = vmatpush1.msra.mxu0 %v1020
        %1069 = vmatprep.subr.mxu0 0.0
        %1070 = vmatpush1.msra.mxu0 0.0
        %1071 = vmatprep.subr.mxu0 0.0
        %1072 = vmatpush1.msra.mxu0 0.0
        %1073 = vmatprep.subr.mxu0 0.0
        %1074 = vmatpush1.msra.mxu0 0.0
        %1075 = vmatprep.subr.mxu0 0.0
        %1076 = vmatpush1.msra.mxu0 0.0
        %1077 = vmatprep.subr.mxu0 0.0
        %1078 = vmatpush1.msra.mxu0 0.0
        %1079 = vmatprep.subr.mxu0 0.0
        %1080 = vmatpush1.msra.mxu0 0.0
        %1081 = vmatprep.subr.mxu0 0.0
        %1082 = vmatpush1.msra.mxu0 0.0
        %1083 = vmatprep.subr.mxu0 0.0
        %1084 = vmatpush1.msra.mxu0 0.0
        %1085 = vmatprep.subr.mxu0 0.0
        %1086 = vmatpush1.msra.mxu0 0.0
        %1087 = vmatprep.subr.mxu0 0.0
        %1088 = vmatpush1.msra.mxu0 0.0
        %1089 = vmatprep.subr.mxu0 0.0
        %1090 = vmatpush1.msra.mxu0 0.0
        %1091 = vmatprep.subr.mxu0 0.0
        %1092 = vmatpush1.msra.mxu0 0.0
        %1093 = vmatprep.subr.mxu0 0.0
        %1094 = vmatpush1.msra.mxu0 0.0
        %1095 = vmatprep.subr.mxu0 0.0
        %1096 = vmatpush1.msra.mxu0 0.0
        %1097 = vmatprep.subr.mxu0 0.0
        %1098 = vmatpush1.msra.mxu0 0.0
        %1099 = vmatprep.subr.mxu0 0.0
        %1100 = vmatpush1.msra.mxu0 0.0
        %1101 = vmatprep.mubr.f32.mxu0 0.0
        %1102 = vmatmul.mubr.f32.gmra.mrb[0].mxu0 %v1030
        %v1103 = vpop.f32.mrb[0].mxu0
        %v1104 = vadd.f32 0.0, %v1103
        %v1105 = vpop.f32.mrb[0].mxu0
        %v1106 = vadd.f32 0.0, %v1105
        %1107 = vdwg.mxu0
        %1108 = vmatprep.subr.mxu0 0.0
        %1109 = vmatpush1.msra.mxu0 %v977
        %1110 = vmatprep.subr.mxu0 0.0
        %1111 = vmatpush1.msra.mxu0 %v980
        %1112 = vmatprep.subr.mxu0 0.0
        %1113 = vmatpush1.msra.mxu0 %v983
        %1114 = vmatprep.subr.mxu0 0.0
        %1115 = vmatpush1.msra.mxu0 %v986
        %1116 = vmatprep.subr.mxu0 0.0
        %1117 = vmatpush1.msra.mxu0 %v989
        %1118 = vmatprep.subr.mxu0 0.0
        %1119 = vmatpush1.msra.mxu0 %v992
        %1120 = vmatprep.subr.mxu0 0.0
        %1121 = vmatpush1.msra.mxu0 %v995
        %1122 = vmatprep.subr.mxu0 0.0
        %1123 = vmatpush1.msra.mxu0 %v998
        %1124 = vmatprep.subr.mxu0 0.0
        %1125 = vmatpush1.msra.mxu0 %v1001
        %1126 = vmatprep.subr.mxu0 0.0
        %1127 = vmatpush1.msra.mxu0 %v1004
        %1128 = vmatprep.subr.mxu0 0.0
        %1129 = vmatpush1.msra.mxu0 %v1007
        %1130 = vmatprep.subr.mxu0 0.0
        %1131 = vmatpush1.msra.mxu0 %v1010
        %1132 = vmatprep.subr.mxu0 0.0
        %1133 = vmatpush1.msra.mxu0 %v1013
        %1134 = vmatprep.subr.mxu0 0.0
        %1135 = vmatpush1.msra.mxu0 %v1016
        %1136 = vmatprep.subr.mxu0 0.0
        %1137 = vmatpush1.msra.mxu0 %v1019
        %1138 = vmatprep.subr.mxu0 0.0
        %1139 = vmatpush1.msra.mxu0 %v1022
        %1140 = vmatprep.subr.mxu0 0.0
        %1141 = vmatpush1.msra.mxu0 0.0
        %1142 = vmatprep.subr.mxu0 0.0
        %1143 = vmatpush1.msra.mxu0 0.0
        %1144 = vmatprep.subr.mxu0 0.0
        %1145 = vmatpush1.msra.mxu0 0.0
        %1146 = vmatprep.subr.mxu0 0.0
        %1147 = vmatpush1.msra.mxu0 0.0
        %1148 = vmatprep.subr.mxu0 0.0
        %1149 = vmatpush1.msra.mxu0 0.0
        %1150 = vmatprep.subr.mxu0 0.0
        %1151 = vmatpush1.msra.mxu0 0.0
        %1152 = vmatprep.subr.mxu0 0.0
        %1153 = vmatpush1.msra.mxu0 0.0
        %1154 = vmatprep.subr.mxu0 0.0
        %1155 = vmatpush1.msra.mxu0 0.0
        %1156 = vmatprep.subr.mxu0 0.0
        %1157 = vmatpush1.msra.mxu0 0.0
        %1158 = vmatprep.subr.mxu0 0.0
        %1159 = vmatpush1.msra.mxu0 0.0
        %1160 = vmatprep.subr.mxu0 0.0
        %1161 = vmatpush1.msra.mxu0 0.0
        %1162 = vmatprep.subr.mxu0 0.0
        %1163 = vmatpush1.msra.mxu0 0.0
        %1164 = vmatprep.subr.mxu0 0.0
        %1165 = vmatpush1.msra.mxu0 0.0
        %1166 = vmatprep.subr.mxu0 0.0
        %1167 = vmatpush1.msra.mxu0 0.0
        %1168 = vmatprep.subr.mxu0 0.0
        %1169 = vmatpush1.msra.mxu0 0.0
        %1170 = vmatprep.subr.mxu0 0.0
        %1171 = vmatpush1.msra.mxu0 0.0
        %1172 = vmatprep.mubr.f32.mxu0 0.0
        %1173 = vmatmul.mubr.f32.gmra.mrb[0].mxu0 %v1030
        %v1174 = vpop.f32.mrb[0].mxu0
        %v1175 = vadd.f32 0.0, %v1174
        %v1176 = vpop.f32.mrb[0].mxu0
        %1177 = vdwg.mxu0
        %v1178 = vadd.f32 %v1034, %v1104
        %v1179 = vxor.u32 %v1178, 2147483648
        %v1180 = vmul.f32 %v1179, 1.442695
        %v1181 = vpow.pop %v1180
        %v1182 = vadd.f32 %v1181, 1.0
        %v1183 = vrcp.pop %v1182
        %v1184 = vmul.f32 1.0, %v1183
        %v1185 = vadd.f32 %v1035, %v1106
        %v1186 = vxor.u32 %v1185, 2147483648
        %v1187 = vmul.f32 %v1186, 1.442695
        %v1188 = vpow.pop %v1187
        %v1189 = vadd.f32 %v1188, 1.0
        %v1190 = vrcp.pop %v1189
        %v1191 = vmul.f32 1.0, %v1190
        %v1192 = vadd.f32 %v1175, %v1028
        %v1193 = vmul.f32 %v1184, %v1192
        %v1194 = vadd.f32 %v1036, %v1193
        %v1195 = vtanh.pop %v1194
        %v1196 = vsub.f32 %v1030, %v1195
        %v1197 = vmul.f32 %v1191, %v1196
        %v1198 = vadd.f32 %v1195, %v1197
        %1199 = vst [vmem:[%s283] sm:$0xff] %v1198
        %s1200 = sadd.s32 %s974, 1
        %s1201 = smul.u32 %s1200, 3
        %s1202 = smul.addr %s1201, 8
        %s1203 = scalar_lea.vmem [#allocation3], %s1202
        %v1204 = vld [vmem:[%s1203] sm:$0xff]
        %v1205 = vld [vmem:[%s1203 + $0x8] sm:$0xff]
        %v1206 = vld [vmem:[%s1203 + $0x10] sm:$0xff]
        %1207 = vmatprep.subr.mxu0 %v976
        %1208 = vmatpush1.msra.mxu0 %v975
        %1209 = vmatprep.subr.mxu0 %v979
        %1210 = vmatpush1.msra.mxu0 %v978
        %1211 = vmatprep.subr.mxu0 %v982
        %1212 = vmatpush1.msra.mxu0 %v981
        %1213 = vmatprep.subr.mxu0 %v985
        %1214 = vmatpush1.msra.mxu0 %v984
        %1215 = vmatprep.subr.mxu0 %v988
        %1216 = vmatpush1.msra.mxu0 %v987
        %1217 = vmatprep.subr.mxu0 %v991
        %1218 = vmatpush1.msra.mxu0 %v990
        %1219 = vmatprep.subr.mxu0 %v994
        %1220 = vmatpush1.msra.mxu0 %v993
        %1221 = vmatprep.subr.mxu0 %v997
        %1222 = vmatpush1.msra.mxu0 %v996
        %1223 = vmatprep.subr.mxu0 %v1000
        %1224 = vmatpush1.msra.mxu0 %v999
        %1225 = vmatprep.subr.mxu0 %v1003
        %1226 = vmatpush1.msra.mxu0 %v1002
        %1227 = vmatprep.subr.mxu0 %v1006
        %1228 = vmatpush1.msra.mxu0 %v1005
        %1229 = vmatprep.subr.mxu0 %v1009
        %1230 = vmatpush1.msra.mxu0 %v1008
        %1231 = vmatprep.subr.mxu0 %v1012
        %1232 = vmatpush1.msra.mxu0 %v1011
        %1233 = vmatprep.subr.mxu0 %v1015
        %1234 = vmatpush1.msra.mxu0 %v1014
        %1235 = vmatprep.subr.mxu0 %v1018
        %1236 = vmatpush1.msra.mxu0 %v1017
        %1237 = vmatprep.subr.mxu0 %v1021
        %1238 = vmatpush1.msra.mxu0 %v1020
        %1239 = vmatprep.subr.mxu0 0.0
        %1240 = vmatpush1.msra.mxu0 0.0
        %1241 = vmatprep.subr.mxu0 0.0
        %1242 = vmatpush1.msra.mxu0 0.0
        %1243 = vmatprep.subr.mxu0 0.0
        %1244 = vmatpush1.msra.mxu0 0.0
        %1245 = vmatprep.subr.mxu0 0.0
        %1246 = vmatpush1.msra.mxu0 0.0
        %1247 = vmatprep.subr.mxu0 0.0
        %1248 = vmatpush1.msra.mxu0 0.0
        %1249 = vmatprep.subr.mxu0 0.0
        %1250 = vmatpush1.msra.mxu0 0.0
        %1251 = vmatprep.subr.mxu0 0.0
        %1252 = vmatpush1.msra.mxu0 0.0
        %1253 = vmatprep.subr.mxu0 0.0
        %1254 = vmatpush1.msra.mxu0 0.0
        %1255 = vmatprep.subr.mxu0 0.0
        %1256 = vmatpush1.msra.mxu0 0.0
        %1257 = vmatprep.subr.mxu0 0.0
        %1258 = vmatpush1.msra.mxu0 0.0
        %1259 = vmatprep.subr.mxu0 0.0
        %1260 = vmatpush1.msra.mxu0 0.0
        %1261 = vmatprep.subr.mxu0 0.0
        %1262 = vmatpush1.msra.mxu0 0.0
        %1263 = vmatprep.subr.mxu0 0.0
        %1264 = vmatpush1.msra.mxu0 0.0
        %1265 = vmatprep.subr.mxu0 0.0
        %1266 = vmatpush1.msra.mxu0 0.0
        %1267 = vmatprep.subr.mxu0 0.0
        %1268 = vmatpush1.msra.mxu0 0.0
        %1269 = vmatprep.subr.mxu0 0.0
        %1270 = vmatpush1.msra.mxu0 0.0
        %1271 = vmatprep.mubr.f32.mxu0 0.0
        %1272 = vmatmul.mubr.f32.gmra.mrb[0].mxu0 %v1198
        %v1273 = vpop.f32.mrb[0].mxu0
        %v1274 = vadd.f32 0.0, %v1273
        %v1275 = vpop.f32.mrb[0].mxu0
        %v1276 = vadd.f32 0.0, %v1275
        %1277 = vdwg.mxu0
        %1278 = vmatprep.subr.mxu0 0.0
        %1279 = vmatpush1.msra.mxu0 %v977
        %1280 = vmatprep.subr.mxu0 0.0
        %1281 = vmatpush1.msra.mxu0 %v980
        %1282 = vmatprep.subr.mxu0 0.0
        %1283 = vmatpush1.msra.mxu0 %v983
        %1284 = vmatprep.subr.mxu0 0.0
        %1285 = vmatpush1.msra.mxu0 %v986
        %1286 = vmatprep.subr.mxu0 0.0
        %1287 = vmatpush1.msra.mxu0 %v989
        %1288 = vmatprep.subr.mxu0 0.0
        %1289 = vmatpush1.msra.mxu0 %v992
        %1290 = vmatprep.subr.mxu0 0.0
        %1291 = vmatpush1.msra.mxu0 %v995
        %1292 = vmatprep.subr.mxu0 0.0
        %1293 = vmatpush1.msra.mxu0 %v998
        %1294 = vmatprep.subr.mxu0 0.0
        %1295 = vmatpush1.msra.mxu0 %v1001
        %1296 = vmatprep.subr.mxu0 0.0
        %1297 = vmatpush1.msra.mxu0 %v1004
        %1298 = vmatprep.subr.mxu0 0.0
        %1299 = vmatpush1.msra.mxu0 %v1007
        %1300 = vmatprep.subr.mxu0 0.0
        %1301 = vmatpush1.msra.mxu0 %v1010
        %1302 = vmatprep.subr.mxu0 0.0
        %1303 = vmatpush1.msra.mxu0 %v1013
        %1304 = vmatprep.subr.mxu0 0.0
        %1305 = vmatpush1.msra.mxu0 %v1016
        %1306 = vmatprep.subr.mxu0 0.0
        %1307 = vmatpush1.msra.mxu0 %v1019
        %1308 = vmatprep.subr.mxu0 0.0
        %1309 = vmatpush1.msra.mxu0 %v1022
        %1310 = vmatprep.subr.mxu0 0.0
        %1311 = vmatpush1.msra.mxu0 0.0
        %1312 = vmatprep.subr.mxu0 0.0
        %1313 = vmatpush1.msra.mxu0 0.0
        %1314 = vmatprep.subr.mxu0 0.0
        %1315 = vmatpush1.msra.mxu0 0.0
        %1316 = vmatprep.subr.mxu0 0.0
        %1317 = vmatpush1.msra.mxu0 0.0
        %1318 = vmatprep.subr.mxu0 0.0
        %1319 = vmatpush1.msra.mxu0 0.0
        %1320 = vmatprep.subr.mxu0 0.0
        %1321 = vmatpush1.msra.mxu0 0.0
        %1322 = vmatprep.subr.mxu0 0.0
        %1323 = vmatpush1.msra.mxu0 0.0
        %1324 = vmatprep.subr.mxu0 0.0
        %1325 = vmatpush1.msra.mxu0 0.0
        %1326 = vmatprep.subr.mxu0 0.0
        %1327 = vmatpush1.msra.mxu0 0.0
        %1328 = vmatprep.subr.mxu0 0.0
        %1329 = vmatpush1.msra.mxu0 0.0
        %1330 = vmatprep.subr.mxu0 0.0
        %1331 = vmatpush1.msra.mxu0 0.0
        %1332 = vmatprep.subr.mxu0 0.0
        %1333 = vmatpush1.msra.mxu0 0.0
        %1334 = vmatprep.subr.mxu0 0.0
        %1335 = vmatpush1.msra.mxu0 0.0
        %1336 = vmatprep.subr.mxu0 0.0
        %1337 = vmatpush1.msra.mxu0 0.0
        %1338 = vmatprep.subr.mxu0 0.0
        %1339 = vmatpush1.msra.mxu0 0.0
        %1340 = vmatprep.subr.mxu0 0.0
        %1341 = vmatpush1.msra.mxu0 0.0
        %1342 = vmatprep.mubr.f32.mxu0 0.0
        %1343 = vmatmul.mubr.f32.gmra.mrb[0].mxu0 %v1198
        %v1344 = vpop.f32.mrb[0].mxu0
        %v1345 = vadd.f32 0.0, %v1344
        %v1346 = vpop.f32.mrb[0].mxu0
        %1347 = vdwg.mxu0
        %v1348 = vadd.f32 %v1204, %v1274
        %v1349 = vxor.u32 %v1348, 2147483648
        %v1350 = vmul.f32 %v1349, 1.442695
        %v1351 = vpow.pop %v1350
        %v1352 = vadd.f32 %v1351, 1.0
        %v1353 = vrcp.pop %v1352
        %v1354 = vmul.f32 1.0, %v1353
        %v1355 = vadd.f32 %v1205, %v1276
        %v1356 = vxor.u32 %v1355, 2147483648
        %v1357 = vmul.f32 %v1356, 1.442695
        %v1358 = vpow.pop %v1357
        %v1359 = vadd.f32 %v1358, 1.0
        %v1360 = vrcp.pop %v1359
        %v1361 = vmul.f32 1.0, %v1360
        %v1362 = vadd.f32 %v1345, %v1028
        %v1363 = vmul.f32 %v1354, %v1362
        %v1364 = vadd.f32 %v1206, %v1363
        %v1365 = vtanh.pop %v1364
        %v1366 = vsub.f32 %v1198, %v1365
        %v1367 = vmul.f32 %v1361, %v1366
        %v1368 = vadd.f32 %v1365, %v1367
        %s1369 = scalar_lea.vmem %s283, 8
        %1370 = vst [vmem:[%s1369] sm:$0xff] %v1368
        %s1371 = sadd.s32 %s974, 2
        %s1372 = smul.u32 %s1371, 3
        %s1373 = smul.addr %s1372, 8
        %s1374 = scalar_lea.vmem [#allocation3], %s1373
        %v1375 = vld [vmem:[%s1374] sm:$0xff]
        %v1376 = vld [vmem:[%s1374 + $0x8] sm:$0xff]
        %v1377 = vld [vmem:[%s1374 + $0x10] sm:$0xff]
        %1378 = vmatprep.subr.mxu0 %v976
        %1379 = vmatpush1.msra.mxu0 %v975
        %1380 = vmatprep.subr.mxu0 %v979
        %1381 = vmatpush1.msra.mxu0 %v978
        %1382 = vmatprep.subr.mxu0 %v982
        %1383 = vmatpush1.msra.mxu0 %v981
        %1384 = vmatprep.subr.mxu0 %v985
        %1385 = vmatpush1.msra.mxu0 %v984
        %1386 = vmatprep.subr.mxu0 %v988
        %1387 = vmatpush1.msra.mxu0 %v987
        %1388 = vmatprep.subr.mxu0 %v991
        %1389 = vmatpush1.msra.mxu0 %v990
        %1390 = vmatprep.subr.mxu0 %v994
        %1391 = vmatpush1.msra.mxu0 %v993
        %1392 = vmatprep.subr.mxu0 %v997
        %1393 = vmatpush1.msra.mxu0 %v996
        %1394 = vmatprep.subr.mxu0 %v1000
        %1395 = vmatpush1.msra.mxu0 %v999
        %1396 = vmatprep.subr.mxu0 %v1003
        %1397 = vmatpush1.msra.mxu0 %v1002
        %1398 = vmatprep.subr.mxu0 %v1006
        %1399 = vmatpush1.msra.mxu0 %v1005
        %1400 = vmatprep.subr.mxu0 %v1009
        %1401 = vmatpush1.msra.mxu0 %v1008
        %1402 = vmatprep.subr.mxu0 %v1012
        %1403 = vmatpush1.msra.mxu0 %v1011
        %1404 = vmatprep.subr.mxu0 %v1015
        %1405 = vmatpush1.msra.mxu0 %v1014
        %1406 = vmatprep.subr.mxu0 %v1018
        %1407 = vmatpush1.msra.mxu0 %v1017
        %1408 = vmatprep.subr.mxu0 %v1021
        %1409 = vmatpush1.msra.mxu0 %v1020
        %1410 = vmatprep.subr.mxu0 0.0
        %1411 = vmatpush1.msra.mxu0 0.0
        %1412 = vmatprep.subr.mxu0 0.0
        %1413 = vmatpush1.msra.mxu0 0.0
        %1414 = vmatprep.subr.mxu0 0.0
        %1415 = vmatpush1.msra.mxu0 0.0
        %1416 = vmatprep.subr.mxu0 0.0
        %1417 = vmatpush1.msra.mxu0 0.0
        %1418 = vmatprep.subr.mxu0 0.0
        %1419 = vmatpush1.msra.mxu0 0.0
        %1420 = vmatprep.subr.mxu0 0.0
        %1421 = vmatpush1.msra.mxu0 0.0
        %1422 = vmatprep.subr.mxu0 0.0
        %1423 = vmatpush1.msra.mxu0 0.0
        %1424 = vmatprep.subr.mxu0 0.0
        %1425 = vmatpush1.msra.mxu0 0.0
        %1426 = vmatprep.subr.mxu0 0.0
        %1427 = vmatpush1.msra.mxu0 0.0
        %1428 = vmatprep.subr.mxu0 0.0
        %1429 = vmatpush1.msra.mxu0 0.0
        %1430 = vmatprep.subr.mxu0 0.0
        %1431 = vmatpush1.msra.mxu0 0.0
        %1432 = vmatprep.subr.mxu0 0.0
        %1433 = vmatpush1.msra.mxu0 0.0
        %1434 = vmatprep.subr.mxu0 0.0
        %1435 = vmatpush1.msra.mxu0 0.0
        %1436 = vmatprep.subr.mxu0 0.0
        %1437 = vmatpush1.msra.mxu0 0.0
        %1438 = vmatprep.subr.mxu0 0.0
        %1439 = vmatpush1.msra.mxu0 0.0
        %1440 = vmatprep.subr.mxu0 0.0
        %1441 = vmatpush1.msra.mxu0 0.0
        %1442 = vmatprep.mubr.f32.mxu0 0.0
        %1443 = vmatmul.mubr.f32.gmra.mrb[0].mxu0 %v1368
        %v1444 = vpop.f32.mrb[0].mxu0
        %v1445 = vadd.f32 0.0, %v1444
        %v1446 = vpop.f32.mrb[0].mxu0
        %v1447 = vadd.f32 0.0, %v1446
        %1448 = vdwg.mxu0
        %1449 = vmatprep.subr.mxu0 0.0
        %1450 = vmatpush1.msra.mxu0 %v977
        %1451 = vmatprep.subr.mxu0 0.0
        %1452 = vmatpush1.msra.mxu0 %v980
        %1453 = vmatprep.subr.mxu0 0.0
        %1454 = vmatpush1.msra.mxu0 %v983
        %1455 = vmatprep.subr.mxu0 0.0
        %1456 = vmatpush1.msra.mxu0 %v986
        %1457 = vmatprep.subr.mxu0 0.0
        %1458 = vmatpush1.msra.mxu0 %v989
        %1459 = vmatprep.subr.mxu0 0.0
        %1460 = vmatpush1.msra.mxu0 %v992
        %1461 = vmatprep.subr.mxu0 0.0
        %1462 = vmatpush1.msra.mxu0 %v995
        %1463 = vmatprep.subr.mxu0 0.0
        %1464 = vmatpush1.msra.mxu0 %v998
        %1465 = vmatprep.subr.mxu0 0.0
        %1466 = vmatpush1.msra.mxu0 %v1001
        %1467 = vmatprep.subr.mxu0 0.0
        %1468 = vmatpush1.msra.mxu0 %v1004
        %1469 = vmatprep.subr.mxu0 0.0
        %1470 = vmatpush1.msra.mxu0 %v1007
        %1471 = vmatprep.subr.mxu0 0.0
        %1472 = vmatpush1.msra.mxu0 %v1010
        %1473 = vmatprep.subr.mxu0 0.0
        %1474 = vmatpush1.msra.mxu0 %v1013
        %1475 = vmatprep.subr.mxu0 0.0
        %1476 = vmatpush1.msra.mxu0 %v1016
        %1477 = vmatprep.subr.mxu0 0.0
        %1478 = vmatpush1.msra.mxu0 %v1019
        %1479 = vmatprep.subr.mxu0 0.0
        %1480 = vmatpush1.msra.mxu0 %v1022
        %1481 = vmatprep.subr.mxu0 0.0
        %1482 = vmatpush1.msra.mxu0 0.0
        %1483 = vmatprep.subr.mxu0 0.0
        %1484 = vmatpush1.msra.mxu0 0.0
        %1485 = vmatprep.subr.mxu0 0.0
        %1486 = vmatpush1.msra.mxu0 0.0
        %1487 = vmatprep.subr.mxu0 0.0
        %1488 = vmatpush1.msra.mxu0 0.0
        %1489 = vmatprep.subr.mxu0 0.0
        %1490 = vmatpush1.msra.mxu0 0.0
        %1491 = vmatprep.subr.mxu0 0.0
        %1492 = vmatpush1.msra.mxu0 0.0
        %1493 = vmatprep.subr.mxu0 0.0
        %1494 = vmatpush1.msra.mxu0 0.0
        %1495 = vmatprep.subr.mxu0 0.0
        %1496 = vmatpush1.msra.mxu0 0.0
        %1497 = vmatprep.subr.mxu0 0.0
        %1498 = vmatpush1.msra.mxu0 0.0
        %1499 = vmatprep.subr.mxu0 0.0
        %1500 = vmatpush1.msra.mxu0 0.0
        %1501 = vmatprep.subr.mxu0 0.0
        %1502 = vmatpush1.msra.mxu0 0.0
        %1503 = vmatprep.subr.mxu0 0.0
        %1504 = vmatpush1.msra.mxu0 0.0
        %1505 = vmatprep.subr.mxu0 0.0
        %1506 = vmatpush1.msra.mxu0 0.0
        %1507 = vmatprep.subr.mxu0 0.0
        %1508 = vmatpush1.msra.mxu0 0.0
        %1509 = vmatprep.subr.mxu0 0.0
        %1510 = vmatpush1.msra.mxu0 0.0
        %1511 = vmatprep.subr.mxu0 0.0
        %1512 = vmatpush1.msra.mxu0 0.0
        %1513 = vmatprep.mubr.f32.mxu0 0.0
        %1514 = vmatmul.mubr.f32.gmra.mrb[0].mxu0 %v1368
        %v1515 = vpop.f32.mrb[0].mxu0
        %v1516 = vadd.f32 0.0, %v1515
        %v1517 = vpop.f32.mrb[0].mxu0
        %1518 = vdwg.mxu0
        %v1519 = vadd.f32 %v1375, %v1445
        %v1520 = vxor.u32 %v1519, 2147483648
        %v1521 = vmul.f32 %v1520, 1.442695
        %v1522 = vpow.pop %v1521
        %v1523 = vadd.f32 %v1522, 1.0
        %v1524 = vrcp.pop %v1523
        %v1525 = vmul.f32 1.0, %v1524
        %v1526 = vadd.f32 %v1376, %v1447
        %v1527 = vxor.u32 %v1526, 2147483648
        %v1528 = vmul.f32 %v1527, 1.442695
        %v1529 = vpow.pop %v1528
        %v1530 = vadd.f32 %v1529, 1.0
        %v1531 = vrcp.pop %v1530
        %v1532 = vmul.f32 1.0, %v1531
        %v1533 = vadd.f32 %v1516, %v1028
        %v1534 = vmul.f32 %v1525, %v1533
        %v1535 = vadd.f32 %v1377, %v1534
        %v1536 = vtanh.pop %v1535
        %v1537 = vsub.f32 %v1368, %v1536
        %v1538 = vmul.f32 %v1532, %v1537
        %v1539 = vadd.f32 %v1536, %v1538
        %s1540 = scalar_lea.vmem %s283, 16
        %1541 = vst [vmem:[%s1540] sm:$0xff] %v1539
        %s1542 = sadd.s32 %s974, 3
        %s1543 = smul.u32 %s1542, 3
        %s1544 = smul.addr %s1543, 8
        %s1545 = scalar_lea.vmem [#allocation3], %s1544
        %v1546 = vld [vmem:[%s1545] sm:$0xff]
        %v1547 = vld [vmem:[%s1545 + $0x8] sm:$0xff]
        %v1548 = vld [vmem:[%s1545 + $0x10] sm:$0xff]
        %1549 = vmatprep.subr.mxu0 %v976
        %1550 = vmatpush1.msra.mxu0 %v975
        %1551 = vmatprep.subr.mxu0 %v979
        %1552 = vmatpush1.msra.mxu0 %v978
        %1553 = vmatprep.subr.mxu0 %v982
        %1554 = vmatpush1.msra.mxu0 %v981
        %1555 = vmatprep.subr.mxu0 %v985
        %1556 = vmatpush1.msra.mxu0 %v984
        %1557 = vmatprep.subr.mxu0 %v988
        %1558 = vmatpush1.msra.mxu0 %v987
        %1559 = vmatprep.subr.mxu0 %v991
        %1560 = vmatpush1.msra.mxu0 %v990
        %1561 = vmatprep.subr.mxu0 %v994
        %1562 = vmatpush1.msra.mxu0 %v993
        %1563 = vmatprep.subr.mxu0 %v997
        %1564 = vmatpush1.msra.mxu0 %v996
        %1565 = vmatprep.subr.mxu0 %v1000
        %1566 = vmatpush1.msra.mxu0 %v999
        %1567 = vmatprep.subr.mxu0 %v1003
        %1568 = vmatpush1.msra.mxu0 %v1002
        %1569 = vmatprep.subr.mxu0 %v1006
        %1570 = vmatpush1.msra.mxu0 %v1005
        %1571 = vmatprep.subr.mxu0 %v1009
        %1572 = vmatpush1.msra.mxu0 %v1008
        %1573 = vmatprep.subr.mxu0 %v1012
        %1574 = vmatpush1.msra.mxu0 %v1011
        %1575 = vmatprep.subr.mxu0 %v1015
        %1576 = vmatpush1.msra.mxu0 %v1014
        %1577 = vmatprep.subr.mxu0 %v1018
        %1578 = vmatpush1.msra.mxu0 %v1017
        %1579 = vmatprep.subr.mxu0 %v1021
        %1580 = vmatpush1.msra.mxu0 %v1020
        %1581 = vmatprep.subr.mxu0 0.0
        %1582 = vmatpush1.msra.mxu0 0.0
        %1583 = vmatprep.subr.mxu0 0.0
        %1584 = vmatpush1.msra.mxu0 0.0
        %1585 = vmatprep.subr.mxu0 0.0
        %1586 = vmatpush1.msra.mxu0 0.0
        %1587 = vmatprep.subr.mxu0 0.0
        %1588 = vmatpush1.msra.mxu0 0.0
        %1589 = vmatprep.subr.mxu0 0.0
        %1590 = vmatpush1.msra.mxu0 0.0
        %1591 = vmatprep.subr.mxu0 0.0
        %1592 = vmatpush1.msra.mxu0 0.0
        %1593 = vmatprep.subr.mxu0 0.0
        %1594 = vmatpush1.msra.mxu0 0.0
        %1595 = vmatprep.subr.mxu0 0.0
        %1596 = vmatpush1.msra.mxu0 0.0
        %1597 = vmatprep.subr.mxu0 0.0
        %1598 = vmatpush1.msra.mxu0 0.0
        %1599 = vmatprep.subr.mxu0 0.0
        %1600 = vmatpush1.msra.mxu0 0.0
        %1601 = vmatprep.subr.mxu0 0.0
        %1602 = vmatpush1.msra.mxu0 0.0
        %1603 = vmatprep.subr.mxu0 0.0
        %1604 = vmatpush1.msra.mxu0 0.0
        %1605 = vmatprep.subr.mxu0 0.0
        %1606 = vmatpush1.msra.mxu0 0.0
        %1607 = vmatprep.subr.mxu0 0.0
        %1608 = vmatpush1.msra.mxu0 0.0
        %1609 = vmatprep.subr.mxu0 0.0
        %1610 = vmatpush1.msra.mxu0 0.0
        %1611 = vmatprep.subr.mxu0 0.0
        %1612 = vmatpush1.msra.mxu0 0.0
        %1613 = vmatprep.mubr.f32.mxu0 0.0
        %1614 = vmatmul.mubr.f32.gmra.mrb[0].mxu0 %v1539
        %v1615 = vpop.f32.mrb[0].mxu0
        %v1616 = vadd.f32 0.0, %v1615
        %v1617 = vpop.f32.mrb[0].mxu0
        %v1618 = vadd.f32 0.0, %v1617
        %1619 = vdwg.mxu0
        %1620 = vmatprep.subr.mxu0 0.0
        %1621 = vmatpush1.msra.mxu0 %v977
        %1622 = vmatprep.subr.mxu0 0.0
        %1623 = vmatpush1.msra.mxu0 %v980
        %1624 = vmatprep.subr.mxu0 0.0
        %1625 = vmatpush1.msra.mxu0 %v983
        %1626 = vmatprep.subr.mxu0 0.0
        %1627 = vmatpush1.msra.mxu0 %v986
        %1628 = vmatprep.subr.mxu0 0.0
        %1629 = vmatpush1.msra.mxu0 %v989
        %1630 = vmatprep.subr.mxu0 0.0
        %1631 = vmatpush1.msra.mxu0 %v992
        %1632 = vmatprep.subr.mxu0 0.0
        %1633 = vmatpush1.msra.mxu0 %v995
        %1634 = vmatprep.subr.mxu0 0.0
        %1635 = vmatpush1.msra.mxu0 %v998
        %1636 = vmatprep.subr.mxu0 0.0
        %1637 = vmatpush1.msra.mxu0 %v1001
        %1638 = vmatprep.subr.mxu0 0.0
        %1639 = vmatpush1.msra.mxu0 %v1004
        %1640 = vmatprep.subr.mxu0 0.0
        %1641 = vmatpush1.msra.mxu0 %v1007
        %1642 = vmatprep.subr.mxu0 0.0
        %1643 = vmatpush1.msra.mxu0 %v1010
        %1644 = vmatprep.subr.mxu0 0.0
        %1645 = vmatpush1.msra.mxu0 %v1013
        %1646 = vmatprep.subr.mxu0 0.0
        %1647 = vmatpush1.msra.mxu0 %v1016
        %1648 = vmatprep.subr.mxu0 0.0
        %1649 = vmatpush1.msra.mxu0 %v1019
        %1650 = vmatprep.subr.mxu0 0.0
        %1651 = vmatpush1.msra.mxu0 %v1022
        %1652 = vmatprep.subr.mxu0 0.0
        %1653 = vmatpush1.msra.mxu0 0.0
        %1654 = vmatprep.subr.mxu0 0.0
        %1655 = vmatpush1.msra.mxu0 0.0
        %1656 = vmatprep.subr.mxu0 0.0
        %1657 = vmatpush1.msra.mxu0 0.0
        %1658 = vmatprep.subr.mxu0 0.0
        %1659 = vmatpush1.msra.mxu0 0.0
        %1660 = vmatprep.subr.mxu0 0.0
        %1661 = vmatpush1.msra.mxu0 0.0
        %1662 = vmatprep.subr.mxu0 0.0
        %1663 = vmatpush1.msra.mxu0 0.0
        %1664 = vmatprep.subr.mxu0 0.0
        %1665 = vmatpush1.msra.mxu0 0.0
        %1666 = vmatprep.subr.mxu0 0.0
        %1667 = vmatpush1.msra.mxu0 0.0
        %1668 = vmatprep.subr.mxu0 0.0
        %1669 = vmatpush1.msra.mxu0 0.0
        %1670 = vmatprep.subr.mxu0 0.0
        %1671 = vmatpush1.msra.mxu0 0.0
        %1672 = vmatprep.subr.mxu0 0.0
        %1673 = vmatpush1.msra.mxu0 0.0
        %1674 = vmatprep.subr.mxu0 0.0
        %1675 = vmatpush1.msra.mxu0 0.0
        %1676 = vmatprep.subr.mxu0 0.0
        %1677 = vmatpush1.msra.mxu0 0.0
        %1678 = vmatprep.subr.mxu0 0.0
        %1679 = vmatpush1.msra.mxu0 0.0
        %1680 = vmatprep.subr.mxu0 0.0
        %1681 = vmatpush1.msra.mxu0 0.0
        %1682 = vmatprep.subr.mxu0 0.0
        %1683 = vmatpush1.msra.mxu0 0.0
        %1684 = vmatprep.mubr.f32.mxu0 0.0
        %1685 = vmatmul.mubr.f32.gmra.mrb[0].mxu0 %v1539
        %v1686 = vpop.f32.mrb[0].mxu0
        %v1687 = vadd.f32 0.0, %v1686
        %v1688 = vpop.f32.mrb[0].mxu0
        %1689 = vdwg.mxu0
        %v1690 = vadd.f32 %v1546, %v1616
        %v1691 = vxor.u32 %v1690, 2147483648
        %v1692 = vmul.f32 %v1691, 1.442695
        %v1693 = vpow.pop %v1692
        %v1694 = vadd.f32 %v1693, 1.0
        %v1695 = vrcp.pop %v1694
        %v1696 = vmul.f32 1.0, %v1695
        %v1697 = vadd.f32 %v1547, %v1618
        %v1698 = vxor.u32 %v1697, 2147483648
        %v1699 = vmul.f32 %v1698, 1.442695
        %v1700 = vpow.pop %v1699
        %v1701 = vadd.f32 %v1700, 1.0
        %v1702 = vrcp.pop %v1701
        %v1703 = vmul.f32 1.0, %v1702
        %v1704 = vadd.f32 %v1687, %v1028
        %v1705 = vmul.f32 %v1696, %v1704
        %v1706 = vadd.f32 %v1548, %v1705
        %v1707 = vtanh.pop %v1706
        %v1708 = vsub.f32 %v1539, %v1707
        %v1709 = vmul.f32 %v1703, %v1708
        %v1710 = vadd.f32 %v1707, %v1709
        %s1711 = scalar_lea.vmem %s283, 24
        %1712 = vst [vmem:[%s1711] sm:$0xff] %v1710
        %s1713 = sadd.s32 %s974, 4
        %s1714 = smul.u32 %s1713, 3
        %s1715 = smul.addr %s1714, 8
        %s1716 = scalar_lea.vmem [#allocation3], %s1715
        %v1717 = vld [vmem:[%s1716] sm:$0xff]
        %v1718 = vld [vmem:[%s1716 + $0x8] sm:$0xff]
        %v1719 = vld [vmem:[%s1716 + $0x10] sm:$0xff]
        %1720 = vmatprep.subr.mxu0 %v976
        %1721 = vmatpush1.msra.mxu0 %v975
        %1722 = vmatprep.subr.mxu0 %v979
        %1723 = vmatpush1.msra.mxu0 %v978
        %1724 = vmatprep.subr.mxu0 %v982
        %1725 = vmatpush1.msra.mxu0 %v981
        %1726 = vmatprep.subr.mxu0 %v985
        %1727 = vmatpush1.msra.mxu0 %v984
        %1728 = vmatprep.subr.mxu0 %v988
        %1729 = vmatpush1.msra.mxu0 %v987
        %1730 = vmatprep.subr.mxu0 %v991
        %1731 = vmatpush1.msra.mxu0 %v990
        %1732 = vmatprep.subr.mxu0 %v994
        %1733 = vmatpush1.msra.mxu0 %v993
        %1734 = vmatprep.subr.mxu0 %v997
        %1735 = vmatpush1.msra.mxu0 %v996
        %1736 = vmatprep.subr.mxu0 %v1000
        %1737 = vmatpush1.msra.mxu0 %v999
        %1738 = vmatprep.subr.mxu0 %v1003
        %1739 = vmatpush1.msra.mxu0 %v1002
        %1740 = vmatprep.subr.mxu0 %v1006
        %1741 = vmatpush1.msra.mxu0 %v1005
        %1742 = vmatprep.subr.mxu0 %v1009
        %1743 = vmatpush1.msra.mxu0 %v1008
        %1744 = vmatprep.subr.mxu0 %v1012
        %1745 = vmatpush1.msra.mxu0 %v1011
        %1746 = vmatprep.subr.mxu0 %v1015
        %1747 = vmatpush1.msra.mxu0 %v1014
        %1748 = vmatprep.subr.mxu0 %v1018
        %1749 = vmatpush1.msra.mxu0 %v1017
        %1750 = vmatprep.subr.mxu0 %v1021
        %1751 = vmatpush1.msra.mxu0 %v1020
        %1752 = vmatprep.subr.mxu0 0.0
        %1753 = vmatpush1.msra.mxu0 0.0
        %1754 = vmatprep.subr.mxu0 0.0
        %1755 = vmatpush1.msra.mxu0 0.0
        %1756 = vmatprep.subr.mxu0 0.0
        %1757 = vmatpush1.msra.mxu0 0.0
        %1758 = vmatprep.subr.mxu0 0.0
        %1759 = vmatpush1.msra.mxu0 0.0
        %1760 = vmatprep.subr.mxu0 0.0
        %1761 = vmatpush1.msra.mxu0 0.0
        %1762 = vmatprep.subr.mxu0 0.0
        %1763 = vmatpush1.msra.mxu0 0.0
        %1764 = vmatprep.subr.mxu0 0.0
        %1765 = vmatpush1.msra.mxu0 0.0
        %1766 = vmatprep.subr.mxu0 0.0
        %1767 = vmatpush1.msra.mxu0 0.0
        %1768 = vmatprep.subr.mxu0 0.0
        %1769 = vmatpush1.msra.mxu0 0.0
        %1770 = vmatprep.subr.mxu0 0.0
        %1771 = vmatpush1.msra.mxu0 0.0
        %1772 = vmatprep.subr.mxu0 0.0
        %1773 = vmatpush1.msra.mxu0 0.0
        %1774 = vmatprep.subr.mxu0 0.0
        %1775 = vmatpush1.msra.mxu0 0.0
        %1776 = vmatprep.subr.mxu0 0.0
        %1777 = vmatpush1.msra.mxu0 0.0
        %1778 = vmatprep.subr.mxu0 0.0
        %1779 = vmatpush1.msra.mxu0 0.0
        %1780 = vmatprep.subr.mxu0 0.0
        %1781 = vmatpush1.msra.mxu0 0.0
        %1782 = vmatprep.subr.mxu0 0.0
        %1783 = vmatpush1.msra.mxu0 0.0
        %1784 = vmatprep.mubr.f32.mxu0 0.0
        %1785 = vmatmul.mubr.f32.gmra.mrb[0].mxu0 %v1710
        %v1786 = vpop.f32.mrb[0].mxu0
        %v1787 = vadd.f32 0.0, %v1786
        %v1788 = vpop.f32.mrb[0].mxu0
        %v1789 = vadd.f32 0.0, %v1788
        %1790 = vdwg.mxu0
        %1791 = vmatprep.subr.mxu0 0.0
        %1792 = vmatpush1.msra.mxu0 %v977
        %1793 = vmatprep.subr.mxu0 0.0
        %1794 = vmatpush1.msra.mxu0 %v980
        %1795 = vmatprep.subr.mxu0 0.0
        %1796 = vmatpush1.msra.mxu0 %v983
        %1797 = vmatprep.subr.mxu0 0.0
        %1798 = vmatpush1.msra.mxu0 %v986
        %1799 = vmatprep.subr.mxu0 0.0
        %1800 = vmatpush1.msra.mxu0 %v989
        %1801 = vmatprep.subr.mxu0 0.0
        %1802 = vmatpush1.msra.mxu0 %v992
        %1803 = vmatprep.subr.mxu0 0.0
        %1804 = vmatpush1.msra.mxu0 %v995
        %1805 = vmatprep.subr.mxu0 0.0
        %1806 = vmatpush1.msra.mxu0 %v998
        %1807 = vmatprep.subr.mxu0 0.0
        %1808 = vmatpush1.msra.mxu0 %v1001
        %1809 = vmatprep.subr.mxu0 0.0
        %1810 = vmatpush1.msra.mxu0 %v1004
        %1811 = vmatprep.subr.mxu0 0.0
        %1812 = vmatpush1.msra.mxu0 %v1007
        %1813 = vmatprep.subr.mxu0 0.0
        %1814 = vmatpush1.msra.mxu0 %v1010
        %1815 = vmatprep.subr.mxu0 0.0
        %1816 = vmatpush1.msra.mxu0 %v1013
        %1817 = vmatprep.subr.mxu0 0.0
        %1818 = vmatpush1.msra.mxu0 %v1016
        %1819 = vmatprep.subr.mxu0 0.0
        %1820 = vmatpush1.msra.mxu0 %v1019
        %1821 = vmatprep.subr.mxu0 0.0
        %1822 = vmatpush1.msra.mxu0 %v1022
        %1823 = vmatprep.subr.mxu0 0.0
        %1824 = vmatpush1.msra.mxu0 0.0
        %1825 = vmatprep.subr.mxu0 0.0
        %1826 = vmatpush1.msra.mxu0 0.0
        %1827 = vmatprep.subr.mxu0 0.0
        %1828 = vmatpush1.msra.mxu0 0.0
        %1829 = vmatprep.subr.mxu0 0.0
        %1830 = vmatpush1.msra.mxu0 0.0
        %1831 = vmatprep.subr.mxu0 0.0
        %1832 = vmatpush1.msra.mxu0 0.0
        %1833 = vmatprep.subr.mxu0 0.0
        %1834 = vmatpush1.msra.mxu0 0.0
        %1835 = vmatprep.subr.mxu0 0.0
        %1836 = vmatpush1.msra.mxu0 0.0
        %1837 = vmatprep.subr.mxu0 0.0
        %1838 = vmatpush1.msra.mxu0 0.0
        %1839 = vmatprep.subr.mxu0 0.0
        %1840 = vmatpush1.msra.mxu0 0.0
        %1841 = vmatprep.subr.mxu0 0.0
        %1842 = vmatpush1.msra.mxu0 0.0
        %1843 = vmatprep.subr.mxu0 0.0
        %1844 = vmatpush1.msra.mxu0 0.0
        %1845 = vmatprep.subr.mxu0 0.0
        %1846 = vmatpush1.msra.mxu0 0.0
        %1847 = vmatprep.subr.mxu0 0.0
        %1848 = vmatpush1.msra.mxu0 0.0
        %1849 = vmatprep.subr.mxu0 0.0
        %1850 = vmatpush1.msra.mxu0 0.0
        %1851 = vmatprep.subr.mxu0 0.0
        %1852 = vmatpush1.msra.mxu0 0.0
        %1853 = vmatprep.subr.mxu0 0.0
        %1854 = vmatpush1.msra.mxu0 0.0
        %1855 = vmatprep.mubr.f32.mxu0 0.0
        %1856 = vmatmul.mubr.f32.gmra.mrb[0].mxu0 %v1710
        %v1857 = vpop.f32.mrb[0].mxu0
        %v1858 = vadd.f32 0.0, %v1857
        %v1859 = vpop.f32.mrb[0].mxu0
        %1860 = vdwg.mxu0
        %v1861 = vadd.f32 %v1717, %v1787
        %v1862 = vxor.u32 %v1861, 2147483648
        %v1863 = vmul.f32 %v1862, 1.442695
        %v1864 = vpow.pop %v1863
        %v1865 = vadd.f32 %v1864, 1.0
        %v1866 = vrcp.pop %v1865
        %v1867 = vmul.f32 1.0, %v1866
        %v1868 = vadd.f32 %v1718, %v1789
        %v1869 = vxor.u32 %v1868, 2147483648
        %v1870 = vmul.f32 %v1869, 1.442695
        %v1871 = vpow.pop %v1870
        %v1872 = vadd.f32 %v1871, 1.0
        %v1873 = vrcp.pop %v1872
        %v1874 = vmul.f32 1.0, %v1873
        %v1875 = vadd.f32 %v1858, %v1028
        %v1876 = vmul.f32 %v1867, %v1875
        %v1877 = vadd.f32 %v1719, %v1876
        %v1878 = vtanh.pop %v1877
        %v1879 = vsub.f32 %v1710, %v1878
        %v1880 = vmul.f32 %v1874, %v1879
        %v1881 = vadd.f32 %v1878, %v1880
        %s1882 = scalar_lea.vmem %s283, 32
        %1883 = vst [vmem:[%s1882] sm:$0xff] %v1881
        %s1884 = sadd.s32 %s974, 5
        %s1885 = smul.u32 %s1884, 3
        %s1886 = smul.addr %s1885, 8
        %s1887 = scalar_lea.vmem [#allocation3], %s1886
        %v1888 = vld [vmem:[%s1887] sm:$0xff]
        %v1889 = vld [vmem:[%s1887 + $0x8] sm:$0xff]
        %v1890 = vld [vmem:[%s1887 + $0x10] sm:$0xff]
        %1891 = vmatprep.subr.mxu0 %v976
        %1892 = vmatpush1.msra.mxu0 %v975
        %1893 = vmatprep.subr.mxu0 %v979
        %1894 = vmatpush1.msra.mxu0 %v978
        %1895 = vmatprep.subr.mxu0 %v982
        %1896 = vmatpush1.msra.mxu0 %v981
        %1897 = vmatprep.subr.mxu0 %v985
        %1898 = vmatpush1.msra.mxu0 %v984
        %1899 = vmatprep.subr.mxu0 %v988
        %1900 = vmatpush1.msra.mxu0 %v987
        %1901 = vmatprep.subr.mxu0 %v991
        %1902 = vmatpush1.msra.mxu0 %v990
        %1903 = vmatprep.subr.mxu0 %v994
        %1904 = vmatpush1.msra.mxu0 %v993
        %1905 = vmatprep.subr.mxu0 %v997
        %1906 = vmatpush1.msra.mxu0 %v996
        %1907 = vmatprep.subr.mxu0 %v1000
        %1908 = vmatpush1.msra.mxu0 %v999
        %1909 = vmatprep.subr.mxu0 %v1003
        %1910 = vmatpush1.msra.mxu0 %v1002
        %1911 = vmatprep.subr.mxu0 %v1006
        %1912 = vmatpush1.msra.mxu0 %v1005
        %1913 = vmatprep.subr.mxu0 %v1009
        %1914 = vmatpush1.msra.mxu0 %v1008
        %1915 = vmatprep.subr.mxu0 %v1012
        %1916 = vmatpush1.msra.mxu0 %v1011
        %1917 = vmatprep.subr.mxu0 %v1015
        %1918 = vmatpush1.msra.mxu0 %v1014
        %1919 = vmatprep.subr.mxu0 %v1018
        %1920 = vmatpush1.msra.mxu0 %v1017
        %1921 = vmatprep.subr.mxu0 %v1021
        %1922 = vmatpush1.msra.mxu0 %v1020
        %1923 = vmatprep.subr.mxu0 0.0
        %1924 = vmatpush1.msra.mxu0 0.0
        %1925 = vmatprep.subr.mxu0 0.0
        %1926 = vmatpush1.msra.mxu0 0.0
        %1927 = vmatprep.subr.mxu0 0.0
        %1928 = vmatpush1.msra.mxu0 0.0
        %1929 = vmatprep.subr.mxu0 0.0
        %1930 = vmatpush1.msra.mxu0 0.0
        %1931 = vmatprep.subr.mxu0 0.0
        %1932 = vmatpush1.msra.mxu0 0.0
        %1933 = vmatprep.subr.mxu0 0.0
        %1934 = vmatpush1.msra.mxu0 0.0
        %1935 = vmatprep.subr.mxu0 0.0
        %1936 = vmatpush1.msra.mxu0 0.0
        %1937 = vmatprep.subr.mxu0 0.0
        %1938 = vmatpush1.msra.mxu0 0.0
        %1939 = vmatprep.subr.mxu0 0.0
        %1940 = vmatpush1.msra.mxu0 0.0
        %1941 = vmatprep.subr.mxu0 0.0
        %1942 = vmatpush1.msra.mxu0 0.0
        %1943 = vmatprep.subr.mxu0 0.0
        %1944 = vmatpush1.msra.mxu0 0.0
        %1945 = vmatprep.subr.mxu0 0.0
        %1946 = vmatpush1.msra.mxu0 0.0
        %1947 = vmatprep.subr.mxu0 0.0
        %1948 = vmatpush1.msra.mxu0 0.0
        %1949 = vmatprep.subr.mxu0 0.0
        %1950 = vmatpush1.msra.mxu0 0.0
        %1951 = vmatprep.subr.mxu0 0.0
        %1952 = vmatpush1.msra.mxu0 0.0
        %1953 = vmatprep.subr.mxu0 0.0
        %1954 = vmatpush1.msra.mxu0 0.0
        %1955 = vmatprep.mubr.f32.mxu0 0.0
        %1956 = vmatmul.mubr.f32.gmra.mrb[0].mxu0 %v1881
        %v1957 = vpop.f32.mrb[0].mxu0
        %v1958 = vadd.f32 0.0, %v1957
        %v1959 = vpop.f32.mrb[0].mxu0
        %v1960 = vadd.f32 0.0, %v1959
        %1961 = vdwg.mxu0
        %1962 = vmatprep.subr.mxu0 0.0
        %1963 = vmatpush1.msra.mxu0 %v977
        %1964 = vmatprep.subr.mxu0 0.0
        %1965 = vmatpush1.msra.mxu0 %v980
        %1966 = vmatprep.subr.mxu0 0.0
        %1967 = vmatpush1.msra.mxu0 %v983
        %1968 = vmatprep.subr.mxu0 0.0
        %1969 = vmatpush1.msra.mxu0 %v986
        %1970 = vmatprep.subr.mxu0 0.0
        %1971 = vmatpush1.msra.mxu0 %v989
        %1972 = vmatprep.subr.mxu0 0.0
        %1973 = vmatpush1.msra.mxu0 %v992
        %1974 = vmatprep.subr.mxu0 0.0
        %1975 = vmatpush1.msra.mxu0 %v995
        %1976 = vmatprep.subr.mxu0 0.0
        %1977 = vmatpush1.msra.mxu0 %v998
        %1978 = vmatprep.subr.mxu0 0.0
        %1979 = vmatpush1.msra.mxu0 %v1001
        %1980 = vmatprep.subr.mxu0 0.0
        %1981 = vmatpush1.msra.mxu0 %v1004
        %1982 = vmatprep.subr.mxu0 0.0
        %1983 = vmatpush1.msra.mxu0 %v1007
        %1984 = vmatprep.subr.mxu0 0.0
        %1985 = vmatpush1.msra.mxu0 %v1010
        %1986 = vmatprep.subr.mxu0 0.0
        %1987 = vmatpush1.msra.mxu0 %v1013
        %1988 = vmatprep.subr.mxu0 0.0
        %1989 = vmatpush1.msra.mxu0 %v1016
        %1990 = vmatprep.subr.mxu0 0.0
        %1991 = vmatpush1.msra.mxu0 %v1019
        %1992 = vmatprep.subr.mxu0 0.0
        %1993 = vmatpush1.msra.mxu0 %v1022
        %1994 = vmatprep.subr.mxu0 0.0
        %1995 = vmatpush1.msra.mxu0 0.0
        %1996 = vmatprep.subr.mxu0 0.0
        %1997 = vmatpush1.msra.mxu0 0.0
        %1998 = vmatprep.subr.mxu0 0.0
        %1999 = vmatpush1.msra.mxu0 0.0
        %2000 = vmatprep.subr.mxu0 0.0
        %2001 = vmatpush1.msra.mxu0 0.0
        %2002 = vmatprep.subr.mxu0 0.0
        %2003 = vmatpush1.msra.mxu0 0.0
        %2004 = vmatprep.subr.mxu0 0.0
        %2005 = vmatpush1.msra.mxu0 0.0
        %2006 = vmatprep.subr.mxu0 0.0
        %2007 = vmatpush1.msra.mxu0 0.0
        %2008 = vmatprep.subr.mxu0 0.0
        %2009 = vmatpush1.msra.mxu0 0.0
        %2010 = vmatprep.subr.mxu0 0.0
        %2011 = vmatpush1.msra.mxu0 0.0
        %2012 = vmatprep.subr.mxu0 0.0
        %2013 = vmatpush1.msra.mxu0 0.0
        %2014 = vmatprep.subr.mxu0 0.0
        %2015 = vmatpush1.msra.mxu0 0.0
        %2016 = vmatprep.subr.mxu0 0.0
        %2017 = vmatpush1.msra.mxu0 0.0
        %2018 = vmatprep.subr.mxu0 0.0
        %2019 = vmatpush1.msra.mxu0 0.0
        %2020 = vmatprep.subr.mxu0 0.0
        %2021 = vmatpush1.msra.mxu0 0.0
        %2022 = vmatprep.subr.mxu0 0.0
        %2023 = vmatpush1.msra.mxu0 0.0
        %2024 = vmatprep.subr.mxu0 0.0
        %2025 = vmatpush1.msra.mxu0 0.0
        %2026 = vmatprep.mubr.f32.mxu0 0.0
        %2027 = vmatmul.mubr.f32.gmra.mrb[0].mxu0 %v1881
        %v2028 = vpop.f32.mrb[0].mxu0
        %v2029 = vadd.f32 0.0, %v2028
        %v2030 = vpop.f32.mrb[0].mxu0
        %2031 = vdwg.mxu0
        %v2032 = vadd.f32 %v1888, %v1958
        %v2033 = vxor.u32 %v2032, 2147483648
        %v2034 = vmul.f32 %v2033, 1.442695
        %v2035 = vpow.pop %v2034
        %v2036 = vadd.f32 %v2035, 1.0
        %v2037 = vrcp.pop %v2036
        %v2038 = vmul.f32 1.0, %v2037
        %v2039 = vadd.f32 %v1889, %v1960
        %v2040 = vxor.u32 %v2039, 2147483648
        %v2041 = vmul.f32 %v2040, 1.442695
        %v2042 = vpow.pop %v2041
        %v2043 = vadd.f32 %v2042, 1.0
        %v2044 = vrcp.pop %v2043
        %v2045 = vmul.f32 1.0, %v2044
        %v2046 = vadd.f32 %v2029, %v1028
        %v2047 = vmul.f32 %v2038, %v2046
        %v2048 = vadd.f32 %v1890, %v2047
        %v2049 = vtanh.pop %v2048
        %v2050 = vsub.f32 %v1881, %v2049
        %v2051 = vmul.f32 %v2045, %v2050
        %v2052 = vadd.f32 %v2049, %v2051
        %s2053 = scalar_lea.vmem %s283, 40
        %2054 = vst [vmem:[%s2053] sm:$0xff] %v2052
        %s2055 = sadd.s32 %s974, 6
        %s2056 = smul.u32 %s2055, 3
        %s2057 = smul.addr %s2056, 8
        %s2058 = scalar_lea.vmem [#allocation3], %s2057
        %v2059 = vld [vmem:[%s2058] sm:$0xff]
        %v2060 = vld [vmem:[%s2058 + $0x8] sm:$0xff]
        %v2061 = vld [vmem:[%s2058 + $0x10] sm:$0xff]
        %2062 = vmatprep.subr.mxu0 %v976
        %2063 = vmatpush1.msra.mxu0 %v975
        %2064 = vmatprep.subr.mxu0 %v979
        %2065 = vmatpush1.msra.mxu0 %v978
        %2066 = vmatprep.subr.mxu0 %v982
        %2067 = vmatpush1.msra.mxu0 %v981
        %2068 = vmatprep.subr.mxu0 %v985
        %2069 = vmatpush1.msra.mxu0 %v984
        %2070 = vmatprep.subr.mxu0 %v988
        %2071 = vmatpush1.msra.mxu0 %v987
        %2072 = vmatprep.subr.mxu0 %v991
        %2073 = vmatpush1.msra.mxu0 %v990
        %2074 = vmatprep.subr.mxu0 %v994
        %2075 = vmatpush1.msra.mxu0 %v993
        %2076 = vmatprep.subr.mxu0 %v997
        %2077 = vmatpush1.msra.mxu0 %v996
        %2078 = vmatprep.subr.mxu0 %v1000
        %2079 = vmatpush1.msra.mxu0 %v999
        %2080 = vmatprep.subr.mxu0 %v1003
        %2081 = vmatpush1.msra.mxu0 %v1002
        %2082 = vmatprep.subr.mxu0 %v1006
        %2083 = vmatpush1.msra.mxu0 %v1005
        %2084 = vmatprep.subr.mxu0 %v1009
        %2085 = vmatpush1.msra.mxu0 %v1008
        %2086 = vmatprep.subr.mxu0 %v1012
        %2087 = vmatpush1.msra.mxu0 %v1011
        %2088 = vmatprep.subr.mxu0 %v1015
        %2089 = vmatpush1.msra.mxu0 %v1014
        %2090 = vmatprep.subr.mxu0 %v1018
        %2091 = vmatpush1.msra.mxu0 %v1017
        %2092 = vmatprep.subr.mxu0 %v1021
        %2093 = vmatpush1.msra.mxu0 %v1020
        %2094 = vmatprep.subr.mxu0 0.0
        %2095 = vmatpush1.msra.mxu0 0.0
        %2096 = vmatprep.subr.mxu0 0.0
        %2097 = vmatpush1.msra.mxu0 0.0
        %2098 = vmatprep.subr.mxu0 0.0
        %2099 = vmatpush1.msra.mxu0 0.0
        %2100 = vmatprep.subr.mxu0 0.0
        %2101 = vmatpush1.msra.mxu0 0.0
        %2102 = vmatprep.subr.mxu0 0.0
        %2103 = vmatpush1.msra.mxu0 0.0
        %2104 = vmatprep.subr.mxu0 0.0
        %2105 = vmatpush1.msra.mxu0 0.0
        %2106 = vmatprep.subr.mxu0 0.0
        %2107 = vmatpush1.msra.mxu0 0.0
        %2108 = vmatprep.subr.mxu0 0.0
        %2109 = vmatpush1.msra.mxu0 0.0
        %2110 = vmatprep.subr.mxu0 0.0
        %2111 = vmatpush1.msra.mxu0 0.0
        %2112 = vmatprep.subr.mxu0 0.0
        %2113 = vmatpush1.msra.mxu0 0.0
        %2114 = vmatprep.subr.mxu0 0.0
        %2115 = vmatpush1.msra.mxu0 0.0
        %2116 = vmatprep.subr.mxu0 0.0
        %2117 = vmatpush1.msra.mxu0 0.0
        %2118 = vmatprep.subr.mxu0 0.0
        %2119 = vmatpush1.msra.mxu0 0.0
        %2120 = vmatprep.subr.mxu0 0.0
        %2121 = vmatpush1.msra.mxu0 0.0
        %2122 = vmatprep.subr.mxu0 0.0
        %2123 = vmatpush1.msra.mxu0 0.0
        %2124 = vmatprep.subr.mxu0 0.0
        %2125 = vmatpush1.msra.mxu0 0.0
        %2126 = vmatprep.mubr.f32.mxu0 0.0
        %2127 = vmatmul.mubr.f32.gmra.mrb[0].mxu0 %v2052
        %v2128 = vpop.f32.mrb[0].mxu0
        %v2129 = vadd.f32 0.0, %v2128
        %v2130 = vpop.f32.mrb[0].mxu0
        %v2131 = vadd.f32 0.0, %v2130
        %2132 = vdwg.mxu0
        %2133 = vmatprep.subr.mxu0 0.0
        %2134 = vmatpush1.msra.mxu0 %v977
        %2135 = vmatprep.subr.mxu0 0.0
        %2136 = vmatpush1.msra.mxu0 %v980
        %2137 = vmatprep.subr.mxu0 0.0
        %2138 = vmatpush1.msra.mxu0 %v983
        %2139 = vmatprep.subr.mxu0 0.0
        %2140 = vmatpush1.msra.mxu0 %v986
        %2141 = vmatprep.subr.mxu0 0.0
        %2142 = vmatpush1.msra.mxu0 %v989
        %2143 = vmatprep.subr.mxu0 0.0
        %2144 = vmatpush1.msra.mxu0 %v992
        %2145 = vmatprep.subr.mxu0 0.0
        %2146 = vmatpush1.msra.mxu0 %v995
        %2147 = vmatprep.subr.mxu0 0.0
        %2148 = vmatpush1.msra.mxu0 %v998
        %2149 = vmatprep.subr.mxu0 0.0
        %2150 = vmatpush1.msra.mxu0 %v1001
        %2151 = vmatprep.subr.mxu0 0.0
        %2152 = vmatpush1.msra.mxu0 %v1004
        %2153 = vmatprep.subr.mxu0 0.0
        %2154 = vmatpush1.msra.mxu0 %v1007
        %2155 = vmatprep.subr.mxu0 0.0
        %2156 = vmatpush1.msra.mxu0 %v1010
        %2157 = vmatprep.subr.mxu0 0.0
        %2158 = vmatpush1.msra.mxu0 %v1013
        %2159 = vmatprep.subr.mxu0 0.0
        %2160 = vmatpush1.msra.mxu0 %v1016
        %2161 = vmatprep.subr.mxu0 0.0
        %2162 = vmatpush1.msra.mxu0 %v1019
        %2163 = vmatprep.subr.mxu0 0.0
        %2164 = vmatpush1.msra.mxu0 %v1022
        %2165 = vmatprep.subr.mxu0 0.0
        %2166 = vmatpush1.msra.mxu0 0.0
        %2167 = vmatprep.subr.mxu0 0.0
        %2168 = vmatpush1.msra.mxu0 0.0
        %2169 = vmatprep.subr.mxu0 0.0
        %2170 = vmatpush1.msra.mxu0 0.0
        %2171 = vmatprep.subr.mxu0 0.0
        %2172 = vmatpush1.msra.mxu0 0.0
        %2173 = vmatprep.subr.mxu0 0.0
        %2174 = vmatpush1.msra.mxu0 0.0
        %2175 = vmatprep.subr.mxu0 0.0
        %2176 = vmatpush1.msra.mxu0 0.0
        %2177 = vmatprep.subr.mxu0 0.0
        %2178 = vmatpush1.msra.mxu0 0.0
        %2179 = vmatprep.subr.mxu0 0.0
        %2180 = vmatpush1.msra.mxu0 0.0
        %2181 = vmatprep.subr.mxu0 0.0
        %2182 = vmatpush1.msra.mxu0 0.0
        %2183 = vmatprep.subr.mxu0 0.0
        %2184 = vmatpush1.msra.mxu0 0.0
        %2185 = vmatprep.subr.mxu0 0.0
        %2186 = vmatpush1.msra.mxu0 0.0
        %2187 = vmatprep.subr.mxu0 0.0
        %2188 = vmatpush1.msra.mxu0 0.0
        %2189 = vmatprep.subr.mxu0 0.0
        %2190 = vmatpush1.msra.mxu0 0.0
        %2191 = vmatprep.subr.mxu0 0.0
        %2192 = vmatpush1.msra.mxu0 0.0
        %2193 = vmatprep.subr.mxu0 0.0
        %2194 = vmatpush1.msra.mxu0 0.0
        %2195 = vmatprep.subr.mxu0 0.0
        %2196 = vmatpush1.msra.mxu0 0.0
        %2197 = vmatprep.mubr.f32.mxu0 0.0
        %2198 = vmatmul.mubr.f32.gmra.mrb[0].mxu0 %v2052
        %v2199 = vpop.f32.mrb[0].mxu0
        %v2200 = vadd.f32 0.0, %v2199
        %v2201 = vpop.f32.mrb[0].mxu0
        %2202 = vdwg.mxu0
        %v2203 = vadd.f32 %v2059, %v2129
        %v2204 = vxor.u32 %v2203, 2147483648
        %v2205 = vmul.f32 %v2204, 1.442695
        %v2206 = vpow.pop %v2205
        %v2207 = vadd.f32 %v2206, 1.0
        %v2208 = vrcp.pop %v2207
        %v2209 = vmul.f32 1.0, %v2208
        %v2210 = vadd.f32 %v2060, %v2131
        %v2211 = vxor.u32 %v2210, 2147483648
        %v2212 = vmul.f32 %v2211, 1.442695
        %v2213 = vpow.pop %v2212
        %v2214 = vadd.f32 %v2213, 1.0
        %v2215 = vrcp.pop %v2214
        %v2216 = vmul.f32 1.0, %v2215
        %v2217 = vadd.f32 %v2200, %v1028
        %v2218 = vmul.f32 %v2209, %v2217
        %v2219 = vadd.f32 %v2061, %v2218
        %v2220 = vtanh.pop %v2219
        %v2221 = vsub.f32 %v2052, %v2220
        %v2222 = vmul.f32 %v2216, %v2221
        %v2223 = vadd.f32 %v2220, %v2222
        %s2224 = scalar_lea.vmem %s283, 48
        %2225 = vst [vmem:[%s2224] sm:$0xff] %v2223
        %s2226 = sadd.s32 %s974, 7
        %s2227 = smul.u32 %s2226, 3
        %s2228 = smul.addr %s2227, 8
        %s2229 = scalar_lea.vmem [#allocation3], %s2228
        %v2230 = vld [vmem:[%s2229] sm:$0xff]
        %v2231 = vld [vmem:[%s2229 + $0x8] sm:$0xff]
        %v2232 = vld [vmem:[%s2229 + $0x10] sm:$0xff]
        %2233 = vmatprep.subr.mxu0 %v976
        %2234 = vmatpush1.msra.mxu0 %v975
        %2235 = vmatprep.subr.mxu0 %v979
        %2236 = vmatpush1.msra.mxu0 %v978
        %2237 = vmatprep.subr.mxu0 %v982
        %2238 = vmatpush1.msra.mxu0 %v981
        %2239 = vmatprep.subr.mxu0 %v985
        %2240 = vmatpush1.msra.mxu0 %v984
        %2241 = vmatprep.subr.mxu0 %v988
        %2242 = vmatpush1.msra.mxu0 %v987
        %2243 = vmatprep.subr.mxu0 %v991
        %2244 = vmatpush1.msra.mxu0 %v990
        %2245 = vmatprep.subr.mxu0 %v994
        %2246 = vmatpush1.msra.mxu0 %v993
        %2247 = vmatprep.subr.mxu0 %v997
        %2248 = vmatpush1.msra.mxu0 %v996
        %2249 = vmatprep.subr.mxu0 %v1000
        %2250 = vmatpush1.msra.mxu0 %v999
        %2251 = vmatprep.subr.mxu0 %v1003
        %2252 = vmatpush1.msra.mxu0 %v1002
        %2253 = vmatprep.subr.mxu0 %v1006
        %2254 = vmatpush1.msra.mxu0 %v1005
        %2255 = vmatprep.subr.mxu0 %v1009
        %2256 = vmatpush1.msra.mxu0 %v1008
        %2257 = vmatprep.subr.mxu0 %v1012
        %2258 = vmatpush1.msra.mxu0 %v1011
        %2259 = vmatprep.subr.mxu0 %v1015
        %2260 = vmatpush1.msra.mxu0 %v1014
        %2261 = vmatprep.subr.mxu0 %v1018
        %2262 = vmatpush1.msra.mxu0 %v1017
        %2263 = vmatprep.subr.mxu0 %v1021
        %2264 = vmatpush1.msra.mxu0 %v1020
        %2265 = vmatprep.subr.mxu0 0.0
        %2266 = vmatpush1.msra.mxu0 0.0
        %2267 = vmatprep.subr.mxu0 0.0
        %2268 = vmatpush1.msra.mxu0 0.0
        %2269 = vmatprep.subr.mxu0 0.0
        %2270 = vmatpush1.msra.mxu0 0.0
        %2271 = vmatprep.subr.mxu0 0.0
        %2272 = vmatpush1.msra.mxu0 0.0
        %2273 = vmatprep.subr.mxu0 0.0
        %2274 = vmatpush1.msra.mxu0 0.0
        %2275 = vmatprep.subr.mxu0 0.0
        %2276 = vmatpush1.msra.mxu0 0.0
        %2277 = vmatprep.subr.mxu0 0.0
        %2278 = vmatpush1.msra.mxu0 0.0
        %2279 = vmatprep.subr.mxu0 0.0
        %2280 = vmatpush1.msra.mxu0 0.0
        %2281 = vmatprep.subr.mxu0 0.0
        %2282 = vmatpush1.msra.mxu0 0.0
        %2283 = vmatprep.subr.mxu0 0.0
        %2284 = vmatpush1.msra.mxu0 0.0
        %2285 = vmatprep.subr.mxu0 0.0
        %2286 = vmatpush1.msra.mxu0 0.0
        %2287 = vmatprep.subr.mxu0 0.0
        %2288 = vmatpush1.msra.mxu0 0.0
        %2289 = vmatprep.subr.mxu0 0.0
        %2290 = vmatpush1.msra.mxu0 0.0
        %2291 = vmatprep.subr.mxu0 0.0
        %2292 = vmatpush1.msra.mxu0 0.0
        %2293 = vmatprep.subr.mxu0 0.0
        %2294 = vmatpush1.msra.mxu0 0.0
        %2295 = vmatprep.subr.mxu0 0.0
        %2296 = vmatpush1.msra.mxu0 0.0
        %2297 = vmatprep.mubr.f32.mxu0 0.0
        %2298 = vmatmul.mubr.f32.gmra.mrb[0].mxu0 %v2223
        %v2299 = vpop.f32.mrb[0].mxu0
        %v2300 = vadd.f32 0.0, %v2299
        %v2301 = vpop.f32.mrb[0].mxu0
        %v2302 = vadd.f32 0.0, %v2301
        %2303 = vdwg.mxu0
        %2304 = vmatprep.subr.mxu0 0.0
        %2305 = vmatpush1.msra.mxu0 %v977
        %2306 = vmatprep.subr.mxu0 0.0
        %2307 = vmatpush1.msra.mxu0 %v980
        %2308 = vmatprep.subr.mxu0 0.0
        %2309 = vmatpush1.msra.mxu0 %v983
        %2310 = vmatprep.subr.mxu0 0.0
        %2311 = vmatpush1.msra.mxu0 %v986
        %2312 = vmatprep.subr.mxu0 0.0
        %2313 = vmatpush1.msra.mxu0 %v989
        %2314 = vmatprep.subr.mxu0 0.0
        %2315 = vmatpush1.msra.mxu0 %v992
        %2316 = vmatprep.subr.mxu0 0.0
        %2317 = vmatpush1.msra.mxu0 %v995
        %2318 = vmatprep.subr.mxu0 0.0
        %2319 = vmatpush1.msra.mxu0 %v998
        %2320 = vmatprep.subr.mxu0 0.0
        %2321 = vmatpush1.msra.mxu0 %v1001
        %2322 = vmatprep.subr.mxu0 0.0
        %2323 = vmatpush1.msra.mxu0 %v1004
        %2324 = vmatprep.subr.mxu0 0.0
        %2325 = vmatpush1.msra.mxu0 %v1007
        %2326 = vmatprep.subr.mxu0 0.0
        %2327 = vmatpush1.msra.mxu0 %v1010
        %2328 = vmatprep.subr.mxu0 0.0
        %2329 = vmatpush1.msra.mxu0 %v1013
        %2330 = vmatprep.subr.mxu0 0.0
        %2331 = vmatpush1.msra.mxu0 %v1016
        %2332 = vmatprep.subr.mxu0 0.0
        %2333 = vmatpush1.msra.mxu0 %v1019
        %2334 = vmatprep.subr.mxu0 0.0
        %2335 = vmatpush1.msra.mxu0 %v1022
        %2336 = vmatprep.subr.mxu0 0.0
        %2337 = vmatpush1.msra.mxu0 0.0
        %2338 = vmatprep.subr.mxu0 0.0
        %2339 = vmatpush1.msra.mxu0 0.0
        %2340 = vmatprep.subr.mxu0 0.0
        %2341 = vmatpush1.msra.mxu0 0.0
        %2342 = vmatprep.subr.mxu0 0.0
        %2343 = vmatpush1.msra.mxu0 0.0
        %2344 = vmatprep.subr.mxu0 0.0
        %2345 = vmatpush1.msra.mxu0 0.0
        %2346 = vmatprep.subr.mxu0 0.0
        %2347 = vmatpush1.msra.mxu0 0.0
        %2348 = vmatprep.subr.mxu0 0.0
        %2349 = vmatpush1.msra.mxu0 0.0
        %2350 = vmatprep.subr.mxu0 0.0
        %2351 = vmatpush1.msra.mxu0 0.0
        %2352 = vmatprep.subr.mxu0 0.0
        %2353 = vmatpush1.msra.mxu0 0.0
        %2354 = vmatprep.subr.mxu0 0.0
        %2355 = vmatpush1.msra.mxu0 0.0
        %2356 = vmatprep.subr.mxu0 0.0
        %2357 = vmatpush1.msra.mxu0 0.0
        %2358 = vmatprep.subr.mxu0 0.0
        %2359 = vmatpush1.msra.mxu0 0.0
        %2360 = vmatprep.subr.mxu0 0.0
        %2361 = vmatpush1.msra.mxu0 0.0
        %2362 = vmatprep.subr.mxu0 0.0
        %2363 = vmatpush1.msra.mxu0 0.0
        %2364 = vmatprep.subr.mxu0 0.0
        %2365 = vmatpush1.msra.mxu0 0.0
        %2366 = vmatprep.subr.mxu0 0.0
        %2367 = vmatpush1.msra.mxu0 0.0
        %2368 = vmatprep.mubr.f32.mxu0 0.0
        %2369 = vmatmul.mubr.f32.gmra.mrb[0].mxu0 %v2223
        %v2370 = vpop.f32.mrb[0].mxu0
        %v2371 = vadd.f32 0.0, %v2370
        %v2372 = vpop.f32.mrb[0].mxu0
        %2373 = vdwg.mxu0
        %v2374 = vadd.f32 %v2230, %v2300
        %v2375 = vxor.u32 %v2374, 2147483648
        %v2376 = vmul.f32 %v2375, 1.442695
        %v2377 = vpow.pop %v2376
        %v2378 = vadd.f32 %v2377, 1.0
        %v2379 = vrcp.pop %v2378
        %v2380 = vmul.f32 1.0, %v2379
        %v2381 = vadd.f32 %v2231, %v2302
        %v2382 = vxor.u32 %v2381, 2147483648
        %v2383 = vmul.f32 %v2382, 1.442695
        %v2384 = vpow.pop %v2383
        %v2385 = vadd.f32 %v2384, 1.0
        %v2386 = vrcp.pop %v2385
        %v2387 = vmul.f32 1.0, %v2386
        %v2388 = vadd.f32 %v2371, %v1028
        %v2389 = vmul.f32 %v2380, %v2388
        %v2390 = vadd.f32 %v2232, %v2389
        %v2391 = vtanh.pop %v2390
        %v2392 = vsub.f32 %v2223, %v2391
        %v2393 = vmul.f32 %v2387, %v2392
        %v2394 = vadd.f32 %v2391, %v2393
        %s2395 = scalar_lea.vmem %s283, 56
        %2396 = vst [vmem:[%s2395] sm:$0xff] %v2394
        %2397 = vst [vmem:[#allocation2] sm:$0xff] %v2394
      $region48: #{gru_model_forward.4} parent=39 // pred_fallthru
        _
      %p2398 = scmp.eq.s32.totalorder %s21, 1
      // Predicated region
      $region49: #{gru_model_forward.4} parent=39 // pred_check
        %p2399 = pneg %p2398
      $region50: #{gru_model_forward.4} parent=39 // pred_check_branch
        %2401 = sbr.rel (%p2399) target = $region52
      $region51: #{gru_model_forward.4} parent=39 // pred_region
        %s2402 = ssub.s32 %s21, 1
        %p2403 = scmp.lt.s32.totalorder %s2402, 0
        %s2404 = ssub.s32 0, %s2402
        %s2405 = scalar_select %p2403, %s2404, %s2402
        %s2406 = sand.u32 %s2405, 1
        %s2407 = ssub.s32 0, %s2406
        %s2408 = scalar_select %p2403, %s2407, %s2406
        %p2409 = scmp.ne.s32.totalorder %s2408, 0
        %p2410 = scmp.lt.s32.totalorder %s2408, 0
        %p2411 = pnand %p2410, %p2409
        %p2412 = pneg %p2411
        %s2413 = sadd.s32 %s2408, 2
        %s2414 = scalar_select %p2412, %s2413, %s2408
        %s2415 = smul.u32 %s2414, 8
        %v2416 = vld [vmem:[%s2] sm:$0xff]
        %v2417 = vld [vmem:[%s2 + $0x8] sm:$0xff]
        %v2418 = vld [vmem:[%s2 + $0x10] sm:$0xff]
        %v2419 = vld [vmem:[%s2 + $0x18] sm:$0xff]
        %v2420 = vld [vmem:[%s2 + $0x20] sm:$0xff]
        %v2421 = vld [vmem:[%s2 + $0x28] sm:$0xff]
        %v2422 = vld [vmem:[%s2 + $0x30] sm:$0xff]
        %v2423 = vld [vmem:[%s2 + $0x38] sm:$0xff]
        %v2424 = vld [vmem:[%s2 + $0x40] sm:$0xff]
        %v2425 = vld [vmem:[%s2 + $0x48] sm:$0xff]
        %v2426 = vld [vmem:[%s2 + $0x50] sm:$0xff]
        %v2427 = vld [vmem:[%s2 + $0x58] sm:$0xff]
        %v2428 = vld [vmem:[%s2 + $0x60] sm:$0xff]
        %v2429 = vld [vmem:[%s2 + $0x68] sm:$0xff]
        %v2430 = vld [vmem:[%s2 + $0x70] sm:$0xff]
        %v2431 = vld [vmem:[%s2 + $0x78] sm:$0xff]
        %v2432 = vld [vmem:[%s2 + $0x80] sm:$0xff]
        %v2433 = vld [vmem:[%s2 + $0x88] sm:$0xff]
        %v2434 = vld [vmem:[%s2 + $0x90] sm:$0xff]
        %v2435 = vld [vmem:[%s2 + $0x98] sm:$0xff]
        %v2436 = vld [vmem:[%s2 + $0xa0] sm:$0xff]
        %v2437 = vld [vmem:[%s2 + $0xa8] sm:$0xff]
        %v2438 = vld [vmem:[%s2 + $0xb0] sm:$0xff]
        %v2439 = vld [vmem:[%s2 + $0xb8] sm:$0xff]
        %v2440 = vld [vmem:[%s2 + $0xc0] sm:$0xff]
        %v2441 = vld [vmem:[%s2 + $0xc8] sm:$0xff]
        %v2442 = vld [vmem:[%s2 + $0xd0] sm:$0xff]
        %v2443 = vld [vmem:[%s2 + $0xd8] sm:$0xff]
        %v2444 = vld [vmem:[%s2 + $0xe0] sm:$0xff]
        %v2445 = vld [vmem:[%s2 + $0xe8] sm:$0xff]
        %v2446 = vld [vmem:[%s2 + $0xf0] sm:$0xff]
        %v2447 = vld [vmem:[%s2 + $0xf8] sm:$0xff]
        %v2448 = vld [vmem:[%s2 + $0x100] sm:$0xff]
        %v2449 = vld [vmem:[%s2 + $0x108] sm:$0xff]
        %v2450 = vld [vmem:[%s2 + $0x110] sm:$0xff]
        %v2451 = vld [vmem:[%s2 + $0x118] sm:$0xff]
        %v2452 = vld [vmem:[%s2 + $0x120] sm:$0xff]
        %v2453 = vld [vmem:[%s2 + $0x128] sm:$0xff]
        %v2454 = vld [vmem:[%s2 + $0x130] sm:$0xff]
        %v2455 = vld [vmem:[%s2 + $0x138] sm:$0xff]
        %v2456 = vld [vmem:[%s2 + $0x140] sm:$0xff]
        %v2457 = vld [vmem:[%s2 + $0x148] sm:$0xff]
        %v2458 = vld [vmem:[%s2 + $0x150] sm:$0xff]
        %v2459 = vld [vmem:[%s2 + $0x158] sm:$0xff]
        %v2460 = vld [vmem:[%s2 + $0x160] sm:$0xff]
        %v2461 = vld [vmem:[%s2 + $0x168] sm:$0xff]
        %v2462 = vld [vmem:[%s2 + $0x170] sm:$0xff]
        %v2463 = vld [vmem:[%s2 + $0x178] sm:$0xff]
        %v2464 = vld [vmem:[%s4] sm:$0x1]
        %v2466 = vlaneseq
        %v2467 = vshrl.u32 %v2466, 7
        %v2468 = vsub.s32 0, %v2467
        %v2469 = vrot.slane %v2464, %v2468
        %v2471 = vld [vmem:[#allocation2] sm:$0xff]
        %s2472 = smul.u32 %s2415, 3
        %s2473 = smul.addr %s2472, 8
        %s2474 = scalar_lea.vmem [#allocation3], %s2473
        %v2475 = vld [vmem:[%s2474] sm:$0xff]
        %v2476 = vld [vmem:[%s2474 + $0x8] sm:$0xff]
        %v2477 = vld [vmem:[%s2474 + $0x10] sm:$0xff]
        %2478 = vmatprep.subr.mxu0 %v2417
        %2479 = vmatpush1.msra.mxu0 %v2416
        %2480 = vmatprep.subr.mxu0 %v2420
        %2481 = vmatpush1.msra.mxu0 %v2419
        %2482 = vmatprep.subr.mxu0 %v2423
        %2483 = vmatpush1.msra.mxu0 %v2422
        %2484 = vmatprep.subr.mxu0 %v2426
        %2485 = vmatpush1.msra.mxu0 %v2425
        %2486 = vmatprep.subr.mxu0 %v2429
        %2487 = vmatpush1.msra.mxu0 %v2428
        %2488 = vmatprep.subr.mxu0 %v2432
        %2489 = vmatpush1.msra.mxu0 %v2431
        %2490 = vmatprep.subr.mxu0 %v2435
        %2491 = vmatpush1.msra.mxu0 %v2434
        %2492 = vmatprep.subr.mxu0 %v2438
        %2493 = vmatpush1.msra.mxu0 %v2437
        %2494 = vmatprep.subr.mxu0 %v2441
        %2495 = vmatpush1.msra.mxu0 %v2440
        %2496 = vmatprep.subr.mxu0 %v2444
        %2497 = vmatpush1.msra.mxu0 %v2443
        %2498 = vmatprep.subr.mxu0 %v2447
        %2499 = vmatpush1.msra.mxu0 %v2446
        %2500 = vmatprep.subr.mxu0 %v2450
        %2501 = vmatpush1.msra.mxu0 %v2449
        %2502 = vmatprep.subr.mxu0 %v2453
        %2503 = vmatpush1.msra.mxu0 %v2452
        %2504 = vmatprep.subr.mxu0 %v2456
        %2505 = vmatpush1.msra.mxu0 %v2455
        %2506 = vmatprep.subr.mxu0 %v2459
        %2507 = vmatpush1.msra.mxu0 %v2458
        %2508 = vmatprep.subr.mxu0 %v2462
        %2509 = vmatpush1.msra.mxu0 %v2461
        %2510 = vmatprep.subr.mxu0 0.0
        %2511 = vmatpush1.msra.mxu0 0.0
        %2512 = vmatprep.subr.mxu0 0.0
        %2513 = vmatpush1.msra.mxu0 0.0
        %2514 = vmatprep.subr.mxu0 0.0
        %2515 = vmatpush1.msra.mxu0 0.0
        %2516 = vmatprep.subr.mxu0 0.0
        %2517 = vmatpush1.msra.mxu0 0.0
        %2518 = vmatprep.subr.mxu0 0.0
        %2519 = vmatpush1.msra.mxu0 0.0
        %2520 = vmatprep.subr.mxu0 0.0
        %2521 = vmatpush1.msra.mxu0 0.0
        %2522 = vmatprep.subr.mxu0 0.0
        %2523 = vmatpush1.msra.mxu0 0.0
        %2524 = vmatprep.subr.mxu0 0.0
        %2525 = vmatpush1.msra.mxu0 0.0
        %2526 = vmatprep.subr.mxu0 0.0
        %2527 = vmatpush1.msra.mxu0 0.0
        %2528 = vmatprep.subr.mxu0 0.0
        %2529 = vmatpush1.msra.mxu0 0.0
        %2530 = vmatprep.subr.mxu0 0.0
        %2531 = vmatpush1.msra.mxu0 0.0
        %2532 = vmatprep.subr.mxu0 0.0
        %2533 = vmatpush1.msra.mxu0 0.0
        %2534 = vmatprep.subr.mxu0 0.0
        %2535 = vmatpush1.msra.mxu0 0.0
        %2536 = vmatprep.subr.mxu0 0.0
        %2537 = vmatpush1.msra.mxu0 0.0
        %2538 = vmatprep.subr.mxu0 0.0
        %2539 = vmatpush1.msra.mxu0 0.0
        %2540 = vmatprep.subr.mxu0 0.0
        %2541 = vmatpush1.msra.mxu0 0.0
        %2542 = vmatprep.mubr.f32.mxu0 0.0
        %2543 = vmatmul.mubr.f32.gmra.mrb[0].mxu0 %v2471
        %v2544 = vpop.f32.mrb[0].mxu0
        %v2545 = vadd.f32 0.0, %v2544
        %v2546 = vpop.f32.mrb[0].mxu0
        %v2547 = vadd.f32 0.0, %v2546
        %2548 = vdwg.mxu0
        %2549 = vmatprep.subr.mxu0 0.0
        %2550 = vmatpush1.msra.mxu0 %v2418
        %2551 = vmatprep.subr.mxu0 0.0
        %2552 = vmatpush1.msra.mxu0 %v2421
        %2553 = vmatprep.subr.mxu0 0.0
        %2554 = vmatpush1.msra.mxu0 %v2424
        %2555 = vmatprep.subr.mxu0 0.0
        %2556 = vmatpush1.msra.mxu0 %v2427
        %2557 = vmatprep.subr.mxu0 0.0
        %2558 = vmatpush1.msra.mxu0 %v2430
        %2559 = vmatprep.subr.mxu0 0.0
        %2560 = vmatpush1.msra.mxu0 %v2433
        %2561 = vmatprep.subr.mxu0 0.0
        %2562 = vmatpush1.msra.mxu0 %v2436
        %2563 = vmatprep.subr.mxu0 0.0
        %2564 = vmatpush1.msra.mxu0 %v2439
        %2565 = vmatprep.subr.mxu0 0.0
        %2566 = vmatpush1.msra.mxu0 %v2442
        %2567 = vmatprep.subr.mxu0 0.0
        %2568 = vmatpush1.msra.mxu0 %v2445
        %2569 = vmatprep.subr.mxu0 0.0
        %2570 = vmatpush1.msra.mxu0 %v2448
        %2571 = vmatprep.subr.mxu0 0.0
        %2572 = vmatpush1.msra.mxu0 %v2451
        %2573 = vmatprep.subr.mxu0 0.0
        %2574 = vmatpush1.msra.mxu0 %v2454
        %2575 = vmatprep.subr.mxu0 0.0
        %2576 = vmatpush1.msra.mxu0 %v2457
        %2577 = vmatprep.subr.mxu0 0.0
        %2578 = vmatpush1.msra.mxu0 %v2460
        %2579 = vmatprep.subr.mxu0 0.0
        %2580 = vmatpush1.msra.mxu0 %v2463
        %2581 = vmatprep.subr.mxu0 0.0
        %2582 = vmatpush1.msra.mxu0 0.0
        %2583 = vmatprep.subr.mxu0 0.0
        %2584 = vmatpush1.msra.mxu0 0.0
        %2585 = vmatprep.subr.mxu0 0.0
        %2586 = vmatpush1.msra.mxu0 0.0
        %2587 = vmatprep.subr.mxu0 0.0
        %2588 = vmatpush1.msra.mxu0 0.0
        %2589 = vmatprep.subr.mxu0 0.0
        %2590 = vmatpush1.msra.mxu0 0.0
        %2591 = vmatprep.subr.mxu0 0.0
        %2592 = vmatpush1.msra.mxu0 0.0
        %2593 = vmatprep.subr.mxu0 0.0
        %2594 = vmatpush1.msra.mxu0 0.0
        %2595 = vmatprep.subr.mxu0 0.0
        %2596 = vmatpush1.msra.mxu0 0.0
        %2597 = vmatprep.subr.mxu0 0.0
        %2598 = vmatpush1.msra.mxu0 0.0
        %2599 = vmatprep.subr.mxu0 0.0
        %2600 = vmatpush1.msra.mxu0 0.0
        %2601 = vmatprep.subr.mxu0 0.0
        %2602 = vmatpush1.msra.mxu0 0.0
        %2603 = vmatprep.subr.mxu0 0.0
        %2604 = vmatpush1.msra.mxu0 0.0
        %2605 = vmatprep.subr.mxu0 0.0
        %2606 = vmatpush1.msra.mxu0 0.0
        %2607 = vmatprep.subr.mxu0 0.0
        %2608 = vmatpush1.msra.mxu0 0.0
        %2609 = vmatprep.subr.mxu0 0.0
        %2610 = vmatpush1.msra.mxu0 0.0
        %2611 = vmatprep.subr.mxu0 0.0
        %2612 = vmatpush1.msra.mxu0 0.0
        %2613 = vmatprep.mubr.f32.mxu0 0.0
        %2614 = vmatmul.mubr.f32.gmra.mrb[0].mxu0 %v2471
        %v2615 = vpop.f32.mrb[0].mxu0
        %v2616 = vadd.f32 0.0, %v2615
        %v2617 = vpop.f32.mrb[0].mxu0
        %2618 = vdwg.mxu0
        %v2619 = vadd.f32 %v2475, %v2545
        %v2620 = vxor.u32 %v2619, 2147483648
        %v2621 = vmul.f32 %v2620, 1.442695
        %v2622 = vpow.pop %v2621
        %v2623 = vadd.f32 %v2622, 1.0
        %v2624 = vrcp.pop %v2623
        %v2625 = vmul.f32 1.0, %v2624
        %v2626 = vadd.f32 %v2476, %v2547
        %v2627 = vxor.u32 %v2626, 2147483648
        %v2628 = vmul.f32 %v2627, 1.442695
        %v2629 = vpow.pop %v2628
        %v2630 = vadd.f32 %v2629, 1.0
        %v2631 = vrcp.pop %v2630
        %v2632 = vmul.f32 1.0, %v2631
        %v2633 = vadd.f32 %v2616, %v2469
        %v2634 = vmul.f32 %v2625, %v2633
        %v2635 = vadd.f32 %v2477, %v2634
        %v2636 = vtanh.pop %v2635
        %v2637 = vsub.f32 %v2471, %v2636
        %v2638 = vmul.f32 %v2632, %v2637
        %v2639 = vadd.f32 %v2636, %v2638
        %2640 = vst [vmem:[%s283] sm:$0xff] %v2639
        %s2641 = sadd.s32 %s2415, 1
        %s2642 = smul.u32 %s2641, 3
        %s2643 = smul.addr %s2642, 8
        %s2644 = scalar_lea.vmem [#allocation3], %s2643
        %v2645 = vld [vmem:[%s2644] sm:$0xff]
        %v2646 = vld [vmem:[%s2644 + $0x8] sm:$0xff]
        %v2647 = vld [vmem:[%s2644 + $0x10] sm:$0xff]
        %2648 = vmatprep.subr.mxu0 %v2417
        %2649 = vmatpush1.msra.mxu0 %v2416
        %2650 = vmatprep.subr.mxu0 %v2420
        %2651 = vmatpush1.msra.mxu0 %v2419
        %2652 = vmatprep.subr.mxu0 %v2423
        %2653 = vmatpush1.msra.mxu0 %v2422
        %2654 = vmatprep.subr.mxu0 %v2426
        %2655 = vmatpush1.msra.mxu0 %v2425
        %2656 = vmatprep.subr.mxu0 %v2429
        %2657 = vmatpush1.msra.mxu0 %v2428
        %2658 = vmatprep.subr.mxu0 %v2432
        %2659 = vmatpush1.msra.mxu0 %v2431
        %2660 = vmatprep.subr.mxu0 %v2435
        %2661 = vmatpush1.msra.mxu0 %v2434
        %2662 = vmatprep.subr.mxu0 %v2438
        %2663 = vmatpush1.msra.mxu0 %v2437
        %2664 = vmatprep.subr.mxu0 %v2441
        %2665 = vmatpush1.msra.mxu0 %v2440
        %2666 = vmatprep.subr.mxu0 %v2444
        %2667 = vmatpush1.msra.mxu0 %v2443
        %2668 = vmatprep.subr.mxu0 %v2447
        %2669 = vmatpush1.msra.mxu0 %v2446
        %2670 = vmatprep.subr.mxu0 %v2450
        %2671 = vmatpush1.msra.mxu0 %v2449
        %2672 = vmatprep.subr.mxu0 %v2453
        %2673 = vmatpush1.msra.mxu0 %v2452
        %2674 = vmatprep.subr.mxu0 %v2456
        %2675 = vmatpush1.msra.mxu0 %v2455
        %2676 = vmatprep.subr.mxu0 %v2459
        %2677 = vmatpush1.msra.mxu0 %v2458
        %2678 = vmatprep.subr.mxu0 %v2462
        %2679 = vmatpush1.msra.mxu0 %v2461
        %2680 = vmatprep.subr.mxu0 0.0
        %2681 = vmatpush1.msra.mxu0 0.0
        %2682 = vmatprep.subr.mxu0 0.0
        %2683 = vmatpush1.msra.mxu0 0.0
        %2684 = vmatprep.subr.mxu0 0.0
        %2685 = vmatpush1.msra.mxu0 0.0
        %2686 = vmatprep.subr.mxu0 0.0
        %2687 = vmatpush1.msra.mxu0 0.0
        %2688 = vmatprep.subr.mxu0 0.0
        %2689 = vmatpush1.msra.mxu0 0.0
        %2690 = vmatprep.subr.mxu0 0.0
        %2691 = vmatpush1.msra.mxu0 0.0
        %2692 = vmatprep.subr.mxu0 0.0
        %2693 = vmatpush1.msra.mxu0 0.0
        %2694 = vmatprep.subr.mxu0 0.0
        %2695 = vmatpush1.msra.mxu0 0.0
        %2696 = vmatprep.subr.mxu0 0.0
        %2697 = vmatpush1.msra.mxu0 0.0
        %2698 = vmatprep.subr.mxu0 0.0
        %2699 = vmatpush1.msra.mxu0 0.0
        %2700 = vmatprep.subr.mxu0 0.0
        %2701 = vmatpush1.msra.mxu0 0.0
        %2702 = vmatprep.subr.mxu0 0.0
        %2703 = vmatpush1.msra.mxu0 0.0
        %2704 = vmatprep.subr.mxu0 0.0
        %2705 = vmatpush1.msra.mxu0 0.0
        %2706 = vmatprep.subr.mxu0 0.0
        %2707 = vmatpush1.msra.mxu0 0.0
        %2708 = vmatprep.subr.mxu0 0.0
        %2709 = vmatpush1.msra.mxu0 0.0
        %2710 = vmatprep.subr.mxu0 0.0
        %2711 = vmatpush1.msra.mxu0 0.0
        %2712 = vmatprep.mubr.f32.mxu0 0.0
        %2713 = vmatmul.mubr.f32.gmra.mrb[0].mxu0 %v2639
        %v2714 = vpop.f32.mrb[0].mxu0
        %v2715 = vadd.f32 0.0, %v2714
        %v2716 = vpop.f32.mrb[0].mxu0
        %v2717 = vadd.f32 0.0, %v2716
        %2718 = vdwg.mxu0
        %2719 = vmatprep.subr.mxu0 0.0
        %2720 = vmatpush1.msra.mxu0 %v2418
        %2721 = vmatprep.subr.mxu0 0.0
        %2722 = vmatpush1.msra.mxu0 %v2421
        %2723 = vmatprep.subr.mxu0 0.0
        %2724 = vmatpush1.msra.mxu0 %v2424
        %2725 = vmatprep.subr.mxu0 0.0
        %2726 = vmatpush1.msra.mxu0 %v2427
        %2727 = vmatprep.subr.mxu0 0.0
        %2728 = vmatpush1.msra.mxu0 %v2430
        %2729 = vmatprep.subr.mxu0 0.0
        %2730 = vmatpush1.msra.mxu0 %v2433
        %2731 = vmatprep.subr.mxu0 0.0
        %2732 = vmatpush1.msra.mxu0 %v2436
        %2733 = vmatprep.subr.mxu0 0.0
        %2734 = vmatpush1.msra.mxu0 %v2439
        %2735 = vmatprep.subr.mxu0 0.0
        %2736 = vmatpush1.msra.mxu0 %v2442
        %2737 = vmatprep.subr.mxu0 0.0
        %2738 = vmatpush1.msra.mxu0 %v2445
        %2739 = vmatprep.subr.mxu0 0.0
        %2740 = vmatpush1.msra.mxu0 %v2448
        %2741 = vmatprep.subr.mxu0 0.0
        %2742 = vmatpush1.msra.mxu0 %v2451
        %2743 = vmatprep.subr.mxu0 0.0
        %2744 = vmatpush1.msra.mxu0 %v2454
        %2745 = vmatprep.subr.mxu0 0.0
        %2746 = vmatpush1.msra.mxu0 %v2457
        %2747 = vmatprep.subr.mxu0 0.0
        %2748 = vmatpush1.msra.mxu0 %v2460
        %2749 = vmatprep.subr.mxu0 0.0
        %2750 = vmatpush1.msra.mxu0 %v2463
        %2751 = vmatprep.subr.mxu0 0.0
        %2752 = vmatpush1.msra.mxu0 0.0
        %2753 = vmatprep.subr.mxu0 0.0
        %2754 = vmatpush1.msra.mxu0 0.0
        %2755 = vmatprep.subr.mxu0 0.0
        %2756 = vmatpush1.msra.mxu0 0.0
        %2757 = vmatprep.subr.mxu0 0.0
        %2758 = vmatpush1.msra.mxu0 0.0
        %2759 = vmatprep.subr.mxu0 0.0
        %2760 = vmatpush1.msra.mxu0 0.0
        %2761 = vmatprep.subr.mxu0 0.0
        %2762 = vmatpush1.msra.mxu0 0.0
        %2763 = vmatprep.subr.mxu0 0.0
        %2764 = vmatpush1.msra.mxu0 0.0
        %2765 = vmatprep.subr.mxu0 0.0
        %2766 = vmatpush1.msra.mxu0 0.0
        %2767 = vmatprep.subr.mxu0 0.0
        %2768 = vmatpush1.msra.mxu0 0.0
        %2769 = vmatprep.subr.mxu0 0.0
        %2770 = vmatpush1.msra.mxu0 0.0
        %2771 = vmatprep.subr.mxu0 0.0
        %2772 = vmatpush1.msra.mxu0 0.0
        %2773 = vmatprep.subr.mxu0 0.0
        %2774 = vmatpush1.msra.mxu0 0.0
        %2775 = vmatprep.subr.mxu0 0.0
        %2776 = vmatpush1.msra.mxu0 0.0
        %2777 = vmatprep.subr.mxu0 0.0
        %2778 = vmatpush1.msra.mxu0 0.0
        %2779 = vmatprep.subr.mxu0 0.0
        %2780 = vmatpush1.msra.mxu0 0.0
        %2781 = vmatprep.subr.mxu0 0.0
        %2782 = vmatpush1.msra.mxu0 0.0
        %2783 = vmatprep.mubr.f32.mxu0 0.0
        %2784 = vmatmul.mubr.f32.gmra.mrb[0].mxu0 %v2639
        %v2785 = vpop.f32.mrb[0].mxu0
        %v2786 = vadd.f32 0.0, %v2785
        %v2787 = vpop.f32.mrb[0].mxu0
        %2788 = vdwg.mxu0
        %v2789 = vadd.f32 %v2645, %v2715
        %v2790 = vxor.u32 %v2789, 2147483648
        %v2791 = vmul.f32 %v2790, 1.442695
        %v2792 = vpow.pop %v2791
        %v2793 = vadd.f32 %v2792, 1.0
        %v2794 = vrcp.pop %v2793
        %v2795 = vmul.f32 1.0, %v2794
        %v2796 = vadd.f32 %v2646, %v2717
        %v2797 = vxor.u32 %v2796, 2147483648
        %v2798 = vmul.f32 %v2797, 1.442695
        %v2799 = vpow.pop %v2798
        %v2800 = vadd.f32 %v2799, 1.0
        %v2801 = vrcp.pop %v2800
        %v2802 = vmul.f32 1.0, %v2801
        %v2803 = vadd.f32 %v2786, %v2469
        %v2804 = vmul.f32 %v2795, %v2803
        %v2805 = vadd.f32 %v2647, %v2804
        %v2806 = vtanh.pop %v2805
        %v2807 = vsub.f32 %v2639, %v2806
        %v2808 = vmul.f32 %v2802, %v2807
        %v2809 = vadd.f32 %v2806, %v2808
        %s2810 = scalar_lea.vmem %s283, 8
        %2811 = vst [vmem:[%s2810] sm:$0xff] %v2809
        %s2812 = sadd.s32 %s2415, 2
        %s2813 = smul.u32 %s2812, 3
        %s2814 = smul.addr %s2813, 8
        %s2815 = scalar_lea.vmem [#allocation3], %s2814
        %v2816 = vld [vmem:[%s2815] sm:$0xff]
        %v2817 = vld [vmem:[%s2815 + $0x8] sm:$0xff]
        %v2818 = vld [vmem:[%s2815 + $0x10] sm:$0xff]
        %2819 = vmatprep.subr.mxu0 %v2417
        %2820 = vmatpush1.msra.mxu0 %v2416
        %2821 = vmatprep.subr.mxu0 %v2420
        %2822 = vmatpush1.msra.mxu0 %v2419
        %2823 = vmatprep.subr.mxu0 %v2423
        %2824 = vmatpush1.msra.mxu0 %v2422
        %2825 = vmatprep.subr.mxu0 %v2426
        %2826 = vmatpush1.msra.mxu0 %v2425
        %2827 = vmatprep.subr.mxu0 %v2429
        %2828 = vmatpush1.msra.mxu0 %v2428
        %2829 = vmatprep.subr.mxu0 %v2432
        %2830 = vmatpush1.msra.mxu0 %v2431
        %2831 = vmatprep.subr.mxu0 %v2435
        %2832 = vmatpush1.msra.mxu0 %v2434
        %2833 = vmatprep.subr.mxu0 %v2438
        %2834 = vmatpush1.msra.mxu0 %v2437
        %2835 = vmatprep.subr.mxu0 %v2441
        %2836 = vmatpush1.msra.mxu0 %v2440
        %2837 = vmatprep.subr.mxu0 %v2444
        %2838 = vmatpush1.msra.mxu0 %v2443
        %2839 = vmatprep.subr.mxu0 %v2447
        %2840 = vmatpush1.msra.mxu0 %v2446
        %2841 = vmatprep.subr.mxu0 %v2450
        %2842 = vmatpush1.msra.mxu0 %v2449
        %2843 = vmatprep.subr.mxu0 %v2453
        %2844 = vmatpush1.msra.mxu0 %v2452
        %2845 = vmatprep.subr.mxu0 %v2456
        %2846 = vmatpush1.msra.mxu0 %v2455
        %2847 = vmatprep.subr.mxu0 %v2459
        %2848 = vmatpush1.msra.mxu0 %v2458
        %2849 = vmatprep.subr.mxu0 %v2462
        %2850 = vmatpush1.msra.mxu0 %v2461
        %2851 = vmatprep.subr.mxu0 0.0
        %2852 = vmatpush1.msra.mxu0 0.0
        %2853 = vmatprep.subr.mxu0 0.0
        %2854 = vmatpush1.msra.mxu0 0.0
        %2855 = vmatprep.subr.mxu0 0.0
        %2856 = vmatpush1.msra.mxu0 0.0
        %2857 = vmatprep.subr.mxu0 0.0
        %2858 = vmatpush1.msra.mxu0 0.0
        %2859 = vmatprep.subr.mxu0 0.0
        %2860 = vmatpush1.msra.mxu0 0.0
        %2861 = vmatprep.subr.mxu0 0.0
        %2862 = vmatpush1.msra.mxu0 0.0
        %2863 = vmatprep.subr.mxu0 0.0
        %2864 = vmatpush1.msra.mxu0 0.0
        %2865 = vmatprep.subr.mxu0 0.0
        %2866 = vmatpush1.msra.mxu0 0.0
        %2867 = vmatprep.subr.mxu0 0.0
        %2868 = vmatpush1.msra.mxu0 0.0
        %2869 = vmatprep.subr.mxu0 0.0
        %2870 = vmatpush1.msra.mxu0 0.0
        %2871 = vmatprep.subr.mxu0 0.0
        %2872 = vmatpush1.msra.mxu0 0.0
        %2873 = vmatprep.subr.mxu0 0.0
        %2874 = vmatpush1.msra.mxu0 0.0
        %2875 = vmatprep.subr.mxu0 0.0
        %2876 = vmatpush1.msra.mxu0 0.0
        %2877 = vmatprep.subr.mxu0 0.0
        %2878 = vmatpush1.msra.mxu0 0.0
        %2879 = vmatprep.subr.mxu0 0.0
        %2880 = vmatpush1.msra.mxu0 0.0
        %2881 = vmatprep.subr.mxu0 0.0
        %2882 = vmatpush1.msra.mxu0 0.0
        %2883 = vmatprep.mubr.f32.mxu0 0.0
        %2884 = vmatmul.mubr.f32.gmra.mrb[0].mxu0 %v2809
        %v2885 = vpop.f32.mrb[0].mxu0
        %v2886 = vadd.f32 0.0, %v2885
        %v2887 = vpop.f32.mrb[0].mxu0
        %v2888 = vadd.f32 0.0, %v2887
        %2889 = vdwg.mxu0
        %2890 = vmatprep.subr.mxu0 0.0
        %2891 = vmatpush1.msra.mxu0 %v2418
        %2892 = vmatprep.subr.mxu0 0.0
        %2893 = vmatpush1.msra.mxu0 %v2421
        %2894 = vmatprep.subr.mxu0 0.0
        %2895 = vmatpush1.msra.mxu0 %v2424
        %2896 = vmatprep.subr.mxu0 0.0
        %2897 = vmatpush1.msra.mxu0 %v2427
        %2898 = vmatprep.subr.mxu0 0.0
        %2899 = vmatpush1.msra.mxu0 %v2430
        %2900 = vmatprep.subr.mxu0 0.0
        %2901 = vmatpush1.msra.mxu0 %v2433
        %2902 = vmatprep.subr.mxu0 0.0
        %2903 = vmatpush1.msra.mxu0 %v2436
        %2904 = vmatprep.subr.mxu0 0.0
        %2905 = vmatpush1.msra.mxu0 %v2439
        %2906 = vmatprep.subr.mxu0 0.0
        %2907 = vmatpush1.msra.mxu0 %v2442
        %2908 = vmatprep.subr.mxu0 0.0
        %2909 = vmatpush1.msra.mxu0 %v2445
        %2910 = vmatprep.subr.mxu0 0.0
        %2911 = vmatpush1.msra.mxu0 %v2448
        %2912 = vmatprep.subr.mxu0 0.0
        %2913 = vmatpush1.msra.mxu0 %v2451
        %2914 = vmatprep.subr.mxu0 0.0
        %2915 = vmatpush1.msra.mxu0 %v2454
        %2916 = vmatprep.subr.mxu0 0.0
        %2917 = vmatpush1.msra.mxu0 %v2457
        %2918 = vmatprep.subr.mxu0 0.0
        %2919 = vmatpush1.msra.mxu0 %v2460
        %2920 = vmatprep.subr.mxu0 0.0
        %2921 = vmatpush1.msra.mxu0 %v2463
        %2922 = vmatprep.subr.mxu0 0.0
        %2923 = vmatpush1.msra.mxu0 0.0
        %2924 = vmatprep.subr.mxu0 0.0
        %2925 = vmatpush1.msra.mxu0 0.0
        %2926 = vmatprep.subr.mxu0 0.0
        %2927 = vmatpush1.msra.mxu0 0.0
        %2928 = vmatprep.subr.mxu0 0.0
        %2929 = vmatpush1.msra.mxu0 0.0
        %2930 = vmatprep.subr.mxu0 0.0
        %2931 = vmatpush1.msra.mxu0 0.0
        %2932 = vmatprep.subr.mxu0 0.0
        %2933 = vmatpush1.msra.mxu0 0.0
        %2934 = vmatprep.subr.mxu0 0.0
        %2935 = vmatpush1.msra.mxu0 0.0
        %2936 = vmatprep.subr.mxu0 0.0
        %2937 = vmatpush1.msra.mxu0 0.0
        %2938 = vmatprep.subr.mxu0 0.0
        %2939 = vmatpush1.msra.mxu0 0.0
        %2940 = vmatprep.subr.mxu0 0.0
        %2941 = vmatpush1.msra.mxu0 0.0
        %2942 = vmatprep.subr.mxu0 0.0
        %2943 = vmatpush1.msra.mxu0 0.0
        %2944 = vmatprep.subr.mxu0 0.0
        %2945 = vmatpush1.msra.mxu0 0.0
        %2946 = vmatprep.subr.mxu0 0.0
        %2947 = vmatpush1.msra.mxu0 0.0
        %2948 = vmatprep.subr.mxu0 0.0
        %2949 = vmatpush1.msra.mxu0 0.0
        %2950 = vmatprep.subr.mxu0 0.0
        %2951 = vmatpush1.msra.mxu0 0.0
        %2952 = vmatprep.subr.mxu0 0.0
        %2953 = vmatpush1.msra.mxu0 0.0
        %2954 = vmatprep.mubr.f32.mxu0 0.0
        %2955 = vmatmul.mubr.f32.gmra.mrb[0].mxu0 %v2809
        %v2956 = vpop.f32.mrb[0].mxu0
        %v2957 = vadd.f32 0.0, %v2956
        %v2958 = vpop.f32.mrb[0].mxu0
        %2959 = vdwg.mxu0
        %v2960 = vadd.f32 %v2816, %v2886
        %v2961 = vxor.u32 %v2960, 2147483648
        %v2962 = vmul.f32 %v2961, 1.442695
        %v2963 = vpow.pop %v2962
        %v2964 = vadd.f32 %v2963, 1.0
        %v2965 = vrcp.pop %v2964
        %v2966 = vmul.f32 1.0, %v2965
        %v2967 = vadd.f32 %v2817, %v2888
        %v2968 = vxor.u32 %v2967, 2147483648
        %v2969 = vmul.f32 %v2968, 1.442695
        %v2970 = vpow.pop %v2969
        %v2971 = vadd.f32 %v2970, 1.0
        %v2972 = vrcp.pop %v2971
        %v2973 = vmul.f32 1.0, %v2972
        %v2974 = vadd.f32 %v2957, %v2469
        %v2975 = vmul.f32 %v2966, %v2974
        %v2976 = vadd.f32 %v2818, %v2975
        %v2977 = vtanh.pop %v2976
        %v2978 = vsub.f32 %v2809, %v2977
        %v2979 = vmul.f32 %v2973, %v2978
        %v2980 = vadd.f32 %v2977, %v2979
        %s2981 = scalar_lea.vmem %s283, 16
        %2982 = vst [vmem:[%s2981] sm:$0xff] %v2980
        %s2983 = sadd.s32 %s2415, 3
        %s2984 = smul.u32 %s2983, 3
        %s2985 = smul.addr %s2984, 8
        %s2986 = scalar_lea.vmem [#allocation3], %s2985
        %v2987 = vld [vmem:[%s2986] sm:$0xff]
        %v2988 = vld [vmem:[%s2986 + $0x8] sm:$0xff]
        %v2989 = vld [vmem:[%s2986 + $0x10] sm:$0xff]
        %2990 = vmatprep.subr.mxu0 %v2417
        %2991 = vmatpush1.msra.mxu0 %v2416
        %2992 = vmatprep.subr.mxu0 %v2420
        %2993 = vmatpush1.msra.mxu0 %v2419
        %2994 = vmatprep.subr.mxu0 %v2423
        %2995 = vmatpush1.msra.mxu0 %v2422
        %2996 = vmatprep.subr.mxu0 %v2426
        %2997 = vmatpush1.msra.mxu0 %v2425
        %2998 = vmatprep.subr.mxu0 %v2429
        %2999 = vmatpush1.msra.mxu0 %v2428
        %3000 = vmatprep.subr.mxu0 %v2432
        %3001 = vmatpush1.msra.mxu0 %v2431
        %3002 = vmatprep.subr.mxu0 %v2435
        %3003 = vmatpush1.msra.mxu0 %v2434
        %3004 = vmatprep.subr.mxu0 %v2438
        %3005 = vmatpush1.msra.mxu0 %v2437
        %3006 = vmatprep.subr.mxu0 %v2441
        %3007 = vmatpush1.msra.mxu0 %v2440
        %3008 = vmatprep.subr.mxu0 %v2444
        %3009 = vmatpush1.msra.mxu0 %v2443
        %3010 = vmatprep.subr.mxu0 %v2447
        %3011 = vmatpush1.msra.mxu0 %v2446
        %3012 = vmatprep.subr.mxu0 %v2450
        %3013 = vmatpush1.msra.mxu0 %v2449
        %3014 = vmatprep.subr.mxu0 %v2453
        %3015 = vmatpush1.msra.mxu0 %v2452
        %3016 = vmatprep.subr.mxu0 %v2456
        %3017 = vmatpush1.msra.mxu0 %v2455
        %3018 = vmatprep.subr.mxu0 %v2459
        %3019 = vmatpush1.msra.mxu0 %v2458
        %3020 = vmatprep.subr.mxu0 %v2462
        %3021 = vmatpush1.msra.mxu0 %v2461
        %3022 = vmatprep.subr.mxu0 0.0
        %3023 = vmatpush1.msra.mxu0 0.0
        %3024 = vmatprep.subr.mxu0 0.0
        %3025 = vmatpush1.msra.mxu0 0.0
        %3026 = vmatprep.subr.mxu0 0.0
        %3027 = vmatpush1.msra.mxu0 0.0
        %3028 = vmatprep.subr.mxu0 0.0
        %3029 = vmatpush1.msra.mxu0 0.0
        %3030 = vmatprep.subr.mxu0 0.0
        %3031 = vmatpush1.msra.mxu0 0.0
        %3032 = vmatprep.subr.mxu0 0.0
        %3033 = vmatpush1.msra.mxu0 0.0
        %3034 = vmatprep.subr.mxu0 0.0
        %3035 = vmatpush1.msra.mxu0 0.0
        %3036 = vmatprep.subr.mxu0 0.0
        %3037 = vmatpush1.msra.mxu0 0.0
        %3038 = vmatprep.subr.mxu0 0.0
        %3039 = vmatpush1.msra.mxu0 0.0
        %3040 = vmatprep.subr.mxu0 0.0
        %3041 = vmatpush1.msra.mxu0 0.0
        %3042 = vmatprep.subr.mxu0 0.0
        %3043 = vmatpush1.msra.mxu0 0.0
        %3044 = vmatprep.subr.mxu0 0.0
        %3045 = vmatpush1.msra.mxu0 0.0
        %3046 = vmatprep.subr.mxu0 0.0
        %3047 = vmatpush1.msra.mxu0 0.0
        %3048 = vmatprep.subr.mxu0 0.0
        %3049 = vmatpush1.msra.mxu0 0.0
        %3050 = vmatprep.subr.mxu0 0.0
        %3051 = vmatpush1.msra.mxu0 0.0
        %3052 = vmatprep.subr.mxu0 0.0
        %3053 = vmatpush1.msra.mxu0 0.0
        %3054 = vmatprep.mubr.f32.mxu0 0.0
        %3055 = vmatmul.mubr.f32.gmra.mrb[0].mxu0 %v2980
        %v3056 = vpop.f32.mrb[0].mxu0
        %v3057 = vadd.f32 0.0, %v3056
        %v3058 = vpop.f32.mrb[0].mxu0
        %v3059 = vadd.f32 0.0, %v3058
        %3060 = vdwg.mxu0
        %3061 = vmatprep.subr.mxu0 0.0
        %3062 = vmatpush1.msra.mxu0 %v2418
        %3063 = vmatprep.subr.mxu0 0.0
        %3064 = vmatpush1.msra.mxu0 %v2421
        %3065 = vmatprep.subr.mxu0 0.0
        %3066 = vmatpush1.msra.mxu0 %v2424
        %3067 = vmatprep.subr.mxu0 0.0
        %3068 = vmatpush1.msra.mxu0 %v2427
        %3069 = vmatprep.subr.mxu0 0.0
        %3070 = vmatpush1.msra.mxu0 %v2430
        %3071 = vmatprep.subr.mxu0 0.0
        %3072 = vmatpush1.msra.mxu0 %v2433
        %3073 = vmatprep.subr.mxu0 0.0
        %3074 = vmatpush1.msra.mxu0 %v2436
        %3075 = vmatprep.subr.mxu0 0.0
        %3076 = vmatpush1.msra.mxu0 %v2439
        %3077 = vmatprep.subr.mxu0 0.0
        %3078 = vmatpush1.msra.mxu0 %v2442
        %3079 = vmatprep.subr.mxu0 0.0
        %3080 = vmatpush1.msra.mxu0 %v2445
        %3081 = vmatprep.subr.mxu0 0.0
        %3082 = vmatpush1.msra.mxu0 %v2448
        %3083 = vmatprep.subr.mxu0 0.0
        %3084 = vmatpush1.msra.mxu0 %v2451
        %3085 = vmatprep.subr.mxu0 0.0
        %3086 = vmatpush1.msra.mxu0 %v2454
        %3087 = vmatprep.subr.mxu0 0.0
        %3088 = vmatpush1.msra.mxu0 %v2457
        %3089 = vmatprep.subr.mxu0 0.0
        %3090 = vmatpush1.msra.mxu0 %v2460
        %3091 = vmatprep.subr.mxu0 0.0
        %3092 = vmatpush1.msra.mxu0 %v2463
        %3093 = vmatprep.subr.mxu0 0.0
        %3094 = vmatpush1.msra.mxu0 0.0
        %3095 = vmatprep.subr.mxu0 0.0
        %3096 = vmatpush1.msra.mxu0 0.0
        %3097 = vmatprep.subr.mxu0 0.0
        %3098 = vmatpush1.msra.mxu0 0.0
        %3099 = vmatprep.subr.mxu0 0.0
        %3100 = vmatpush1.msra.mxu0 0.0
        %3101 = vmatprep.subr.mxu0 0.0
        %3102 = vmatpush1.msra.mxu0 0.0
        %3103 = vmatprep.subr.mxu0 0.0
        %3104 = vmatpush1.msra.mxu0 0.0
        %3105 = vmatprep.subr.mxu0 0.0
        %3106 = vmatpush1.msra.mxu0 0.0
        %3107 = vmatprep.subr.mxu0 0.0
        %3108 = vmatpush1.msra.mxu0 0.0
        %3109 = vmatprep.subr.mxu0 0.0
        %3110 = vmatpush1.msra.mxu0 0.0
        %3111 = vmatprep.subr.mxu0 0.0
        %3112 = vmatpush1.msra.mxu0 0.0
        %3113 = vmatprep.subr.mxu0 0.0
        %3114 = vmatpush1.msra.mxu0 0.0
        %3115 = vmatprep.subr.mxu0 0.0
        %3116 = vmatpush1.msra.mxu0 0.0
        %3117 = vmatprep.subr.mxu0 0.0
        %3118 = vmatpush1.msra.mxu0 0.0
        %3119 = vmatprep.subr.mxu0 0.0
        %3120 = vmatpush1.msra.mxu0 0.0
        %3121 = vmatprep.subr.mxu0 0.0
        %3122 = vmatpush1.msra.mxu0 0.0
        %3123 = vmatprep.subr.mxu0 0.0
        %3124 = vmatpush1.msra.mxu0 0.0
        %3125 = vmatprep.mubr.f32.mxu0 0.0
        %3126 = vmatmul.mubr.f32.gmra.mrb[0].mxu0 %v2980
        %v3127 = vpop.f32.mrb[0].mxu0
        %v3128 = vadd.f32 0.0, %v3127
        %v3129 = vpop.f32.mrb[0].mxu0
        %3130 = vdwg.mxu0
        %v3131 = vadd.f32 %v2987, %v3057
        %v3132 = vxor.u32 %v3131, 2147483648
        %v3133 = vmul.f32 %v3132, 1.442695
        %v3134 = vpow.pop %v3133
        %v3135 = vadd.f32 %v3134, 1.0
        %v3136 = vrcp.pop %v3135
        %v3137 = vmul.f32 1.0, %v3136
        %v3138 = vadd.f32 %v2988, %v3059
        %v3139 = vxor.u32 %v3138, 2147483648
        %v3140 = vmul.f32 %v3139, 1.442695
        %v3141 = vpow.pop %v3140
        %v3142 = vadd.f32 %v3141, 1.0
        %v3143 = vrcp.pop %v3142
        %v3144 = vmul.f32 1.0, %v3143
        %v3145 = vadd.f32 %v3128, %v2469
        %v3146 = vmul.f32 %v3137, %v3145
        %v3147 = vadd.f32 %v2989, %v3146
        %v3148 = vtanh.pop %v3147
        %v3149 = vsub.f32 %v2980, %v3148
        %v3150 = vmul.f32 %v3144, %v3149
        %v3151 = vadd.f32 %v3148, %v3150
        %s3152 = scalar_lea.vmem %s283, 24
        %3153 = vst [vmem:[%s3152] sm:$0xff] %v3151
        %s3154 = sadd.s32 %s2415, 4
        %s3155 = smul.u32 %s3154, 3
        %s3156 = smul.addr %s3155, 8
        %s3157 = scalar_lea.vmem [#allocation3], %s3156
        %v3158 = vld [vmem:[%s3157] sm:$0xff]
        %v3159 = vld [vmem:[%s3157 + $0x8] sm:$0xff]
        %v3160 = vld [vmem:[%s3157 + $0x10] sm:$0xff]
        %3161 = vmatprep.subr.mxu0 %v2417
        %3162 = vmatpush1.msra.mxu0 %v2416
        %3163 = vmatprep.subr.mxu0 %v2420
        %3164 = vmatpush1.msra.mxu0 %v2419
        %3165 = vmatprep.subr.mxu0 %v2423
        %3166 = vmatpush1.msra.mxu0 %v2422
        %3167 = vmatprep.subr.mxu0 %v2426
        %3168 = vmatpush1.msra.mxu0 %v2425
        %3169 = vmatprep.subr.mxu0 %v2429
        %3170 = vmatpush1.msra.mxu0 %v2428
        %3171 = vmatprep.subr.mxu0 %v2432
        %3172 = vmatpush1.msra.mxu0 %v2431
        %3173 = vmatprep.subr.mxu0 %v2435
        %3174 = vmatpush1.msra.mxu0 %v2434
        %3175 = vmatprep.subr.mxu0 %v2438
        %3176 = vmatpush1.msra.mxu0 %v2437
        %3177 = vmatprep.subr.mxu0 %v2441
        %3178 = vmatpush1.msra.mxu0 %v2440
        %3179 = vmatprep.subr.mxu0 %v2444
        %3180 = vmatpush1.msra.mxu0 %v2443
        %3181 = vmatprep.subr.mxu0 %v2447
        %3182 = vmatpush1.msra.mxu0 %v2446
        %3183 = vmatprep.subr.mxu0 %v2450
        %3184 = vmatpush1.msra.mxu0 %v2449
        %3185 = vmatprep.subr.mxu0 %v2453
        %3186 = vmatpush1.msra.mxu0 %v2452
        %3187 = vmatprep.subr.mxu0 %v2456
        %3188 = vmatpush1.msra.mxu0 %v2455
        %3189 = vmatprep.subr.mxu0 %v2459
        %3190 = vmatpush1.msra.mxu0 %v2458
        %3191 = vmatprep.subr.mxu0 %v2462
        %3192 = vmatpush1.msra.mxu0 %v2461
        %3193 = vmatprep.subr.mxu0 0.0
        %3194 = vmatpush1.msra.mxu0 0.0
        %3195 = vmatprep.subr.mxu0 0.0
        %3196 = vmatpush1.msra.mxu0 0.0
        %3197 = vmatprep.subr.mxu0 0.0
        %3198 = vmatpush1.msra.mxu0 0.0
        %3199 = vmatprep.subr.mxu0 0.0
        %3200 = vmatpush1.msra.mxu0 0.0
        %3201 = vmatprep.subr.mxu0 0.0
        %3202 = vmatpush1.msra.mxu0 0.0
        %3203 = vmatprep.subr.mxu0 0.0
        %3204 = vmatpush1.msra.mxu0 0.0
        %3205 = vmatprep.subr.mxu0 0.0
        %3206 = vmatpush1.msra.mxu0 0.0
        %3207 = vmatprep.subr.mxu0 0.0
        %3208 = vmatpush1.msra.mxu0 0.0
        %3209 = vmatprep.subr.mxu0 0.0
        %3210 = vmatpush1.msra.mxu0 0.0
        %3211 = vmatprep.subr.mxu0 0.0
        %3212 = vmatpush1.msra.mxu0 0.0
        %3213 = vmatprep.subr.mxu0 0.0
        %3214 = vmatpush1.msra.mxu0 0.0
        %3215 = vmatprep.subr.mxu0 0.0
        %3216 = vmatpush1.msra.mxu0 0.0
        %3217 = vmatprep.subr.mxu0 0.0
        %3218 = vmatpush1.msra.mxu0 0.0
        %3219 = vmatprep.subr.mxu0 0.0
        %3220 = vmatpush1.msra.mxu0 0.0
        %3221 = vmatprep.subr.mxu0 0.0
        %3222 = vmatpush1.msra.mxu0 0.0
        %3223 = vmatprep.subr.mxu0 0.0
        %3224 = vmatpush1.msra.mxu0 0.0
        %3225 = vmatprep.mubr.f32.mxu0 0.0
        %3226 = vmatmul.mubr.f32.gmra.mrb[0].mxu0 %v3151
        %v3227 = vpop.f32.mrb[0].mxu0
        %v3228 = vadd.f32 0.0, %v3227
        %v3229 = vpop.f32.mrb[0].mxu0
        %v3230 = vadd.f32 0.0, %v3229
        %3231 = vdwg.mxu0
        %3232 = vmatprep.subr.mxu0 0.0
        %3233 = vmatpush1.msra.mxu0 %v2418
        %3234 = vmatprep.subr.mxu0 0.0
        %3235 = vmatpush1.msra.mxu0 %v2421
        %3236 = vmatprep.subr.mxu0 0.0
        %3237 = vmatpush1.msra.mxu0 %v2424
        %3238 = vmatprep.subr.mxu0 0.0
        %3239 = vmatpush1.msra.mxu0 %v2427
        %3240 = vmatprep.subr.mxu0 0.0
        %3241 = vmatpush1.msra.mxu0 %v2430
        %3242 = vmatprep.subr.mxu0 0.0
        %3243 = vmatpush1.msra.mxu0 %v2433
        %3244 = vmatprep.subr.mxu0 0.0
        %3245 = vmatpush1.msra.mxu0 %v2436
        %3246 = vmatprep.subr.mxu0 0.0
        %3247 = vmatpush1.msra.mxu0 %v2439
        %3248 = vmatprep.subr.mxu0 0.0
        %3249 = vmatpush1.msra.mxu0 %v2442
        %3250 = vmatprep.subr.mxu0 0.0
        %3251 = vmatpush1.msra.mxu0 %v2445
        %3252 = vmatprep.subr.mxu0 0.0
        %3253 = vmatpush1.msra.mxu0 %v2448
        %3254 = vmatprep.subr.mxu0 0.0
        %3255 = vmatpush1.msra.mxu0 %v2451
        %3256 = vmatprep.subr.mxu0 0.0
        %3257 = vmatpush1.msra.mxu0 %v2454
        %3258 = vmatprep.subr.mxu0 0.0
        %3259 = vmatpush1.msra.mxu0 %v2457
        %3260 = vmatprep.subr.mxu0 0.0
        %3261 = vmatpush1.msra.mxu0 %v2460
        %3262 = vmatprep.subr.mxu0 0.0
        %3263 = vmatpush1.msra.mxu0 %v2463
        %3264 = vmatprep.subr.mxu0 0.0
        %3265 = vmatpush1.msra.mxu0 0.0
        %3266 = vmatprep.subr.mxu0 0.0
        %3267 = vmatpush1.msra.mxu0 0.0
        %3268 = vmatprep.subr.mxu0 0.0
        %3269 = vmatpush1.msra.mxu0 0.0
        %3270 = vmatprep.subr.mxu0 0.0
        %3271 = vmatpush1.msra.mxu0 0.0
        %3272 = vmatprep.subr.mxu0 0.0
        %3273 = vmatpush1.msra.mxu0 0.0
        %3274 = vmatprep.subr.mxu0 0.0
        %3275 = vmatpush1.msra.mxu0 0.0
        %3276 = vmatprep.subr.mxu0 0.0
        %3277 = vmatpush1.msra.mxu0 0.0
        %3278 = vmatprep.subr.mxu0 0.0
        %3279 = vmatpush1.msra.mxu0 0.0
        %3280 = vmatprep.subr.mxu0 0.0
        %3281 = vmatpush1.msra.mxu0 0.0
        %3282 = vmatprep.subr.mxu0 0.0
        %3283 = vmatpush1.msra.mxu0 0.0
        %3284 = vmatprep.subr.mxu0 0.0
        %3285 = vmatpush1.msra.mxu0 0.0
        %3286 = vmatprep.subr.mxu0 0.0
        %3287 = vmatpush1.msra.mxu0 0.0
        %3288 = vmatprep.subr.mxu0 0.0
        %3289 = vmatpush1.msra.mxu0 0.0
        %3290 = vmatprep.subr.mxu0 0.0
        %3291 = vmatpush1.msra.mxu0 0.0
        %3292 = vmatprep.subr.mxu0 0.0
        %3293 = vmatpush1.msra.mxu0 0.0
        %3294 = vmatprep.subr.mxu0 0.0
        %3295 = vmatpush1.msra.mxu0 0.0
        %3296 = vmatprep.mubr.f32.mxu0 0.0
        %3297 = vmatmul.mubr.f32.gmra.mrb[0].mxu0 %v3151
        %v3298 = vpop.f32.mrb[0].mxu0
        %v3299 = vadd.f32 0.0, %v3298
        %v3300 = vpop.f32.mrb[0].mxu0
        %3301 = vdwg.mxu0
        %v3302 = vadd.f32 %v3158, %v3228
        %v3303 = vxor.u32 %v3302, 2147483648
        %v3304 = vmul.f32 %v3303, 1.442695
        %v3305 = vpow.pop %v3304
        %v3306 = vadd.f32 %v3305, 1.0
        %v3307 = vrcp.pop %v3306
        %v3308 = vmul.f32 1.0, %v3307
        %v3309 = vadd.f32 %v3159, %v3230
        %v3310 = vxor.u32 %v3309, 2147483648
        %v3311 = vmul.f32 %v3310, 1.442695
        %v3312 = vpow.pop %v3311
        %v3313 = vadd.f32 %v3312, 1.0
        %v3314 = vrcp.pop %v3313
        %v3315 = vmul.f32 1.0, %v3314
        %v3316 = vadd.f32 %v3299, %v2469
        %v3317 = vmul.f32 %v3308, %v3316
        %v3318 = vadd.f32 %v3160, %v3317
        %v3319 = vtanh.pop %v3318
        %v3320 = vsub.f32 %v3151, %v3319
        %v3321 = vmul.f32 %v3315, %v3320
        %v3322 = vadd.f32 %v3319, %v3321
        %s3323 = scalar_lea.vmem %s283, 32
        %3324 = vst [vmem:[%s3323] sm:$0xff] %v3322
        %s3325 = sadd.s32 %s2415, 5
        %s3326 = smul.u32 %s3325, 3
        %s3327 = smul.addr %s3326, 8
        %s3328 = scalar_lea.vmem [#allocation3], %s3327
        %v3329 = vld [vmem:[%s3328] sm:$0xff]
        %v3330 = vld [vmem:[%s3328 + $0x8] sm:$0xff]
        %v3331 = vld [vmem:[%s3328 + $0x10] sm:$0xff]
        %3332 = vmatprep.subr.mxu0 %v2417
        %3333 = vmatpush1.msra.mxu0 %v2416
        %3334 = vmatprep.subr.mxu0 %v2420
        %3335 = vmatpush1.msra.mxu0 %v2419
        %3336 = vmatprep.subr.mxu0 %v2423
        %3337 = vmatpush1.msra.mxu0 %v2422
        %3338 = vmatprep.subr.mxu0 %v2426
        %3339 = vmatpush1.msra.mxu0 %v2425
        %3340 = vmatprep.subr.mxu0 %v2429
        %3341 = vmatpush1.msra.mxu0 %v2428
        %3342 = vmatprep.subr.mxu0 %v2432
        %3343 = vmatpush1.msra.mxu0 %v2431
        %3344 = vmatprep.subr.mxu0 %v2435
        %3345 = vmatpush1.msra.mxu0 %v2434
        %3346 = vmatprep.subr.mxu0 %v2438
        %3347 = vmatpush1.msra.mxu0 %v2437
        %3348 = vmatprep.subr.mxu0 %v2441
        %3349 = vmatpush1.msra.mxu0 %v2440
        %3350 = vmatprep.subr.mxu0 %v2444
        %3351 = vmatpush1.msra.mxu0 %v2443
        %3352 = vmatprep.subr.mxu0 %v2447
        %3353 = vmatpush1.msra.mxu0 %v2446
        %3354 = vmatprep.subr.mxu0 %v2450
        %3355 = vmatpush1.msra.mxu0 %v2449
        %3356 = vmatprep.subr.mxu0 %v2453
        %3357 = vmatpush1.msra.mxu0 %v2452
        %3358 = vmatprep.subr.mxu0 %v2456
        %3359 = vmatpush1.msra.mxu0 %v2455
        %3360 = vmatprep.subr.mxu0 %v2459
        %3361 = vmatpush1.msra.mxu0 %v2458
        %3362 = vmatprep.subr.mxu0 %v2462
        %3363 = vmatpush1.msra.mxu0 %v2461
        %3364 = vmatprep.subr.mxu0 0.0
        %3365 = vmatpush1.msra.mxu0 0.0
        %3366 = vmatprep.subr.mxu0 0.0
        %3367 = vmatpush1.msra.mxu0 0.0
        %3368 = vmatprep.subr.mxu0 0.0
        %3369 = vmatpush1.msra.mxu0 0.0
        %3370 = vmatprep.subr.mxu0 0.0
        %3371 = vmatpush1.msra.mxu0 0.0
        %3372 = vmatprep.subr.mxu0 0.0
        %3373 = vmatpush1.msra.mxu0 0.0
        %3374 = vmatprep.subr.mxu0 0.0
        %3375 = vmatpush1.msra.mxu0 0.0
        %3376 = vmatprep.subr.mxu0 0.0
        %3377 = vmatpush1.msra.mxu0 0.0
        %3378 = vmatprep.subr.mxu0 0.0
        %3379 = vmatpush1.msra.mxu0 0.0
        %3380 = vmatprep.subr.mxu0 0.0
        %3381 = vmatpush1.msra.mxu0 0.0
        %3382 = vmatprep.subr.mxu0 0.0
        %3383 = vmatpush1.msra.mxu0 0.0
        %3384 = vmatprep.subr.mxu0 0.0
        %3385 = vmatpush1.msra.mxu0 0.0
        %3386 = vmatprep.subr.mxu0 0.0
        %3387 = vmatpush1.msra.mxu0 0.0
        %3388 = vmatprep.subr.mxu0 0.0
        %3389 = vmatpush1.msra.mxu0 0.0
        %3390 = vmatprep.subr.mxu0 0.0
        %3391 = vmatpush1.msra.mxu0 0.0
        %3392 = vmatprep.subr.mxu0 0.0
        %3393 = vmatpush1.msra.mxu0 0.0
        %3394 = vmatprep.subr.mxu0 0.0
        %3395 = vmatpush1.msra.mxu0 0.0
        %3396 = vmatprep.mubr.f32.mxu0 0.0
        %3397 = vmatmul.mubr.f32.gmra.mrb[0].mxu0 %v3322
        %v3398 = vpop.f32.mrb[0].mxu0
        %v3399 = vadd.f32 0.0, %v3398
        %v3400 = vpop.f32.mrb[0].mxu0
        %v3401 = vadd.f32 0.0, %v3400
        %3402 = vdwg.mxu0
        %3403 = vmatprep.subr.mxu0 0.0
        %3404 = vmatpush1.msra.mxu0 %v2418
        %3405 = vmatprep.subr.mxu0 0.0
        %3406 = vmatpush1.msra.mxu0 %v2421
        %3407 = vmatprep.subr.mxu0 0.0
        %3408 = vmatpush1.msra.mxu0 %v2424
        %3409 = vmatprep.subr.mxu0 0.0
        %3410 = vmatpush1.msra.mxu0 %v2427
        %3411 = vmatprep.subr.mxu0 0.0
        %3412 = vmatpush1.msra.mxu0 %v2430
        %3413 = vmatprep.subr.mxu0 0.0
        %3414 = vmatpush1.msra.mxu0 %v2433
        %3415 = vmatprep.subr.mxu0 0.0
        %3416 = vmatpush1.msra.mxu0 %v2436
        %3417 = vmatprep.subr.mxu0 0.0
        %3418 = vmatpush1.msra.mxu0 %v2439
        %3419 = vmatprep.subr.mxu0 0.0
        %3420 = vmatpush1.msra.mxu0 %v2442
        %3421 = vmatprep.subr.mxu0 0.0
        %3422 = vmatpush1.msra.mxu0 %v2445
        %3423 = vmatprep.subr.mxu0 0.0
        %3424 = vmatpush1.msra.mxu0 %v2448
        %3425 = vmatprep.subr.mxu0 0.0
        %3426 = vmatpush1.msra.mxu0 %v2451
        %3427 = vmatprep.subr.mxu0 0.0
        %3428 = vmatpush1.msra.mxu0 %v2454
        %3429 = vmatprep.subr.mxu0 0.0
        %3430 = vmatpush1.msra.mxu0 %v2457
        %3431 = vmatprep.subr.mxu0 0.0
        %3432 = vmatpush1.msra.mxu0 %v2460
        %3433 = vmatprep.subr.mxu0 0.0
        %3434 = vmatpush1.msra.mxu0 %v2463
        %3435 = vmatprep.subr.mxu0 0.0
        %3436 = vmatpush1.msra.mxu0 0.0
        %3437 = vmatprep.subr.mxu0 0.0
        %3438 = vmatpush1.msra.mxu0 0.0
        %3439 = vmatprep.subr.mxu0 0.0
        %3440 = vmatpush1.msra.mxu0 0.0
        %3441 = vmatprep.subr.mxu0 0.0
        %3442 = vmatpush1.msra.mxu0 0.0
        %3443 = vmatprep.subr.mxu0 0.0
        %3444 = vmatpush1.msra.mxu0 0.0
        %3445 = vmatprep.subr.mxu0 0.0
        %3446 = vmatpush1.msra.mxu0 0.0
        %3447 = vmatprep.subr.mxu0 0.0
        %3448 = vmatpush1.msra.mxu0 0.0
        %3449 = vmatprep.subr.mxu0 0.0
        %3450 = vmatpush1.msra.mxu0 0.0
        %3451 = vmatprep.subr.mxu0 0.0
        %3452 = vmatpush1.msra.mxu0 0.0
        %3453 = vmatprep.subr.mxu0 0.0
        %3454 = vmatpush1.msra.mxu0 0.0
        %3455 = vmatprep.subr.mxu0 0.0
        %3456 = vmatpush1.msra.mxu0 0.0
        %3457 = vmatprep.subr.mxu0 0.0
        %3458 = vmatpush1.msra.mxu0 0.0
        %3459 = vmatprep.subr.mxu0 0.0
        %3460 = vmatpush1.msra.mxu0 0.0
        %3461 = vmatprep.subr.mxu0 0.0
        %3462 = vmatpush1.msra.mxu0 0.0
        %3463 = vmatprep.subr.mxu0 0.0
        %3464 = vmatpush1.msra.mxu0 0.0
        %3465 = vmatprep.subr.mxu0 0.0
        %3466 = vmatpush1.msra.mxu0 0.0
        %3467 = vmatprep.mubr.f32.mxu0 0.0
        %3468 = vmatmul.mubr.f32.gmra.mrb[0].mxu0 %v3322
        %v3469 = vpop.f32.mrb[0].mxu0
        %v3470 = vadd.f32 0.0, %v3469
        %v3471 = vpop.f32.mrb[0].mxu0
        %3472 = vdwg.mxu0
        %v3473 = vadd.f32 %v3329, %v3399
        %v3474 = vxor.u32 %v3473, 2147483648
        %v3475 = vmul.f32 %v3474, 1.442695
        %v3476 = vpow.pop %v3475
        %v3477 = vadd.f32 %v3476, 1.0
        %v3478 = vrcp.pop %v3477
        %v3479 = vmul.f32 1.0, %v3478
        %v3480 = vadd.f32 %v3330, %v3401
        %v3481 = vxor.u32 %v3480, 2147483648
        %v3482 = vmul.f32 %v3481, 1.442695
        %v3483 = vpow.pop %v3482
        %v3484 = vadd.f32 %v3483, 1.0
        %v3485 = vrcp.pop %v3484
        %v3486 = vmul.f32 1.0, %v3485
        %v3487 = vadd.f32 %v3470, %v2469
        %v3488 = vmul.f32 %v3479, %v3487
        %v3489 = vadd.f32 %v3331, %v3488
        %v3490 = vtanh.pop %v3489
        %v3491 = vsub.f32 %v3322, %v3490
        %v3492 = vmul.f32 %v3486, %v3491
        %v3493 = vadd.f32 %v3490, %v3492
        %s3494 = scalar_lea.vmem %s283, 40
        %3495 = vst [vmem:[%s3494] sm:$0xff] %v3493
        %s3496 = sadd.s32 %s2415, 6
        %s3497 = smul.u32 %s3496, 3
        %s3498 = smul.addr %s3497, 8
        %s3499 = scalar_lea.vmem [#allocation3], %s3498
        %v3500 = vld [vmem:[%s3499] sm:$0xff]
        %v3501 = vld [vmem:[%s3499 + $0x8] sm:$0xff]
        %v3502 = vld [vmem:[%s3499 + $0x10] sm:$0xff]
        %3503 = vmatprep.subr.mxu0 %v2417
        %3504 = vmatpush1.msra.mxu0 %v2416
        %3505 = vmatprep.subr.mxu0 %v2420
        %3506 = vmatpush1.msra.mxu0 %v2419
        %3507 = vmatprep.subr.mxu0 %v2423
        %3508 = vmatpush1.msra.mxu0 %v2422
        %3509 = vmatprep.subr.mxu0 %v2426
        %3510 = vmatpush1.msra.mxu0 %v2425
        %3511 = vmatprep.subr.mxu0 %v2429
        %3512 = vmatpush1.msra.mxu0 %v2428
        %3513 = vmatprep.subr.mxu0 %v2432
        %3514 = vmatpush1.msra.mxu0 %v2431
        %3515 = vmatprep.subr.mxu0 %v2435
        %3516 = vmatpush1.msra.mxu0 %v2434
        %3517 = vmatprep.subr.mxu0 %v2438
        %3518 = vmatpush1.msra.mxu0 %v2437
        %3519 = vmatprep.subr.mxu0 %v2441
        %3520 = vmatpush1.msra.mxu0 %v2440
        %3521 = vmatprep.subr.mxu0 %v2444
        %3522 = vmatpush1.msra.mxu0 %v2443
        %3523 = vmatprep.subr.mxu0 %v2447
        %3524 = vmatpush1.msra.mxu0 %v2446
        %3525 = vmatprep.subr.mxu0 %v2450
        %3526 = vmatpush1.msra.mxu0 %v2449
        %3527 = vmatprep.subr.mxu0 %v2453
        %3528 = vmatpush1.msra.mxu0 %v2452
        %3529 = vmatprep.subr.mxu0 %v2456
        %3530 = vmatpush1.msra.mxu0 %v2455
        %3531 = vmatprep.subr.mxu0 %v2459
        %3532 = vmatpush1.msra.mxu0 %v2458
        %3533 = vmatprep.subr.mxu0 %v2462
        %3534 = vmatpush1.msra.mxu0 %v2461
        %3535 = vmatprep.subr.mxu0 0.0
        %3536 = vmatpush1.msra.mxu0 0.0
        %3537 = vmatprep.subr.mxu0 0.0
        %3538 = vmatpush1.msra.mxu0 0.0
        %3539 = vmatprep.subr.mxu0 0.0
        %3540 = vmatpush1.msra.mxu0 0.0
        %3541 = vmatprep.subr.mxu0 0.0
        %3542 = vmatpush1.msra.mxu0 0.0
        %3543 = vmatprep.subr.mxu0 0.0
        %3544 = vmatpush1.msra.mxu0 0.0
        %3545 = vmatprep.subr.mxu0 0.0
        %3546 = vmatpush1.msra.mxu0 0.0
        %3547 = vmatprep.subr.mxu0 0.0
        %3548 = vmatpush1.msra.mxu0 0.0
        %3549 = vmatprep.subr.mxu0 0.0
        %3550 = vmatpush1.msra.mxu0 0.0
        %3551 = vmatprep.subr.mxu0 0.0
        %3552 = vmatpush1.msra.mxu0 0.0
        %3553 = vmatprep.subr.mxu0 0.0
        %3554 = vmatpush1.msra.mxu0 0.0
        %3555 = vmatprep.subr.mxu0 0.0
        %3556 = vmatpush1.msra.mxu0 0.0
        %3557 = vmatprep.subr.mxu0 0.0
        %3558 = vmatpush1.msra.mxu0 0.0
        %3559 = vmatprep.subr.mxu0 0.0
        %3560 = vmatpush1.msra.mxu0 0.0
        %3561 = vmatprep.subr.mxu0 0.0
        %3562 = vmatpush1.msra.mxu0 0.0
        %3563 = vmatprep.subr.mxu0 0.0
        %3564 = vmatpush1.msra.mxu0 0.0
        %3565 = vmatprep.subr.mxu0 0.0
        %3566 = vmatpush1.msra.mxu0 0.0
        %3567 = vmatprep.mubr.f32.mxu0 0.0
        %3568 = vmatmul.mubr.f32.gmra.mrb[0].mxu0 %v3493
        %v3569 = vpop.f32.mrb[0].mxu0
        %v3570 = vadd.f32 0.0, %v3569
        %v3571 = vpop.f32.mrb[0].mxu0
        %v3572 = vadd.f32 0.0, %v3571
        %3573 = vdwg.mxu0
        %3574 = vmatprep.subr.mxu0 0.0
        %3575 = vmatpush1.msra.mxu0 %v2418
        %3576 = vmatprep.subr.mxu0 0.0
        %3577 = vmatpush1.msra.mxu0 %v2421
        %3578 = vmatprep.subr.mxu0 0.0
        %3579 = vmatpush1.msra.mxu0 %v2424
        %3580 = vmatprep.subr.mxu0 0.0
        %3581 = vmatpush1.msra.mxu0 %v2427
        %3582 = vmatprep.subr.mxu0 0.0
        %3583 = vmatpush1.msra.mxu0 %v2430
        %3584 = vmatprep.subr.mxu0 0.0
        %3585 = vmatpush1.msra.mxu0 %v2433
        %3586 = vmatprep.subr.mxu0 0.0
        %3587 = vmatpush1.msra.mxu0 %v2436
        %3588 = vmatprep.subr.mxu0 0.0
        %3589 = vmatpush1.msra.mxu0 %v2439
        %3590 = vmatprep.subr.mxu0 0.0
        %3591 = vmatpush1.msra.mxu0 %v2442
        %3592 = vmatprep.subr.mxu0 0.0
        %3593 = vmatpush1.msra.mxu0 %v2445
        %3594 = vmatprep.subr.mxu0 0.0
        %3595 = vmatpush1.msra.mxu0 %v2448
        %3596 = vmatprep.subr.mxu0 0.0
        %3597 = vmatpush1.msra.mxu0 %v2451
        %3598 = vmatprep.subr.mxu0 0.0
        %3599 = vmatpush1.msra.mxu0 %v2454
        %3600 = vmatprep.subr.mxu0 0.0
        %3601 = vmatpush1.msra.mxu0 %v2457
        %3602 = vmatprep.subr.mxu0 0.0
        %3603 = vmatpush1.msra.mxu0 %v2460
        %3604 = vmatprep.subr.mxu0 0.0
        %3605 = vmatpush1.msra.mxu0 %v2463
        %3606 = vmatprep.subr.mxu0 0.0
        %3607 = vmatpush1.msra.mxu0 0.0
        %3608 = vmatprep.subr.mxu0 0.0
        %3609 = vmatpush1.msra.mxu0 0.0
        %3610 = vmatprep.subr.mxu0 0.0
        %3611 = vmatpush1.msra.mxu0 0.0
        %3612 = vmatprep.subr.mxu0 0.0
        %3613 = vmatpush1.msra.mxu0 0.0
        %3614 = vmatprep.subr.mxu0 0.0
        %3615 = vmatpush1.msra.mxu0 0.0
        %3616 = vmatprep.subr.mxu0 0.0
        %3617 = vmatpush1.msra.mxu0 0.0
        %3618 = vmatprep.subr.mxu0 0.0
        %3619 = vmatpush1.msra.mxu0 0.0
        %3620 = vmatprep.subr.mxu0 0.0
        %3621 = vmatpush1.msra.mxu0 0.0
        %3622 = vmatprep.subr.mxu0 0.0
        %3623 = vmatpush1.msra.mxu0 0.0
        %3624 = vmatprep.subr.mxu0 0.0
        %3625 = vmatpush1.msra.mxu0 0.0
        %3626 = vmatprep.subr.mxu0 0.0
        %3627 = vmatpush1.msra.mxu0 0.0
        %3628 = vmatprep.subr.mxu0 0.0
        %3629 = vmatpush1.msra.mxu0 0.0
        %3630 = vmatprep.subr.mxu0 0.0
        %3631 = vmatpush1.msra.mxu0 0.0
        %3632 = vmatprep.subr.mxu0 0.0
        %3633 = vmatpush1.msra.mxu0 0.0
        %3634 = vmatprep.subr.mxu0 0.0
        %3635 = vmatpush1.msra.mxu0 0.0
        %3636 = vmatprep.subr.mxu0 0.0
        %3637 = vmatpush1.msra.mxu0 0.0
        %3638 = vmatprep.mubr.f32.mxu0 0.0
        %3639 = vmatmul.mubr.f32.gmra.mrb[0].mxu0 %v3493
        %v3640 = vpop.f32.mrb[0].mxu0
        %v3641 = vadd.f32 0.0, %v3640
        %v3642 = vpop.f32.mrb[0].mxu0
        %3643 = vdwg.mxu0
        %v3644 = vadd.f32 %v3500, %v3570
        %v3645 = vxor.u32 %v3644, 2147483648
        %v3646 = vmul.f32 %v3645, 1.442695
        %v3647 = vpow.pop %v3646
        %v3648 = vadd.f32 %v3647, 1.0
        %v3649 = vrcp.pop %v3648
        %v3650 = vmul.f32 1.0, %v3649
        %v3651 = vadd.f32 %v3501, %v3572
        %v3652 = vxor.u32 %v3651, 2147483648
        %v3653 = vmul.f32 %v3652, 1.442695
        %v3654 = vpow.pop %v3653
        %v3655 = vadd.f32 %v3654, 1.0
        %v3656 = vrcp.pop %v3655
        %v3657 = vmul.f32 1.0, %v3656
        %v3658 = vadd.f32 %v3641, %v2469
        %v3659 = vmul.f32 %v3650, %v3658
        %v3660 = vadd.f32 %v3502, %v3659
        %v3661 = vtanh.pop %v3660
        %v3662 = vsub.f32 %v3493, %v3661
        %v3663 = vmul.f32 %v3657, %v3662
        %v3664 = vadd.f32 %v3661, %v3663
        %s3665 = scalar_lea.vmem %s283, 48
        %3666 = vst [vmem:[%s3665] sm:$0xff] %v3664
        %s3667 = sadd.s32 %s2415, 7
        %s3668 = smul.u32 %s3667, 3
        %s3669 = smul.addr %s3668, 8
        %s3670 = scalar_lea.vmem [#allocation3], %s3669
        %v3671 = vld [vmem:[%s3670] sm:$0xff]
        %v3672 = vld [vmem:[%s3670 + $0x8] sm:$0xff]
        %v3673 = vld [vmem:[%s3670 + $0x10] sm:$0xff]
        %3674 = vmatprep.subr.mxu0 %v2417
        %3675 = vmatpush1.msra.mxu0 %v2416
        %3676 = vmatprep.subr.mxu0 %v2420
        %3677 = vmatpush1.msra.mxu0 %v2419
        %3678 = vmatprep.subr.mxu0 %v2423
        %3679 = vmatpush1.msra.mxu0 %v2422
        %3680 = vmatprep.subr.mxu0 %v2426
        %3681 = vmatpush1.msra.mxu0 %v2425
        %3682 = vmatprep.subr.mxu0 %v2429
        %3683 = vmatpush1.msra.mxu0 %v2428
        %3684 = vmatprep.subr.mxu0 %v2432
        %3685 = vmatpush1.msra.mxu0 %v2431
        %3686 = vmatprep.subr.mxu0 %v2435
        %3687 = vmatpush1.msra.mxu0 %v2434
        %3688 = vmatprep.subr.mxu0 %v2438
        %3689 = vmatpush1.msra.mxu0 %v2437
        %3690 = vmatprep.subr.mxu0 %v2441
        %3691 = vmatpush1.msra.mxu0 %v2440
        %3692 = vmatprep.subr.mxu0 %v2444
        %3693 = vmatpush1.msra.mxu0 %v2443
        %3694 = vmatprep.subr.mxu0 %v2447
        %3695 = vmatpush1.msra.mxu0 %v2446
        %3696 = vmatprep.subr.mxu0 %v2450
        %3697 = vmatpush1.msra.mxu0 %v2449
        %3698 = vmatprep.subr.mxu0 %v2453
        %3699 = vmatpush1.msra.mxu0 %v2452
        %3700 = vmatprep.subr.mxu0 %v2456
        %3701 = vmatpush1.msra.mxu0 %v2455
        %3702 = vmatprep.subr.mxu0 %v2459
        %3703 = vmatpush1.msra.mxu0 %v2458
        %3704 = vmatprep.subr.mxu0 %v2462
        %3705 = vmatpush1.msra.mxu0 %v2461
        %3706 = vmatprep.subr.mxu0 0.0
        %3707 = vmatpush1.msra.mxu0 0.0
        %3708 = vmatprep.subr.mxu0 0.0
        %3709 = vmatpush1.msra.mxu0 0.0
        %3710 = vmatprep.subr.mxu0 0.0
        %3711 = vmatpush1.msra.mxu0 0.0
        %3712 = vmatprep.subr.mxu0 0.0
        %3713 = vmatpush1.msra.mxu0 0.0
        %3714 = vmatprep.subr.mxu0 0.0
        %3715 = vmatpush1.msra.mxu0 0.0
        %3716 = vmatprep.subr.mxu0 0.0
        %3717 = vmatpush1.msra.mxu0 0.0
        %3718 = vmatprep.subr.mxu0 0.0
        %3719 = vmatpush1.msra.mxu0 0.0
        %3720 = vmatprep.subr.mxu0 0.0
        %3721 = vmatpush1.msra.mxu0 0.0
        %3722 = vmatprep.subr.mxu0 0.0
        %3723 = vmatpush1.msra.mxu0 0.0
        %3724 = vmatprep.subr.mxu0 0.0
        %3725 = vmatpush1.msra.mxu0 0.0
        %3726 = vmatprep.subr.mxu0 0.0
        %3727 = vmatpush1.msra.mxu0 0.0
        %3728 = vmatprep.subr.mxu0 0.0
        %3729 = vmatpush1.msra.mxu0 0.0
        %3730 = vmatprep.subr.mxu0 0.0
        %3731 = vmatpush1.msra.mxu0 0.0
        %3732 = vmatprep.subr.mxu0 0.0
        %3733 = vmatpush1.msra.mxu0 0.0
        %3734 = vmatprep.subr.mxu0 0.0
        %3735 = vmatpush1.msra.mxu0 0.0
        %3736 = vmatprep.subr.mxu0 0.0
        %3737 = vmatpush1.msra.mxu0 0.0
        %3738 = vmatprep.mubr.f32.mxu0 0.0
        %3739 = vmatmul.mubr.f32.gmra.mrb[0].mxu0 %v3664
        %v3740 = vpop.f32.mrb[0].mxu0
        %v3741 = vadd.f32 0.0, %v3740
        %v3742 = vpop.f32.mrb[0].mxu0
        %v3743 = vadd.f32 0.0, %v3742
        %3744 = vdwg.mxu0
        %3745 = vmatprep.subr.mxu0 0.0
        %3746 = vmatpush1.msra.mxu0 %v2418
        %3747 = vmatprep.subr.mxu0 0.0
        %3748 = vmatpush1.msra.mxu0 %v2421
        %3749 = vmatprep.subr.mxu0 0.0
        %3750 = vmatpush1.msra.mxu0 %v2424
        %3751 = vmatprep.subr.mxu0 0.0
        %3752 = vmatpush1.msra.mxu0 %v2427
        %3753 = vmatprep.subr.mxu0 0.0
        %3754 = vmatpush1.msra.mxu0 %v2430
        %3755 = vmatprep.subr.mxu0 0.0
        %3756 = vmatpush1.msra.mxu0 %v2433
        %3757 = vmatprep.subr.mxu0 0.0
        %3758 = vmatpush1.msra.mxu0 %v2436
        %3759 = vmatprep.subr.mxu0 0.0
        %3760 = vmatpush1.msra.mxu0 %v2439
        %3761 = vmatprep.subr.mxu0 0.0
        %3762 = vmatpush1.msra.mxu0 %v2442
        %3763 = vmatprep.subr.mxu0 0.0
        %3764 = vmatpush1.msra.mxu0 %v2445
        %3765 = vmatprep.subr.mxu0 0.0
        %3766 = vmatpush1.msra.mxu0 %v2448
        %3767 = vmatprep.subr.mxu0 0.0
        %3768 = vmatpush1.msra.mxu0 %v2451
        %3769 = vmatprep.subr.mxu0 0.0
        %3770 = vmatpush1.msra.mxu0 %v2454
        %3771 = vmatprep.subr.mxu0 0.0
        %3772 = vmatpush1.msra.mxu0 %v2457
        %3773 = vmatprep.subr.mxu0 0.0
        %3774 = vmatpush1.msra.mxu0 %v2460
        %3775 = vmatprep.subr.mxu0 0.0
        %3776 = vmatpush1.msra.mxu0 %v2463
        %3777 = vmatprep.subr.mxu0 0.0
        %3778 = vmatpush1.msra.mxu0 0.0
        %3779 = vmatprep.subr.mxu0 0.0
        %3780 = vmatpush1.msra.mxu0 0.0
        %3781 = vmatprep.subr.mxu0 0.0
        %3782 = vmatpush1.msra.mxu0 0.0
        %3783 = vmatprep.subr.mxu0 0.0
        %3784 = vmatpush1.msra.mxu0 0.0
        %3785 = vmatprep.subr.mxu0 0.0
        %3786 = vmatpush1.msra.mxu0 0.0
        %3787 = vmatprep.subr.mxu0 0.0
        %3788 = vmatpush1.msra.mxu0 0.0
        %3789 = vmatprep.subr.mxu0 0.0
        %3790 = vmatpush1.msra.mxu0 0.0
        %3791 = vmatprep.subr.mxu0 0.0
        %3792 = vmatpush1.msra.mxu0 0.0
        %3793 = vmatprep.subr.mxu0 0.0
        %3794 = vmatpush1.msra.mxu0 0.0
        %3795 = vmatprep.subr.mxu0 0.0
        %3796 = vmatpush1.msra.mxu0 0.0
        %3797 = vmatprep.subr.mxu0 0.0
        %3798 = vmatpush1.msra.mxu0 0.0
        %3799 = vmatprep.subr.mxu0 0.0
        %3800 = vmatpush1.msra.mxu0 0.0
        %3801 = vmatprep.subr.mxu0 0.0
        %3802 = vmatpush1.msra.mxu0 0.0
        %3803 = vmatprep.subr.mxu0 0.0
        %3804 = vmatpush1.msra.mxu0 0.0
        %3805 = vmatprep.subr.mxu0 0.0
        %3806 = vmatpush1.msra.mxu0 0.0
        %3807 = vmatprep.subr.mxu0 0.0
        %3808 = vmatpush1.msra.mxu0 0.0
        %3809 = vmatprep.mubr.f32.mxu0 0.0
        %3810 = vmatmul.mubr.f32.gmra.mrb[0].mxu0 %v3664
        %v3811 = vpop.f32.mrb[0].mxu0
        %v3812 = vadd.f32 0.0, %v3811
        %v3813 = vpop.f32.mrb[0].mxu0
        %3814 = vdwg.mxu0
        %v3815 = vadd.f32 %v3671, %v3741
        %v3816 = vxor.u32 %v3815, 2147483648
        %v3817 = vmul.f32 %v3816, 1.442695
        %v3818 = vpow.pop %v3817
        %v3819 = vadd.f32 %v3818, 1.0
        %v3820 = vrcp.pop %v3819
        %v3821 = vmul.f32 1.0, %v3820
        %v3822 = vadd.f32 %v3672, %v3743
        %v3823 = vxor.u32 %v3822, 2147483648
        %v3824 = vmul.f32 %v3823, 1.442695
        %v3825 = vpow.pop %v3824
        %v3826 = vadd.f32 %v3825, 1.0
        %v3827 = vrcp.pop %v3826
        %v3828 = vmul.f32 1.0, %v3827
        %v3829 = vadd.f32 %v3812, %v2469
        %v3830 = vmul.f32 %v3821, %v3829
        %v3831 = vadd.f32 %v3673, %v3830
        %v3832 = vtanh.pop %v3831
        %v3833 = vsub.f32 %v3664, %v3832
        %v3834 = vmul.f32 %v3828, %v3833
        %v3835 = vadd.f32 %v3832, %v3834
        %s3836 = scalar_lea.vmem %s283, 56
        %3837 = vst [vmem:[%s3836] sm:$0xff] %v3835
        %3838 = vst [vmem:[#allocation2] sm:$0xff] %v3835
      $region52: #{gru_model_forward.4} parent=39 // pred_fallthru
        _
      %s3839 = ssub.s32 %s21, 1
      %p3840 = scmp.gt.s32.totalorder %s3839, 0
      %s3841 = scalar_select %p3840, %s3839, 0
      %s3842 = smul.u32 8, %s3841
      %p3843 = scmp.lt.s32.totalorder %s3842, 7
      %s3844 = scalar_select %p3843, %s3842, 7
      %p3845 = scmp.lt.s32.totalorder %s20, 0
      %s3846 = scalar_select %p3845, %s20, 0
      %s3847 = sadd.s32 %s3846, %s3844
      %s3848 = smul.addr %s3847, 8
      %s3849 = scalar_lea.vmem %s5, %s3848
      // Predicated region
      $region53: #{gru_model_forward.4} parent=39 // pred_check
        %p3850 = pneg %p170
      $region54: #{gru_model_forward.4} parent=39 // pred_check_branch
        %3852 = sbr.rel (%p3850) target = $region56
      $region55: #{gru_model_forward.4} parent=39 // pred_region
        %s3853 = ssub.s32 %s21, 1
        %p3854 = scmp.gt.s32.totalorder %s3853, 0
        %s3855 = scalar_select %p3854, %s3853, 0
        %s3856 = smul.u32 8, %s3855
      $region56: #{gru_model_forward.4} parent=39 // pred_fallthru
        _
    $region40: #{gru_model_forward.4} parent=5 // pred_fallthru
      _
    %p3857 = scmp.le.s32.totalorder 2, %s11
    // Predicated region
    $region57: #{gru_model_forward.4} parent=5 // pred_check
      %p3858 = pneg %p3857
    $region58: #{gru_model_forward.4} parent=5 // pred_check_branch
      %3860 = sbr.rel (%p3858) target = $region60
    $region59: #{gru_model_forward.4} parent=5 // pred_region
      %s3861 = ssub.s32 %s11, 2
      // Predicated region
      $region61: #{gru_model_forward.4} parent=59 // pred_check
        %p3862 = pneg %p176
      $region62: #{gru_model_forward.4} parent=59 // pred_check_branch
        %3864 = sbr.rel (%p3862) target = $region64
      $region63: #{gru_model_forward.4} parent=59 // pred_region
        %s3865 = ssub.s32 %s23, 1
        %p3866 = scmp.gt.s32.totalorder %s3865, 0
        %s3867 = scalar_select %p3866, %s3865, 0
        %s3868 = smul.u32 8, %s3867
        %p3869 = scmp.lt.s32.totalorder %s3868, 7
        %s3870 = scalar_select %p3869, %s3868, 7
        %p3871 = scmp.lt.s32.totalorder %s22, 0
        %s3872 = scalar_select %p3871, %s22, 0
        %s3873 = sadd.s32 %s3872, %s3870
        %s3874 = smul.addr %s3873, 8
        %s3875 = scalar_lea.vmem %s5, %s3874
      $region64: #{gru_model_forward.4} parent=59 // pred_fallthru
        _
    $region60: #{gru_model_forward.4} parent=5 // pred_fallthru
      _
  $region6: #{gru_model_forward.4} parent=0 // loop_footer
    %s15 = sadd.s32 1, %s11
  $region7: #{gru_model_forward.4} parent=0 // loop_footer_branch
    %10 = sbr.rel target = $region3
  $region8: #{gru_model_forward.4} parent=0 // loop_exit
    _

</llo_original>
